<compile_context>
chip_gen: v6e
topology: v6e:2x2x1
jax: 0.10.0
libtpu: 0.0.40
codegen_flags: <defaults>
</compile_context>

<pallas_src>
import functools
import math

import jax
import jax.numpy as jnp
from jax.experimental import pallas as pl
from jax.experimental.pallas import tpu as pltpu

LN_EPS = 1e-5
VMEM_LIMIT = 48 * 1024 * 1024      # leaves headroom on v7x (64 MiB physical VMEM)
SEQ_TILE_TARGET = 1024             # sequence rows per tile (multiple of 16)
GELU_APPROX = True                 # tanh GELU (EUP slot); deviation from erf default


# ------------------------------ helpers --------------------------------------


def _round_up(x, m):
    return -(-x // m) * m


def _gelu(x):
    return jax.nn.gelu(x, approximate=GELU_APPROX)


def _plan_tiles(n, target=SEQ_TILE_TARGET):
    """Pick (seq_tile, reduction_splits, tiles_per_split, padded_N)."""
    tn = min(target, _round_up(n, 16))
    nt = -(-n // tn)
    splits = 2 if nt >= 2 else 1          # v7x: give pass-1 a parallel axis
    nt = _round_up(nt, splits)
    return tn, splits, nt // splits, tn * nt


def _block_diag_mask(width, block):
    """(width,width) f32 0/1 mask, 1 inside diagonal (block x block) blocks."""
    r = jnp.arange(width) // block
    return (r[:, None] == r[None, :]).astype(jnp.float32)


# ----------------------------- Pallas kernels --------------------------------


def _mlp2_kernel(x_ref, w1_ref, b1_ref, w2_ref, b2_ref, o_ref):
    """Fused 2-layer MLP: Linear -> GELU -> Linear (bf16 matmuls, f32 accum)."""
    cd = w1_ref.dtype
    x = x_ref[0].astype(cd)                                              # (tn, Cin)
    h = jnp.dot(x, w1_ref[...], preferred_element_type=jnp.float32) + b1_ref[...]
    h = _gelu(h)
    y = jnp.dot(h.astype(cd), w2_ref[...],
                preferred_element_type=jnp.float32) + b2_ref[...]
    o_ref[0] = y.astype(o_ref.dtype)


def _kv_accum_kernel(x_ref, wkv_ref, bkv_ref, lng_ref, lnb_ref, avg_ref, out_ref,
                     *, seq_tile, tiles_per_split, n_valid, n_total):
    """Pass 1: accumulate a partial K^T V (per batch, per reduction split)."""
    s = pl.program_id(1)
    n = pl.program_id(2)

    @pl.when(n == 0)
    def _():
        out_ref[...] = jnp.zeros_like(out_ref)

    cd = wkv_ref.dtype                                                   # bf16
    two_e = wkv_ref.shape[1]
    e = two_e // 2

    x = x_ref[0]                                                         # (tn, E) bf16
    kv = jnp.dot(x, wkv_ref[...],
                 preferred_element_type=jnp.float32) + bkv_ref[...]      # (tn, 2E) f32

    # Per-head LayerNorm of K and V for all 2*num_heads head blocks at once.
    # Pooling runs as bf16 block-diagonal matmuls on the MXU (f32 accumulation),
    # with the centered variance form for robustness at bf16 operand precision.
    mean = jnp.dot(kv.astype(cd), avg_ref[...], preferred_element_type=jnp.float32)
    ctr = kv - mean
    var = jnp.dot((ctr * ctr).astype(cd), avg_ref[...],
                  preferred_element_type=jnp.float32)
    kvn = ctr * jax.lax.rsqrt(var + LN_EPS) * lng_ref[...] + lnb_ref[...]

    k = kvn[:, :e]
    v = kvn[:, e:]

    if n_total != n_valid:  # static: zero padded rows so they don't contribute
        row0 = (s * tiles_per_split + n) * seq_tile
        rows = row0 + jax.lax.broadcasted_iota(jnp.int32, (seq_tile, 1), 0)
        k = k * (rows < n_valid).astype(kvn.dtype)

    # K^T V contracted over the sequence tile, accumulated in the resident block.
    out_ref[...] += jax.lax.dot_general(k.astype(cd), v.astype(cd),
                                        (((0,), (0,)), ((), ())),
                                        preferred_element_type=jnp.float32)


def _fold_kernel(part_ref, wq_ref, bq_ref, wo_ref, bo_ref, mask_ref,
                 wa_ref, ba_ref, *, inv_n):
    """Per-batch fold: KV = mask * sum(partials) / N; W_attn = Wq KV Wo;
    b_attn = bq KV Wo + bo.  (Exact for linear attention: KV is constant per batch.)"""
    cd = wq_ref.dtype
    kv = jnp.sum(part_ref[0], axis=0) * (mask_ref[...] * inv_n)          # (E,E) f32
    kv_c = kv.astype(cd)
    t = jnp.dot(wq_ref[...], kv_c, preferred_element_type=jnp.float32)
    wa = jnp.dot(t.astype(cd), wo_ref[...], preferred_element_type=jnp.float32)
    tb = jnp.dot(bq_ref[...].astype(cd), kv_c, preferred_element_type=jnp.float32)
    ba = jnp.dot(tb.astype(cd), wo_ref[...],
                 preferred_element_type=jnp.float32) + bo_ref[...]
    wa_ref[0] = wa.astype(wa_ref.dtype)
    ba_ref[0] = ba.astype(ba_ref.dtype)


def _encoder_tail(x_ref, wa_ref, ba_ref, w1_ref, b1_ref, w2_ref, b2_ref):
    """Folded attention + residual + encoder MLP + residual (shared body)."""
    cd = w1_ref.dtype
    x = x_ref[0]                                                         # (tn, E) bf16
    xf = x.astype(jnp.float32)
    y = jnp.dot(x, wa_ref[0], preferred_element_type=jnp.float32) \
        + ba_ref[0] + xf                                                 # attn(seq)+seq
    h = _gelu(jnp.dot(y.astype(cd), w1_ref[...],
                      preferred_element_type=jnp.float32) + b1_ref[...])
    z = jnp.dot(h.astype(cd), w2_ref[...],
                preferred_element_type=jnp.float32) + b2_ref[...] + y    # mlp(seq)+seq
    return z, cd


def _attn_mlp_kernel(x_ref, wa_ref, ba_ref, w1_ref, b1_ref, w2_ref, b2_ref, o_ref):
    z, _ = _encoder_tail(x_ref, wa_ref, ba_ref, w1_ref, b1_ref, w2_ref, b2_ref)
    o_ref[0] = z.astype(o_ref.dtype)


def _attn_mlp_project_kernel(x_ref, wa_ref, ba_ref, w1_ref, b1_ref, w2_ref, b2_ref,
                             pw1_ref, pb1_ref, pw2_ref, pb2_ref, o_ref):
    """Last encoder layer with the project MLP fused in (saves a (B,N,E) round trip)."""
    z, cd = _encoder_tail(x_ref, wa_ref, ba_ref, w1_ref, b1_ref, w2_ref, b2_ref)
    h2 = _gelu(jnp.dot(z.astype(cd), pw1_ref[...],
                       preferred_element_type=jnp.float32) + pb1_ref[...])
    out = jnp.dot(h2.astype(cd), pw2_ref[...],
                  preferred_element_type=jnp.float32) + pb2_ref[...]
    o_ref[0] = out.astype(o_ref.dtype)


# ----------------------------- pallas_call wrappers ---------------------------


def mlp2(x, w1, b1, w2, b2, *, seq_tile, out_dtype=jnp.bfloat16):
    B, n_pad, cin = x.shape
    ch = w1.shape[1]
    cout = w2.shape[1]
    return pl.pallas_call(
        _mlp2_kernel,
        out_shape=jax.ShapeDtypeStruct((B, n_pad, cout), out_dtype),
        grid=(B, n_pad // seq_tile),
        in_specs=[
            pl.BlockSpec((1, seq_tile, cin), lambda b, n: (b, n, 0)),
            pl.BlockSpec((cin, ch), lambda b, n: (0, 0)),
            pl.BlockSpec((1, ch), lambda b, n: (0, 0)),
            pl.BlockSpec((ch, cout), lambda b, n: (0, 0)),
            pl.BlockSpec((1, cout), lambda b, n: (0, 0)),
        ],
        out_specs=pl.BlockSpec((1, seq_tile, cout), lambda b, n: (b, n, 0)),
        compiler_params=pltpu.CompilerParams(
            dimension_semantics=("parallel", "parallel"),
            vmem_limit_bytes=VMEM_LIMIT),
    )(x, w1, b1, w2, b2)


def galerkin_encoder_layer(x, layer, *, avg, mask, n_valid, tiling, project=None,
                           compute_dtype=jnp.bfloat16):
    B, n_pad, E = x.shape
    tn, splits, tps = tiling
    two_e = 2 * E

    # ---- pass 1: per-(batch, split) partial K^T V, accumulated over N tiles ----
    partial = pl.pallas_call(
        functools.partial(_kv_accum_kernel, seq_tile=tn, tiles_per_split=tps,
                          n_valid=n_valid, n_total=n_pad),
        out_shape=jax.ShapeDtypeStruct((B, splits, E, E), jnp.float32),
        grid=(B, splits, tps),
        in_specs=[
            pl.BlockSpec((1, tn, E), lambda b, s, n: (b, s * tps + n, 0)),
            pl.BlockSpec((E, two_e), lambda b, s, n: (0, 0)),
            pl.BlockSpec((1, two_e), lambda b, s, n: (0, 0)),
            pl.BlockSpec((1, two_e), lambda b, s, n: (0, 0)),
            pl.BlockSpec((1, two_e), lambda b, s, n: (0, 0)),
            pl.BlockSpec((two_e, two_e), lambda b, s, n: (0, 0)),
        ],
        out_specs=pl.BlockSpec((None, None, E, E), lambda b, s, n: (b, s, 0, 0)),
        compiler_params=pltpu.CompilerParams(
            dimension_semantics=("parallel", "parallel", "arbitrary"),
            vmem_limit_bytes=VMEM_LIMIT),
    )(x, layer["wkv"], layer["bkv"], layer["ln_g"], layer["ln_b"], avg)

    # ---- fold: sum partials, mask to per-head blocks, fold Wq/Wo/biases in ----
    w_attn, b_attn = pl.pallas_call(
        functools.partial(_fold_kernel, inv_n=1.0 / n_valid),
        out_shape=(jax.ShapeDtypeStruct((B, E, E), compute_dtype),
                   jax.ShapeDtypeStruct((B, 1, E), jnp.float32)),
        grid=(B,),
        in_specs=[
            pl.BlockSpec((1, splits, E, E), lambda b: (b, 0, 0, 0)),
            pl.BlockSpec((E, E), lambda b: (0, 0)),
            pl.BlockSpec((1, E), lambda b: (0, 0)),
            pl.BlockSpec((E, E), lambda b: (0, 0)),
            pl.BlockSpec((1, E), lambda b: (0, 0)),
            pl.BlockSpec((E, E), lambda b: (0, 0)),
        ],
        out_specs=(pl.BlockSpec((1, E, E), lambda b: (b, 0, 0)),
                   pl.BlockSpec((1, 1, E), lambda b: (b, 0, 0))),
        compiler_params=pltpu.CompilerParams(
            dimension_semantics=("parallel",),
            vmem_limit_bytes=VMEM_LIMIT),
    )(partial, layer["wq"], layer["bq"], layer["wo"], layer["bo"], mask)

    # ---- pass 2: folded attention + residual + MLP + residual (+ project) ----
    h1 = layer["w1"].shape[1]
    in_specs = [
        pl.BlockSpec((1, tn, E), lambda b, n: (b, n, 0)),
        pl.BlockSpec((1, E, E), lambda b, n: (b, 0, 0)),
        pl.BlockSpec((1, 1, E), lambda b, n: (b, 0, 0)),
        pl.BlockSpec((E, h1), lambda b, n: (0, 0)),
        pl.BlockSpec((1, h1), lambda b, n: (0, 0)),
        pl.BlockSpec((h1, E), lambda b, n: (0, 0)),
        pl.BlockSpec((1, E), lambda b, n: (0, 0)),
    ]
    args = [x, w_attn, b_attn, layer["w1"], layer["b1"], layer["w2"], layer["b2"]]
    if project is None:
        kernel = _attn_mlp_kernel
        out_dim = E
    else:
        kernel = _attn_mlp_project_kernel
        pw1, pb1, pw2, pb2 = project
        ph = pw1.shape[1]
        out_dim = pw2.shape[1]
        in_specs += [
            pl.BlockSpec((E, ph), lambda b, n: (0, 0)),
            pl.BlockSpec((1, ph), lambda b, n: (0, 0)),
            pl.BlockSpec((ph, out_dim), lambda b, n: (0, 0)),
            pl.BlockSpec((1, out_dim), lambda b, n: (0, 0)),
        ]
        args += [pw1, pb1, pw2, pb2]

    return pl.pallas_call(
        kernel,
        out_shape=jax.ShapeDtypeStruct((B, n_pad, out_dim), compute_dtype),
        grid=(B, n_pad // tn),
        in_specs=in_specs,
        out_specs=pl.BlockSpec((1, tn, out_dim), lambda b, n: (b, n, 0)),
        compiler_params=pltpu.CompilerParams(
            dimension_semantics=("parallel", "parallel"),
            vmem_limit_bytes=VMEM_LIMIT),
    )(*args)


# ----------------------------- parameters ------------------------------------


def _init_linear(key, cin, cout):
    kw, kb = jax.random.split(key)
    bound = 1.0 / math.sqrt(cin)
    w = jax.random.uniform(kw, (cin, cout), jnp.float32, -bound, bound)
    b = jax.random.uniform(kb, (1, cout), jnp.float32, -bound, bound)
    return w, b


def init_params(key, in_channels, out_channels, embed_dim, num_heads, num_layers):
    """PyTorch-style (unfused, f32) parameter layout."""
    assert embed_dim % num_heads == 0
    head_dim = embed_dim // num_heads
    keys = jax.random.split(key, 4 + num_layers)

    def mlp_params(k, cin, ch, cout):
        k1, k2 = jax.random.split(k)
        w1, b1 = _init_linear(k1, cin, ch)
        w2, b2 = _init_linear(k2, ch, cout)
        return (w1, b1, w2, b2)

    params = {
        "lift": mlp_params(keys[0], in_channels + 2, embed_dim, embed_dim),
        "project": mlp_params(keys[1], embed_dim, embed_dim, out_channels),
        "encoders": [],
    }
    for i in range(num_layers):
        ka, km = jax.random.split(keys[2 + i])
        kq, kk, kv, ko = jax.random.split(ka, 4)
        wq, bq = _init_linear(kq, embed_dim, embed_dim)
        wk, bk = _init_linear(kk, embed_dim, embed_dim)
        wv, bv = _init_linear(kv, embed_dim, embed_dim)
        wo, bo = _init_linear(ko, embed_dim, embed_dim)
        # per-head LayerNorm params for K and V (PyTorch default init: ones/zeros)
        kg = jnp.ones((num_heads, head_dim), jnp.float32)
        kb_ = jnp.zeros((num_heads, head_dim), jnp.float32)
        vg = jnp.ones((num_heads, head_dim), jnp.float32)
        vb = jnp.zeros((num_heads, head_dim), jnp.float32)
        params["encoders"].append({
            "attn": (wq, bq, wk, bk, wv, bv, kg, kb_, vg, vb, wo, bo),
            "mlp": mlp_params(km, embed_dim, embed_dim, embed_dim),
        })
    return params


def _pad_lanes(w, b, multiple=128):
    cout = w.shape[1]
    cp = _round_up(cout, multiple)
    if cp != cout:
        w = jnp.pad(w, ((0, 0), (0, cp - cout)))
        b = jnp.pad(b, ((0, 0), (0, cp - cout)))
    return w, b


def prepare_params(raw, *, compute_dtype=jnp.bfloat16):
    """Pack weights for the kernels: fuse K|V, flatten per-head LN params,
    hoist the block-diagonal pooling/mask constants, pad the narrow projection
    output to a lane-dense width, cast matmul weights to bf16."""
    def pack_mlp(p, pad_out=False):
        w1, b1, w2, b2 = p
        if pad_out:
            w2, b2 = _pad_lanes(w2, b2)
        return (w1.astype(compute_dtype), b1, w2.astype(compute_dtype), b2)

    out = {
        "lift": pack_mlp(raw["lift"]),
        "project": pack_mlp(raw["project"], pad_out=True),
        "encoders": [],
        "avg": None,
        "mask": None,
    }
    for lyr in raw["encoders"]:
        (wq, bq, wk, bk, wv, bv, kg, kb_, vg, vb, wo, bo) = lyr["attn"]
        w1, b1, w2, b2 = lyr["mlp"]
        out["encoders"].append({
            "wq": wq.astype(compute_dtype), "bq": bq,
            "wkv": jnp.concatenate([wk, wv], axis=1).astype(compute_dtype),
            "bkv": jnp.concatenate([bk, bv], axis=1),
            "ln_g": jnp.concatenate([kg.reshape(1, -1), vg.reshape(1, -1)], axis=1),
            "ln_b": jnp.concatenate([kb_.reshape(1, -1), vb.reshape(1, -1)], axis=1),
            "wo": wo.astype(compute_dtype), "bo": bo,
            "w1": w1.astype(compute_dtype), "b1": b1,
            "w2": w2.astype(compute_dtype), "b2": b2,
        })
    if raw["encoders"]:
        wq = raw["encoders"][0]["attn"][0]
        kg = raw["encoders"][0]["attn"][6]
        e = wq.shape[0]
        _, dh = kg.shape
        # Hoisted constants (never rebuilt inside kernels):
        out["avg"] = (_block_diag_mask(2 * e, dh) / dh).astype(compute_dtype)
        out["mask"] = _block_diag_mask(e, dh)
    return out


# ----------------------------- forward (glue) ---------------------------------


def galerkin_transformer_2d(params, x, domain_size_x, domain_size_y, *, out_channels):
    """x: (B, C, H, W) NCHW -> (B, out_channels, H, W). pos_method='concat'."""
    del domain_size_x, domain_size_y  # unused in the reference forward
    B, C, H, W = x.shape
    N = H * W
    # cell-centered unit grid in [0,1], rescaled to [-1,1]
    yy = (jnp.arange(H, dtype=jnp.float32) + 0.5) / H
    xx = (jnp.arange(W, dtype=jnp.float32) + 0.5) / W
    gy, gx = jnp.meshgrid(yy, xx, indexing="ij")
    g = 2.0 * jnp.stack([gy, gx], axis=0) - 1.0                          # (2, H, W)
    g = jnp.broadcast_to(g[None], (B, 2, H, W))
    xc = jnp.concatenate([g, x.astype(jnp.float32)], axis=1)             # (B, 2+C, H, W)
    seq = jnp.transpose(xc, (0, 2, 3, 1)).reshape(B, N, C + 2)           # b c h w -> b (h w) c

    tn, splits, tps, n_pad = _plan_tiles(N)
    if n_pad != N:
        seq = jnp.pad(seq, ((0, 0), (0, n_pad - N), (0, 0)))

    seq = mlp2(seq.astype(jnp.bfloat16), *params["lift"], seq_tile=tn)

    encoders = params["encoders"]
    for i, layer in enumerate(encoders):
        project = params["project"] if i == len(encoders) - 1 else None
        seq = galerkin_encoder_layer(
            seq, layer, avg=params["avg"], mask=params["mask"],
            n_valid=N, tiling=(tn, splits, tps), project=project)
    if not encoders:  # degenerate: no encoder layers -> standalone project MLP
        seq = mlp2(seq, *params["project"], seq_tile=tn)

    # project output is lane-padded; slice back and restore f32/NCHW in JAX
    proj = seq[:, :N, :out_channels].astype(jnp.float32)
    return jnp.transpose(proj.reshape(B, H, W, out_channels), (0, 3, 1, 2))


# ----------------------------- main -------------------------------------------


if __name__ == "__main__":
    key = jax.random.PRNGKey(0)
    B, Cin, H, W = 2, 4, 16, 16
    # NOTE: for real workloads pick embed_dim as a multiple of 128 (ideally 256
    # on v6e/v7x to fill the 256-wide MXU); the small demo uses 32.
    Cout, embed_dim, num_heads, num_layers = 3, 32, 4, 2

    kp, kx = jax.random.split(key)
    raw = init_params(kp, Cin, Cout, embed_dim, num_heads, num_layers)
    params = prepare_params(raw)
    x = jax.random.normal(kx, (B, Cin, H, W), jnp.float32)

    fwd = jax.jit(functools.partial(galerkin_transformer_2d, out_channels=Cout))
    y = jax.block_until_ready(fwd(params, x, 1.0, 1.0))
    assert y.shape == (B, Cout, H, W), y.shape
    assert jnp.all(jnp.isfinite(y))
    print("KERNEL_OK")
</pallas_src>

<mosaic_0001>
module attributes {stable_mosaic.version = 11 : i64} {
  func.func @_kv_accum_kernel(%arg0: i32, %arg1: i32, %arg2: i32, %arg3: memref<1x256x32xbf16, #tpu.memory_space<vmem>>, %arg4: memref<32x64xbf16, #tpu.memory_space<vmem>>, %arg5: memref<1x64xf32, #tpu.memory_space<vmem>>, %arg6: memref<1x64xf32, #tpu.memory_space<vmem>>, %arg7: memref<1x64xf32, #tpu.memory_space<vmem>>, %arg8: memref<64x64xbf16, #tpu.memory_space<vmem>>, %arg9: memref<1x1x32x32xf32, #tpu.memory_space<vmem>>) attributes {dimension_semantics = [#tpu.dimension_semantics<parallel>, #tpu.dimension_semantics<parallel>, #tpu.dimension_semantics<arbitrary>], iteration_bounds = array<i64: 2, 1, 1>, scalar_prefetch = 0 : i64, scratch_operands = 0 : i64, tpu.core_type = #tpu.core_type<tc>, window_params = [{transform_indices = @transform_0, window_bounds = array<i64: 1, 256, 32>}, {pipeline_mode = #tpu.pipeline_mode<synchronous>, transform_indices = @transform_1, window_bounds = array<i64: 32, 64>}, {pipeline_mode = #tpu.pipeline_mode<synchronous>, transform_indices = @transform_2, window_bounds = array<i64: 1, 64>}, {pipeline_mode = #tpu.pipeline_mode<synchronous>, transform_indices = @transform_3, window_bounds = array<i64: 1, 64>}, {pipeline_mode = #tpu.pipeline_mode<synchronous>, transform_indices = @transform_4, window_bounds = array<i64: 1, 64>}, {pipeline_mode = #tpu.pipeline_mode<synchronous>, transform_indices = @transform_5, window_bounds = array<i64: 64, 64>}, {transform_indices = @transform_6, window_bounds = array<i64: 1, 1, 32, 32>}]} {
    %c0_i32 = arith.constant 0 : i32
    %0 = arith.cmpi eq, %arg2, %c0_i32 : i32
    %1 = arith.extui %0 : i1 to i32
    %c0_i32_0 = arith.constant 0 : i32
    %2 = arith.cmpi ne, %1, %c0_i32_0 : i32
    scf.if %2 {
      %cst_27 = arith.constant 0.000000e+00 : f32
      %39 = vector.broadcast %cst_27 : f32 to vector<32x32xf32>
      %c0_28 = arith.constant 0 : index
      %c0_29 = arith.constant 0 : index
      %c0_30 = arith.constant 0 : index
      %c0_31 = arith.constant 0 : index
      %40 = vector.load %arg9[%c0_28, %c0_29, %c0_30, %c0_31] : memref<1x1x32x32xf32, #tpu.memory_space<vmem>>, vector<1x1x32x32xf32>
      %41 = vector.shape_cast %40 : vector<1x1x32x32xf32> to vector<32x32xf32>
      %42 = vector.shape_cast %39 : vector<32x32xf32> to vector<1x1x32x32xf32>
      tpu.vector_store %arg9[%c0_28, %c0_29, %c0_30, %c0_31], %42 {strides = array<i32>} : memref<1x1x32x32xf32, #tpu.memory_space<vmem>>, vector<1x1x32x32xf32>,
    } else {
    }
    %c0 = arith.constant 0 : index
    %c0_1 = arith.constant 0 : index
    %c0_2 = arith.constant 0 : index
    %3 = vector.load %arg3[%c0, %c0_1, %c0_2] : memref<1x256x32xbf16, #tpu.memory_space<vmem>>, vector<1x256x32xbf16>
    %4 = vector.shape_cast %3 : vector<1x256x32xbf16> to vector<256x32xbf16>
    %c0_3 = arith.constant 0 : index
    %c0_4 = arith.constant 0 : index
    %5 = vector.load %arg4[%c0_3, %c0_4] : memref<32x64xbf16, #tpu.memory_space<vmem>>, vector<32x64xbf16>
    %cst = arith.constant dense<0.000000e+00> : vector<256x64xf32>
    %6 = tpu.matmul %4, %5, %cst {dimension_numbers = #tpu.dot_dimension_numbers<[1], [0], [0], [1], [0, 0, 1, 1], [], []>} : vector<256x32xbf16>, vector<32x64xbf16>, vector<256x64xf32> -> vector<256x64xf32>
    %c0_5 = arith.constant 0 : index
    %c0_6 = arith.constant 0 : index
    %7 = vector.load %arg5[%c0_5, %c0_6] : memref<1x64xf32, #tpu.memory_space<vmem>>, vector<1x64xf32>
    %8 = vector.broadcast %7 : vector<1x64xf32> to vector<256x64xf32>
    %9 = arith.addf %6, %8 : vector<256x64xf32>
    %10 = arith.truncf %9 : vector<256x64xf32> to vector<256x64xbf16>
    %c0_7 = arith.constant 0 : index
    %c0_8 = arith.constant 0 : index
    %11 = vector.load %arg8[%c0_7, %c0_8] : memref<64x64xbf16, #tpu.memory_space<vmem>>, vector<64x64xbf16>
    %cst_9 = arith.constant dense<0.000000e+00> : vector<256x64xf32>
    %12 = tpu.matmul %10, %11, %cst_9 {dimension_numbers = #tpu.dot_dimension_numbers<[1], [0], [0], [1], [0, 0, 1, 1], [], []>} : vector<256x64xbf16>, vector<64x64xbf16>, vector<256x64xf32> -> vector<256x64xf32>
    %13 = arith.subf %9, %12 : vector<256x64xf32>
    %14 = arith.mulf %13, %13 : vector<256x64xf32>
    %15 = arith.truncf %14 : vector<256x64xf32> to vector<256x64xbf16>
    %c0_10 = arith.constant 0 : index
    %c0_11 = arith.constant 0 : index
    %16 = vector.load %arg8[%c0_10, %c0_11] : memref<64x64xbf16, #tpu.memory_space<vmem>>, vector<64x64xbf16>
    %cst_12 = arith.constant dense<0.000000e+00> : vector<256x64xf32>
    %17 = tpu.matmul %15, %16, %cst_12 {dimension_numbers = #tpu.dot_dimension_numbers<[1], [0], [0], [1], [0, 0, 1, 1], [], []>} : vector<256x64xbf16>, vector<64x64xbf16>, vector<256x64xf32> -> vector<256x64xf32>
    %cst_13 = arith.constant 9.99999974E-6 : f32
    %18 = vector.broadcast %cst_13 : f32 to vector<256x64xf32>
    %19 = arith.addf %17, %18 : vector<256x64xf32>
    %20 = math.rsqrt %19 : vector<256x64xf32>
    %21 = arith.mulf %13, %20 : vector<256x64xf32>
    %c0_14 = arith.constant 0 : index
    %c0_15 = arith.constant 0 : index
    %22 = vector.load %arg6[%c0_14, %c0_15] : memref<1x64xf32, #tpu.memory_space<vmem>>, vector<1x64xf32>
    %23 = vector.broadcast %22 : vector<1x64xf32> to vector<256x64xf32>
    %24 = arith.mulf %21, %23 : vector<256x64xf32>
    %c0_16 = arith.constant 0 : index
    %c0_17 = arith.constant 0 : index
    %25 = vector.load %arg7[%c0_16, %c0_17] : memref<1x64xf32, #tpu.memory_space<vmem>>, vector<1x64xf32>
    %26 = vector.broadcast %25 : vector<1x64xf32> to vector<256x64xf32>
    %27 = arith.addf %24, %26 : vector<256x64xf32>
    %28 = vector.extract_strided_slice %27 {offsets = [0, 0], sizes = [256, 32], strides = [1, 1]} : vector<256x64xf32> to vector<256x32xf32>
    %29 = vector.extract_strided_slice %27 {offsets = [0, 32], sizes = [256, 32], strides = [1, 1]} : vector<256x64xf32> to vector<256x32xf32>
    %c0_18 = arith.constant 0 : index
    %c0_19 = arith.constant 0 : index
    %c0_20 = arith.constant 0 : index
    %c0_21 = arith.constant 0 : index
    %30 = vector.load %arg9[%c0_18, %c0_19, %c0_20, %c0_21] : memref<1x1x32x32xf32, #tpu.memory_space<vmem>>, vector<1x1x32x32xf32>
    %31 = vector.shape_cast %30 : vector<1x1x32x32xf32> to vector<32x32xf32>
    %32 = arith.truncf %28 : vector<256x32xf32> to vector<256x32xbf16>
    %33 = arith.truncf %29 : vector<256x32xf32> to vector<256x32xbf16>
    %cst_22 = arith.constant dense<0.000000e+00> : vector<32x32xf32>
    %34 = tpu.matmul %32, %33, %cst_22 {dimension_numbers = #tpu.dot_dimension_numbers<[0], [0], [1], [1], [0, 1, 1, 1], [], []>} : vector<256x32xbf16>, vector<256x32xbf16>, vector<32x32xf32> -> vector<32x32xf32>
    %35 = arith.addf %31, %34 : vector<32x32xf32>
    %c0_23 = arith.constant 0 : index
    %c0_24 = arith.constant 0 : index
    %c0_25 = arith.constant 0 : index
    %c0_26 = arith.constant 0 : index
    %36 = vector.load %arg9[%c0_23, %c0_24, %c0_25, %c0_26] : memref<1x1x32x32xf32, #tpu.memory_space<vmem>>, vector<1x1x32x32xf32>
    %37 = vector.shape_cast %36 : vector<1x1x32x32xf32> to vector<32x32xf32>
    %38 = vector.shape_cast %35 : vector<32x32xf32> to vector<1x1x32x32xf32>
    tpu.vector_store %arg9[%c0_23, %c0_24, %c0_25, %c0_26], %38 {strides = array<i32>} : memref<1x1x32x32xf32, #tpu.memory_space<vmem>>, vector<1x1x32x32xf32>,
    return
  }
  func.func @transform_0(%arg0: i32, %arg1: i32, %arg2: i32) -> (i32, i32, i32) {
    %c1_i32 = arith.constant 1 : i32
    %0 = arith.muli %arg1, %c1_i32 : i32
    %1 = arith.addi %0, %arg2 : i32
    %c0_i32 = arith.constant 0 : i32
    %c0_i32_0 = arith.constant 0 : i32
    return %arg0, %1, %c0_i32 : i32, i32, i32
  }
  func.func @transform_1(%arg0: i32, %arg1: i32, %arg2: i32) -> (i32, i32) {
    %c0_i32 = arith.constant 0 : i32
    %c0_i32_0 = arith.constant 0 : i32
    %c0_i32_1 = arith.constant 0 : i32
    return %c0_i32, %c0_i32_0 : i32, i32
  }
  func.func @transform_2(%arg0: i32, %arg1: i32, %arg2: i32) -> (i32, i32) {
    %c0_i32 = arith.constant 0 : i32
    %c0_i32_0 = arith.constant 0 : i32
    %c0_i32_1 = arith.constant 0 : i32
    return %c0_i32, %c0_i32_0 : i32, i32
  }
  func.func @transform_3(%arg0: i32, %arg1: i32, %arg2: i32) -> (i32, i32) {
    %c0_i32 = arith.constant 0 : i32
    %c0_i32_0 = arith.constant 0 : i32
    %c0_i32_1 = arith.constant 0 : i32
    return %c0_i32, %c0_i32_0 : i32, i32
  }
  func.func @transform_4(%arg0: i32, %arg1: i32, %arg2: i32) -> (i32, i32) {
    %c0_i32 = arith.constant 0 : i32
    %c0_i32_0 = arith.constant 0 : i32
    %c0_i32_1 = arith.constant 0 : i32
    return %c0_i32, %c0_i32_0 : i32, i32
  }
  func.func @transform_5(%arg0: i32, %arg1: i32, %arg2: i32) -> (i32, i32) {
    %c0_i32 = arith.constant 0 : i32
    %c0_i32_0 = arith.constant 0 : i32
    %c0_i32_1 = arith.constant 0 : i32
    return %c0_i32, %c0_i32_0 : i32, i32
  }
  func.func @transform_6(%arg0: i32, %arg1: i32, %arg2: i32) -> (i32, i32, i32, i32) {
    %c0_i32 = arith.constant 0 : i32
    %c0_i32_0 = arith.constant 0 : i32
    %c0_i32_1 = arith.constant 0 : i32
    return %arg0, %arg1, %c0_i32, %c0_i32_0 : i32, i32, i32, i32
  }
}

module attributes {stable_mosaic.version = 11 : i64} {
  func.func @_mlp2_kernel(%arg0: i32, %arg1: i32, %arg2: memref<1x256x6xbf16, #tpu.memory_space<vmem>>, %arg3: memref<6x32xbf16, #tpu.memory_space<vmem>>, %arg4: memref<1x32xf32, #tpu.memory_space<vmem>>, %arg5: memref<32x32xbf16, #tpu.memory_space<vmem>>, %arg6: memref<1x32xf32, #tpu.memory_space<vmem>>, %arg7: memref<1x256x32xbf16, #tpu.memory_space<vmem>>) attributes {dimension_semantics = [#tpu.dimension_semantics<parallel>, #tpu.dimension_semantics<parallel>], iteration_bounds = array<i64: 2, 1>, scalar_prefetch = 0 : i64, scratch_operands = 0 : i64, tpu.core_type = #tpu.core_type<tc>, window_params = [{transform_indices = @transform_0, window_bounds = array<i64: 1, 256, 6>}, {pipeline_mode = #tpu.pipeline_mode<synchronous>, transform_indices = @transform_1, window_bounds = array<i64: 6, 32>}, {pipeline_mode = #tpu.pipeline_mode<synchronous>, transform_indices = @transform_2, window_bounds = array<i64: 1, 32>}, {pipeline_mode = #tpu.pipeline_mode<synchronous>, transform_indices = @transform_3, window_bounds = array<i64: 32, 32>}, {pipeline_mode = #tpu.pipeline_mode<synchronous>, transform_indices = @transform_4, window_bounds = array<i64: 1, 32>}, {transform_indices = @transform_5, window_bounds = array<i64: 1, 256, 32>}]} {
    %c0 = arith.constant 0 : index
    %c0_0 = arith.constant 0 : index
    %c0_1 = arith.constant 0 : index
    %0 = vector.load %arg2[%c0, %c0_0, %c0_1] : memref<1x256x6xbf16, #tpu.memory_space<vmem>>, vector<1x256x6xbf16>
    %1 = vector.shape_cast %0 : vector<1x256x6xbf16> to vector<256x6xbf16>
    %c0_2 = arith.constant 0 : index
    %c0_3 = arith.constant 0 : index
    %2 = vector.load %arg3[%c0_2, %c0_3] : memref<6x32xbf16, #tpu.memory_space<vmem>>, vector<6x32xbf16>
    %cst = arith.constant dense<0.000000e+00> : vector<256x32xf32>
    %3 = tpu.matmul %1, %2, %cst {dimension_numbers = #tpu.dot_dimension_numbers<[1], [0], [0], [1], [0, 0, 1, 1], [], []>} : vector<256x6xbf16>, vector<6x32xbf16>, vector<256x32xf32> -> vector<256x32xf32>
    %c0_4 = arith.constant 0 : index
    %c0_5 = arith.constant 0 : index
    %4 = vector.load %arg4[%c0_4, %c0_5] : memref<1x32xf32, #tpu.memory_space<vmem>>, vector<1x32xf32>
    %5 = vector.broadcast %4 : vector<1x32xf32> to vector<256x32xf32>
    %6 = arith.addf %3, %5 : vector<256x32xf32>
    %7 = arith.mulf %6, %6 : vector<256x32xf32>
    %8 = arith.mulf %6, %7 : vector<256x32xf32>
    %cst_6 = arith.constant 4.471500e-02 : f32
    %9 = vector.broadcast %cst_6 : f32 to vector<256x32xf32>
    %10 = arith.mulf %9, %8 : vector<256x32xf32>
    %11 = arith.addf %6, %10 : vector<256x32xf32>
    %cst_7 = arith.constant 0.797884583 : f32
    %12 = vector.broadcast %cst_7 : f32 to vector<256x32xf32>
    %13 = arith.mulf %12, %11 : vector<256x32xf32>
    %14 = math.tanh %13 : vector<256x32xf32>
    %cst_8 = arith.constant 1.000000e+00 : f32
    %15 = vector.broadcast %cst_8 : f32 to vector<256x32xf32>
    %16 = arith.addf %15, %14 : vector<256x32xf32>
    %cst_9 = arith.constant 5.000000e-01 : f32
    %17 = vector.broadcast %cst_9 : f32 to vector<256x32xf32>
    %18 = arith.mulf %17, %16 : vector<256x32xf32>
    %19 = arith.mulf %6, %18 : vector<256x32xf32>
    %20 = arith.truncf %19 : vector<256x32xf32> to vector<256x32xbf16>
    %c0_10 = arith.constant 0 : index
    %c0_11 = arith.constant 0 : index
    %21 = vector.load %arg5[%c0_10, %c0_11] : memref<32x32xbf16, #tpu.memory_space<vmem>>, vector<32x32xbf16>
    %cst_12 = arith.constant dense<0.000000e+00> : vector<256x32xf32>
    %22 = tpu.matmul %20, %21, %cst_12 {dimension_numbers = #tpu.dot_dimension_numbers<[1], [0], [0], [1], [0, 0, 1, 1], [], []>} : vector<256x32xbf16>, vector<32x32xbf16>, vector<256x32xf32> -> vector<256x32xf32>
    %c0_13 = arith.constant 0 : index
    %c0_14 = arith.constant 0 : index
    %23 = vector.load %arg6[%c0_13, %c0_14] : memref<1x32xf32, #tpu.memory_space<vmem>>, vector<1x32xf32>
    %24 = vector.broadcast %23 : vector<1x32xf32> to vector<256x32xf32>
    %25 = arith.addf %22, %24 : vector<256x32xf32>
    %26 = arith.truncf %25 : vector<256x32xf32> to vector<256x32xbf16>
    %c0_15 = arith.constant 0 : index
    %c0_16 = arith.constant 0 : index
    %c0_17 = arith.constant 0 : index
    %27 = vector.load %arg7[%c0_15, %c0_16, %c0_17] : memref<1x256x32xbf16, #tpu.memory_space<vmem>>, vector<1x256x32xbf16>
    %28 = vector.shape_cast %27 : vector<1x256x32xbf16> to vector<256x32xbf16>
    %29 = vector.shape_cast %26 : vector<256x32xbf16> to vector<1x256x32xbf16>
    tpu.vector_store %arg7[%c0_15, %c0_16, %c0_17], %29 {strides = array<i32>} : memref<1x256x32xbf16, #tpu.memory_space<vmem>>, vector<1x256x32xbf16>,
    return
  }
  func.func @transform_0(%arg0: i32, %arg1: i32) -> (i32, i32, i32) {
    %c0_i32 = arith.constant 0 : i32
    %c0_i32_0 = arith.constant 0 : i32
    return %arg0, %arg1, %c0_i32 : i32, i32, i32
  }
  func.func @transform_1(%arg0: i32, %arg1: i32) -> (i32, i32) {
    %c0_i32 = arith.constant 0 : i32
    %c0_i32_0 = arith.constant 0 : i32
    %c0_i32_1 = arith.constant 0 : i32
    return %c0_i32, %c0_i32_0 : i32, i32
  }
  func.func @transform_2(%arg0: i32, %arg1: i32) -> (i32, i32) {
    %c0_i32 = arith.constant 0 : i32
    %c0_i32_0 = arith.constant 0 : i32
    %c0_i32_1 = arith.constant 0 : i32
    return %c0_i32, %c0_i32_0 : i32, i32
  }
  func.func @transform_3(%arg0: i32, %arg1: i32) -> (i32, i32) {
    %c0_i32 = arith.constant 0 : i32
    %c0_i32_0 = arith.constant 0 : i32
    %c0_i32_1 = arith.constant 0 : i32
    return %c0_i32, %c0_i32_0 : i32, i32
  }
  func.func @transform_4(%arg0: i32, %arg1: i32) -> (i32, i32) {
    %c0_i32 = arith.constant 0 : i32
    %c0_i32_0 = arith.constant 0 : i32
    %c0_i32_1 = arith.constant 0 : i32
    return %c0_i32, %c0_i32_0 : i32, i32
  }
  func.func @transform_5(%arg0: i32, %arg1: i32) -> (i32, i32, i32) {
    %c0_i32 = arith.constant 0 : i32
    %c0_i32_0 = arith.constant 0 : i32
    return %arg0, %arg1, %c0_i32 : i32, i32, i32
  }
}

module attributes {stable_mosaic.version = 11 : i64} {
  func.func @_fold_kernel(%arg0: i32, %arg1: memref<1x1x32x32xf32, #tpu.memory_space<vmem>>, %arg2: memref<32x32xbf16, #tpu.memory_space<vmem>>, %arg3: memref<1x32xf32, #tpu.memory_space<vmem>>, %arg4: memref<32x32xbf16, #tpu.memory_space<vmem>>, %arg5: memref<1x32xf32, #tpu.memory_space<vmem>>, %arg6: memref<32x32xf32, #tpu.memory_space<vmem>>, %arg7: memref<1x32x32xbf16, #tpu.memory_space<vmem>>, %arg8: memref<1x1x32xf32, #tpu.memory_space<vmem>>) attributes {dimension_semantics = [#tpu.dimension_semantics<parallel>], iteration_bounds = array<i64: 2>, scalar_prefetch = 0 : i64, scratch_operands = 0 : i64, tpu.core_type = #tpu.core_type<tc>, window_params = [{transform_indices = @transform_0, window_bounds = array<i64: 1, 1, 32, 32>}, {pipeline_mode = #tpu.pipeline_mode<synchronous>, transform_indices = @transform_1, window_bounds = array<i64: 32, 32>}, {pipeline_mode = #tpu.pipeline_mode<synchronous>, transform_indices = @transform_2, window_bounds = array<i64: 1, 32>}, {pipeline_mode = #tpu.pipeline_mode<synchronous>, transform_indices = @transform_3, window_bounds = array<i64: 32, 32>}, {pipeline_mode = #tpu.pipeline_mode<synchronous>, transform_indices = @transform_4, window_bounds = array<i64: 1, 32>}, {pipeline_mode = #tpu.pipeline_mode<synchronous>, transform_indices = @transform_5, window_bounds = array<i64: 32, 32>}, {transform_indices = @transform_6, window_bounds = array<i64: 1, 32, 32>}, {transform_indices = @transform_7, window_bounds = array<i64: 1, 1, 32>}]} {
    %c0 = arith.constant 0 : index
    %c0_0 = arith.constant 0 : index
    %c0_1 = arith.constant 0 : index
    %c0_2 = arith.constant 0 : index
    %0 = vector.load %arg1[%c0, %c0_0, %c0_1, %c0_2] : memref<1x1x32x32xf32, #tpu.memory_space<vmem>>, vector<1x1x32x32xf32>
    %1 = vector.shape_cast %0 : vector<1x1x32x32xf32> to vector<1x32x32xf32>
    %cst = arith.constant dense<0.000000e+00> : vector<32x32xf32>
    %2 = vector.multi_reduction <add>, %1, %cst [0] : vector<1x32x32xf32> to vector<32x32xf32>
    %c0_3 = arith.constant 0 : index
    %c0_4 = arith.constant 0 : index
    %3 = vector.load %arg6[%c0_3, %c0_4] : memref<32x32xf32, #tpu.memory_space<vmem>>, vector<32x32xf32>
    %cst_5 = arith.constant 3.906250e-03 : f32
    %4 = vector.broadcast %cst_5 : f32 to vector<32x32xf32>
    %5 = arith.mulf %3, %4 : vector<32x32xf32>
    %6 = arith.mulf %2, %5 : vector<32x32xf32>
    %7 = arith.truncf %6 : vector<32x32xf32> to vector<32x32xbf16>
    %c0_6 = arith.constant 0 : index
    %c0_7 = arith.constant 0 : index
    %8 = vector.load %arg2[%c0_6, %c0_7] : memref<32x32xbf16, #tpu.memory_space<vmem>>, vector<32x32xbf16>
    %cst_8 = arith.constant dense<0.000000e+00> : vector<32x32xf32>
    %9 = tpu.matmul %8, %7, %cst_8 {dimension_numbers = #tpu.dot_dimension_numbers<[1], [0], [0], [1], [0, 0, 1, 1], [], []>} : vector<32x32xbf16>, vector<32x32xbf16>, vector<32x32xf32> -> vector<32x32xf32>
    %10 = arith.truncf %9 : vector<32x32xf32> to vector<32x32xbf16>
    %c0_9 = arith.constant 0 : index
    %c0_10 = arith.constant 0 : index
    %11 = vector.load %arg4[%c0_9, %c0_10] : memref<32x32xbf16, #tpu.memory_space<vmem>>, vector<32x32xbf16>
    %cst_11 = arith.constant dense<0.000000e+00> : vector<32x32xf32>
    %12 = tpu.matmul %10, %11, %cst_11 {dimension_numbers = #tpu.dot_dimension_numbers<[1], [0], [0], [1], [0, 0, 1, 1], [], []>} : vector<32x32xbf16>, vector<32x32xbf16>, vector<32x32xf32> -> vector<32x32xf32>
    %c0_12 = arith.constant 0 : index
    %c0_13 = arith.constant 0 : index
    %13 = vector.load %arg3[%c0_12, %c0_13] : memref<1x32xf32, #tpu.memory_space<vmem>>, vector<1x32xf32>
    %14 = arith.truncf %13 : vector<1x32xf32> to vector<1x32xbf16>
    %cst_14 = arith.constant dense<0.000000e+00> : vector<1x32xf32>
    %15 = tpu.matmul %14, %7, %cst_14 {dimension_numbers = #tpu.dot_dimension_numbers<[1], [0], [0], [1], [0, 0, 1, 1], [], []>} : vector<1x32xbf16>, vector<32x32xbf16>, vector<1x32xf32> -> vector<1x32xf32>
    %16 = arith.truncf %15 : vector<1x32xf32> to vector<1x32xbf16>
    %c0_15 = arith.constant 0 : index
    %c0_16 = arith.constant 0 : index
    %17 = vector.load %arg4[%c0_15, %c0_16] : memref<32x32xbf16, #tpu.memory_space<vmem>>, vector<32x32xbf16>
    %cst_17 = arith.constant dense<0.000000e+00> : vector<1x32xf32>
    %18 = tpu.matmul %16, %17, %cst_17 {dimension_numbers = #tpu.dot_dimension_numbers<[1], [0], [0], [1], [0, 0, 1, 1], [], []>} : vector<1x32xbf16>, vector<32x32xbf16>, vector<1x32xf32> -> vector<1x32xf32>
    %c0_18 = arith.constant 0 : index
    %c0_19 = arith.constant 0 : index
    %19 = vector.load %arg5[%c0_18, %c0_19] : memref<1x32xf32, #tpu.memory_space<vmem>>, vector<1x32xf32>
    %20 = arith.addf %18, %19 : vector<1x32xf32>
    %21 = arith.truncf %12 : vector<32x32xf32> to vector<32x32xbf16>
    %c0_20 = arith.constant 0 : index
    %c0_21 = arith.constant 0 : index
    %c0_22 = arith.constant 0 : index
    %22 = vector.load %arg7[%c0_20, %c0_21, %c0_22] : memref<1x32x32xbf16, #tpu.memory_space<vmem>>, vector<1x32x32xbf16>
    %23 = vector.shape_cast %22 : vector<1x32x32xbf16> to vector<32x32xbf16>
    %24 = vector.shape_cast %21 : vector<32x32xbf16> to vector<1x32x32xbf16>
    tpu.vector_store %arg7[%c0_20, %c0_21, %c0_22], %24 {strides = array<i32>} : memref<1x32x32xbf16, #tpu.memory_space<vmem>>, vector<1x32x32xbf16>,
    %c0_23 = arith.constant 0 : index
    %c0_24 = arith.constant 0 : index
    %c0_25 = arith.constant 0 : index
    %25 = vector.load %arg8[%c0_23, %c0_24, %c0_25] : memref<1x1x32xf32, #tpu.memory_space<vmem>>, vector<1x1x32xf32>
    %26 = vector.shape_cast %25 : vector<1x1x32xf32> to vector<1x32xf32>
    %27 = vector.shape_cast %20 : vector<1x32xf32> to vector<1x1x32xf32>
    tpu.vector_store %arg8[%c0_23, %c0_24, %c0_25], %27 {strides = array<i32>} : memref<1x1x32xf32, #tpu.memory_space<vmem>>, vector<1x1x32xf32>,
    return
  }
  func.func @transform_0(%arg0: i32) -> (i32, i32, i32, i32) {
    %c0_i32 = arith.constant 0 : i32
    %c0_i32_0 = arith.constant 0 : i32
    %c0_i32_1 = arith.constant 0 : i32
    %c0_i32_2 = arith.constant 0 : i32
    return %arg0, %c0_i32, %c0_i32_0, %c0_i32_1 : i32, i32, i32, i32
  }
  func.func @transform_1(%arg0: i32) -> (i32, i32) {
    %c0_i32 = arith.constant 0 : i32
    %c0_i32_0 = arith.constant 0 : i32
    %c0_i32_1 = arith.constant 0 : i32
    return %c0_i32, %c0_i32_0 : i32, i32
  }
  func.func @transform_2(%arg0: i32) -> (i32, i32) {
    %c0_i32 = arith.constant 0 : i32
    %c0_i32_0 = arith.constant 0 : i32
    %c0_i32_1 = arith.constant 0 : i32
    return %c0_i32, %c0_i32_0 : i32, i32
  }
  func.func @transform_3(%arg0: i32) -> (i32, i32) {
    %c0_i32 = arith.constant 0 : i32
    %c0_i32_0 = arith.constant 0 : i32
    %c0_i32_1 = arith.constant 0 : i32
    return %c0_i32, %c0_i32_0 : i32, i32
  }
  func.func @transform_4(%arg0: i32) -> (i32, i32) {
    %c0_i32 = arith.constant 0 : i32
    %c0_i32_0 = arith.constant 0 : i32
    %c0_i32_1 = arith.constant 0 : i32
    return %c0_i32, %c0_i32_0 : i32, i32
  }
  func.func @transform_5(%arg0: i32) -> (i32, i32) {
    %c0_i32 = arith.constant 0 : i32
    %c0_i32_0 = arith.constant 0 : i32
    %c0_i32_1 = arith.constant 0 : i32
    return %c0_i32, %c0_i32_0 : i32, i32
  }
  func.func @transform_6(%arg0: i32) -> (i32, i32, i32) {
    %c0_i32 = arith.constant 0 : i32
    %c0_i32_0 = arith.constant 0 : i32
    %c0_i32_1 = arith.constant 0 : i32
    return %arg0, %c0_i32, %c0_i32_0 : i32, i32, i32
  }
  func.func @transform_7(%arg0: i32) -> (i32, i32, i32) {
    %c0_i32 = arith.constant 0 : i32
    %c0_i32_0 = arith.constant 0 : i32
    %c0_i32_1 = arith.constant 0 : i32
    return %arg0, %c0_i32, %c0_i32_0 : i32, i32, i32
  }
}

module attributes {stable_mosaic.version = 11 : i64} {
  func.func @_attn_mlp_kernel(%arg0: i32, %arg1: i32, %arg2: memref<1x256x32xbf16, #tpu.memory_space<vmem>>, %arg3: memref<1x32x32xbf16, #tpu.memory_space<vmem>>, %arg4: memref<1x1x32xf32, #tpu.memory_space<vmem>>, %arg5: memref<32x32xbf16, #tpu.memory_space<vmem>>, %arg6: memref<1x32xf32, #tpu.memory_space<vmem>>, %arg7: memref<32x32xbf16, #tpu.memory_space<vmem>>, %arg8: memref<1x32xf32, #tpu.memory_space<vmem>>, %arg9: memref<1x256x32xbf16, #tpu.memory_space<vmem>>) attributes {dimension_semantics = [#tpu.dimension_semantics<parallel>, #tpu.dimension_semantics<parallel>], iteration_bounds = array<i64: 2, 1>, scalar_prefetch = 0 : i64, scratch_operands = 0 : i64, tpu.core_type = #tpu.core_type<tc>, window_params = [{transform_indices = @transform_0, window_bounds = array<i64: 1, 256, 32>}, {transform_indices = @transform_1, window_bounds = array<i64: 1, 32, 32>}, {transform_indices = @transform_2, window_bounds = array<i64: 1, 1, 32>}, {pipeline_mode = #tpu.pipeline_mode<synchronous>, transform_indices = @transform_3, window_bounds = array<i64: 32, 32>}, {pipeline_mode = #tpu.pipeline_mode<synchronous>, transform_indices = @transform_4, window_bounds = array<i64: 1, 32>}, {pipeline_mode = #tpu.pipeline_mode<synchronous>, transform_indices = @transform_5, window_bounds = array<i64: 32, 32>}, {pipeline_mode = #tpu.pipeline_mode<synchronous>, transform_indices = @transform_6, window_bounds = array<i64: 1, 32>}, {transform_indices = @transform_7, window_bounds = array<i64: 1, 256, 32>}]} {
    %c0 = arith.constant 0 : index
    %c0_0 = arith.constant 0 : index
    %c0_1 = arith.constant 0 : index
    %0 = vector.load %arg2[%c0, %c0_0, %c0_1] : memref<1x256x32xbf16, #tpu.memory_space<vmem>>, vector<1x256x32xbf16>
    %1 = vector.shape_cast %0 : vector<1x256x32xbf16> to vector<256x32xbf16>
    %2 = arith.extf %1 : vector<256x32xbf16> to vector<256x32xf32>
    %c0_2 = arith.constant 0 : index
    %c0_3 = arith.constant 0 : index
    %c0_4 = arith.constant 0 : index
    %3 = vector.load %arg3[%c0_2, %c0_3, %c0_4] : memref<1x32x32xbf16, #tpu.memory_space<vmem>>, vector<1x32x32xbf16>
    %4 = vector.shape_cast %3 : vector<1x32x32xbf16> to vector<32x32xbf16>
    %cst = arith.constant dense<0.000000e+00> : vector<256x32xf32>
    %5 = tpu.matmul %1, %4, %cst {dimension_numbers = #tpu.dot_dimension_numbers<[1], [0], [0], [1], [0, 0, 1, 1], [], []>} : vector<256x32xbf16>, vector<32x32xbf16>, vector<256x32xf32> -> vector<256x32xf32>
    %c0_5 = arith.constant 0 : index
    %c0_6 = arith.constant 0 : index
    %c0_7 = arith.constant 0 : index
    %6 = vector.load %arg4[%c0_5, %c0_6, %c0_7] : memref<1x1x32xf32, #tpu.memory_space<vmem>>, vector<1x1x32xf32>
    %7 = vector.shape_cast %6 : vector<1x1x32xf32> to vector<1x32xf32>
    %8 = vector.broadcast %7 : vector<1x32xf32> to vector<256x32xf32>
    %9 = arith.addf %5, %8 : vector<256x32xf32>
    %10 = arith.addf %9, %2 : vector<256x32xf32>
    %11 = arith.truncf %10 : vector<256x32xf32> to vector<256x32xbf16>
    %c0_8 = arith.constant 0 : index
    %c0_9 = arith.constant 0 : index
    %12 = vector.load %arg5[%c0_8, %c0_9] : memref<32x32xbf16, #tpu.memory_space<vmem>>, vector<32x32xbf16>
    %cst_10 = arith.constant dense<0.000000e+00> : vector<256x32xf32>
    %13 = tpu.matmul %11, %12, %cst_10 {dimension_numbers = #tpu.dot_dimension_numbers<[1], [0], [0], [1], [0, 0, 1, 1], [], []>} : vector<256x32xbf16>, vector<32x32xbf16>, vector<256x32xf32> -> vector<256x32xf32>
    %c0_11 = arith.constant 0 : index
    %c0_12 = arith.constant 0 : index
    %14 = vector.load %arg6[%c0_11, %c0_12] : memref<1x32xf32, #tpu.memory_space<vmem>>, vector<1x32xf32>
    %15 = vector.broadcast %14 : vector<1x32xf32> to vector<256x32xf32>
    %16 = arith.addf %13, %15 : vector<256x32xf32>
    %17 = arith.mulf %16, %16 : vector<256x32xf32>
    %18 = arith.mulf %16, %17 : vector<256x32xf32>
    %cst_13 = arith.constant 4.471500e-02 : f32
    %19 = vector.broadcast %cst_13 : f32 to vector<256x32xf32>
    %20 = arith.mulf %19, %18 : vector<256x32xf32>
    %21 = arith.addf %16, %20 : vector<256x32xf32>
    %cst_14 = arith.constant 0.797884583 : f32
    %22 = vector.broadcast %cst_14 : f32 to vector<256x32xf32>
    %23 = arith.mulf %22, %21 : vector<256x32xf32>
    %24 = math.tanh %23 : vector<256x32xf32>
    %cst_15 = arith.constant 1.000000e+00 : f32
    %25 = vector.broadcast %cst_15 : f32 to vector<256x32xf32>
    %26 = arith.addf %25, %24 : vector<256x32xf32>
    %cst_16 = arith.constant 5.000000e-01 : f32
    %27 = vector.broadcast %cst_16 : f32 to vector<256x32xf32>
    %28 = arith.mulf %27, %26 : vector<256x32xf32>
    %29 = arith.mulf %16, %28 : vector<256x32xf32>
    %30 = arith.truncf %29 : vector<256x32xf32> to vector<256x32xbf16>
    %c0_17 = arith.constant 0 : index
    %c0_18 = arith.constant 0 : index
    %31 = vector.load %arg7[%c0_17, %c0_18] : memref<32x32xbf16, #tpu.memory_space<vmem>>, vector<32x32xbf16>
    %cst_19 = arith.constant dense<0.000000e+00> : vector<256x32xf32>
    %32 = tpu.matmul %30, %31, %cst_19 {dimension_numbers = #tpu.dot_dimension_numbers<[1], [0], [0], [1], [0, 0, 1, 1], [], []>} : vector<256x32xbf16>, vector<32x32xbf16>, vector<256x32xf32> -> vector<256x32xf32>
    %c0_20 = arith.constant 0 : index
    %c0_21 = arith.constant 0 : index
    %33 = vector.load %arg8[%c0_20, %c0_21] : memref<1x32xf32, #tpu.memory_space<vmem>>, vector<1x32xf32>
    %34 = vector.broadcast %33 : vector<1x32xf32> to vector<256x32xf32>
    %35 = arith.addf %32, %34 : vector<256x32xf32>
    %36 = arith.addf %35, %10 : vector<256x32xf32>
    %37 = arith.truncf %36 : vector<256x32xf32> to vector<256x32xbf16>
    %c0_22 = arith.constant 0 : index
    %c0_23 = arith.constant 0 : index
    %c0_24 = arith.constant 0 : index
    %38 = vector.load %arg9[%c0_22, %c0_23, %c0_24] : memref<1x256x32xbf16, #tpu.memory_space<vmem>>, vector<1x256x32xbf16>
    %39 = vector.shape_cast %38 : vector<1x256x32xbf16> to vector<256x32xbf16>
    %40 = vector.shape_cast %37 : vector<256x32xbf16> to vector<1x256x32xbf16>
    tpu.vector_store %arg9[%c0_22, %c0_23, %c0_24], %40 {strides = array<i32>} : memref<1x256x32xbf16, #tpu.memory_space<vmem>>, vector<1x256x32xbf16>,
    return
  }
  func.func @transform_0(%arg0: i32, %arg1: i32) -> (i32, i32, i32) {
    %c0_i32 = arith.constant 0 : i32
    %c0_i32_0 = arith.constant 0 : i32
    return %arg0, %arg1, %c0_i32 : i32, i32, i32
  }
  func.func @transform_1(%arg0: i32, %arg1: i32) -> (i32, i32, i32) {
    %c0_i32 = arith.constant 0 : i32
    %c0_i32_0 = arith.constant 0 : i32
    %c0_i32_1 = arith.constant 0 : i32
    return %arg0, %c0_i32, %c0_i32_0 : i32, i32, i32
  }
  func.func @transform_2(%arg0: i32, %arg1: i32) -> (i32, i32, i32) {
    %c0_i32 = arith.constant 0 : i32
    %c0_i32_0 = arith.constant 0 : i32
    %c0_i32_1 = arith.constant 0 : i32
    return %arg0, %c0_i32, %c0_i32_0 : i32, i32, i32
  }
  func.func @transform_3(%arg0: i32, %arg1: i32) -> (i32, i32) {
    %c0_i32 = arith.constant 0 : i32
    %c0_i32_0 = arith.constant 0 : i32
    %c0_i32_1 = arith.constant 0 : i32
    return %c0_i32, %c0_i32_0 : i32, i32
  }
  func.func @transform_4(%arg0: i32, %arg1: i32) -> (i32, i32) {
    %c0_i32 = arith.constant 0 : i32
    %c0_i32_0 = arith.constant 0 : i32
    %c0_i32_1 = arith.constant 0 : i32
    return %c0_i32, %c0_i32_0 : i32, i32
  }
  func.func @transform_5(%arg0: i32, %arg1: i32) -> (i32, i32) {
    %c0_i32 = arith.constant 0 : i32
    %c0_i32_0 = arith.constant 0 : i32
    %c0_i32_1 = arith.constant 0 : i32
    return %c0_i32, %c0_i32_0 : i32, i32
  }
  func.func @transform_6(%arg0: i32, %arg1: i32) -> (i32, i32) {
    %c0_i32 = arith.constant 0 : i32
    %c0_i32_0 = arith.constant 0 : i32
    %c0_i32_1 = arith.constant 0 : i32
    return %c0_i32, %c0_i32_0 : i32, i32
  }
  func.func @transform_7(%arg0: i32, %arg1: i32) -> (i32, i32, i32) {
    %c0_i32 = arith.constant 0 : i32
    %c0_i32_0 = arith.constant 0 : i32
    return %arg0, %arg1, %c0_i32 : i32, i32, i32
  }
}

module attributes {stable_mosaic.version = 11 : i64} {
  func.func @_attn_mlp_project_kernel(%arg0: i32, %arg1: i32, %arg2: memref<1x256x32xbf16, #tpu.memory_space<vmem>>, %arg3: memref<1x32x32xbf16, #tpu.memory_space<vmem>>, %arg4: memref<1x1x32xf32, #tpu.memory_space<vmem>>, %arg5: memref<32x32xbf16, #tpu.memory_space<vmem>>, %arg6: memref<1x32xf32, #tpu.memory_space<vmem>>, %arg7: memref<32x32xbf16, #tpu.memory_space<vmem>>, %arg8: memref<1x32xf32, #tpu.memory_space<vmem>>, %arg9: memref<32x32xbf16, #tpu.memory_space<vmem>>, %arg10: memref<1x32xf32, #tpu.memory_space<vmem>>, %arg11: memref<32x128xbf16, #tpu.memory_space<vmem>>, %arg12: memref<1x128xf32, #tpu.memory_space<vmem>>, %arg13: memref<1x256x128xbf16, #tpu.memory_space<vmem>>) attributes {dimension_semantics = [#tpu.dimension_semantics<parallel>, #tpu.dimension_semantics<parallel>], iteration_bounds = array<i64: 2, 1>, scalar_prefetch = 0 : i64, scratch_operands = 0 : i64, tpu.core_type = #tpu.core_type<tc>, window_params = [{transform_indices = @transform_0, window_bounds = array<i64: 1, 256, 32>}, {transform_indices = @transform_1, window_bounds = array<i64: 1, 32, 32>}, {transform_indices = @transform_2, window_bounds = array<i64: 1, 1, 32>}, {pipeline_mode = #tpu.pipeline_mode<synchronous>, transform_indices = @transform_3, window_bounds = array<i64: 32, 32>}, {pipeline_mode = #tpu.pipeline_mode<synchronous>, transform_indices = @transform_4, window_bounds = array<i64: 1, 32>}, {pipeline_mode = #tpu.pipeline_mode<synchronous>, transform_indices = @transform_5, window_bounds = array<i64: 32, 32>}, {pipeline_mode = #tpu.pipeline_mode<synchronous>, transform_indices = @transform_6, window_bounds = array<i64: 1, 32>}, {pipeline_mode = #tpu.pipeline_mode<synchronous>, transform_indices = @transform_7, window_bounds = array<i64: 32, 32>}, {pipeline_mode = #tpu.pipeline_mode<synchronous>, transform_indices = @transform_8, window_bounds = array<i64: 1, 32>}, {pipeline_mode = #tpu.pipeline_mode<synchronous>, transform_indices = @transform_9, window_bounds = array<i64: 32, 128>}, {pipeline_mode = #tpu.pipeline_mode<synchronous>, transform_indices = @transform_10, window_bounds = array<i64: 1, 128>}, {transform_indices = @transform_11, window_bounds = array<i64: 1, 256, 128>}]} {
    %c0 = arith.constant 0 : index
    %c0_0 = arith.constant 0 : index
    %c0_1 = arith.constant 0 : index
    %0 = vector.load %arg2[%c0, %c0_0, %c0_1] : memref<1x256x32xbf16, #tpu.memory_space<vmem>>, vector<1x256x32xbf16>
    %1 = vector.shape_cast %0 : vector<1x256x32xbf16> to vector<256x32xbf16>
    %2 = arith.extf %1 : vector<256x32xbf16> to vector<256x32xf32>
    %c0_2 = arith.constant 0 : index
    %c0_3 = arith.constant 0 : index
    %c0_4 = arith.constant 0 : index
    %3 = vector.load %arg3[%c0_2, %c0_3, %c0_4] : memref<1x32x32xbf16, #tpu.memory_space<vmem>>, vector<1x32x32xbf16>
    %4 = vector.shape_cast %3 : vector<1x32x32xbf16> to vector<32x32xbf16>
    %cst = arith.constant dense<0.000000e+00> : vector<256x32xf32>
    %5 = tpu.matmul %1, %4, %cst {dimension_numbers = #tpu.dot_dimension_numbers<[1], [0], [0], [1], [0, 0, 1, 1], [], []>} : vector<256x32xbf16>, vector<32x32xbf16>, vector<256x32xf32> -> vector<256x32xf32>
    %c0_5 = arith.constant 0 : index
    %c0_6 = arith.constant 0 : index
    %c0_7 = arith.constant 0 : index
    %6 = vector.load %arg4[%c0_5, %c0_6, %c0_7] : memref<1x1x32xf32, #tpu.memory_space<vmem>>, vector<1x1x32xf32>
    %7 = vector.shape_cast %6 : vector<1x1x32xf32> to vector<1x32xf32>
    %8 = vector.broadcast %7 : vector<1x32xf32> to vector<256x32xf32>
    %9 = arith.addf %5, %8 : vector<256x32xf32>
    %10 = arith.addf %9, %2 : vector<256x32xf32>
    %11 = arith.truncf %10 : vector<256x32xf32> to vector<256x32xbf16>
    %c0_8 = arith.constant 0 : index
    %c0_9 = arith.constant 0 : index
    %12 = vector.load %arg5[%c0_8, %c0_9] : memref<32x32xbf16, #tpu.memory_space<vmem>>, vector<32x32xbf16>
    %cst_10 = arith.constant dense<0.000000e+00> : vector<256x32xf32>
    %13 = tpu.matmul %11, %12, %cst_10 {dimension_numbers = #tpu.dot_dimension_numbers<[1], [0], [0], [1], [0, 0, 1, 1], [], []>} : vector<256x32xbf16>, vector<32x32xbf16>, vector<256x32xf32> -> vector<256x32xf32>
    %c0_11 = arith.constant 0 : index
    %c0_12 = arith.constant 0 : index
    %14 = vector.load %arg6[%c0_11, %c0_12] : memref<1x32xf32, #tpu.memory_space<vmem>>, vector<1x32xf32>
    %15 = vector.broadcast %14 : vector<1x32xf32> to vector<256x32xf32>
    %16 = arith.addf %13, %15 : vector<256x32xf32>
    %17 = arith.mulf %16, %16 : vector<256x32xf32>
    %18 = arith.mulf %16, %17 : vector<256x32xf32>
    %cst_13 = arith.constant 4.471500e-02 : f32
    %19 = vector.broadcast %cst_13 : f32 to vector<256x32xf32>
    %20 = arith.mulf %19, %18 : vector<256x32xf32>
    %21 = arith.addf %16, %20 : vector<256x32xf32>
    %cst_14 = arith.constant 0.797884583 : f32
    %22 = vector.broadcast %cst_14 : f32 to vector<256x32xf32>
    %23 = arith.mulf %22, %21 : vector<256x32xf32>
    %24 = math.tanh %23 : vector<256x32xf32>
    %cst_15 = arith.constant 1.000000e+00 : f32
    %25 = vector.broadcast %cst_15 : f32 to vector<256x32xf32>
    %26 = arith.addf %25, %24 : vector<256x32xf32>
    %cst_16 = arith.constant 5.000000e-01 : f32
    %27 = vector.broadcast %cst_16 : f32 to vector<256x32xf32>
    %28 = arith.mulf %27, %26 : vector<256x32xf32>
    %29 = arith.mulf %16, %28 : vector<256x32xf32>
    %30 = arith.truncf %29 : vector<256x32xf32> to vector<256x32xbf16>
    %c0_17 = arith.constant 0 : index
    %c0_18 = arith.constant 0 : index
    %31 = vector.load %arg7[%c0_17, %c0_18] : memref<32x32xbf16, #tpu.memory_space<vmem>>, vector<32x32xbf16>
    %cst_19 = arith.constant dense<0.000000e+00> : vector<256x32xf32>
    %32 = tpu.matmul %30, %31, %cst_19 {dimension_numbers = #tpu.dot_dimension_numbers<[1], [0], [0], [1], [0, 0, 1, 1], [], []>} : vector<256x32xbf16>, vector<32x32xbf16>, vector<256x32xf32> -> vector<256x32xf32>
    %c0_20 = arith.constant 0 : index
    %c0_21 = arith.constant 0 : index
    %33 = vector.load %arg8[%c0_20, %c0_21] : memref<1x32xf32, #tpu.memory_space<vmem>>, vector<1x32xf32>
    %34 = vector.broadcast %33 : vector<1x32xf32> to vector<256x32xf32>
    %35 = arith.addf %32, %34 : vector<256x32xf32>
    %36 = arith.addf %35, %10 : vector<256x32xf32>
    %37 = arith.truncf %36 : vector<256x32xf32> to vector<256x32xbf16>
    %c0_22 = arith.constant 0 : index
    %c0_23 = arith.constant 0 : index
    %38 = vector.load %arg9[%c0_22, %c0_23] : memref<32x32xbf16, #tpu.memory_space<vmem>>, vector<32x32xbf16>
    %cst_24 = arith.constant dense<0.000000e+00> : vector<256x32xf32>
    %39 = tpu.matmul %37, %38, %cst_24 {dimension_numbers = #tpu.dot_dimension_numbers<[1], [0], [0], [1], [0, 0, 1, 1], [], []>} : vector<256x32xbf16>, vector<32x32xbf16>, vector<256x32xf32> -> vector<256x32xf32>
    %c0_25 = arith.constant 0 : index
    %c0_26 = arith.constant 0 : index
    %40 = vector.load %arg10[%c0_25, %c0_26] : memref<1x32xf32, #tpu.memory_space<vmem>>, vector<1x32xf32>
    %41 = vector.broadcast %40 : vector<1x32xf32> to vector<256x32xf32>
    %42 = arith.addf %39, %41 : vector<256x32xf32>
    %43 = arith.mulf %42, %42 : vector<256x32xf32>
    %44 = arith.mulf %42, %43 : vector<256x32xf32>
    %cst_27 = arith.constant 4.471500e-02 : f32
    %45 = vector.broadcast %cst_27 : f32 to vector<256x32xf32>
    %46 = arith.mulf %45, %44 : vector<256x32xf32>
    %47 = arith.addf %42, %46 : vector<256x32xf32>
    %cst_28 = arith.constant 0.797884583 : f32
    %48 = vector.broadcast %cst_28 : f32 to vector<256x32xf32>
    %49 = arith.mulf %48, %47 : vector<256x32xf32>
    %50 = math.tanh %49 : vector<256x32xf32>
    %cst_29 = arith.constant 1.000000e+00 : f32
    %51 = vector.broadcast %cst_29 : f32 to vector<256x32xf32>
    %52 = arith.addf %51, %50 : vector<256x32xf32>
    %cst_30 = arith.constant 5.000000e-01 : f32
    %53 = vector.broadcast %cst_30 : f32 to vector<256x32xf32>
    %54 = arith.mulf %53, %52 : vector<256x32xf32>
    %55 = arith.mulf %42, %54 : vector<256x32xf32>
    %56 = arith.truncf %55 : vector<256x32xf32> to vector<256x32xbf16>
    %c0_31 = arith.constant 0 : index
    %c0_32 = arith.constant 0 : index
    %57 = vector.load %arg11[%c0_31, %c0_32] : memref<32x128xbf16, #tpu.memory_space<vmem>>, vector<32x128xbf16>
    %cst_33 = arith.constant dense<0.000000e+00> : vector<256x128xf32>
    %58 = tpu.matmul %56, %57, %cst_33 {dimension_numbers = #tpu.dot_dimension_numbers<[1], [0], [0], [1], [0, 0, 1, 1], [], []>} : vector<256x32xbf16>, vector<32x128xbf16>, vector<256x128xf32> -> vector<256x128xf32>
    %c0_34 = arith.constant 0 : index
    %c0_35 = arith.constant 0 : index
    %59 = vector.load %arg12[%c0_34, %c0_35] : memref<1x128xf32, #tpu.memory_space<vmem>>, vector<1x128xf32>
    %60 = vector.broadcast %59 : vector<1x128xf32> to vector<256x128xf32>
    %61 = arith.addf %58, %60 : vector<256x128xf32>
    %62 = arith.truncf %61 : vector<256x128xf32> to vector<256x128xbf16>
    %c0_36 = arith.constant 0 : index
    %c0_37 = arith.constant 0 : index
    %c0_38 = arith.constant 0 : index
    %63 = vector.load %arg13[%c0_36, %c0_37, %c0_38] : memref<1x256x128xbf16, #tpu.memory_space<vmem>>, vector<1x256x128xbf16>
    %64 = vector.shape_cast %63 : vector<1x256x128xbf16> to vector<256x128xbf16>
    %65 = vector.shape_cast %62 : vector<256x128xbf16> to vector<1x256x128xbf16>
    tpu.vector_store %arg13[%c0_36, %c0_37, %c0_38], %65 {strides = array<i32>} : memref<1x256x128xbf16, #tpu.memory_space<vmem>>, vector<1x256x128xbf16>,
    return
  }
  func.func @transform_0(%arg0: i32, %arg1: i32) -> (i32, i32, i32) {
    %c0_i32 = arith.constant 0 : i32
    %c0_i32_0 = arith.constant 0 : i32
    return %arg0, %arg1, %c0_i32 : i32, i32, i32
  }
  func.func @transform_1(%arg0: i32, %arg1: i32) -> (i32, i32, i32) {
    %c0_i32 = arith.constant 0 : i32
    %c0_i32_0 = arith.constant 0 : i32
    %c0_i32_1 = arith.constant 0 : i32
    return %arg0, %c0_i32, %c0_i32_0 : i32, i32, i32
  }
  func.func @transform_2(%arg0: i32, %arg1: i32) -> (i32, i32, i32) {
    %c0_i32 = arith.constant 0 : i32
    %c0_i32_0 = arith.constant 0 : i32
    %c0_i32_1 = arith.constant 0 : i32
    return %arg0, %c0_i32, %c0_i32_0 : i32, i32, i32
  }
  func.func @transform_3(%arg0: i32, %arg1: i32) -> (i32, i32) {
    %c0_i32 = arith.constant 0 : i32
    %c0_i32_0 = arith.constant 0 : i32
    %c0_i32_1 = arith.constant 0 : i32
    return %c0_i32, %c0_i32_0 : i32, i32
  }
  func.func @transform_4(%arg0: i32, %arg1: i32) -> (i32, i32) {
    %c0_i32 = arith.constant 0 : i32
    %c0_i32_0 = arith.constant 0 : i32
    %c0_i32_1 = arith.constant 0 : i32
    return %c0_i32, %c0_i32_0 : i32, i32
  }
  func.func @transform_5(%arg0: i32, %arg1: i32) -> (i32, i32) {
    %c0_i32 = arith.constant 0 : i32
    %c0_i32_0 = arith.constant 0 : i32
    %c0_i32_1 = arith.constant 0 : i32
    return %c0_i32, %c0_i32_0 : i32, i32
  }
  func.func @transform_6(%arg0: i32, %arg1: i32) -> (i32, i32) {
    %c0_i32 = arith.constant 0 : i32
    %c0_i32_0 = arith.constant 0 : i32
    %c0_i32_1 = arith.constant 0 : i32
    return %c0_i32, %c0_i32_0 : i32, i32
  }
  func.func @transform_7(%arg0: i32, %arg1: i32) -> (i32, i32) {
    %c0_i32 = arith.constant 0 : i32
    %c0_i32_0 = arith.constant 0 : i32
    %c0_i32_1 = arith.constant 0 : i32
    return %c0_i32, %c0_i32_0 : i32, i32
  }
  func.func @transform_8(%arg0: i32, %arg1: i32) -> (i32, i32) {
    %c0_i32 = arith.constant 0 : i32
    %c0_i32_0 = arith.constant 0 : i32
    %c0_i32_1 = arith.constant 0 : i32
    return %c0_i32, %c0_i32_0 : i32, i32
  }
  func.func @transform_9(%arg0: i32, %arg1: i32) -> (i32, i32) {
    %c0_i32 = arith.constant 0 : i32
    %c0_i32_0 = arith.constant 0 : i32
    %c0_i32_1 = arith.constant 0 : i32
    return %c0_i32, %c0_i32_0 : i32, i32
  }
  func.func @transform_10(%arg0: i32, %arg1: i32) -> (i32, i32) {
    %c0_i32 = arith.constant 0 : i32
    %c0_i32_0 = arith.constant 0 : i32
    %c0_i32_1 = arith.constant 0 : i32
    return %c0_i32, %c0_i32_0 : i32, i32
  }
  func.func @transform_11(%arg0: i32, %arg1: i32) -> (i32, i32, i32) {
    %c0_i32 = arith.constant 0 : i32
    %c0_i32_0 = arith.constant 0 : i32
    return %arg0, %arg1, %c0_i32 : i32, i32, i32
  }
}

</mosaic_0001>

<llo_original>
// kernel: galerkin_transformer_2d.9
$region0: #{galerkin_transformer_2d.9}
  #allocation0 [shape = 'u32[]', space=smem, size = 0x4, offset = 0x4, fixed_abs, tag = 'smem constant byte address 0x4 - core index']
  #allocation1 [shape = 'u32[144,128]{1,0:T(1,128)}', space=vmem, size = 0x12000, scoped, tag = 'internal scratch']
  %s0 = inlined_call_operand.vmem [shape: f32[2,1,32,32], index: 0, kind: input, shape index: {}]
  %s1 = inlined_call_operand.vmem [shape: bf16[32,32], index: 1, kind: input, shape index: {}]
  %s2 = inlined_call_operand.vmem [shape: f32[1,32], index: 2, kind: input, shape index: {}]
  %s3 = inlined_call_operand.vmem [shape: bf16[32,32], index: 3, kind: input, shape index: {}]
  %s4 = inlined_call_operand.vmem [shape: f32[1,32], index: 4, kind: input, shape index: {}]
  %s5 = inlined_call_operand.vmem [shape: f32[32,32], index: 5, kind: input, shape index: {}]
  %s6 = inlined_call_operand.vmem [shape: bf16[2,32,32], index: 6, kind: output, shape index: {0}]
  %s7 = inlined_call_operand.vmem [shape: f32[2,1,32], index: 7, kind: output, shape index: {1}]
  %8 = xla_tuple %s6, %s7
  %s9 = sld [smem:[#allocation0]]
  $region65: #{galerkin_transformer_2d.9} parent=0
    _
  %s11 = ssub.s32 1, %s9
  %s12 = scalar_select 0, %s11, %s9
  loop: start=0, step=1, limit=4
  $region2: #{galerkin_transformer_2d.9} parent=0 // loop_pre_header
    _
  $region3: #{galerkin_transformer_2d.9} parent=0 // loop_header
    %s14 = sphi 0, %s18
    %p15 = scmp.ge.s32.totalorder %s14, 4
    %s24 = sphi 0, %s26
    %s27 = sphi 0, %s24
    %s28 = sphi 0, %s27
    %s44 = sphi 0, %s28
    %s48 = sphi 0, %s48
    %s50 = sphi 0, %s48
    %s51 = sphi 0, %s50
    %s65 = sphi 0, %s51
    %s69 = sphi 0, %s69
    %s71 = sphi 0, %s69
    %s72 = sphi 0, %s71
    %s86 = sphi 0, %s72
    %s90 = sphi 0, %s90
    %s92 = sphi 0, %s90
    %s93 = sphi 0, %s92
    %s107 = sphi 0, %s93
    %s111 = sphi 0, %s111
    %s113 = sphi 0, %s111
    %s114 = sphi 0, %s113
    %s128 = sphi 0, %s114
    %s132 = sphi 0, %s132
    %s134 = sphi 0, %s132
    %s135 = sphi 0, %s134
    %s149 = sphi 0, %s135
    %s155 = sphi 0, %s157
    %s158 = sphi 0, %s155
    %s159 = sphi 0, %s158
    %s175 = sphi 0, %s159
    %s181 = sphi 0, %s183
    %s184 = sphi 0, %s181
    %s185 = sphi 0, %s184
    %s201 = sphi 0, %s185
  $region4: #{galerkin_transformer_2d.9} parent=0 // loop_header_branch
    %17 = sbr.rel (%p15) target = $region8
  $region5: #{galerkin_transformer_2d.9} parent=0 // loop_body
    %s19 = ssub.s32 %s14, 1
    %s20 = ssub.s32 %s14, 2
    %s21 = sadd.s32 %s14, 1
    %s22 = ssub.s32 %s14, %s21
    %p23 = scmp.eq.s32.totalorder %s22, 0
    %s25 = sadd.s32 %s24, 1
    %s26 = scalar_select %p23, %s24, %s25
    %p29 = pneg %p23
    %p30 = scmp.eq.s32.totalorder %s14, 1
    %p31 = por %p29, %p30
    %p32 = scmp.ne.s32.totalorder %s24, %s27
    %p33 = scmp.eq.s32.totalorder %s14, 0
    %p34 = por %p32, %p33
    %p35 = scmp.ne.s32.totalorder %s24, %s27
    %p36 = scmp.eq.s32.totalorder %s19, 1
    %p37 = por %p35, %p36
    %p38 = scmp.ne.s32.totalorder %s27, %s28
    %p39 = scmp.eq.s32.totalorder %s19, 0
    %p40 = por %p38, %p39
    %p41 = scmp.ne.s32.totalorder %s27, %s28
    %p42 = scmp.eq.s32.totalorder %s20, 1
    %p43 = por %p41, %p42
    %p45 = scmp.ne.s32.totalorder %s28, %s44
    %p46 = scmp.eq.s32.totalorder %s20, 0
    %p47 = por %p45, %p46
    %s49 = sadd.s32 %s48, 1
    %p52 = scmp.eq.s32.totalorder %s14, 1
    %p53 = scmp.ne.s32.totalorder %s48, %s50
    %p54 = scmp.eq.s32.totalorder %s14, 0
    %p55 = por %p53, %p54
    %p56 = scmp.ne.s32.totalorder %s48, %s50
    %p57 = scmp.eq.s32.totalorder %s19, 1
    %p58 = por %p56, %p57
    %p59 = scmp.ne.s32.totalorder %s50, %s51
    %p60 = scmp.eq.s32.totalorder %s19, 0
    %p61 = por %p59, %p60
    %p62 = scmp.ne.s32.totalorder %s50, %s51
    %p63 = scmp.eq.s32.totalorder %s20, 1
    %p64 = por %p62, %p63
    %p66 = scmp.ne.s32.totalorder %s51, %s65
    %p67 = scmp.eq.s32.totalorder %s20, 0
    %p68 = por %p66, %p67
    %s70 = sadd.s32 %s69, 1
    %p73 = scmp.eq.s32.totalorder %s14, 1
    %p74 = scmp.ne.s32.totalorder %s69, %s71
    %p75 = scmp.eq.s32.totalorder %s14, 0
    %p76 = por %p74, %p75
    %p77 = scmp.ne.s32.totalorder %s69, %s71
    %p78 = scmp.eq.s32.totalorder %s19, 1
    %p79 = por %p77, %p78
    %p80 = scmp.ne.s32.totalorder %s71, %s72
    %p81 = scmp.eq.s32.totalorder %s19, 0
    %p82 = por %p80, %p81
    %p83 = scmp.ne.s32.totalorder %s71, %s72
    %p84 = scmp.eq.s32.totalorder %s20, 1
    %p85 = por %p83, %p84
    %p87 = scmp.ne.s32.totalorder %s72, %s86
    %p88 = scmp.eq.s32.totalorder %s20, 0
    %p89 = por %p87, %p88
    %s91 = sadd.s32 %s90, 1
    %p94 = scmp.eq.s32.totalorder %s14, 1
    %p95 = scmp.ne.s32.totalorder %s90, %s92
    %p96 = scmp.eq.s32.totalorder %s14, 0
    %p97 = por %p95, %p96
    %p98 = scmp.ne.s32.totalorder %s90, %s92
    %p99 = scmp.eq.s32.totalorder %s19, 1
    %p100 = por %p98, %p99
    %p101 = scmp.ne.s32.totalorder %s92, %s93
    %p102 = scmp.eq.s32.totalorder %s19, 0
    %p103 = por %p101, %p102
    %p104 = scmp.ne.s32.totalorder %s92, %s93
    %p105 = scmp.eq.s32.totalorder %s20, 1
    %p106 = por %p104, %p105
    %p108 = scmp.ne.s32.totalorder %s93, %s107
    %p109 = scmp.eq.s32.totalorder %s20, 0
    %p110 = por %p108, %p109
    %s112 = sadd.s32 %s111, 1
    %p115 = scmp.eq.s32.totalorder %s14, 1
    %p116 = scmp.ne.s32.totalorder %s111, %s113
    %p117 = scmp.eq.s32.totalorder %s14, 0
    %p118 = por %p116, %p117
    %p119 = scmp.ne.s32.totalorder %s111, %s113
    %p120 = scmp.eq.s32.totalorder %s19, 1
    %p121 = por %p119, %p120
    %p122 = scmp.ne.s32.totalorder %s113, %s114
    %p123 = scmp.eq.s32.totalorder %s19, 0
    %p124 = por %p122, %p123
    %p125 = scmp.ne.s32.totalorder %s113, %s114
    %p126 = scmp.eq.s32.totalorder %s20, 1
    %p127 = por %p125, %p126
    %p129 = scmp.ne.s32.totalorder %s114, %s128
    %p130 = scmp.eq.s32.totalorder %s20, 0
    %p131 = por %p129, %p130
    %s133 = sadd.s32 %s132, 1
    %p136 = scmp.eq.s32.totalorder %s14, 1
    %p137 = scmp.ne.s32.totalorder %s132, %s134
    %p138 = scmp.eq.s32.totalorder %s14, 0
    %p139 = por %p137, %p138
    %p140 = scmp.ne.s32.totalorder %s132, %s134
    %p141 = scmp.eq.s32.totalorder %s19, 1
    %p142 = por %p140, %p141
    %p143 = scmp.ne.s32.totalorder %s134, %s135
    %p144 = scmp.eq.s32.totalorder %s19, 0
    %p145 = por %p143, %p144
    %p146 = scmp.ne.s32.totalorder %s134, %s135
    %p147 = scmp.eq.s32.totalorder %s20, 1
    %p148 = por %p146, %p147
    %p150 = scmp.ne.s32.totalorder %s135, %s149
    %p151 = scmp.eq.s32.totalorder %s20, 0
    %p152 = por %p150, %p151
    %s153 = ssub.s32 %s14, %s21
    %p154 = scmp.eq.s32.totalorder %s153, 0
    %s156 = sadd.s32 %s155, 1
    %s157 = scalar_select %p154, %s155, %s156
    %p160 = pneg %p154
    %p161 = scmp.eq.s32.totalorder %s14, 1
    %p162 = por %p160, %p161
    %p163 = scmp.ne.s32.totalorder %s155, %s158
    %p164 = scmp.eq.s32.totalorder %s14, 0
    %p165 = por %p163, %p164
    %p166 = scmp.ne.s32.totalorder %s155, %s158
    %p167 = scmp.eq.s32.totalorder %s19, 1
    %p168 = por %p166, %p167
    %p169 = scmp.ne.s32.totalorder %s158, %s159
    %p170 = scmp.eq.s32.totalorder %s19, 0
    %p171 = por %p169, %p170
    %p172 = scmp.ne.s32.totalorder %s158, %s159
    %p173 = scmp.eq.s32.totalorder %s20, 1
    %p174 = por %p172, %p173
    %p176 = scmp.ne.s32.totalorder %s159, %s175
    %p177 = scmp.eq.s32.totalorder %s20, 0
    %p178 = por %p176, %p177
    %s179 = ssub.s32 %s14, %s21
    %p180 = scmp.eq.s32.totalorder %s179, 0
    %s182 = sadd.s32 %s181, 1
    %s183 = scalar_select %p180, %s181, %s182
    %p186 = pneg %p180
    %p187 = scmp.eq.s32.totalorder %s14, 1
    %p188 = por %p186, %p187
    %p189 = scmp.ne.s32.totalorder %s181, %s184
    %p190 = scmp.eq.s32.totalorder %s14, 0
    %p191 = por %p189, %p190
    %p192 = scmp.ne.s32.totalorder %s181, %s184
    %p193 = scmp.eq.s32.totalorder %s19, 1
    %p194 = por %p192, %p193
    %p195 = scmp.ne.s32.totalorder %s184, %s185
    %p196 = scmp.eq.s32.totalorder %s19, 0
    %p197 = por %p195, %p196
    %p198 = scmp.ne.s32.totalorder %s184, %s185
    %p199 = scmp.eq.s32.totalorder %s20, 1
    %p200 = por %p198, %p199
    %p202 = scmp.ne.s32.totalorder %s185, %s201
    %p203 = scmp.eq.s32.totalorder %s20, 0
    %p204 = por %p202, %p203
    %p205 = scmp.le.s32.totalorder 1, %s14
    %p206 = scmp.lt.s32.totalorder %s14, 3
    %p207 = pnand %p205, %p206
    %p208 = pneg %p207
    // Predicated region
    $region9: #{galerkin_transformer_2d.9} parent=5 // pred_check
      _
    $region10: #{galerkin_transformer_2d.9} parent=5 // pred_check_branch
      %210 = sbr.rel (%p207) target = $region12
    $region11: #{galerkin_transformer_2d.9} parent=5 // pred_region
      %s211 = ssub.s32 %s14, 1
      // Predicated region
      $region13: #{galerkin_transformer_2d.9} parent=11 // pred_check
        %p212 = pneg %p61
      $region14: #{galerkin_transformer_2d.9} parent=11 // pred_check_branch
        %214 = sbr.rel (%p212) target = $region16
      $region15: #{galerkin_transformer_2d.9} parent=11 // pred_region
        _
      $region16: #{galerkin_transformer_2d.9} parent=11 // pred_fallthru
        _
      // Predicated region
      $region17: #{galerkin_transformer_2d.9} parent=11 // pred_check
        %p215 = pneg %p82
      $region18: #{galerkin_transformer_2d.9} parent=11 // pred_check_branch
        %217 = sbr.rel (%p215) target = $region20
      $region19: #{galerkin_transformer_2d.9} parent=11 // pred_region
        _
      $region20: #{galerkin_transformer_2d.9} parent=11 // pred_fallthru
        _
      // Predicated region
      $region21: #{galerkin_transformer_2d.9} parent=11 // pred_check
        %p218 = pneg %p103
      $region22: #{galerkin_transformer_2d.9} parent=11 // pred_check_branch
        %220 = sbr.rel (%p218) target = $region24
      $region23: #{galerkin_transformer_2d.9} parent=11 // pred_region
        _
      $region24: #{galerkin_transformer_2d.9} parent=11 // pred_fallthru
        _
      // Predicated region
      $region25: #{galerkin_transformer_2d.9} parent=11 // pred_check
        %p221 = pneg %p124
      $region26: #{galerkin_transformer_2d.9} parent=11 // pred_check_branch
        %223 = sbr.rel (%p221) target = $region28
      $region27: #{galerkin_transformer_2d.9} parent=11 // pred_region
        _
      $region28: #{galerkin_transformer_2d.9} parent=11 // pred_fallthru
        _
      // Predicated region
      $region29: #{galerkin_transformer_2d.9} parent=11 // pred_check
        %p224 = pneg %p145
      $region30: #{galerkin_transformer_2d.9} parent=11 // pred_check_branch
        %226 = sbr.rel (%p224) target = $region32
      $region31: #{galerkin_transformer_2d.9} parent=11 // pred_region
        _
      $region32: #{galerkin_transformer_2d.9} parent=11 // pred_fallthru
        _
    $region12: #{galerkin_transformer_2d.9} parent=5 // pred_fallthru
      _
    %p227 = scmp.lt.s32.totalorder %s14, 2
    // Predicated region
    $region33: #{galerkin_transformer_2d.9} parent=5 // pred_check
      %p228 = pneg %p227
    $region34: #{galerkin_transformer_2d.9} parent=5 // pred_check_branch
      %230 = sbr.rel (%p228) target = $region36
    $region35: #{galerkin_transformer_2d.9} parent=5 // pred_region
      // Predicated region
      $region37: #{galerkin_transformer_2d.9} parent=35 // pred_check
        %p231 = pneg %p34
      $region38: #{galerkin_transformer_2d.9} parent=35 // pred_check_branch
        %233 = sbr.rel (%p231) target = $region40
      $region39: #{galerkin_transformer_2d.9} parent=35 // pred_region
        %p234 = scmp.lt.s32.totalorder %s14, 1
        %s235 = scalar_select %p234, %s14, 1
        %s236 = smul.addr %s235, 4
        %s237 = smul.addr %s236, 8
        %s238 = scalar_lea.vmem %s0, %s237
      $region40: #{galerkin_transformer_2d.9} parent=35 // pred_fallthru
        _
    $region36: #{galerkin_transformer_2d.9} parent=5 // pred_fallthru
      _
    %p239 = scmp.le.s32.totalorder 1, %s14
    %p240 = scmp.lt.s32.totalorder %s14, 3
    %p241 = pnand %p239, %p240
    %p242 = pneg %p241
    // Predicated region
    $region41: #{galerkin_transformer_2d.9} parent=5 // pred_check
      _
    $region42: #{galerkin_transformer_2d.9} parent=5 // pred_check_branch
      %244 = sbr.rel (%p241) target = $region44
    $region43: #{galerkin_transformer_2d.9} parent=5 // pred_region
      %s245 = ssub.s32 %s14, 1
      %p246 = scmp.lt.s32.totalorder %s19, 1
      %s247 = scalar_select %p246, %s19, 1
      %s248 = smul.addr %s247, 4
      %s249 = smul.addr %s248, 8
      %s250 = scalar_lea.vmem %s0, %s249
      %p251 = pneg %p40
      %p252 = pneg %p37
      %p253 = pneg %p61
      %p254 = pneg %p58
      %p255 = pneg %p82
      %p256 = pneg %p79
      %p257 = pneg %p103
      %p258 = pneg %p100
      %p259 = pneg %p124
      %p260 = pneg %p121
      %p261 = pneg %p145
      %p262 = pneg %p142
      %p263 = pneg %p171
      %p264 = pneg %p168
      %p265 = scmp.lt.s32.totalorder %s19, 1
      %s266 = scalar_select %p265, %s19, 1
      %s267 = smul.addr %s266, 4
      %s268 = smul.addr %s267, 4
      %s269 = scalar_lea.vmem %s6, %s268
      %p270 = pneg %p197
      %p271 = pneg %p194
      %p272 = scmp.lt.s32.totalorder %s19, 1
      %s273 = scalar_select %p272, %s19, 1
      %s274 = scalar_lea.vmem %s7, %s273
      %p275 = scmp.lt.s32.totalorder %s19, 1
      %s276 = scalar_select %p275, %s19, 1
      %s277 = smul.addr %s276, 4
      %s278 = smul.addr %s277, 8
      %s279 = scalar_lea.vmem %s0, %s278
      %p280 = scmp.lt.s32.totalorder %s19, 1
      %s281 = scalar_select %p280, %s19, 1
      %s282 = smul.addr %s281, 4
      %s283 = smul.addr %s282, 4
      %s284 = scalar_lea.vmem %s6, %s283
      %p285 = scmp.lt.s32.totalorder %s19, 1
      %s286 = scalar_select %p285, %s19, 1
      %s287 = scalar_lea.vmem %s7, %s286
      %v289 = vld [vmem:[%s279] sm:$0xff]
      %v290 = vld [vmem:[%s279 + $0x8] sm:$0xff]
      %v291 = vld [vmem:[%s279 + $0x10] sm:$0xff]
      %v292 = vld [vmem:[%s279 + $0x18] sm:$0xff]
      %v293 = vadd.f32 %v289, 0.0
      %v294 = vadd.f32 %v290, 0.0
      %v295 = vadd.f32 %v291, 0.0
      %v296 = vadd.f32 %v292, 0.0
      %v297 = vld [vmem:[%s5] sm:$0xff]
      %v298 = vld [vmem:[%s5 + $0x8] sm:$0xff]
      %v299 = vld [vmem:[%s5 + $0x10] sm:$0xff]
      %v300 = vld [vmem:[%s5 + $0x18] sm:$0xff]
      %v301 = vmul.f32 %v297, 0.00390625
      %v302 = vmul.f32 %v298, 0.00390625
      %v303 = vmul.f32 %v299, 0.00390625
      %v304 = vmul.f32 %v300, 0.00390625
      %v305 = vmul.f32 %v293, %v301
      %v306 = vmul.f32 %v294, %v302
      %v307 = vmul.f32 %v295, %v303
      %v308 = vmul.f32 %v296, %v304
      %v309 = vpack.c.bf16 %v306, %v305
      %v310 = vpack.c.bf16 %v308, %v307
      %v311 = vld [vmem:[%s1] sm:$0xf]
      %v312 = vld [vmem:[%s1 + $0x4] sm:$0xf]
      %v313 = vld [vmem:[%s1 + $0x8] sm:$0xf]
      %v314 = vld [vmem:[%s1 + $0xc] sm:$0xf]
      %v319 = vunpack.c.l.b16 %v311
      %v320 = vunpack.c.l.b16 %v312
      %v321 = vunpack.c.l.b16 %v313
      %v322 = vunpack.c.l.b16 %v314
      %v323 = vpack.c.b16 %v320, %v319
      %v324 = vpack.c.b16 %v322, %v321
      %vm325 = vcmask 261120
      %v327 = vsel %vm325, %v323, 0
      %v330 = vsel %vm325, %v324, 0
      %332 = vmatprep.subr.bf16.mxu0 0
      %333 = vmatpush1.bf16.msra.mxu0 0
      %334 = vmatprep.subr.bf16.mxu0 0
      %335 = vmatpush1.bf16.msra.mxu0 0
      %336 = vmatprep.subr.bf16.mxu0 0
      %337 = vmatpush1.bf16.msra.mxu0 0
      %338 = vmatprep.subr.bf16.mxu0 0
      %339 = vmatpush1.bf16.msra.mxu0 0
      %340 = vmatprep.subr.bf16.mxu0 0
      %341 = vmatpush1.bf16.msra.mxu0 0
      %342 = vmatprep.subr.bf16.mxu0 0
      %343 = vmatpush1.bf16.msra.mxu0 0
      %344 = vmatprep.subr.bf16.mxu0 0
      %345 = vmatpush1.bf16.msra.mxu0 %v310
      %346 = vmatprep.subr.bf16.mxu0 0
      %347 = vmatpush1.bf16.msra.mxu0 %v309
      %348 = vmatprep.subr.bf16.mxu0 0
      %349 = vmatpush2.bf16.msra.mxu0 0
      %350 = vmatprep.subr.bf16.mxu0 0
      %351 = vmatpush2.bf16.msra.mxu0 0
      %352 = vmatprep.subr.bf16.mxu0 0
      %353 = vmatpush2.bf16.msra.mxu0 0
      %354 = vmatprep.subr.bf16.mxu0 0
      %355 = vmatpush2.bf16.msra.mxu0 0
      %356 = vmatprep.subr.bf16.mxu0 0
      %357 = vmatpush2.bf16.msra.mxu0 0
      %358 = vmatprep.subr.bf16.mxu0 0
      %359 = vmatpush2.bf16.msra.mxu0 0
      %360 = vmatprep.subr.bf16.mxu0 0
      %361 = vmatpush2.bf16.msra.mxu0 0
      %362 = vmatprep.subr.bf16.mxu0 0
      %363 = vmatpush2.bf16.msra.mxu0 0
      %364 = vmatprep.mubr.bf16.mxu0 0
      %365 = vmatmul.mubr.bf16.gmra.mxu0 %v327
      %v366 = vpop.f32.mrf.mxu0
      %v367 = vadd.f32 0.0, %v366
      %v368 = vpop.f32.mrf.mxu0
      %v369 = vpop.f32.mrf.mxu0
      %v370 = vadd.f32 0.0, %v369
      %v371 = vpop.f32.mrf.mxu0
      %372 = vmatprep.mubr.bf16.mxu0 0
      %373 = vmatmul.mubr.bf16.gmra.mxu0 %v330
      %v374 = vpop.f32.mrf.mxu0
      %v375 = vadd.f32 0.0, %v374
      %v376 = vpop.f32.mrf.mxu0
      %v377 = vpop.f32.mrf.mxu0
      %v378 = vadd.f32 0.0, %v377
      %v379 = vpop.f32.mrf.mxu0
      %380 = vdwg.mxu0
      %v381 = vpack.c.bf16 %v370, %v367
      %v382 = vpack.c.bf16 %v378, %v375
      %v383 = vld [vmem:[%s3] sm:$0xf]
      %v384 = vld [vmem:[%s3 + $0x4] sm:$0xf]
      %v385 = vld [vmem:[%s3 + $0x8] sm:$0xf]
      %v386 = vld [vmem:[%s3 + $0xc] sm:$0xf]
      %v391 = vunpack.c.l.b16 %v383
      %v392 = vunpack.c.l.b16 %v384
      %v393 = vunpack.c.l.b16 %v385
      %v394 = vunpack.c.l.b16 %v386
      %v395 = vpack.c.b16 %v392, %v391
      %v396 = vpack.c.b16 %v394, %v393
      %v400 = vsel %vm325, %v381, 0
      %v403 = vsel %vm325, %v382, 0
      %405 = vmatprep.subr.bf16.mxu0 0
      %406 = vmatpush1.bf16.msra.mxu0 0
      %407 = vmatprep.subr.bf16.mxu0 0
      %408 = vmatpush1.bf16.msra.mxu0 0
      %409 = vmatprep.subr.bf16.mxu0 0
      %410 = vmatpush1.bf16.msra.mxu0 0
      %411 = vmatprep.subr.bf16.mxu0 0
      %412 = vmatpush1.bf16.msra.mxu0 0
      %413 = vmatprep.subr.bf16.mxu0 0
      %414 = vmatpush1.bf16.msra.mxu0 0
      %415 = vmatprep.subr.bf16.mxu0 0
      %416 = vmatpush1.bf16.msra.mxu0 0
      %417 = vmatprep.subr.bf16.mxu0 0
      %418 = vmatpush1.bf16.msra.mxu0 %v396
      %419 = vmatprep.subr.bf16.mxu0 0
      %420 = vmatpush1.bf16.msra.mxu0 %v395
      %421 = vmatprep.subr.bf16.mxu0 0
      %422 = vmatpush2.bf16.msra.mxu0 0
      %423 = vmatprep.subr.bf16.mxu0 0
      %424 = vmatpush2.bf16.msra.mxu0 0
      %425 = vmatprep.subr.bf16.mxu0 0
      %426 = vmatpush2.bf16.msra.mxu0 0
      %427 = vmatprep.subr.bf16.mxu0 0
      %428 = vmatpush2.bf16.msra.mxu0 0
      %429 = vmatprep.subr.bf16.mxu0 0
      %430 = vmatpush2.bf16.msra.mxu0 0
      %431 = vmatprep.subr.bf16.mxu0 0
      %432 = vmatpush2.bf16.msra.mxu0 0
      %433 = vmatprep.subr.bf16.mxu0 0
      %434 = vmatpush2.bf16.msra.mxu0 0
      %435 = vmatprep.subr.bf16.mxu0 0
      %436 = vmatpush2.bf16.msra.mxu0 0
      %437 = vmatprep.mubr.bf16.mxu0 0
      %438 = vmatmul.mubr.bf16.gmra.mxu0 %v400
      %v439 = vpop.f32.mrf.mxu0
      %v440 = vadd.f32 0.0, %v439
      %v441 = vpop.f32.mrf.mxu0
      %v442 = vpop.f32.mrf.mxu0
      %v443 = vadd.f32 0.0, %v442
      %v444 = vpop.f32.mrf.mxu0
      %445 = vmatprep.mubr.bf16.mxu0 0
      %446 = vmatmul.mubr.bf16.gmra.mxu0 %v403
      %v447 = vpop.f32.mrf.mxu0
      %v448 = vadd.f32 0.0, %v447
      %v449 = vpop.f32.mrf.mxu0
      %v450 = vpop.f32.mrf.mxu0
      %v451 = vadd.f32 0.0, %v450
      %v452 = vpop.f32.mrf.mxu0
      %453 = vdwg.mxu0
      %v454 = vld [vmem:[%s2] sm:$0x1]
      %v455 = vpack.c.bf16 %v454, %v454
      %v457 = vsel %vm325, %v455, 0
      %459 = vmatprep.subr.bf16.mxu0 0
      %460 = vmatpush1.bf16.msra.mxu0 0
      %461 = vmatprep.subr.bf16.mxu0 0
      %462 = vmatpush1.bf16.msra.mxu0 0
      %463 = vmatprep.subr.bf16.mxu0 0
      %464 = vmatpush1.bf16.msra.mxu0 0
      %465 = vmatprep.subr.bf16.mxu0 0
      %466 = vmatpush1.bf16.msra.mxu0 0
      %467 = vmatprep.subr.bf16.mxu0 0
      %468 = vmatpush1.bf16.msra.mxu0 0
      %469 = vmatprep.subr.bf16.mxu0 0
      %470 = vmatpush1.bf16.msra.mxu0 0
      %471 = vmatprep.subr.bf16.mxu0 0
      %472 = vmatpush1.bf16.msra.mxu0 %v310
      %473 = vmatprep.subr.bf16.mxu0 0
      %474 = vmatpush1.bf16.msra.mxu0 %v309
      %475 = vmatprep.subr.bf16.mxu0 0
      %476 = vmatpush2.bf16.msra.mxu0 0
      %477 = vmatprep.subr.bf16.mxu0 0
      %478 = vmatpush2.bf16.msra.mxu0 0
      %479 = vmatprep.subr.bf16.mxu0 0
      %480 = vmatpush2.bf16.msra.mxu0 0
      %481 = vmatprep.subr.bf16.mxu0 0
      %482 = vmatpush2.bf16.msra.mxu0 0
      %483 = vmatprep.subr.bf16.mxu0 0
      %484 = vmatpush2.bf16.msra.mxu0 0
      %485 = vmatprep.subr.bf16.mxu0 0
      %486 = vmatpush2.bf16.msra.mxu0 0
      %487 = vmatprep.subr.bf16.mxu0 0
      %488 = vmatpush2.bf16.msra.mxu0 0
      %489 = vmatprep.subr.bf16.mxu0 0
      %490 = vmatpush2.bf16.msra.mxu0 0
      %491 = vmatprep.mubr.bf16.mxu0 0
      %492 = vmatmul.mubr.bf16.gmra.mxu0 %v457
      %v493 = vpop.f32.mrf.mxu0
      %v494 = vadd.f32 0.0, %v493
      %v495 = vpop.f32.mrf.mxu0
      %v496 = vpop.f32.mrf.mxu0
      %v497 = vpop.f32.mrf.mxu0
      %498 = vdwg.mxu0
      %v499 = vpack.c.bf16 %v494, %v494
      %v500 = vld [vmem:[%s4] sm:$0x1]
      %v502 = vsel %vm325, %v499, 0
      %504 = vmatprep.subr.bf16.mxu0 0
      %505 = vmatpush1.bf16.msra.mxu0 0
      %506 = vmatprep.subr.bf16.mxu0 0
      %507 = vmatpush1.bf16.msra.mxu0 0
      %508 = vmatprep.subr.bf16.mxu0 0
      %509 = vmatpush1.bf16.msra.mxu0 0
      %510 = vmatprep.subr.bf16.mxu0 0
      %511 = vmatpush1.bf16.msra.mxu0 0
      %512 = vmatprep.subr.bf16.mxu0 0
      %513 = vmatpush1.bf16.msra.mxu0 0
      %514 = vmatprep.subr.bf16.mxu0 0
      %515 = vmatpush1.bf16.msra.mxu0 0
      %516 = vmatprep.subr.bf16.mxu0 0
      %517 = vmatpush1.bf16.msra.mxu0 %v396
      %518 = vmatprep.subr.bf16.mxu0 0
      %519 = vmatpush1.bf16.msra.mxu0 %v395
      %520 = vmatprep.subr.bf16.mxu0 0
      %521 = vmatpush2.bf16.msra.mxu0 0
      %522 = vmatprep.subr.bf16.mxu0 0
      %523 = vmatpush2.bf16.msra.mxu0 0
      %524 = vmatprep.subr.bf16.mxu0 0
      %525 = vmatpush2.bf16.msra.mxu0 0
      %526 = vmatprep.subr.bf16.mxu0 0
      %527 = vmatpush2.bf16.msra.mxu0 0
      %528 = vmatprep.subr.bf16.mxu0 0
      %529 = vmatpush2.bf16.msra.mxu0 0
      %530 = vmatprep.subr.bf16.mxu0 0
      %531 = vmatpush2.bf16.msra.mxu0 0
      %532 = vmatprep.subr.bf16.mxu0 0
      %533 = vmatpush2.bf16.msra.mxu0 0
      %534 = vmatprep.subr.bf16.mxu0 0
      %535 = vmatpush2.bf16.msra.mxu0 0
      %536 = vmatprep.mubr.bf16.mxu0 0
      %537 = vmatmul.mubr.bf16.gmra.mxu0 %v502
      %v538 = vpop.f32.mrf.mxu0
      %v539 = vadd.f32 %v500, %v538
      %v540 = vpop.f32.mrf.mxu0
      %v541 = vpop.f32.mrf.mxu0
      %v542 = vpop.f32.mrf.mxu0
      %543 = vdwg.mxu0
      %v544 = vpack.c.bf16 %v443, %v440
      %v545 = vpack.c.bf16 %v451, %v448
      %v548 = vunpack.c.l.b16 %v544
      %v549 = vunpack.c.h.b16 %v544
      %v550 = vunpack.c.l.b16 %v545
      %v551 = vunpack.c.h.b16 %v545
      %v552 = vpack.c.b16 %v548, %v548
      %v553 = vpack.c.b16 %v549, %v549
      %v554 = vpack.c.b16 %v550, %v550
      %v555 = vpack.c.b16 %v551, %v551
      %vm560 = vcmask 257024
      %561 = vst.msk [vmem:[%s284] sm:$0xf] %vm560, %v552
      %562 = vst.msk [vmem:[%s284 + $0x4] sm:$0xf] %vm560, %v553
      %563 = vst.msk [vmem:[%s284 + $0x8] sm:$0xf] %vm560, %v554
      %564 = vst.msk [vmem:[%s284 + $0xc] sm:$0xf] %vm560, %v555
      %vm565 = vcmask 253952
      %566 = vst.msk [vmem:[%s287] sm:$0x1] %vm565, %v539
      %p567 = scmp.lt.s32.totalorder %s19, 1
      %s568 = scalar_select %p567, %s19, 1
      %s569 = smul.addr %s568, 4
      %s570 = smul.addr %s569, 4
      %s571 = scalar_lea.vmem %s6, %s570
      %p572 = scmp.lt.s32.totalorder %s19, 1
      %s573 = scalar_select %p572, %s19, 1
      %s574 = scalar_lea.vmem %s7, %s573
      // Predicated region
      $region45: #{galerkin_transformer_2d.9} parent=43 // pred_check
        %p575 = pneg %p168
      $region46: #{galerkin_transformer_2d.9} parent=43 // pred_check_branch
        %577 = sbr.rel (%p575) target = $region48
      $region47: #{galerkin_transformer_2d.9} parent=43 // pred_region
        _
      $region48: #{galerkin_transformer_2d.9} parent=43 // pred_fallthru
        _
      // Predicated region
      $region49: #{galerkin_transformer_2d.9} parent=43 // pred_check
        %p578 = pneg %p194
      $region50: #{galerkin_transformer_2d.9} parent=43 // pred_check_branch
        %580 = sbr.rel (%p578) target = $region52
      $region51: #{galerkin_transformer_2d.9} parent=43 // pred_region
        _
      $region52: #{galerkin_transformer_2d.9} parent=43 // pred_fallthru
        _
    $region44: #{galerkin_transformer_2d.9} parent=5 // pred_fallthru
      _
    %p581 = scmp.le.s32.totalorder 2, %s14
    // Predicated region
    $region53: #{galerkin_transformer_2d.9} parent=5 // pred_check
      %p582 = pneg %p581
    $region54: #{galerkin_transformer_2d.9} parent=5 // pred_check_branch
      %584 = sbr.rel (%p582) target = $region56
    $region55: #{galerkin_transformer_2d.9} parent=5 // pred_region
      %s585 = ssub.s32 %s14, 2
      // Predicated region
      $region57: #{galerkin_transformer_2d.9} parent=55 // pred_check
        %p586 = pneg %p174
      $region58: #{galerkin_transformer_2d.9} parent=55 // pred_check_branch
        %588 = sbr.rel (%p586) target = $region60
      $region59: #{galerkin_transformer_2d.9} parent=55 // pred_region
        %p589 = scmp.lt.s32.totalorder %s20, 1
        %s590 = scalar_select %p589, %s20, 1
        %s591 = smul.addr %s590, 4
        %s592 = smul.addr %s591, 4
        %s593 = scalar_lea.vmem %s6, %s592
      $region60: #{galerkin_transformer_2d.9} parent=55 // pred_fallthru
        _
      // Predicated region
      $region61: #{galerkin_transformer_2d.9} parent=55 // pred_check
        %p594 = pneg %p200
      $region62: #{galerkin_transformer_2d.9} parent=55 // pred_check_branch
        %596 = sbr.rel (%p594) target = $region64
      $region63: #{galerkin_transformer_2d.9} parent=55 // pred_region
        %p597 = scmp.lt.s32.totalorder %s20, 1
        %s598 = scalar_select %p597, %s20, 1
        %s599 = scalar_lea.vmem %s7, %s598
      $region64: #{galerkin_transformer_2d.9} parent=55 // pred_fallthru
        _
    $region56: #{galerkin_transformer_2d.9} parent=5 // pred_fallthru
      _
  $region6: #{galerkin_transformer_2d.9} parent=0 // loop_footer
    %s18 = sadd.s32 1, %s14
  $region7: #{galerkin_transformer_2d.9} parent=0 // loop_footer_branch
    %13 = sbr.rel target = $region3
  $region8: #{galerkin_transformer_2d.9} parent=0 // loop_exit
    _

// kernel: galerkin_transformer_2d.7
$region0: #{galerkin_transformer_2d.7}
  #allocation0 [shape = 'u32[]', space=smem, size = 0x4, offset = 0x4, fixed_abs, tag = 'smem constant byte address 0x4 - core index']
  #allocation1 [shape = 'u32[144,128]{1,0:T(1,128)}', space=vmem, size = 0x12000, scoped, tag = 'internal scratch']
  %s0 = inlined_call_operand.vmem [shape: bf16[2,256,6], index: 0, kind: input, shape index: {}]
  %s1 = inlined_call_operand.vmem [shape: bf16[6,32], index: 1, kind: input, shape index: {}]
  %s2 = inlined_call_operand.vmem [shape: f32[1,32], index: 2, kind: input, shape index: {}]
  %s3 = inlined_call_operand.vmem [shape: bf16[32,32], index: 3, kind: input, shape index: {}]
  %s4 = inlined_call_operand.vmem [shape: f32[1,32], index: 4, kind: input, shape index: {}]
  %s5 = inlined_call_operand.vmem [shape: bf16[2,256,32], index: 5, kind: output, shape index: {}]
  %s6 = sld [smem:[#allocation0]]
  $region53: #{galerkin_transformer_2d.7} parent=0
    _
  %s8 = ssub.s32 1, %s6
  %s9 = scalar_select 0, %s8, %s6
  loop: start=0, step=1, limit=4
  $region2: #{galerkin_transformer_2d.7} parent=0 // loop_pre_header
    _
  $region3: #{galerkin_transformer_2d.7} parent=0 // loop_header
    %s11 = sphi 0, %s15
    %p12 = scmp.ge.s32.totalorder %s11, 4
    %s18 = sphi 0, %s30
    %s19 = sphi 0, %s26
    %s20 = sphi 0, %s18
    %s21 = sphi 0, %s19
    %s22 = sphi 0, %s20
    %s23 = sphi 0, %s21
    %s35 = sphi 0, %s37
    %s38 = sphi 0, %s35
    %s39 = sphi 0, %s38
    %s55 = sphi 0, %s39
    %s59 = sphi 0, %s59
    %s61 = sphi 0, %s59
    %s62 = sphi 0, %s61
    %s76 = sphi 0, %s62
    %s80 = sphi 0, %s80
    %s82 = sphi 0, %s80
    %s83 = sphi 0, %s82
    %s97 = sphi 0, %s83
    %s101 = sphi 0, %s101
    %s103 = sphi 0, %s101
    %s104 = sphi 0, %s103
    %s118 = sphi 0, %s104
    %s122 = sphi 0, %s122
    %s124 = sphi 0, %s122
    %s125 = sphi 0, %s124
    %s139 = sphi 0, %s125
    %s147 = sphi 0, %s149
    %s150 = sphi 0, %s147
    %s151 = sphi 0, %s150
    %s167 = sphi 0, %s151
  $region4: #{galerkin_transformer_2d.7} parent=0 // loop_header_branch
    %14 = sbr.rel (%p12) target = $region8
  $region5: #{galerkin_transformer_2d.7} parent=0 // loop_body
    %s16 = ssub.s32 %s11, 1
    %s17 = ssub.s32 %s11, 2
    %s24 = sadd.s32 1, %s19
    %p25 = scmp.ge.s32.totalorder %s24, 1
    %s26 = scalar_select %p25, 0, %s24
    %s27 = sadd.s32 1, %s18
    %s28 = scalar_select %p25, %s27, %s18
    %p29 = scmp.ge.s32.totalorder %s28, 2
    %s30 = scalar_select %p29, 0, %s28
    %s31 = ssub.s32 %s18, %s30
    %s32 = ssub.s32 %s19, %s26
    %s33 = sor.u32 %s31, %s32
    %p34 = scmp.eq.s32.totalorder %s33, 0
    %s36 = sadd.s32 %s35, 1
    %s37 = scalar_select %p34, %s35, %s36
    %p40 = pneg %p34
    %p41 = scmp.eq.s32.totalorder %s11, 1
    %p42 = por %p40, %p41
    %p43 = scmp.ne.s32.totalorder %s35, %s38
    %p44 = scmp.eq.s32.totalorder %s11, 0
    %p45 = por %p43, %p44
    %p46 = scmp.ne.s32.totalorder %s35, %s38
    %p47 = scmp.eq.s32.totalorder %s16, 1
    %p48 = por %p46, %p47
    %p49 = scmp.ne.s32.totalorder %s38, %s39
    %p50 = scmp.eq.s32.totalorder %s16, 0
    %p51 = por %p49, %p50
    %p52 = scmp.ne.s32.totalorder %s38, %s39
    %p53 = scmp.eq.s32.totalorder %s17, 1
    %p54 = por %p52, %p53
    %p56 = scmp.ne.s32.totalorder %s39, %s55
    %p57 = scmp.eq.s32.totalorder %s17, 0
    %p58 = por %p56, %p57
    %s60 = sadd.s32 %s59, 1
    %p63 = scmp.eq.s32.totalorder %s11, 1
    %p64 = scmp.ne.s32.totalorder %s59, %s61
    %p65 = scmp.eq.s32.totalorder %s11, 0
    %p66 = por %p64, %p65
    %p67 = scmp.ne.s32.totalorder %s59, %s61
    %p68 = scmp.eq.s32.totalorder %s16, 1
    %p69 = por %p67, %p68
    %p70 = scmp.ne.s32.totalorder %s61, %s62
    %p71 = scmp.eq.s32.totalorder %s16, 0
    %p72 = por %p70, %p71
    %p73 = scmp.ne.s32.totalorder %s61, %s62
    %p74 = scmp.eq.s32.totalorder %s17, 1
    %p75 = por %p73, %p74
    %p77 = scmp.ne.s32.totalorder %s62, %s76
    %p78 = scmp.eq.s32.totalorder %s17, 0
    %p79 = por %p77, %p78
    %s81 = sadd.s32 %s80, 1
    %p84 = scmp.eq.s32.totalorder %s11, 1
    %p85 = scmp.ne.s32.totalorder %s80, %s82
    %p86 = scmp.eq.s32.totalorder %s11, 0
    %p87 = por %p85, %p86
    %p88 = scmp.ne.s32.totalorder %s80, %s82
    %p89 = scmp.eq.s32.totalorder %s16, 1
    %p90 = por %p88, %p89
    %p91 = scmp.ne.s32.totalorder %s82, %s83
    %p92 = scmp.eq.s32.totalorder %s16, 0
    %p93 = por %p91, %p92
    %p94 = scmp.ne.s32.totalorder %s82, %s83
    %p95 = scmp.eq.s32.totalorder %s17, 1
    %p96 = por %p94, %p95
    %p98 = scmp.ne.s32.totalorder %s83, %s97
    %p99 = scmp.eq.s32.totalorder %s17, 0
    %p100 = por %p98, %p99
    %s102 = sadd.s32 %s101, 1
    %p105 = scmp.eq.s32.totalorder %s11, 1
    %p106 = scmp.ne.s32.totalorder %s101, %s103
    %p107 = scmp.eq.s32.totalorder %s11, 0
    %p108 = por %p106, %p107
    %p109 = scmp.ne.s32.totalorder %s101, %s103
    %p110 = scmp.eq.s32.totalorder %s16, 1
    %p111 = por %p109, %p110
    %p112 = scmp.ne.s32.totalorder %s103, %s104
    %p113 = scmp.eq.s32.totalorder %s16, 0
    %p114 = por %p112, %p113
    %p115 = scmp.ne.s32.totalorder %s103, %s104
    %p116 = scmp.eq.s32.totalorder %s17, 1
    %p117 = por %p115, %p116
    %p119 = scmp.ne.s32.totalorder %s104, %s118
    %p120 = scmp.eq.s32.totalorder %s17, 0
    %p121 = por %p119, %p120
    %s123 = sadd.s32 %s122, 1
    %p126 = scmp.eq.s32.totalorder %s11, 1
    %p127 = scmp.ne.s32.totalorder %s122, %s124
    %p128 = scmp.eq.s32.totalorder %s11, 0
    %p129 = por %p127, %p128
    %p130 = scmp.ne.s32.totalorder %s122, %s124
    %p131 = scmp.eq.s32.totalorder %s16, 1
    %p132 = por %p130, %p131
    %p133 = scmp.ne.s32.totalorder %s124, %s125
    %p134 = scmp.eq.s32.totalorder %s16, 0
    %p135 = por %p133, %p134
    %p136 = scmp.ne.s32.totalorder %s124, %s125
    %p137 = scmp.eq.s32.totalorder %s17, 1
    %p138 = por %p136, %p137
    %p140 = scmp.ne.s32.totalorder %s125, %s139
    %p141 = scmp.eq.s32.totalorder %s17, 0
    %p142 = por %p140, %p141
    %s143 = ssub.s32 %s18, %s30
    %s144 = ssub.s32 %s19, %s26
    %s145 = sor.u32 %s143, %s144
    %p146 = scmp.eq.s32.totalorder %s145, 0
    %s148 = sadd.s32 %s147, 1
    %s149 = scalar_select %p146, %s147, %s148
    %p152 = pneg %p146
    %p153 = scmp.eq.s32.totalorder %s11, 1
    %p154 = por %p152, %p153
    %p155 = scmp.ne.s32.totalorder %s147, %s150
    %p156 = scmp.eq.s32.totalorder %s11, 0
    %p157 = por %p155, %p156
    %p158 = scmp.ne.s32.totalorder %s147, %s150
    %p159 = scmp.eq.s32.totalorder %s16, 1
    %p160 = por %p158, %p159
    %p161 = scmp.ne.s32.totalorder %s150, %s151
    %p162 = scmp.eq.s32.totalorder %s16, 0
    %p163 = por %p161, %p162
    %p164 = scmp.ne.s32.totalorder %s150, %s151
    %p165 = scmp.eq.s32.totalorder %s17, 1
    %p166 = por %p164, %p165
    %p168 = scmp.ne.s32.totalorder %s151, %s167
    %p169 = scmp.eq.s32.totalorder %s17, 0
    %p170 = por %p168, %p169
    %p171 = scmp.le.s32.totalorder 1, %s11
    %p172 = scmp.lt.s32.totalorder %s11, 3
    %p173 = pnand %p171, %p172
    %p174 = pneg %p173
    // Predicated region
    $region9: #{galerkin_transformer_2d.7} parent=5 // pred_check
      _
    $region10: #{galerkin_transformer_2d.7} parent=5 // pred_check_branch
      %176 = sbr.rel (%p173) target = $region12
    $region11: #{galerkin_transformer_2d.7} parent=5 // pred_region
      %s177 = ssub.s32 %s11, 1
      // Predicated region
      $region13: #{galerkin_transformer_2d.7} parent=11 // pred_check
        %p178 = pneg %p72
      $region14: #{galerkin_transformer_2d.7} parent=11 // pred_check_branch
        %180 = sbr.rel (%p178) target = $region16
      $region15: #{galerkin_transformer_2d.7} parent=11 // pred_region
        _
      $region16: #{galerkin_transformer_2d.7} parent=11 // pred_fallthru
        _
      // Predicated region
      $region17: #{galerkin_transformer_2d.7} parent=11 // pred_check
        %p181 = pneg %p93
      $region18: #{galerkin_transformer_2d.7} parent=11 // pred_check_branch
        %183 = sbr.rel (%p181) target = $region20
      $region19: #{galerkin_transformer_2d.7} parent=11 // pred_region
        _
      $region20: #{galerkin_transformer_2d.7} parent=11 // pred_fallthru
        _
      // Predicated region
      $region21: #{galerkin_transformer_2d.7} parent=11 // pred_check
        %p184 = pneg %p114
      $region22: #{galerkin_transformer_2d.7} parent=11 // pred_check_branch
        %186 = sbr.rel (%p184) target = $region24
      $region23: #{galerkin_transformer_2d.7} parent=11 // pred_region
        _
      $region24: #{galerkin_transformer_2d.7} parent=11 // pred_fallthru
        _
      // Predicated region
      $region25: #{galerkin_transformer_2d.7} parent=11 // pred_check
        %p187 = pneg %p135
      $region26: #{galerkin_transformer_2d.7} parent=11 // pred_check_branch
        %189 = sbr.rel (%p187) target = $region28
      $region27: #{galerkin_transformer_2d.7} parent=11 // pred_region
        _
      $region28: #{galerkin_transformer_2d.7} parent=11 // pred_fallthru
        _
    $region12: #{galerkin_transformer_2d.7} parent=5 // pred_fallthru
      _
    %p190 = scmp.lt.s32.totalorder %s11, 2
    // Predicated region
    $region29: #{galerkin_transformer_2d.7} parent=5 // pred_check
      %p191 = pneg %p190
    $region30: #{galerkin_transformer_2d.7} parent=5 // pred_check_branch
      %193 = sbr.rel (%p191) target = $region32
    $region31: #{galerkin_transformer_2d.7} parent=5 // pred_region
      // Predicated region
      $region33: #{galerkin_transformer_2d.7} parent=31 // pred_check
        %p194 = pneg %p45
      $region34: #{galerkin_transformer_2d.7} parent=31 // pred_check_branch
        %196 = sbr.rel (%p194) target = $region36
      $region35: #{galerkin_transformer_2d.7} parent=31 // pred_region
        %s197 = smul.u32 32, %s19
        %p198 = scmp.lt.s32.totalorder %s18, 1
        %s199 = scalar_select %p198, %s18, 1
        %p200 = scmp.lt.s32.totalorder %s197, 31
        %s201 = scalar_select %p200, %s197, 31
        %s202 = smul.addr %s199, 32
        %s203 = sadd.s32 %s201, %s202
        %s204 = smul.addr %s203, 4
        %s205 = scalar_lea.vmem %s0, %s204
        %s206 = smul.u32 32, %s19
      $region36: #{galerkin_transformer_2d.7} parent=31 // pred_fallthru
        _
    $region32: #{galerkin_transformer_2d.7} parent=5 // pred_fallthru
      _
    %p207 = scmp.le.s32.totalorder 1, %s11
    %p208 = scmp.lt.s32.totalorder %s11, 3
    %p209 = pnand %p207, %p208
    %p210 = pneg %p209
    // Predicated region
    $region37: #{galerkin_transformer_2d.7} parent=5 // pred_check
      _
    $region38: #{galerkin_transformer_2d.7} parent=5 // pred_check_branch
      %212 = sbr.rel (%p209) target = $region40
    $region39: #{galerkin_transformer_2d.7} parent=5 // pred_region
      %s213 = ssub.s32 %s11, 1
      %s214 = smul.u32 32, %s21
      %p215 = scmp.lt.s32.totalorder %s20, 1
      %s216 = scalar_select %p215, %s20, 1
      %p217 = scmp.lt.s32.totalorder %s214, 31
      %s218 = scalar_select %p217, %s214, 31
      %s219 = smul.addr %s216, 32
      %s220 = sadd.s32 %s218, %s219
      %s221 = smul.addr %s220, 4
      %s222 = scalar_lea.vmem %s0, %s221
      %p223 = pneg %p51
      %p224 = pneg %p48
      %p225 = pneg %p72
      %p226 = pneg %p69
      %p227 = pneg %p93
      %p228 = pneg %p90
      %p229 = pneg %p114
      %p230 = pneg %p111
      %p231 = pneg %p135
      %p232 = pneg %p132
      %p233 = pneg %p163
      %p234 = pneg %p160
      %s235 = smul.u32 32, %s21
      %p236 = scmp.lt.s32.totalorder %s20, 1
      %s237 = scalar_select %p236, %s20, 1
      %p238 = scmp.lt.s32.totalorder %s235, 31
      %s239 = scalar_select %p238, %s235, 31
      %s240 = smul.addr %s237, 32
      %s241 = sadd.s32 %s239, %s240
      %s242 = smul.addr %s241, 4
      %s243 = scalar_lea.vmem %s5, %s242
      %s244 = smul.u32 32, %s21
      %p245 = scmp.lt.s32.totalorder %s20, 1
      %s246 = scalar_select %p245, %s20, 1
      %p247 = scmp.lt.s32.totalorder %s244, 31
      %s248 = scalar_select %p247, %s244, 31
      %s249 = smul.addr %s246, 32
      %s250 = sadd.s32 %s248, %s249
      %s251 = smul.addr %s250, 4
      %s252 = scalar_lea.vmem %s0, %s251
      %s253 = smul.u32 32, %s21
      %s254 = smul.u32 32, %s21
      %p255 = scmp.lt.s32.totalorder %s20, 1
      %s256 = scalar_select %p255, %s20, 1
      %p257 = scmp.lt.s32.totalorder %s254, 31
      %s258 = scalar_select %p257, %s254, 31
      %s259 = smul.addr %s256, 32
      %s260 = sadd.s32 %s258, %s259
      %s261 = smul.addr %s260, 4
      %s262 = scalar_lea.vmem %s5, %s261
      %s263 = smul.u32 32, %s21
      %v265 = vld [vmem:[%s252] sm:$0xf]
      %v266 = vld [vmem:[%s252 + $0x4] sm:$0xf]
      %v267 = vld [vmem:[%s252 + $0x8] sm:$0xf]
      %v268 = vld [vmem:[%s252 + $0xc] sm:$0xf]
      %v269 = vld [vmem:[%s252 + $0x10] sm:$0xf]
      %v270 = vld [vmem:[%s252 + $0x14] sm:$0xf]
      %v271 = vld [vmem:[%s252 + $0x18] sm:$0xf]
      %v272 = vld [vmem:[%s252 + $0x1c] sm:$0xf]
      %v273 = vld [vmem:[%s252 + $0x20] sm:$0xf]
      %v274 = vld [vmem:[%s252 + $0x24] sm:$0xf]
      %v275 = vld [vmem:[%s252 + $0x28] sm:$0xf]
      %v276 = vld [vmem:[%s252 + $0x2c] sm:$0xf]
      %v277 = vld [vmem:[%s252 + $0x30] sm:$0xf]
      %v278 = vld [vmem:[%s252 + $0x34] sm:$0xf]
      %v279 = vld [vmem:[%s252 + $0x38] sm:$0xf]
      %v280 = vld [vmem:[%s252 + $0x3c] sm:$0xf]
      %v281 = vld [vmem:[%s252 + $0x40] sm:$0xf]
      %v282 = vld [vmem:[%s252 + $0x44] sm:$0xf]
      %v283 = vld [vmem:[%s252 + $0x48] sm:$0xf]
      %v284 = vld [vmem:[%s252 + $0x4c] sm:$0xf]
      %v285 = vld [vmem:[%s252 + $0x50] sm:$0xf]
      %v286 = vld [vmem:[%s252 + $0x54] sm:$0xf]
      %v287 = vld [vmem:[%s252 + $0x58] sm:$0xf]
      %v288 = vld [vmem:[%s252 + $0x5c] sm:$0xf]
      %v289 = vld [vmem:[%s252 + $0x60] sm:$0xf]
      %v290 = vld [vmem:[%s252 + $0x64] sm:$0xf]
      %v291 = vld [vmem:[%s252 + $0x68] sm:$0xf]
      %v292 = vld [vmem:[%s252 + $0x6c] sm:$0xf]
      %v293 = vld [vmem:[%s252 + $0x70] sm:$0xf]
      %v294 = vld [vmem:[%s252 + $0x74] sm:$0xf]
      %v295 = vld [vmem:[%s252 + $0x78] sm:$0xf]
      %v296 = vld [vmem:[%s252 + $0x7c] sm:$0xf]
      %v297 = vld [vmem:[%s1] sm:$0x7]
      %v298 = vld [vmem:[%s2] sm:$0x1]
      %v300 = vlaneseq
      %v301 = vshrl.u32 %v300, 7
      %v302 = vsub.s32 0, %v301
      %v303 = vrot.slane %v298, %v302
      %v337 = vunpack.c.l.b16 %v265
      %v338 = vunpack.c.l.b16 %v266
      %v339 = vunpack.c.l.b16 %v267
      %v340 = vunpack.c.l.b16 %v268
      %v341 = vunpack.c.l.b16 %v269
      %v342 = vunpack.c.l.b16 %v270
      %v343 = vunpack.c.l.b16 %v271
      %v344 = vunpack.c.l.b16 %v272
      %v345 = vunpack.c.l.b16 %v273
      %v346 = vunpack.c.l.b16 %v274
      %v347 = vunpack.c.l.b16 %v275
      %v348 = vunpack.c.l.b16 %v276
      %v349 = vunpack.c.l.b16 %v277
      %v350 = vunpack.c.l.b16 %v278
      %v351 = vunpack.c.l.b16 %v279
      %v352 = vunpack.c.l.b16 %v280
      %v353 = vunpack.c.l.b16 %v281
      %v354 = vunpack.c.l.b16 %v282
      %v355 = vunpack.c.l.b16 %v283
      %v356 = vunpack.c.l.b16 %v284
      %v357 = vunpack.c.l.b16 %v285
      %v358 = vunpack.c.l.b16 %v286
      %v359 = vunpack.c.l.b16 %v287
      %v360 = vunpack.c.l.b16 %v288
      %v361 = vunpack.c.l.b16 %v289
      %v362 = vunpack.c.l.b16 %v290
      %v363 = vunpack.c.l.b16 %v291
      %v364 = vunpack.c.l.b16 %v292
      %v365 = vunpack.c.l.b16 %v293
      %v366 = vunpack.c.l.b16 %v294
      %v367 = vunpack.c.l.b16 %v295
      %v368 = vunpack.c.l.b16 %v296
      %v369 = vpack.c.b16 %v338, %v337
      %v370 = vpack.c.b16 %v340, %v339
      %v371 = vpack.c.b16 %v342, %v341
      %v372 = vpack.c.b16 %v344, %v343
      %v373 = vpack.c.b16 %v346, %v345
      %v374 = vpack.c.b16 %v348, %v347
      %v375 = vpack.c.b16 %v350, %v349
      %v376 = vpack.c.b16 %v352, %v351
      %v377 = vpack.c.b16 %v354, %v353
      %v378 = vpack.c.b16 %v356, %v355
      %v379 = vpack.c.b16 %v358, %v357
      %v380 = vpack.c.b16 %v360, %v359
      %v381 = vpack.c.b16 %v362, %v361
      %v382 = vpack.c.b16 %v364, %v363
      %v383 = vpack.c.b16 %v366, %v365
      %v384 = vpack.c.b16 %v368, %v367
      %vm385 = vcmask 48128
      %v387 = vsel %vm385, %v369, 0
      %v390 = vsel %vm385, %v370, 0
      %v393 = vsel %vm385, %v371, 0
      %v396 = vsel %vm385, %v372, 0
      %v399 = vsel %vm385, %v373, 0
      %v402 = vsel %vm385, %v374, 0
      %v405 = vsel %vm385, %v375, 0
      %v408 = vsel %vm385, %v376, 0
      %v411 = vsel %vm385, %v377, 0
      %v414 = vsel %vm385, %v378, 0
      %v417 = vsel %vm385, %v379, 0
      %v420 = vsel %vm385, %v380, 0
      %v423 = vsel %vm385, %v381, 0
      %v426 = vsel %vm385, %v382, 0
      %v429 = vsel %vm385, %v383, 0
      %v432 = vsel %vm385, %v384, 0
      %vm434 = vcmask 1042432
      %v436 = vsel %vm434, %v297, 0
      %438 = vmatprep.subr.bf16.mxu0 0
      %439 = vmatpush1.bf16.msra.mxu0 0
      %440 = vmatprep.subr.bf16.mxu0 0
      %441 = vmatpush1.bf16.msra.mxu0 0
      %442 = vmatprep.subr.bf16.mxu0 0
      %443 = vmatpush1.bf16.msra.mxu0 0
      %444 = vmatprep.subr.bf16.mxu0 0
      %445 = vmatpush1.bf16.msra.mxu0 0
      %446 = vmatprep.subr.bf16.mxu0 0
      %447 = vmatpush1.bf16.msra.mxu0 0
      %448 = vmatprep.subr.bf16.mxu0 0
      %449 = vmatpush1.bf16.msra.mxu0 0
      %450 = vmatprep.subr.bf16.mxu0 0
      %451 = vmatpush1.bf16.msra.mxu0 0
      %452 = vmatprep.subr.bf16.mxu0 0
      %453 = vmatpush1.bf16.msra.mxu0 %v436
      %454 = vmatprep.subr.bf16.mxu0 0
      %455 = vmatpush2.bf16.msra.mxu0 0
      %456 = vmatprep.subr.bf16.mxu0 0
      %457 = vmatpush2.bf16.msra.mxu0 0
      %458 = vmatprep.subr.bf16.mxu0 0
      %459 = vmatpush2.bf16.msra.mxu0 0
      %460 = vmatprep.subr.bf16.mxu0 0
      %461 = vmatpush2.bf16.msra.mxu0 0
      %462 = vmatprep.subr.bf16.mxu0 0
      %463 = vmatpush2.bf16.msra.mxu0 0
      %464 = vmatprep.subr.bf16.mxu0 0
      %465 = vmatpush2.bf16.msra.mxu0 0
      %466 = vmatprep.subr.bf16.mxu0 0
      %467 = vmatpush2.bf16.msra.mxu0 0
      %468 = vmatprep.subr.bf16.mxu0 0
      %469 = vmatpush2.bf16.msra.mxu0 0
      %470 = vmatprep.mubr.bf16.mxu0 0
      %471 = vmatmul.mubr.bf16.gmra.mxu0 %v387
      %v472 = vpop.f32.mrf.mxu0
      %v473 = vadd.f32 %v303, %v472
      %v474 = vpop.f32.mrf.mxu0
      %v475 = vpop.f32.mrf.mxu0
      %v476 = vadd.f32 %v303, %v475
      %v477 = vpop.f32.mrf.mxu0
      %478 = vmatprep.mubr.bf16.mxu0 0
      %479 = vmatmul.mubr.bf16.gmra.mxu0 %v390
      %v480 = vpop.f32.mrf.mxu0
      %v481 = vadd.f32 %v303, %v480
      %v482 = vpop.f32.mrf.mxu0
      %v483 = vpop.f32.mrf.mxu0
      %v484 = vadd.f32 %v303, %v483
      %v485 = vpop.f32.mrf.mxu0
      %486 = vmatprep.mubr.bf16.mxu0 0
      %487 = vmatmul.mubr.bf16.gmra.mxu0 %v393
      %v488 = vpop.f32.mrf.mxu0
      %v489 = vadd.f32 %v303, %v488
      %v490 = vpop.f32.mrf.mxu0
      %v491 = vpop.f32.mrf.mxu0
      %v492 = vadd.f32 %v303, %v491
      %v493 = vpop.f32.mrf.mxu0
      %494 = vmatprep.mubr.bf16.mxu0 0
      %495 = vmatmul.mubr.bf16.gmra.mxu0 %v396
      %v496 = vpop.f32.mrf.mxu0
      %v497 = vadd.f32 %v303, %v496
      %v498 = vpop.f32.mrf.mxu0
      %v499 = vpop.f32.mrf.mxu0
      %v500 = vadd.f32 %v303, %v499
      %v501 = vpop.f32.mrf.mxu0
      %502 = vmatprep.mubr.bf16.mxu0 0
      %503 = vmatmul.mubr.bf16.gmra.mxu0 %v399
      %v504 = vpop.f32.mrf.mxu0
      %v505 = vadd.f32 %v303, %v504
      %v506 = vpop.f32.mrf.mxu0
      %v507 = vpop.f32.mrf.mxu0
      %v508 = vadd.f32 %v303, %v507
      %v509 = vpop.f32.mrf.mxu0
      %510 = vmatprep.mubr.bf16.mxu0 0
      %511 = vmatmul.mubr.bf16.gmra.mxu0 %v402
      %v512 = vpop.f32.mrf.mxu0
      %v513 = vadd.f32 %v303, %v512
      %v514 = vpop.f32.mrf.mxu0
      %v515 = vpop.f32.mrf.mxu0
      %v516 = vadd.f32 %v303, %v515
      %v517 = vpop.f32.mrf.mxu0
      %518 = vmatprep.mubr.bf16.mxu0 0
      %519 = vmatmul.mubr.bf16.gmra.mxu0 %v405
      %v520 = vpop.f32.mrf.mxu0
      %v521 = vadd.f32 %v303, %v520
      %v522 = vpop.f32.mrf.mxu0
      %v523 = vpop.f32.mrf.mxu0
      %v524 = vadd.f32 %v303, %v523
      %v525 = vpop.f32.mrf.mxu0
      %526 = vmatprep.mubr.bf16.mxu0 0
      %527 = vmatmul.mubr.bf16.gmra.mxu0 %v408
      %v528 = vpop.f32.mrf.mxu0
      %v529 = vadd.f32 %v303, %v528
      %v530 = vpop.f32.mrf.mxu0
      %v531 = vpop.f32.mrf.mxu0
      %v532 = vadd.f32 %v303, %v531
      %v533 = vpop.f32.mrf.mxu0
      %534 = vmatprep.mubr.bf16.mxu0 0
      %535 = vmatmul.mubr.bf16.gmra.mxu0 %v411
      %v536 = vpop.f32.mrf.mxu0
      %v537 = vadd.f32 %v303, %v536
      %v538 = vpop.f32.mrf.mxu0
      %v539 = vpop.f32.mrf.mxu0
      %v540 = vadd.f32 %v303, %v539
      %v541 = vpop.f32.mrf.mxu0
      %542 = vmatprep.mubr.bf16.mxu0 0
      %543 = vmatmul.mubr.bf16.gmra.mxu0 %v414
      %v544 = vpop.f32.mrf.mxu0
      %v545 = vadd.f32 %v303, %v544
      %v546 = vpop.f32.mrf.mxu0
      %v547 = vpop.f32.mrf.mxu0
      %v548 = vadd.f32 %v303, %v547
      %v549 = vpop.f32.mrf.mxu0
      %550 = vmatprep.mubr.bf16.mxu0 0
      %551 = vmatmul.mubr.bf16.gmra.mxu0 %v417
      %v552 = vpop.f32.mrf.mxu0
      %v553 = vadd.f32 %v303, %v552
      %v554 = vpop.f32.mrf.mxu0
      %v555 = vpop.f32.mrf.mxu0
      %v556 = vadd.f32 %v303, %v555
      %v557 = vpop.f32.mrf.mxu0
      %558 = vmatprep.mubr.bf16.mxu0 0
      %559 = vmatmul.mubr.bf16.gmra.mxu0 %v420
      %v560 = vpop.f32.mrf.mxu0
      %v561 = vadd.f32 %v303, %v560
      %v562 = vpop.f32.mrf.mxu0
      %v563 = vpop.f32.mrf.mxu0
      %v564 = vadd.f32 %v303, %v563
      %v565 = vpop.f32.mrf.mxu0
      %566 = vmatprep.mubr.bf16.mxu0 0
      %567 = vmatmul.mubr.bf16.gmra.mxu0 %v423
      %v568 = vpop.f32.mrf.mxu0
      %v569 = vadd.f32 %v303, %v568
      %v570 = vpop.f32.mrf.mxu0
      %v571 = vpop.f32.mrf.mxu0
      %v572 = vadd.f32 %v303, %v571
      %v573 = vpop.f32.mrf.mxu0
      %574 = vmatprep.mubr.bf16.mxu0 0
      %575 = vmatmul.mubr.bf16.gmra.mxu0 %v426
      %v576 = vpop.f32.mrf.mxu0
      %v577 = vadd.f32 %v303, %v576
      %v578 = vpop.f32.mrf.mxu0
      %v579 = vpop.f32.mrf.mxu0
      %v580 = vadd.f32 %v303, %v579
      %v581 = vpop.f32.mrf.mxu0
      %582 = vmatprep.mubr.bf16.mxu0 0
      %583 = vmatmul.mubr.bf16.gmra.mxu0 %v429
      %v584 = vpop.f32.mrf.mxu0
      %v585 = vadd.f32 %v303, %v584
      %v586 = vpop.f32.mrf.mxu0
      %v587 = vpop.f32.mrf.mxu0
      %v588 = vadd.f32 %v303, %v587
      %v589 = vpop.f32.mrf.mxu0
      %590 = vmatprep.mubr.bf16.mxu0 0
      %591 = vmatmul.mubr.bf16.gmra.mxu0 %v432
      %v592 = vpop.f32.mrf.mxu0
      %v593 = vadd.f32 %v303, %v592
      %v594 = vpop.f32.mrf.mxu0
      %v595 = vpop.f32.mrf.mxu0
      %v596 = vadd.f32 %v303, %v595
      %v597 = vpop.f32.mrf.mxu0
      %598 = vdwg.mxu0
      %v599 = vmul.f32 %v473, %v473
      %v600 = vmul.f32 %v476, %v476
      %v601 = vmul.f32 %v481, %v481
      %v602 = vmul.f32 %v484, %v484
      %v603 = vmul.f32 %v489, %v489
      %v604 = vmul.f32 %v492, %v492
      %v605 = vmul.f32 %v497, %v497
      %v606 = vmul.f32 %v500, %v500
      %v607 = vmul.f32 %v505, %v505
      %v608 = vmul.f32 %v508, %v508
      %v609 = vmul.f32 %v513, %v513
      %v610 = vmul.f32 %v516, %v516
      %v611 = vmul.f32 %v521, %v521
      %v612 = vmul.f32 %v524, %v524
      %v613 = vmul.f32 %v529, %v529
      %v614 = vmul.f32 %v532, %v532
      %v615 = vmul.f32 %v537, %v537
      %v616 = vmul.f32 %v540, %v540
      %v617 = vmul.f32 %v545, %v545
      %v618 = vmul.f32 %v548, %v548
      %v619 = vmul.f32 %v553, %v553
      %v620 = vmul.f32 %v556, %v556
      %v621 = vmul.f32 %v561, %v561
      %v622 = vmul.f32 %v564, %v564
      %v623 = vmul.f32 %v569, %v569
      %v624 = vmul.f32 %v572, %v572
      %v625 = vmul.f32 %v577, %v577
      %v626 = vmul.f32 %v580, %v580
      %v627 = vmul.f32 %v585, %v585
      %v628 = vmul.f32 %v588, %v588
      %v629 = vmul.f32 %v593, %v593
      %v630 = vmul.f32 %v596, %v596
      %v631 = vmul.f32 %v473, %v599
      %v632 = vmul.f32 %v476, %v600
      %v633 = vmul.f32 %v481, %v601
      %v634 = vmul.f32 %v484, %v602
      %v635 = vmul.f32 %v489, %v603
      %v636 = vmul.f32 %v492, %v604
      %v637 = vmul.f32 %v497, %v605
      %v638 = vmul.f32 %v500, %v606
      %v639 = vmul.f32 %v505, %v607
      %v640 = vmul.f32 %v508, %v608
      %v641 = vmul.f32 %v513, %v609
      %v642 = vmul.f32 %v516, %v610
      %v643 = vmul.f32 %v521, %v611
      %v644 = vmul.f32 %v524, %v612
      %v645 = vmul.f32 %v529, %v613
      %v646 = vmul.f32 %v532, %v614
      %v647 = vmul.f32 %v537, %v615
      %v648 = vmul.f32 %v540, %v616
      %v649 = vmul.f32 %v545, %v617
      %v650 = vmul.f32 %v548, %v618
      %v651 = vmul.f32 %v553, %v619
      %v652 = vmul.f32 %v556, %v620
      %v653 = vmul.f32 %v561, %v621
      %v654 = vmul.f32 %v564, %v622
      %v655 = vmul.f32 %v569, %v623
      %v656 = vmul.f32 %v572, %v624
      %v657 = vmul.f32 %v577, %v625
      %v658 = vmul.f32 %v580, %v626
      %v659 = vmul.f32 %v585, %v627
      %v660 = vmul.f32 %v588, %v628
      %v661 = vmul.f32 %v593, %v629
      %v662 = vmul.f32 %v596, %v630
      %v663 = vmul.f32 %v631, 0.044715
      %v664 = vmul.f32 %v632, 0.044715
      %v665 = vmul.f32 %v633, 0.044715
      %v666 = vmul.f32 %v634, 0.044715
      %v667 = vmul.f32 %v635, 0.044715
      %v668 = vmul.f32 %v636, 0.044715
      %v669 = vmul.f32 %v637, 0.044715
      %v670 = vmul.f32 %v638, 0.044715
      %v671 = vmul.f32 %v639, 0.044715
      %v672 = vmul.f32 %v640, 0.044715
      %v673 = vmul.f32 %v641, 0.044715
      %v674 = vmul.f32 %v642, 0.044715
      %v675 = vmul.f32 %v643, 0.044715
      %v676 = vmul.f32 %v644, 0.044715
      %v677 = vmul.f32 %v645, 0.044715
      %v678 = vmul.f32 %v646, 0.044715
      %v679 = vmul.f32 %v647, 0.044715
      %v680 = vmul.f32 %v648, 0.044715
      %v681 = vmul.f32 %v649, 0.044715
      %v682 = vmul.f32 %v650, 0.044715
      %v683 = vmul.f32 %v651, 0.044715
      %v684 = vmul.f32 %v652, 0.044715
      %v685 = vmul.f32 %v653, 0.044715
      %v686 = vmul.f32 %v654, 0.044715
      %v687 = vmul.f32 %v655, 0.044715
      %v688 = vmul.f32 %v656, 0.044715
      %v689 = vmul.f32 %v657, 0.044715
      %v690 = vmul.f32 %v658, 0.044715
      %v691 = vmul.f32 %v659, 0.044715
      %v692 = vmul.f32 %v660, 0.044715
      %v693 = vmul.f32 %v661, 0.044715
      %v694 = vmul.f32 %v662, 0.044715
      %v695 = vadd.f32 %v473, %v663
      %v696 = vadd.f32 %v476, %v664
      %v697 = vadd.f32 %v481, %v665
      %v698 = vadd.f32 %v484, %v666
      %v699 = vadd.f32 %v489, %v667
      %v700 = vadd.f32 %v492, %v668
      %v701 = vadd.f32 %v497, %v669
      %v702 = vadd.f32 %v500, %v670
      %v703 = vadd.f32 %v505, %v671
      %v704 = vadd.f32 %v508, %v672
      %v705 = vadd.f32 %v513, %v673
      %v706 = vadd.f32 %v516, %v674
      %v707 = vadd.f32 %v521, %v675
      %v708 = vadd.f32 %v524, %v676
      %v709 = vadd.f32 %v529, %v677
      %v710 = vadd.f32 %v532, %v678
      %v711 = vadd.f32 %v537, %v679
      %v712 = vadd.f32 %v540, %v680
      %v713 = vadd.f32 %v545, %v681
      %v714 = vadd.f32 %v548, %v682
      %v715 = vadd.f32 %v553, %v683
      %v716 = vadd.f32 %v556, %v684
      %v717 = vadd.f32 %v561, %v685
      %v718 = vadd.f32 %v564, %v686
      %v719 = vadd.f32 %v569, %v687
      %v720 = vadd.f32 %v572, %v688
      %v721 = vadd.f32 %v577, %v689
      %v722 = vadd.f32 %v580, %v690
      %v723 = vadd.f32 %v585, %v691
      %v724 = vadd.f32 %v588, %v692
      %v725 = vadd.f32 %v593, %v693
      %v726 = vadd.f32 %v596, %v694
      %v727 = vmul.f32 %v695, 0.7978846
      %v728 = vmul.f32 %v696, 0.7978846
      %v729 = vmul.f32 %v697, 0.7978846
      %v730 = vmul.f32 %v698, 0.7978846
      %v731 = vmul.f32 %v699, 0.7978846
      %v732 = vmul.f32 %v700, 0.7978846
      %v733 = vmul.f32 %v701, 0.7978846
      %v734 = vmul.f32 %v702, 0.7978846
      %v735 = vmul.f32 %v703, 0.7978846
      %v736 = vmul.f32 %v704, 0.7978846
      %v737 = vmul.f32 %v705, 0.7978846
      %v738 = vmul.f32 %v706, 0.7978846
      %v739 = vmul.f32 %v707, 0.7978846
      %v740 = vmul.f32 %v708, 0.7978846
      %v741 = vmul.f32 %v709, 0.7978846
      %v742 = vmul.f32 %v710, 0.7978846
      %v743 = vmul.f32 %v711, 0.7978846
      %v744 = vmul.f32 %v712, 0.7978846
      %v745 = vmul.f32 %v713, 0.7978846
      %v746 = vmul.f32 %v714, 0.7978846
      %v747 = vmul.f32 %v715, 0.7978846
      %v748 = vmul.f32 %v716, 0.7978846
      %v749 = vmul.f32 %v717, 0.7978846
      %v750 = vmul.f32 %v718, 0.7978846
      %v751 = vmul.f32 %v719, 0.7978846
      %v752 = vmul.f32 %v720, 0.7978846
      %v753 = vmul.f32 %v721, 0.7978846
      %v754 = vmul.f32 %v722, 0.7978846
      %v755 = vmul.f32 %v723, 0.7978846
      %v756 = vmul.f32 %v724, 0.7978846
      %v757 = vmul.f32 %v725, 0.7978846
      %v758 = vmul.f32 %v726, 0.7978846
      %v759 = vtanh.pop %v727
      %v760 = vtanh.pop %v728
      %v761 = vtanh.pop %v729
      %v762 = vtanh.pop %v730
      %v763 = vtanh.pop %v731
      %v764 = vtanh.pop %v732
      %v765 = vtanh.pop %v733
      %v766 = vtanh.pop %v734
      %v767 = vtanh.pop %v735
      %v768 = vtanh.pop %v736
      %v769 = vtanh.pop %v737
      %v770 = vtanh.pop %v738
      %v771 = vtanh.pop %v739
      %v772 = vtanh.pop %v740
      %v773 = vtanh.pop %v741
      %v774 = vtanh.pop %v742
      %v775 = vtanh.pop %v743
      %v776 = vtanh.pop %v744
      %v777 = vtanh.pop %v745
      %v778 = vtanh.pop %v746
      %v779 = vtanh.pop %v747
      %v780 = vtanh.pop %v748
      %v781 = vtanh.pop %v749
      %v782 = vtanh.pop %v750
      %v783 = vtanh.pop %v751
      %v784 = vtanh.pop %v752
      %v785 = vtanh.pop %v753
      %v786 = vtanh.pop %v754
      %v787 = vtanh.pop %v755
      %v788 = vtanh.pop %v756
      %v789 = vtanh.pop %v757
      %v790 = vtanh.pop %v758
      %v791 = vadd.f32 %v759, 1.0
      %v792 = vadd.f32 %v760, 1.0
      %v793 = vadd.f32 %v761, 1.0
      %v794 = vadd.f32 %v762, 1.0
      %v795 = vadd.f32 %v763, 1.0
      %v796 = vadd.f32 %v764, 1.0
      %v797 = vadd.f32 %v765, 1.0
      %v798 = vadd.f32 %v766, 1.0
      %v799 = vadd.f32 %v767, 1.0
      %v800 = vadd.f32 %v768, 1.0
      %v801 = vadd.f32 %v769, 1.0
      %v802 = vadd.f32 %v770, 1.0
      %v803 = vadd.f32 %v771, 1.0
      %v804 = vadd.f32 %v772, 1.0
      %v805 = vadd.f32 %v773, 1.0
      %v806 = vadd.f32 %v774, 1.0
      %v807 = vadd.f32 %v775, 1.0
      %v808 = vadd.f32 %v776, 1.0
      %v809 = vadd.f32 %v777, 1.0
      %v810 = vadd.f32 %v778, 1.0
      %v811 = vadd.f32 %v779, 1.0
      %v812 = vadd.f32 %v780, 1.0
      %v813 = vadd.f32 %v781, 1.0
      %v814 = vadd.f32 %v782, 1.0
      %v815 = vadd.f32 %v783, 1.0
      %v816 = vadd.f32 %v784, 1.0
      %v817 = vadd.f32 %v785, 1.0
      %v818 = vadd.f32 %v786, 1.0
      %v819 = vadd.f32 %v787, 1.0
      %v820 = vadd.f32 %v788, 1.0
      %v821 = vadd.f32 %v789, 1.0
      %v822 = vadd.f32 %v790, 1.0
      %v823 = vmul.f32 %v791, 0.5
      %v824 = vmul.f32 %v792, 0.5
      %v825 = vmul.f32 %v793, 0.5
      %v826 = vmul.f32 %v794, 0.5
      %v827 = vmul.f32 %v795, 0.5
      %v828 = vmul.f32 %v796, 0.5
      %v829 = vmul.f32 %v797, 0.5
      %v830 = vmul.f32 %v798, 0.5
      %v831 = vmul.f32 %v799, 0.5
      %v832 = vmul.f32 %v800, 0.5
      %v833 = vmul.f32 %v801, 0.5
      %v834 = vmul.f32 %v802, 0.5
      %v835 = vmul.f32 %v803, 0.5
      %v836 = vmul.f32 %v804, 0.5
      %v837 = vmul.f32 %v805, 0.5
      %v838 = vmul.f32 %v806, 0.5
      %v839 = vmul.f32 %v807, 0.5
      %v840 = vmul.f32 %v808, 0.5
      %v841 = vmul.f32 %v809, 0.5
      %v842 = vmul.f32 %v810, 0.5
      %v843 = vmul.f32 %v811, 0.5
      %v844 = vmul.f32 %v812, 0.5
      %v845 = vmul.f32 %v813, 0.5
      %v846 = vmul.f32 %v814, 0.5
      %v847 = vmul.f32 %v815, 0.5
      %v848 = vmul.f32 %v816, 0.5
      %v849 = vmul.f32 %v817, 0.5
      %v850 = vmul.f32 %v818, 0.5
      %v851 = vmul.f32 %v819, 0.5
      %v852 = vmul.f32 %v820, 0.5
      %v853 = vmul.f32 %v821, 0.5
      %v854 = vmul.f32 %v822, 0.5
      %v855 = vmul.f32 %v473, %v823
      %v856 = vmul.f32 %v476, %v824
      %v857 = vmul.f32 %v481, %v825
      %v858 = vmul.f32 %v484, %v826
      %v859 = vmul.f32 %v489, %v827
      %v860 = vmul.f32 %v492, %v828
      %v861 = vmul.f32 %v497, %v829
      %v862 = vmul.f32 %v500, %v830
      %v863 = vmul.f32 %v505, %v831
      %v864 = vmul.f32 %v508, %v832
      %v865 = vmul.f32 %v513, %v833
      %v866 = vmul.f32 %v516, %v834
      %v867 = vmul.f32 %v521, %v835
      %v868 = vmul.f32 %v524, %v836
      %v869 = vmul.f32 %v529, %v837
      %v870 = vmul.f32 %v532, %v838
      %v871 = vmul.f32 %v537, %v839
      %v872 = vmul.f32 %v540, %v840
      %v873 = vmul.f32 %v545, %v841
      %v874 = vmul.f32 %v548, %v842
      %v875 = vmul.f32 %v553, %v843
      %v876 = vmul.f32 %v556, %v844
      %v877 = vmul.f32 %v561, %v845
      %v878 = vmul.f32 %v564, %v846
      %v879 = vmul.f32 %v569, %v847
      %v880 = vmul.f32 %v572, %v848
      %v881 = vmul.f32 %v577, %v849
      %v882 = vmul.f32 %v580, %v850
      %v883 = vmul.f32 %v585, %v851
      %v884 = vmul.f32 %v588, %v852
      %v885 = vmul.f32 %v593, %v853
      %v886 = vmul.f32 %v596, %v854
      %v887 = vpack.c.bf16 %v856, %v855
      %v888 = vpack.c.bf16 %v858, %v857
      %v889 = vpack.c.bf16 %v860, %v859
      %v890 = vpack.c.bf16 %v862, %v861
      %v891 = vpack.c.bf16 %v864, %v863
      %v892 = vpack.c.bf16 %v866, %v865
      %v893 = vpack.c.bf16 %v868, %v867
      %v894 = vpack.c.bf16 %v870, %v869
      %v895 = vpack.c.bf16 %v872, %v871
      %v896 = vpack.c.bf16 %v874, %v873
      %v897 = vpack.c.bf16 %v876, %v875
      %v898 = vpack.c.bf16 %v878, %v877
      %v899 = vpack.c.bf16 %v880, %v879
      %v900 = vpack.c.bf16 %v882, %v881
      %v901 = vpack.c.bf16 %v884, %v883
      %v902 = vpack.c.bf16 %v886, %v885
      %v903 = vld [vmem:[%s3] sm:$0xf]
      %v904 = vld [vmem:[%s3 + $0x4] sm:$0xf]
      %v905 = vld [vmem:[%s3 + $0x8] sm:$0xf]
      %v906 = vld [vmem:[%s3 + $0xc] sm:$0xf]
      %v907 = vld [vmem:[%s4] sm:$0x1]
      %v909 = vlaneseq
      %v910 = vshrl.u32 %v909, 7
      %v911 = vsub.s32 0, %v910
      %v912 = vrot.slane %v907, %v911
      %v918 = vunpack.c.l.b16 %v903
      %v919 = vunpack.c.l.b16 %v904
      %v920 = vunpack.c.l.b16 %v905
      %v921 = vunpack.c.l.b16 %v906
      %v922 = vpack.c.b16 %v919, %v918
      %v923 = vpack.c.b16 %v921, %v920
      %vm926 = vcmask 261120
      %v928 = vsel %vm926, %v887, 0
      %v931 = vsel %vm926, %v888, 0
      %v934 = vsel %vm926, %v889, 0
      %v937 = vsel %vm926, %v890, 0
      %v940 = vsel %vm926, %v891, 0
      %v943 = vsel %vm926, %v892, 0
      %v946 = vsel %vm926, %v893, 0
      %v949 = vsel %vm926, %v894, 0
      %v952 = vsel %vm926, %v895, 0
      %v955 = vsel %vm926, %v896, 0
      %v958 = vsel %vm926, %v897, 0
      %v961 = vsel %vm926, %v898, 0
      %v964 = vsel %vm926, %v899, 0
      %v967 = vsel %vm926, %v900, 0
      %v970 = vsel %vm926, %v901, 0
      %v973 = vsel %vm926, %v902, 0
      %975 = vmatprep.subr.bf16.mxu0 0
      %976 = vmatpush1.bf16.msra.mxu0 0
      %977 = vmatprep.subr.bf16.mxu0 0
      %978 = vmatpush1.bf16.msra.mxu0 0
      %979 = vmatprep.subr.bf16.mxu0 0
      %980 = vmatpush1.bf16.msra.mxu0 0
      %981 = vmatprep.subr.bf16.mxu0 0
      %982 = vmatpush1.bf16.msra.mxu0 0
      %983 = vmatprep.subr.bf16.mxu0 0
      %984 = vmatpush1.bf16.msra.mxu0 0
      %985 = vmatprep.subr.bf16.mxu0 0
      %986 = vmatpush1.bf16.msra.mxu0 0
      %987 = vmatprep.subr.bf16.mxu0 0
      %988 = vmatpush1.bf16.msra.mxu0 %v923
      %989 = vmatprep.subr.bf16.mxu0 0
      %990 = vmatpush1.bf16.msra.mxu0 %v922
      %991 = vmatprep.subr.bf16.mxu0 0
      %992 = vmatpush2.bf16.msra.mxu0 0
      %993 = vmatprep.subr.bf16.mxu0 0
      %994 = vmatpush2.bf16.msra.mxu0 0
      %995 = vmatprep.subr.bf16.mxu0 0
      %996 = vmatpush2.bf16.msra.mxu0 0
      %997 = vmatprep.subr.bf16.mxu0 0
      %998 = vmatpush2.bf16.msra.mxu0 0
      %999 = vmatprep.subr.bf16.mxu0 0
      %1000 = vmatpush2.bf16.msra.mxu0 0
      %1001 = vmatprep.subr.bf16.mxu0 0
      %1002 = vmatpush2.bf16.msra.mxu0 0
      %1003 = vmatprep.subr.bf16.mxu0 0
      %1004 = vmatpush2.bf16.msra.mxu0 0
      %1005 = vmatprep.subr.bf16.mxu0 0
      %1006 = vmatpush2.bf16.msra.mxu0 0
      %1007 = vmatprep.mubr.bf16.mxu0 0
      %1008 = vmatmul.mubr.bf16.gmra.mxu0 %v928
      %v1009 = vpop.f32.mrf.mxu0
      %v1010 = vadd.f32 %v912, %v1009
      %v1011 = vpop.f32.mrf.mxu0
      %v1012 = vpop.f32.mrf.mxu0
      %v1013 = vadd.f32 %v912, %v1012
      %v1014 = vpop.f32.mrf.mxu0
      %1015 = vmatprep.mubr.bf16.mxu0 0
      %1016 = vmatmul.mubr.bf16.gmra.mxu0 %v931
      %v1017 = vpop.f32.mrf.mxu0
      %v1018 = vadd.f32 %v912, %v1017
      %v1019 = vpop.f32.mrf.mxu0
      %v1020 = vpop.f32.mrf.mxu0
      %v1021 = vadd.f32 %v912, %v1020
      %v1022 = vpop.f32.mrf.mxu0
      %1023 = vmatprep.mubr.bf16.mxu0 0
      %1024 = vmatmul.mubr.bf16.gmra.mxu0 %v934
      %v1025 = vpop.f32.mrf.mxu0
      %v1026 = vadd.f32 %v912, %v1025
      %v1027 = vpop.f32.mrf.mxu0
      %v1028 = vpop.f32.mrf.mxu0
      %v1029 = vadd.f32 %v912, %v1028
      %v1030 = vpop.f32.mrf.mxu0
      %1031 = vmatprep.mubr.bf16.mxu0 0
      %1032 = vmatmul.mubr.bf16.gmra.mxu0 %v937
      %v1033 = vpop.f32.mrf.mxu0
      %v1034 = vadd.f32 %v912, %v1033
      %v1035 = vpop.f32.mrf.mxu0
      %v1036 = vpop.f32.mrf.mxu0
      %v1037 = vadd.f32 %v912, %v1036
      %v1038 = vpop.f32.mrf.mxu0
      %1039 = vmatprep.mubr.bf16.mxu0 0
      %1040 = vmatmul.mubr.bf16.gmra.mxu0 %v940
      %v1041 = vpop.f32.mrf.mxu0
      %v1042 = vadd.f32 %v912, %v1041
      %v1043 = vpop.f32.mrf.mxu0
      %v1044 = vpop.f32.mrf.mxu0
      %v1045 = vadd.f32 %v912, %v1044
      %v1046 = vpop.f32.mrf.mxu0
      %1047 = vmatprep.mubr.bf16.mxu0 0
      %1048 = vmatmul.mubr.bf16.gmra.mxu0 %v943
      %v1049 = vpop.f32.mrf.mxu0
      %v1050 = vadd.f32 %v912, %v1049
      %v1051 = vpop.f32.mrf.mxu0
      %v1052 = vpop.f32.mrf.mxu0
      %v1053 = vadd.f32 %v912, %v1052
      %v1054 = vpop.f32.mrf.mxu0
      %1055 = vmatprep.mubr.bf16.mxu0 0
      %1056 = vmatmul.mubr.bf16.gmra.mxu0 %v946
      %v1057 = vpop.f32.mrf.mxu0
      %v1058 = vadd.f32 %v912, %v1057
      %v1059 = vpop.f32.mrf.mxu0
      %v1060 = vpop.f32.mrf.mxu0
      %v1061 = vadd.f32 %v912, %v1060
      %v1062 = vpop.f32.mrf.mxu0
      %1063 = vmatprep.mubr.bf16.mxu0 0
      %1064 = vmatmul.mubr.bf16.gmra.mxu0 %v949
      %v1065 = vpop.f32.mrf.mxu0
      %v1066 = vadd.f32 %v912, %v1065
      %v1067 = vpop.f32.mrf.mxu0
      %v1068 = vpop.f32.mrf.mxu0
      %v1069 = vadd.f32 %v912, %v1068
      %v1070 = vpop.f32.mrf.mxu0
      %1071 = vmatprep.mubr.bf16.mxu0 0
      %1072 = vmatmul.mubr.bf16.gmra.mxu0 %v952
      %v1073 = vpop.f32.mrf.mxu0
      %v1074 = vadd.f32 %v912, %v1073
      %v1075 = vpop.f32.mrf.mxu0
      %v1076 = vpop.f32.mrf.mxu0
      %v1077 = vadd.f32 %v912, %v1076
      %v1078 = vpop.f32.mrf.mxu0
      %1079 = vmatprep.mubr.bf16.mxu0 0
      %1080 = vmatmul.mubr.bf16.gmra.mxu0 %v955
      %v1081 = vpop.f32.mrf.mxu0
      %v1082 = vadd.f32 %v912, %v1081
      %v1083 = vpop.f32.mrf.mxu0
      %v1084 = vpop.f32.mrf.mxu0
      %v1085 = vadd.f32 %v912, %v1084
      %v1086 = vpop.f32.mrf.mxu0
      %1087 = vmatprep.mubr.bf16.mxu0 0
      %1088 = vmatmul.mubr.bf16.gmra.mxu0 %v958
      %v1089 = vpop.f32.mrf.mxu0
      %v1090 = vadd.f32 %v912, %v1089
      %v1091 = vpop.f32.mrf.mxu0
      %v1092 = vpop.f32.mrf.mxu0
      %v1093 = vadd.f32 %v912, %v1092
      %v1094 = vpop.f32.mrf.mxu0
      %1095 = vmatprep.mubr.bf16.mxu0 0
      %1096 = vmatmul.mubr.bf16.gmra.mxu0 %v961
      %v1097 = vpop.f32.mrf.mxu0
      %v1098 = vadd.f32 %v912, %v1097
      %v1099 = vpop.f32.mrf.mxu0
      %v1100 = vpop.f32.mrf.mxu0
      %v1101 = vadd.f32 %v912, %v1100
      %v1102 = vpop.f32.mrf.mxu0
      %1103 = vmatprep.mubr.bf16.mxu0 0
      %1104 = vmatmul.mubr.bf16.gmra.mxu0 %v964
      %v1105 = vpop.f32.mrf.mxu0
      %v1106 = vadd.f32 %v912, %v1105
      %v1107 = vpop.f32.mrf.mxu0
      %v1108 = vpop.f32.mrf.mxu0
      %v1109 = vadd.f32 %v912, %v1108
      %v1110 = vpop.f32.mrf.mxu0
      %1111 = vmatprep.mubr.bf16.mxu0 0
      %1112 = vmatmul.mubr.bf16.gmra.mxu0 %v967
      %v1113 = vpop.f32.mrf.mxu0
      %v1114 = vadd.f32 %v912, %v1113
      %v1115 = vpop.f32.mrf.mxu0
      %v1116 = vpop.f32.mrf.mxu0
      %v1117 = vadd.f32 %v912, %v1116
      %v1118 = vpop.f32.mrf.mxu0
      %1119 = vmatprep.mubr.bf16.mxu0 0
      %1120 = vmatmul.mubr.bf16.gmra.mxu0 %v970
      %v1121 = vpop.f32.mrf.mxu0
      %v1122 = vadd.f32 %v912, %v1121
      %v1123 = vpop.f32.mrf.mxu0
      %v1124 = vpop.f32.mrf.mxu0
      %v1125 = vadd.f32 %v912, %v1124
      %v1126 = vpop.f32.mrf.mxu0
      %1127 = vmatprep.mubr.bf16.mxu0 0
      %1128 = vmatmul.mubr.bf16.gmra.mxu0 %v973
      %v1129 = vpop.f32.mrf.mxu0
      %v1130 = vadd.f32 %v912, %v1129
      %v1131 = vpop.f32.mrf.mxu0
      %v1132 = vpop.f32.mrf.mxu0
      %v1133 = vadd.f32 %v912, %v1132
      %v1134 = vpop.f32.mrf.mxu0
      %1135 = vdwg.mxu0
      %v1136 = vpack.c.bf16 %v1013, %v1010
      %v1137 = vpack.c.bf16 %v1021, %v1018
      %v1138 = vpack.c.bf16 %v1029, %v1026
      %v1139 = vpack.c.bf16 %v1037, %v1034
      %v1140 = vpack.c.bf16 %v1045, %v1042
      %v1141 = vpack.c.bf16 %v1053, %v1050
      %v1142 = vpack.c.bf16 %v1061, %v1058
      %v1143 = vpack.c.bf16 %v1069, %v1066
      %v1144 = vpack.c.bf16 %v1077, %v1074
      %v1145 = vpack.c.bf16 %v1085, %v1082
      %v1146 = vpack.c.bf16 %v1093, %v1090
      %v1147 = vpack.c.bf16 %v1101, %v1098
      %v1148 = vpack.c.bf16 %v1109, %v1106
      %v1149 = vpack.c.bf16 %v1117, %v1114
      %v1150 = vpack.c.bf16 %v1125, %v1122
      %v1151 = vpack.c.bf16 %v1133, %v1130
      %v1168 = vunpack.c.l.b16 %v1136
      %v1169 = vunpack.c.h.b16 %v1136
      %v1170 = vunpack.c.l.b16 %v1137
      %v1171 = vunpack.c.h.b16 %v1137
      %v1172 = vunpack.c.l.b16 %v1138
      %v1173 = vunpack.c.h.b16 %v1138
      %v1174 = vunpack.c.l.b16 %v1139
      %v1175 = vunpack.c.h.b16 %v1139
      %v1176 = vunpack.c.l.b16 %v1140
      %v1177 = vunpack.c.h.b16 %v1140
      %v1178 = vunpack.c.l.b16 %v1141
      %v1179 = vunpack.c.h.b16 %v1141
      %v1180 = vunpack.c.l.b16 %v1142
      %v1181 = vunpack.c.h.b16 %v1142
      %v1182 = vunpack.c.l.b16 %v1143
      %v1183 = vunpack.c.h.b16 %v1143
      %v1184 = vunpack.c.l.b16 %v1144
      %v1185 = vunpack.c.h.b16 %v1144
      %v1186 = vunpack.c.l.b16 %v1145
      %v1187 = vunpack.c.h.b16 %v1145
      %v1188 = vunpack.c.l.b16 %v1146
      %v1189 = vunpack.c.h.b16 %v1146
      %v1190 = vunpack.c.l.b16 %v1147
      %v1191 = vunpack.c.h.b16 %v1147
      %v1192 = vunpack.c.l.b16 %v1148
      %v1193 = vunpack.c.h.b16 %v1148
      %v1194 = vunpack.c.l.b16 %v1149
      %v1195 = vunpack.c.h.b16 %v1149
      %v1196 = vunpack.c.l.b16 %v1150
      %v1197 = vunpack.c.h.b16 %v1150
      %v1198 = vunpack.c.l.b16 %v1151
      %v1199 = vunpack.c.h.b16 %v1151
      %v1200 = vpack.c.b16 %v1168, %v1168
      %v1201 = vpack.c.b16 %v1169, %v1169
      %v1202 = vpack.c.b16 %v1170, %v1170
      %v1203 = vpack.c.b16 %v1171, %v1171
      %v1204 = vpack.c.b16 %v1172, %v1172
      %v1205 = vpack.c.b16 %v1173, %v1173
      %v1206 = vpack.c.b16 %v1174, %v1174
      %v1207 = vpack.c.b16 %v1175, %v1175
      %v1208 = vpack.c.b16 %v1176, %v1176
      %v1209 = vpack.c.b16 %v1177, %v1177
      %v1210 = vpack.c.b16 %v1178, %v1178
      %v1211 = vpack.c.b16 %v1179, %v1179
      %v1212 = vpack.c.b16 %v1180, %v1180
      %v1213 = vpack.c.b16 %v1181, %v1181
      %v1214 = vpack.c.b16 %v1182, %v1182
      %v1215 = vpack.c.b16 %v1183, %v1183
      %v1216 = vpack.c.b16 %v1184, %v1184
      %v1217 = vpack.c.b16 %v1185, %v1185
      %v1218 = vpack.c.b16 %v1186, %v1186
      %v1219 = vpack.c.b16 %v1187, %v1187
      %v1220 = vpack.c.b16 %v1188, %v1188
      %v1221 = vpack.c.b16 %v1189, %v1189
      %v1222 = vpack.c.b16 %v1190, %v1190
      %v1223 = vpack.c.b16 %v1191, %v1191
      %v1224 = vpack.c.b16 %v1192, %v1192
      %v1225 = vpack.c.b16 %v1193, %v1193
      %v1226 = vpack.c.b16 %v1194, %v1194
      %v1227 = vpack.c.b16 %v1195, %v1195
      %v1228 = vpack.c.b16 %v1196, %v1196
      %v1229 = vpack.c.b16 %v1197, %v1197
      %v1230 = vpack.c.b16 %v1198, %v1198
      %v1231 = vpack.c.b16 %v1199, %v1199
      %vm1264 = vcmask 257024
      %1265 = vst.msk [vmem:[%s262] sm:$0xf] %vm1264, %v1200
      %1266 = vst.msk [vmem:[%s262 + $0x4] sm:$0xf] %vm1264, %v1201
      %1267 = vst.msk [vmem:[%s262 + $0x8] sm:$0xf] %vm1264, %v1202
      %1268 = vst.msk [vmem:[%s262 + $0xc] sm:$0xf] %vm1264, %v1203
      %1269 = vst.msk [vmem:[%s262 + $0x10] sm:$0xf] %vm1264, %v1204
      %1270 = vst.msk [vmem:[%s262 + $0x14] sm:$0xf] %vm1264, %v1205
      %1271 = vst.msk [vmem:[%s262 + $0x18] sm:$0xf] %vm1264, %v1206
      %1272 = vst.msk [vmem:[%s262 + $0x1c] sm:$0xf] %vm1264, %v1207
      %1273 = vst.msk [vmem:[%s262 + $0x20] sm:$0xf] %vm1264, %v1208
      %1274 = vst.msk [vmem:[%s262 + $0x24] sm:$0xf] %vm1264, %v1209
      %1275 = vst.msk [vmem:[%s262 + $0x28] sm:$0xf] %vm1264, %v1210
      %1276 = vst.msk [vmem:[%s262 + $0x2c] sm:$0xf] %vm1264, %v1211
      %1277 = vst.msk [vmem:[%s262 + $0x30] sm:$0xf] %vm1264, %v1212
      %1278 = vst.msk [vmem:[%s262 + $0x34] sm:$0xf] %vm1264, %v1213
      %1279 = vst.msk [vmem:[%s262 + $0x38] sm:$0xf] %vm1264, %v1214
      %1280 = vst.msk [vmem:[%s262 + $0x3c] sm:$0xf] %vm1264, %v1215
      %1281 = vst.msk [vmem:[%s262 + $0x40] sm:$0xf] %vm1264, %v1216
      %1282 = vst.msk [vmem:[%s262 + $0x44] sm:$0xf] %vm1264, %v1217
      %1283 = vst.msk [vmem:[%s262 + $0x48] sm:$0xf] %vm1264, %v1218
      %1284 = vst.msk [vmem:[%s262 + $0x4c] sm:$0xf] %vm1264, %v1219
      %1285 = vst.msk [vmem:[%s262 + $0x50] sm:$0xf] %vm1264, %v1220
      %1286 = vst.msk [vmem:[%s262 + $0x54] sm:$0xf] %vm1264, %v1221
      %1287 = vst.msk [vmem:[%s262 + $0x58] sm:$0xf] %vm1264, %v1222
      %1288 = vst.msk [vmem:[%s262 + $0x5c] sm:$0xf] %vm1264, %v1223
      %1289 = vst.msk [vmem:[%s262 + $0x60] sm:$0xf] %vm1264, %v1224
      %1290 = vst.msk [vmem:[%s262 + $0x64] sm:$0xf] %vm1264, %v1225
      %1291 = vst.msk [vmem:[%s262 + $0x68] sm:$0xf] %vm1264, %v1226
      %1292 = vst.msk [vmem:[%s262 + $0x6c] sm:$0xf] %vm1264, %v1227
      %1293 = vst.msk [vmem:[%s262 + $0x70] sm:$0xf] %vm1264, %v1228
      %1294 = vst.msk [vmem:[%s262 + $0x74] sm:$0xf] %vm1264, %v1229
      %1295 = vst.msk [vmem:[%s262 + $0x78] sm:$0xf] %vm1264, %v1230
      %1296 = vst.msk [vmem:[%s262 + $0x7c] sm:$0xf] %vm1264, %v1231
      %s1297 = smul.u32 32, %s21
      %p1298 = scmp.lt.s32.totalorder %s20, 1
      %s1299 = scalar_select %p1298, %s20, 1
      %p1300 = scmp.lt.s32.totalorder %s1297, 31
      %s1301 = scalar_select %p1300, %s1297, 31
      %s1302 = smul.addr %s1299, 32
      %s1303 = sadd.s32 %s1301, %s1302
      %s1304 = smul.addr %s1303, 4
      %s1305 = scalar_lea.vmem %s5, %s1304
      // Predicated region
      $region41: #{galerkin_transformer_2d.7} parent=39 // pred_check
        %p1306 = pneg %p160
      $region42: #{galerkin_transformer_2d.7} parent=39 // pred_check_branch
        %1308 = sbr.rel (%p1306) target = $region44
      $region43: #{galerkin_transformer_2d.7} parent=39 // pred_region
        %s1309 = smul.u32 32, %s21
      $region44: #{galerkin_transformer_2d.7} parent=39 // pred_fallthru
        _
    $region40: #{galerkin_transformer_2d.7} parent=5 // pred_fallthru
      _
    %p1310 = scmp.le.s32.totalorder 2, %s11
    // Predicated region
    $region45: #{galerkin_transformer_2d.7} parent=5 // pred_check
      %p1311 = pneg %p1310
    $region46: #{galerkin_transformer_2d.7} parent=5 // pred_check_branch
      %1313 = sbr.rel (%p1311) target = $region48
    $region47: #{galerkin_transformer_2d.7} parent=5 // pred_region
      %s1314 = ssub.s32 %s11, 2
      // Predicated region
      $region49: #{galerkin_transformer_2d.7} parent=47 // pred_check
        %p1315 = pneg %p166
      $region50: #{galerkin_transformer_2d.7} parent=47 // pred_check_branch
        %1317 = sbr.rel (%p1315) target = $region52
      $region51: #{galerkin_transformer_2d.7} parent=47 // pred_region
        %s1318 = smul.u32 32, %s23
        %p1319 = scmp.lt.s32.totalorder %s22, 1
        %s1320 = scalar_select %p1319, %s22, 1
        %p1321 = scmp.lt.s32.totalorder %s1318, 31
        %s1322 = scalar_select %p1321, %s1318, 31
        %s1323 = smul.addr %s1320, 32
        %s1324 = sadd.s32 %s1322, %s1323
        %s1325 = smul.addr %s1324, 4
        %s1326 = scalar_lea.vmem %s5, %s1325
      $region52: #{galerkin_transformer_2d.7} parent=47 // pred_fallthru
        _
    $region48: #{galerkin_transformer_2d.7} parent=5 // pred_fallthru
      _
  $region6: #{galerkin_transformer_2d.7} parent=0 // loop_footer
    %s15 = sadd.s32 1, %s11
  $region7: #{galerkin_transformer_2d.7} parent=0 // loop_footer_branch
    %10 = sbr.rel target = $region3
  $region8: #{galerkin_transformer_2d.7} parent=0 // loop_exit
    _

// kernel: galerkin_transformer_2d.8
$region0: #{galerkin_transformer_2d.8}
  #allocation0 [shape = 'u32[]', space=smem, size = 0x4, offset = 0x4, fixed_abs, tag = 'smem constant byte address 0x4 - core index']
  #allocation1 [shape = 'u32[144,128]{1,0:T(1,128)}', space=vmem, size = 0x12000, scoped, tag = 'internal scratch']
  %s0 = inlined_call_operand.vmem [shape: bf16[2,256,32], index: 0, kind: input, shape index: {}]
  %s1 = inlined_call_operand.vmem [shape: bf16[32,64], index: 1, kind: input, shape index: {}]
  %s2 = inlined_call_operand.vmem [shape: f32[1,64], index: 2, kind: input, shape index: {}]
  %s3 = inlined_call_operand.vmem [shape: f32[1,64], index: 3, kind: input, shape index: {}]
  %s4 = inlined_call_operand.vmem [shape: f32[1,64], index: 4, kind: input, shape index: {}]
  %s5 = inlined_call_operand.vmem [shape: bf16[64,64], index: 5, kind: input, shape index: {}]
  %s6 = inlined_call_operand.vmem [shape: f32[2,1,32,32], index: 6, kind: output, shape index: {}]
  %s7 = sld [smem:[#allocation0]]
  $region61: #{galerkin_transformer_2d.8} parent=0
    _
  %s9 = ssub.s32 1, %s7
  %s10 = scalar_select 0, %s9, %s7
  loop: start=0, step=1, limit=4
  $region2: #{galerkin_transformer_2d.8} parent=0 // loop_pre_header
    _
  $region3: #{galerkin_transformer_2d.8} parent=0 // loop_header
    %s12 = sphi 0, %s16
    %p13 = scmp.ge.s32.totalorder %s12, 4
    %s19 = sphi 0, %s38
    %s20 = sphi 0, %s34
    %s21 = sphi 0, %s30
    %s22 = sphi 0, %s19
    %s23 = sphi 0, %s20
    %s24 = sphi 0, %s21
    %s25 = sphi 0, %s22
    %s26 = sphi 0, %s23
    %s27 = sphi 0, %s24
    %s45 = sphi 0, %s47
    %s48 = sphi 0, %s45
    %s49 = sphi 0, %s48
    %s65 = sphi 0, %s49
    %s69 = sphi 0, %s69
    %s71 = sphi 0, %s69
    %s72 = sphi 0, %s71
    %s86 = sphi 0, %s72
    %s90 = sphi 0, %s90
    %s92 = sphi 0, %s90
    %s93 = sphi 0, %s92
    %s107 = sphi 0, %s93
    %s111 = sphi 0, %s111
    %s113 = sphi 0, %s111
    %s114 = sphi 0, %s113
    %s128 = sphi 0, %s114
    %s132 = sphi 0, %s132
    %s134 = sphi 0, %s132
    %s135 = sphi 0, %s134
    %s149 = sphi 0, %s135
    %s153 = sphi 0, %s153
    %s155 = sphi 0, %s153
    %s156 = sphi 0, %s155
    %s170 = sphi 0, %s156
    %s178 = sphi 0, %s180
    %s181 = sphi 0, %s178
    %s182 = sphi 0, %s181
    %s198 = sphi 0, %s182
  $region4: #{galerkin_transformer_2d.8} parent=0 // loop_header_branch
    %15 = sbr.rel (%p13) target = $region8
  $region5: #{galerkin_transformer_2d.8} parent=0 // loop_body
    %s17 = ssub.s32 %s12, 1
    %s18 = ssub.s32 %s12, 2
    %s28 = sadd.s32 1, %s21
    %p29 = scmp.ge.s32.totalorder %s28, 1
    %s30 = scalar_select %p29, 0, %s28
    %s31 = sadd.s32 1, %s20
    %s32 = scalar_select %p29, %s31, %s20
    %p33 = scmp.ge.s32.totalorder %s32, 1
    %s34 = scalar_select %p33, 0, %s32
    %s35 = sadd.s32 1, %s19
    %s36 = scalar_select %p33, %s35, %s19
    %p37 = scmp.ge.s32.totalorder %s36, 2
    %s38 = scalar_select %p37, 0, %s36
    %s39 = sadd.s32 %s20, %s21
    %s40 = sadd.s32 %s34, %s30
    %s41 = ssub.s32 %s19, %s38
    %s42 = ssub.s32 %s39, %s40
    %s43 = sor.u32 %s41, %s42
    %p44 = scmp.eq.s32.totalorder %s43, 0
    %s46 = sadd.s32 %s45, 1
    %s47 = scalar_select %p44, %s45, %s46
    %p50 = pneg %p44
    %p51 = scmp.eq.s32.totalorder %s12, 1
    %p52 = por %p50, %p51
    %p53 = scmp.ne.s32.totalorder %s45, %s48
    %p54 = scmp.eq.s32.totalorder %s12, 0
    %p55 = por %p53, %p54
    %p56 = scmp.ne.s32.totalorder %s45, %s48
    %p57 = scmp.eq.s32.totalorder %s17, 1
    %p58 = por %p56, %p57
    %p59 = scmp.ne.s32.totalorder %s48, %s49
    %p60 = scmp.eq.s32.totalorder %s17, 0
    %p61 = por %p59, %p60
    %p62 = scmp.ne.s32.totalorder %s48, %s49
    %p63 = scmp.eq.s32.totalorder %s18, 1
    %p64 = por %p62, %p63
    %p66 = scmp.ne.s32.totalorder %s49, %s65
    %p67 = scmp.eq.s32.totalorder %s18, 0
    %p68 = por %p66, %p67
    %s70 = sadd.s32 %s69, 1
    %p73 = scmp.eq.s32.totalorder %s12, 1
    %p74 = scmp.ne.s32.totalorder %s69, %s71
    %p75 = scmp.eq.s32.totalorder %s12, 0
    %p76 = por %p74, %p75
    %p77 = scmp.ne.s32.totalorder %s69, %s71
    %p78 = scmp.eq.s32.totalorder %s17, 1
    %p79 = por %p77, %p78
    %p80 = scmp.ne.s32.totalorder %s71, %s72
    %p81 = scmp.eq.s32.totalorder %s17, 0
    %p82 = por %p80, %p81
    %p83 = scmp.ne.s32.totalorder %s71, %s72
    %p84 = scmp.eq.s32.totalorder %s18, 1
    %p85 = por %p83, %p84
    %p87 = scmp.ne.s32.totalorder %s72, %s86
    %p88 = scmp.eq.s32.totalorder %s18, 0
    %p89 = por %p87, %p88
    %s91 = sadd.s32 %s90, 1
    %p94 = scmp.eq.s32.totalorder %s12, 1
    %p95 = scmp.ne.s32.totalorder %s90, %s92
    %p96 = scmp.eq.s32.totalorder %s12, 0
    %p97 = por %p95, %p96
    %p98 = scmp.ne.s32.totalorder %s90, %s92
    %p99 = scmp.eq.s32.totalorder %s17, 1
    %p100 = por %p98, %p99
    %p101 = scmp.ne.s32.totalorder %s92, %s93
    %p102 = scmp.eq.s32.totalorder %s17, 0
    %p103 = por %p101, %p102
    %p104 = scmp.ne.s32.totalorder %s92, %s93
    %p105 = scmp.eq.s32.totalorder %s18, 1
    %p106 = por %p104, %p105
    %p108 = scmp.ne.s32.totalorder %s93, %s107
    %p109 = scmp.eq.s32.totalorder %s18, 0
    %p110 = por %p108, %p109
    %s112 = sadd.s32 %s111, 1
    %p115 = scmp.eq.s32.totalorder %s12, 1
    %p116 = scmp.ne.s32.totalorder %s111, %s113
    %p117 = scmp.eq.s32.totalorder %s12, 0
    %p118 = por %p116, %p117
    %p119 = scmp.ne.s32.totalorder %s111, %s113
    %p120 = scmp.eq.s32.totalorder %s17, 1
    %p121 = por %p119, %p120
    %p122 = scmp.ne.s32.totalorder %s113, %s114
    %p123 = scmp.eq.s32.totalorder %s17, 0
    %p124 = por %p122, %p123
    %p125 = scmp.ne.s32.totalorder %s113, %s114
    %p126 = scmp.eq.s32.totalorder %s18, 1
    %p127 = por %p125, %p126
    %p129 = scmp.ne.s32.totalorder %s114, %s128
    %p130 = scmp.eq.s32.totalorder %s18, 0
    %p131 = por %p129, %p130
    %s133 = sadd.s32 %s132, 1
    %p136 = scmp.eq.s32.totalorder %s12, 1
    %p137 = scmp.ne.s32.totalorder %s132, %s134
    %p138 = scmp.eq.s32.totalorder %s12, 0
    %p139 = por %p137, %p138
    %p140 = scmp.ne.s32.totalorder %s132, %s134
    %p141 = scmp.eq.s32.totalorder %s17, 1
    %p142 = por %p140, %p141
    %p143 = scmp.ne.s32.totalorder %s134, %s135
    %p144 = scmp.eq.s32.totalorder %s17, 0
    %p145 = por %p143, %p144
    %p146 = scmp.ne.s32.totalorder %s134, %s135
    %p147 = scmp.eq.s32.totalorder %s18, 1
    %p148 = por %p146, %p147
    %p150 = scmp.ne.s32.totalorder %s135, %s149
    %p151 = scmp.eq.s32.totalorder %s18, 0
    %p152 = por %p150, %p151
    %s154 = sadd.s32 %s153, 1
    %p157 = scmp.eq.s32.totalorder %s12, 1
    %p158 = scmp.ne.s32.totalorder %s153, %s155
    %p159 = scmp.eq.s32.totalorder %s12, 0
    %p160 = por %p158, %p159
    %p161 = scmp.ne.s32.totalorder %s153, %s155
    %p162 = scmp.eq.s32.totalorder %s17, 1
    %p163 = por %p161, %p162
    %p164 = scmp.ne.s32.totalorder %s155, %s156
    %p165 = scmp.eq.s32.totalorder %s17, 0
    %p166 = por %p164, %p165
    %p167 = scmp.ne.s32.totalorder %s155, %s156
    %p168 = scmp.eq.s32.totalorder %s18, 1
    %p169 = por %p167, %p168
    %p171 = scmp.ne.s32.totalorder %s156, %s170
    %p172 = scmp.eq.s32.totalorder %s18, 0
    %p173 = por %p171, %p172
    %s174 = ssub.s32 %s19, %s38
    %s175 = ssub.s32 %s20, %s34
    %s176 = sor.u32 %s174, %s175
    %p177 = scmp.eq.s32.totalorder %s176, 0
    %s179 = sadd.s32 %s178, 1
    %s180 = scalar_select %p177, %s178, %s179
    %p183 = pneg %p177
    %p184 = scmp.eq.s32.totalorder %s12, 1
    %p185 = por %p183, %p184
    %p186 = scmp.ne.s32.totalorder %s178, %s181
    %p187 = scmp.eq.s32.totalorder %s12, 0
    %p188 = por %p186, %p187
    %p189 = scmp.ne.s32.totalorder %s178, %s181
    %p190 = scmp.eq.s32.totalorder %s17, 1
    %p191 = por %p189, %p190
    %p192 = scmp.ne.s32.totalorder %s181, %s182
    %p193 = scmp.eq.s32.totalorder %s17, 0
    %p194 = por %p192, %p193
    %p195 = scmp.ne.s32.totalorder %s181, %s182
    %p196 = scmp.eq.s32.totalorder %s18, 1
    %p197 = por %p195, %p196
    %p199 = scmp.ne.s32.totalorder %s182, %s198
    %p200 = scmp.eq.s32.totalorder %s18, 0
    %p201 = por %p199, %p200
    %p202 = scmp.le.s32.totalorder 1, %s12
    %p203 = scmp.lt.s32.totalorder %s12, 3
    %p204 = pnand %p202, %p203
    %p205 = pneg %p204
    // Predicated region
    $region9: #{galerkin_transformer_2d.8} parent=5 // pred_check
      _
    $region10: #{galerkin_transformer_2d.8} parent=5 // pred_check_branch
      %207 = sbr.rel (%p204) target = $region12
    $region11: #{galerkin_transformer_2d.8} parent=5 // pred_region
      %s208 = ssub.s32 %s12, 1
      // Predicated region
      $region13: #{galerkin_transformer_2d.8} parent=11 // pred_check
        %p209 = pneg %p82
      $region14: #{galerkin_transformer_2d.8} parent=11 // pred_check_branch
        %211 = sbr.rel (%p209) target = $region16
      $region15: #{galerkin_transformer_2d.8} parent=11 // pred_region
        _
      $region16: #{galerkin_transformer_2d.8} parent=11 // pred_fallthru
        _
      // Predicated region
      $region17: #{galerkin_transformer_2d.8} parent=11 // pred_check
        %p212 = pneg %p103
      $region18: #{galerkin_transformer_2d.8} parent=11 // pred_check_branch
        %214 = sbr.rel (%p212) target = $region20
      $region19: #{galerkin_transformer_2d.8} parent=11 // pred_region
        _
      $region20: #{galerkin_transformer_2d.8} parent=11 // pred_fallthru
        _
      // Predicated region
      $region21: #{galerkin_transformer_2d.8} parent=11 // pred_check
        %p215 = pneg %p124
      $region22: #{galerkin_transformer_2d.8} parent=11 // pred_check_branch
        %217 = sbr.rel (%p215) target = $region24
      $region23: #{galerkin_transformer_2d.8} parent=11 // pred_region
        _
      $region24: #{galerkin_transformer_2d.8} parent=11 // pred_fallthru
        _
      // Predicated region
      $region25: #{galerkin_transformer_2d.8} parent=11 // pred_check
        %p218 = pneg %p145
      $region26: #{galerkin_transformer_2d.8} parent=11 // pred_check_branch
        %220 = sbr.rel (%p218) target = $region28
      $region27: #{galerkin_transformer_2d.8} parent=11 // pred_region
        _
      $region28: #{galerkin_transformer_2d.8} parent=11 // pred_fallthru
        _
      // Predicated region
      $region29: #{galerkin_transformer_2d.8} parent=11 // pred_check
        %p221 = pneg %p166
      $region30: #{galerkin_transformer_2d.8} parent=11 // pred_check_branch
        %223 = sbr.rel (%p221) target = $region32
      $region31: #{galerkin_transformer_2d.8} parent=11 // pred_region
        _
      $region32: #{galerkin_transformer_2d.8} parent=11 // pred_fallthru
        _
    $region12: #{galerkin_transformer_2d.8} parent=5 // pred_fallthru
      _
    %p224 = scmp.lt.s32.totalorder %s12, 2
    // Predicated region
    $region33: #{galerkin_transformer_2d.8} parent=5 // pred_check
      %p225 = pneg %p224
    $region34: #{galerkin_transformer_2d.8} parent=5 // pred_check_branch
      %227 = sbr.rel (%p225) target = $region36
    $region35: #{galerkin_transformer_2d.8} parent=5 // pred_region
      // Predicated region
      $region37: #{galerkin_transformer_2d.8} parent=35 // pred_check
        %p228 = pneg %p55
      $region38: #{galerkin_transformer_2d.8} parent=35 // pred_check_branch
        %230 = sbr.rel (%p228) target = $region40
      $region39: #{galerkin_transformer_2d.8} parent=35 // pred_region
        %s231 = sadd.s32 %s20, %s21
        %s232 = smul.u32 32, %s231
        %p233 = scmp.lt.s32.totalorder %s19, 1
        %s234 = scalar_select %p233, %s19, 1
        %p235 = scmp.lt.s32.totalorder %s232, 31
        %s236 = scalar_select %p235, %s232, 31
        %s237 = smul.addr %s234, 32
        %s238 = sadd.s32 %s236, %s237
        %s239 = smul.addr %s238, 4
        %s240 = scalar_lea.vmem %s0, %s239
        %s241 = sadd.s32 %s20, %s21
        %s242 = smul.u32 32, %s241
      $region40: #{galerkin_transformer_2d.8} parent=35 // pred_fallthru
        _
    $region36: #{galerkin_transformer_2d.8} parent=5 // pred_fallthru
      _
    %p243 = scmp.le.s32.totalorder 1, %s12
    %p244 = scmp.lt.s32.totalorder %s12, 3
    %p245 = pnand %p243, %p244
    %p246 = pneg %p245
    // Predicated region
    $region41: #{galerkin_transformer_2d.8} parent=5 // pred_check
      _
    $region42: #{galerkin_transformer_2d.8} parent=5 // pred_check_branch
      %248 = sbr.rel (%p245) target = $region44
    $region43: #{galerkin_transformer_2d.8} parent=5 // pred_region
      %s249 = ssub.s32 %s12, 1
      %s250 = sadd.s32 %s23, %s24
      %s251 = smul.u32 32, %s250
      %p252 = scmp.lt.s32.totalorder %s22, 1
      %s253 = scalar_select %p252, %s22, 1
      %p254 = scmp.lt.s32.totalorder %s251, 31
      %s255 = scalar_select %p254, %s251, 31
      %s256 = smul.addr %s253, 32
      %s257 = sadd.s32 %s255, %s256
      %s258 = smul.addr %s257, 4
      %s259 = scalar_lea.vmem %s0, %s258
      %p260 = pneg %p61
      %p261 = pneg %p58
      %p262 = pneg %p82
      %p263 = pneg %p79
      %p264 = pneg %p103
      %p265 = pneg %p100
      %p266 = pneg %p124
      %p267 = pneg %p121
      %p268 = pneg %p145
      %p269 = pneg %p142
      %p270 = pneg %p166
      %p271 = pneg %p163
      %p272 = pneg %p194
      %p273 = pneg %p191
      %p274 = scmp.lt.s32.totalorder %s22, 1
      %s275 = scalar_select %p274, %s22, 1
      %p276 = scmp.lt.s32.totalorder %s23, 0
      %s277 = scalar_select %p276, %s23, 0
      %s278 = smul.addr %s277, 4
      %s279 = smul.addr %s275, 4
      %s280 = sadd.s32 %s278, %s279
      %s281 = smul.addr %s280, 8
      %s282 = scalar_lea.vmem %s6, %s281
      %s283 = sadd.s32 %s23, %s24
      %s284 = smul.u32 32, %s283
      %p285 = scmp.lt.s32.totalorder %s22, 1
      %s286 = scalar_select %p285, %s22, 1
      %p287 = scmp.lt.s32.totalorder %s284, 31
      %s288 = scalar_select %p287, %s284, 31
      %s289 = smul.addr %s286, 32
      %s290 = sadd.s32 %s288, %s289
      %s291 = smul.addr %s290, 4
      %s292 = scalar_lea.vmem %s0, %s291
      %s293 = sadd.s32 %s23, %s24
      %s294 = smul.u32 32, %s293
      %p295 = scmp.lt.s32.totalorder %s22, 1
      %s296 = scalar_select %p295, %s22, 1
      %p297 = scmp.lt.s32.totalorder %s23, 0
      %s298 = scalar_select %p297, %s23, 0
      %s299 = smul.addr %s298, 4
      %s300 = smul.addr %s296, 4
      %s301 = sadd.s32 %s299, %s300
      %s302 = smul.addr %s301, 8
      %s303 = scalar_lea.vmem %s6, %s302
      %p305 = scmp.eq.s32.totalorder %s24, 0
      // Predicated region
      $region45: #{galerkin_transformer_2d.8} parent=43 // pred_check
        %p306 = pneg %p305
      $region46: #{galerkin_transformer_2d.8} parent=43 // pred_check_branch
        %308 = sbr.rel (%p306) target = $region48
      $region47: #{galerkin_transformer_2d.8} parent=43 // pred_region
        %vm309 = vcmask 261120
        %310 = vst.msk [vmem:[%s303] sm:$0xff] %vm309, 0.0
        %311 = vst.msk [vmem:[%s303 + $0x8] sm:$0xff] %vm309, 0.0
        %312 = vst.msk [vmem:[%s303 + $0x10] sm:$0xff] %vm309, 0.0
        %313 = vst.msk [vmem:[%s303 + $0x18] sm:$0xff] %vm309, 0.0
      $region48: #{galerkin_transformer_2d.8} parent=43 // pred_fallthru
        _
      %v314 = vld [vmem:[%s292] sm:$0xf]
      %v315 = vld [vmem:[%s292 + $0x4] sm:$0xf]
      %v316 = vld [vmem:[%s292 + $0x8] sm:$0xf]
      %v317 = vld [vmem:[%s292 + $0xc] sm:$0xf]
      %v318 = vld [vmem:[%s292 + $0x10] sm:$0xf]
      %v319 = vld [vmem:[%s292 + $0x14] sm:$0xf]
      %v320 = vld [vmem:[%s292 + $0x18] sm:$0xf]
      %v321 = vld [vmem:[%s292 + $0x1c] sm:$0xf]
      %v322 = vld [vmem:[%s292 + $0x20] sm:$0xf]
      %v323 = vld [vmem:[%s292 + $0x24] sm:$0xf]
      %v324 = vld [vmem:[%s292 + $0x28] sm:$0xf]
      %v325 = vld [vmem:[%s292 + $0x2c] sm:$0xf]
      %v326 = vld [vmem:[%s292 + $0x30] sm:$0xf]
      %v327 = vld [vmem:[%s292 + $0x34] sm:$0xf]
      %v328 = vld [vmem:[%s292 + $0x38] sm:$0xf]
      %v329 = vld [vmem:[%s292 + $0x3c] sm:$0xf]
      %v330 = vld [vmem:[%s292 + $0x40] sm:$0xf]
      %v331 = vld [vmem:[%s292 + $0x44] sm:$0xf]
      %v332 = vld [vmem:[%s292 + $0x48] sm:$0xf]
      %v333 = vld [vmem:[%s292 + $0x4c] sm:$0xf]
      %v334 = vld [vmem:[%s292 + $0x50] sm:$0xf]
      %v335 = vld [vmem:[%s292 + $0x54] sm:$0xf]
      %v336 = vld [vmem:[%s292 + $0x58] sm:$0xf]
      %v337 = vld [vmem:[%s292 + $0x5c] sm:$0xf]
      %v338 = vld [vmem:[%s292 + $0x60] sm:$0xf]
      %v339 = vld [vmem:[%s292 + $0x64] sm:$0xf]
      %v340 = vld [vmem:[%s292 + $0x68] sm:$0xf]
      %v341 = vld [vmem:[%s292 + $0x6c] sm:$0xf]
      %v342 = vld [vmem:[%s292 + $0x70] sm:$0xf]
      %v343 = vld [vmem:[%s292 + $0x74] sm:$0xf]
      %v344 = vld [vmem:[%s292 + $0x78] sm:$0xf]
      %v345 = vld [vmem:[%s292 + $0x7c] sm:$0xf]
      %v346 = vld [vmem:[%s1] sm:$0xf]
      %v347 = vld [vmem:[%s1 + $0x4] sm:$0xf]
      %v348 = vld [vmem:[%s1 + $0x8] sm:$0xf]
      %v349 = vld [vmem:[%s1 + $0xc] sm:$0xf]
      %v350 = vld [vmem:[%s2] sm:$0x1]
      %v352 = vlaneseq
      %v353 = vshrl.u32 %v352, 7
      %v354 = vsub.s32 0, %v353
      %v355 = vrot.slane %v350, %v354
      %v389 = vunpack.c.l.b16 %v314
      %v390 = vunpack.c.l.b16 %v315
      %v391 = vunpack.c.l.b16 %v316
      %v392 = vunpack.c.l.b16 %v317
      %v393 = vunpack.c.l.b16 %v318
      %v394 = vunpack.c.l.b16 %v319
      %v395 = vunpack.c.l.b16 %v320
      %v396 = vunpack.c.l.b16 %v321
      %v397 = vunpack.c.l.b16 %v322
      %v398 = vunpack.c.l.b16 %v323
      %v399 = vunpack.c.l.b16 %v324
      %v400 = vunpack.c.l.b16 %v325
      %v401 = vunpack.c.l.b16 %v326
      %v402 = vunpack.c.l.b16 %v327
      %v403 = vunpack.c.l.b16 %v328
      %v404 = vunpack.c.l.b16 %v329
      %v405 = vunpack.c.l.b16 %v330
      %v406 = vunpack.c.l.b16 %v331
      %v407 = vunpack.c.l.b16 %v332
      %v408 = vunpack.c.l.b16 %v333
      %v409 = vunpack.c.l.b16 %v334
      %v410 = vunpack.c.l.b16 %v335
      %v411 = vunpack.c.l.b16 %v336
      %v412 = vunpack.c.l.b16 %v337
      %v413 = vunpack.c.l.b16 %v338
      %v414 = vunpack.c.l.b16 %v339
      %v415 = vunpack.c.l.b16 %v340
      %v416 = vunpack.c.l.b16 %v341
      %v417 = vunpack.c.l.b16 %v342
      %v418 = vunpack.c.l.b16 %v343
      %v419 = vunpack.c.l.b16 %v344
      %v420 = vunpack.c.l.b16 %v345
      %v421 = vpack.c.b16 %v390, %v389
      %v422 = vpack.c.b16 %v392, %v391
      %v423 = vpack.c.b16 %v394, %v393
      %v424 = vpack.c.b16 %v396, %v395
      %v425 = vpack.c.b16 %v398, %v397
      %v426 = vpack.c.b16 %v400, %v399
      %v427 = vpack.c.b16 %v402, %v401
      %v428 = vpack.c.b16 %v404, %v403
      %v429 = vpack.c.b16 %v406, %v405
      %v430 = vpack.c.b16 %v408, %v407
      %v431 = vpack.c.b16 %v410, %v409
      %v432 = vpack.c.b16 %v412, %v411
      %v433 = vpack.c.b16 %v414, %v413
      %v434 = vpack.c.b16 %v416, %v415
      %v435 = vpack.c.b16 %v418, %v417
      %v436 = vpack.c.b16 %v420, %v419
      %v441 = vunpack.c.l.b16 %v346
      %v442 = vunpack.c.l.b16 %v347
      %v443 = vunpack.c.l.b16 %v348
      %v444 = vunpack.c.l.b16 %v349
      %v445 = vpack.c.b16 %v442, %v441
      %v446 = vpack.c.b16 %v444, %v443
      %vm449 = vcmask 261120
      %v451 = vsel %vm449, %v421, 0
      %v454 = vsel %vm449, %v422, 0
      %v457 = vsel %vm449, %v423, 0
      %v460 = vsel %vm449, %v424, 0
      %v463 = vsel %vm449, %v425, 0
      %v466 = vsel %vm449, %v426, 0
      %v469 = vsel %vm449, %v427, 0
      %v472 = vsel %vm449, %v428, 0
      %v475 = vsel %vm449, %v429, 0
      %v478 = vsel %vm449, %v430, 0
      %v481 = vsel %vm449, %v431, 0
      %v484 = vsel %vm449, %v432, 0
      %v487 = vsel %vm449, %v433, 0
      %v490 = vsel %vm449, %v434, 0
      %v493 = vsel %vm449, %v435, 0
      %v496 = vsel %vm449, %v436, 0
      %498 = vmatprep.subr.bf16.mxu0 0
      %499 = vmatpush1.bf16.msra.mxu0 0
      %500 = vmatprep.subr.bf16.mxu0 0
      %501 = vmatpush1.bf16.msra.mxu0 0
      %502 = vmatprep.subr.bf16.mxu0 0
      %503 = vmatpush1.bf16.msra.mxu0 0
      %504 = vmatprep.subr.bf16.mxu0 0
      %505 = vmatpush1.bf16.msra.mxu0 0
      %506 = vmatprep.subr.bf16.mxu0 0
      %507 = vmatpush1.bf16.msra.mxu0 0
      %508 = vmatprep.subr.bf16.mxu0 0
      %509 = vmatpush1.bf16.msra.mxu0 0
      %510 = vmatprep.subr.bf16.mxu0 0
      %511 = vmatpush1.bf16.msra.mxu0 %v446
      %512 = vmatprep.subr.bf16.mxu0 0
      %513 = vmatpush1.bf16.msra.mxu0 %v445
      %514 = vmatprep.subr.bf16.mxu0 0
      %515 = vmatpush2.bf16.msra.mxu0 0
      %516 = vmatprep.subr.bf16.mxu0 0
      %517 = vmatpush2.bf16.msra.mxu0 0
      %518 = vmatprep.subr.bf16.mxu0 0
      %519 = vmatpush2.bf16.msra.mxu0 0
      %520 = vmatprep.subr.bf16.mxu0 0
      %521 = vmatpush2.bf16.msra.mxu0 0
      %522 = vmatprep.subr.bf16.mxu0 0
      %523 = vmatpush2.bf16.msra.mxu0 0
      %524 = vmatprep.subr.bf16.mxu0 0
      %525 = vmatpush2.bf16.msra.mxu0 0
      %526 = vmatprep.subr.bf16.mxu0 0
      %527 = vmatpush2.bf16.msra.mxu0 0
      %528 = vmatprep.subr.bf16.mxu0 0
      %529 = vmatpush2.bf16.msra.mxu0 0
      %530 = vmatprep.mubr.bf16.mxu0 0
      %531 = vmatmul.mubr.bf16.gmra.mxu0 %v451
      %v532 = vpop.f32.mrf.mxu0
      %v533 = vadd.f32 %v355, %v532
      %v534 = vpop.f32.mrf.mxu0
      %v535 = vpop.f32.mrf.mxu0
      %v536 = vadd.f32 %v355, %v535
      %v537 = vpop.f32.mrf.mxu0
      %538 = vmatprep.mubr.bf16.mxu0 0
      %539 = vmatmul.mubr.bf16.gmra.mxu0 %v454
      %v540 = vpop.f32.mrf.mxu0
      %v541 = vadd.f32 %v355, %v540
      %v542 = vpop.f32.mrf.mxu0
      %v543 = vpop.f32.mrf.mxu0
      %v544 = vadd.f32 %v355, %v543
      %v545 = vpop.f32.mrf.mxu0
      %546 = vmatprep.mubr.bf16.mxu0 0
      %547 = vmatmul.mubr.bf16.gmra.mxu0 %v457
      %v548 = vpop.f32.mrf.mxu0
      %v549 = vadd.f32 %v355, %v548
      %v550 = vpop.f32.mrf.mxu0
      %v551 = vpop.f32.mrf.mxu0
      %v552 = vadd.f32 %v355, %v551
      %v553 = vpop.f32.mrf.mxu0
      %554 = vmatprep.mubr.bf16.mxu0 0
      %555 = vmatmul.mubr.bf16.gmra.mxu0 %v460
      %v556 = vpop.f32.mrf.mxu0
      %v557 = vadd.f32 %v355, %v556
      %v558 = vpop.f32.mrf.mxu0
      %v559 = vpop.f32.mrf.mxu0
      %v560 = vadd.f32 %v355, %v559
      %v561 = vpop.f32.mrf.mxu0
      %562 = vmatprep.mubr.bf16.mxu0 0
      %563 = vmatmul.mubr.bf16.gmra.mxu0 %v463
      %v564 = vpop.f32.mrf.mxu0
      %v565 = vadd.f32 %v355, %v564
      %v566 = vpop.f32.mrf.mxu0
      %v567 = vpop.f32.mrf.mxu0
      %v568 = vadd.f32 %v355, %v567
      %v569 = vpop.f32.mrf.mxu0
      %570 = vmatprep.mubr.bf16.mxu0 0
      %571 = vmatmul.mubr.bf16.gmra.mxu0 %v466
      %v572 = vpop.f32.mrf.mxu0
      %v573 = vadd.f32 %v355, %v572
      %v574 = vpop.f32.mrf.mxu0
      %v575 = vpop.f32.mrf.mxu0
      %v576 = vadd.f32 %v355, %v575
      %v577 = vpop.f32.mrf.mxu0
      %578 = vmatprep.mubr.bf16.mxu0 0
      %579 = vmatmul.mubr.bf16.gmra.mxu0 %v469
      %v580 = vpop.f32.mrf.mxu0
      %v581 = vadd.f32 %v355, %v580
      %v582 = vpop.f32.mrf.mxu0
      %v583 = vpop.f32.mrf.mxu0
      %v584 = vadd.f32 %v355, %v583
      %v585 = vpop.f32.mrf.mxu0
      %586 = vmatprep.mubr.bf16.mxu0 0
      %587 = vmatmul.mubr.bf16.gmra.mxu0 %v472
      %v588 = vpop.f32.mrf.mxu0
      %v589 = vadd.f32 %v355, %v588
      %v590 = vpop.f32.mrf.mxu0
      %v591 = vpop.f32.mrf.mxu0
      %v592 = vadd.f32 %v355, %v591
      %v593 = vpop.f32.mrf.mxu0
      %594 = vmatprep.mubr.bf16.mxu0 0
      %595 = vmatmul.mubr.bf16.gmra.mxu0 %v475
      %v596 = vpop.f32.mrf.mxu0
      %v597 = vadd.f32 %v355, %v596
      %v598 = vpop.f32.mrf.mxu0
      %v599 = vpop.f32.mrf.mxu0
      %v600 = vadd.f32 %v355, %v599
      %v601 = vpop.f32.mrf.mxu0
      %602 = vmatprep.mubr.bf16.mxu0 0
      %603 = vmatmul.mubr.bf16.gmra.mxu0 %v478
      %v604 = vpop.f32.mrf.mxu0
      %v605 = vadd.f32 %v355, %v604
      %v606 = vpop.f32.mrf.mxu0
      %v607 = vpop.f32.mrf.mxu0
      %v608 = vadd.f32 %v355, %v607
      %v609 = vpop.f32.mrf.mxu0
      %610 = vmatprep.mubr.bf16.mxu0 0
      %611 = vmatmul.mubr.bf16.gmra.mxu0 %v481
      %v612 = vpop.f32.mrf.mxu0
      %v613 = vadd.f32 %v355, %v612
      %v614 = vpop.f32.mrf.mxu0
      %v615 = vpop.f32.mrf.mxu0
      %v616 = vadd.f32 %v355, %v615
      %v617 = vpop.f32.mrf.mxu0
      %618 = vmatprep.mubr.bf16.mxu0 0
      %619 = vmatmul.mubr.bf16.gmra.mxu0 %v484
      %v620 = vpop.f32.mrf.mxu0
      %v621 = vadd.f32 %v355, %v620
      %v622 = vpop.f32.mrf.mxu0
      %v623 = vpop.f32.mrf.mxu0
      %v624 = vadd.f32 %v355, %v623
      %v625 = vpop.f32.mrf.mxu0
      %626 = vmatprep.mubr.bf16.mxu0 0
      %627 = vmatmul.mubr.bf16.gmra.mxu0 %v487
      %v628 = vpop.f32.mrf.mxu0
      %v629 = vadd.f32 %v355, %v628
      %v630 = vpop.f32.mrf.mxu0
      %v631 = vpop.f32.mrf.mxu0
      %v632 = vadd.f32 %v355, %v631
      %v633 = vpop.f32.mrf.mxu0
      %634 = vmatprep.mubr.bf16.mxu0 0
      %635 = vmatmul.mubr.bf16.gmra.mxu0 %v490
      %v636 = vpop.f32.mrf.mxu0
      %v637 = vadd.f32 %v355, %v636
      %v638 = vpop.f32.mrf.mxu0
      %v639 = vpop.f32.mrf.mxu0
      %v640 = vadd.f32 %v355, %v639
      %v641 = vpop.f32.mrf.mxu0
      %642 = vmatprep.mubr.bf16.mxu0 0
      %643 = vmatmul.mubr.bf16.gmra.mxu0 %v493
      %v644 = vpop.f32.mrf.mxu0
      %v645 = vadd.f32 %v355, %v644
      %v646 = vpop.f32.mrf.mxu0
      %v647 = vpop.f32.mrf.mxu0
      %v648 = vadd.f32 %v355, %v647
      %v649 = vpop.f32.mrf.mxu0
      %650 = vmatprep.mubr.bf16.mxu0 0
      %651 = vmatmul.mubr.bf16.gmra.mxu0 %v496
      %v652 = vpop.f32.mrf.mxu0
      %v653 = vadd.f32 %v355, %v652
      %v654 = vpop.f32.mrf.mxu0
      %v655 = vpop.f32.mrf.mxu0
      %v656 = vadd.f32 %v355, %v655
      %v657 = vpop.f32.mrf.mxu0
      %658 = vdwg.mxu0
      %v659 = vpack.c.bf16 %v536, %v533
      %v660 = vpack.c.bf16 %v544, %v541
      %v661 = vpack.c.bf16 %v552, %v549
      %v662 = vpack.c.bf16 %v560, %v557
      %v663 = vpack.c.bf16 %v568, %v565
      %v664 = vpack.c.bf16 %v576, %v573
      %v665 = vpack.c.bf16 %v584, %v581
      %v666 = vpack.c.bf16 %v592, %v589
      %v667 = vpack.c.bf16 %v600, %v597
      %v668 = vpack.c.bf16 %v608, %v605
      %v669 = vpack.c.bf16 %v616, %v613
      %v670 = vpack.c.bf16 %v624, %v621
      %v671 = vpack.c.bf16 %v632, %v629
      %v672 = vpack.c.bf16 %v640, %v637
      %v673 = vpack.c.bf16 %v648, %v645
      %v674 = vpack.c.bf16 %v656, %v653
      %v675 = vld [vmem:[%s5] sm:$0xf]
      %v676 = vld [vmem:[%s5 + $0x4] sm:$0xf]
      %v677 = vld [vmem:[%s5 + $0x8] sm:$0xf]
      %v678 = vld [vmem:[%s5 + $0xc] sm:$0xf]
      %v679 = vld [vmem:[%s5 + $0x10] sm:$0xf]
      %v680 = vld [vmem:[%s5 + $0x14] sm:$0xf]
      %v681 = vld [vmem:[%s5 + $0x18] sm:$0xf]
      %v682 = vld [vmem:[%s5 + $0x1c] sm:$0xf]
      %v691 = vunpack.c.l.b16 %v675
      %v692 = vunpack.c.l.b16 %v676
      %v693 = vunpack.c.l.b16 %v677
      %v694 = vunpack.c.l.b16 %v678
      %v695 = vunpack.c.l.b16 %v679
      %v696 = vunpack.c.l.b16 %v680
      %v697 = vunpack.c.l.b16 %v681
      %v698 = vunpack.c.l.b16 %v682
      %v699 = vpack.c.b16 %v692, %v691
      %v700 = vpack.c.b16 %v694, %v693
      %v701 = vpack.c.b16 %v696, %v695
      %v702 = vpack.c.b16 %v698, %v697
      %vm707 = vcmask 523264
      %v709 = vsel %vm707, %v659, 0
      %v712 = vsel %vm707, %v660, 0
      %v715 = vsel %vm707, %v661, 0
      %v718 = vsel %vm707, %v662, 0
      %v721 = vsel %vm707, %v663, 0
      %v724 = vsel %vm707, %v664, 0
      %v727 = vsel %vm707, %v665, 0
      %v730 = vsel %vm707, %v666, 0
      %v733 = vsel %vm707, %v667, 0
      %v736 = vsel %vm707, %v668, 0
      %v739 = vsel %vm707, %v669, 0
      %v742 = vsel %vm707, %v670, 0
      %v745 = vsel %vm707, %v671, 0
      %v748 = vsel %vm707, %v672, 0
      %v751 = vsel %vm707, %v673, 0
      %v754 = vsel %vm707, %v674, 0
      %756 = vmatprep.subr.bf16.mxu0 0
      %757 = vmatpush1.bf16.msra.mxu0 0
      %758 = vmatprep.subr.bf16.mxu0 0
      %759 = vmatpush1.bf16.msra.mxu0 0
      %760 = vmatprep.subr.bf16.mxu0 0
      %761 = vmatpush1.bf16.msra.mxu0 0
      %762 = vmatprep.subr.bf16.mxu0 0
      %763 = vmatpush1.bf16.msra.mxu0 0
      %764 = vmatprep.subr.bf16.mxu0 0
      %765 = vmatpush1.bf16.msra.mxu0 %v702
      %766 = vmatprep.subr.bf16.mxu0 0
      %767 = vmatpush1.bf16.msra.mxu0 %v701
      %768 = vmatprep.subr.bf16.mxu0 0
      %769 = vmatpush1.bf16.msra.mxu0 %v700
      %770 = vmatprep.subr.bf16.mxu0 0
      %771 = vmatpush1.bf16.msra.mxu0 %v699
      %772 = vmatprep.subr.bf16.mxu0 0
      %773 = vmatpush2.bf16.msra.mxu0 0
      %774 = vmatprep.subr.bf16.mxu0 0
      %775 = vmatpush2.bf16.msra.mxu0 0
      %776 = vmatprep.subr.bf16.mxu0 0
      %777 = vmatpush2.bf16.msra.mxu0 0
      %778 = vmatprep.subr.bf16.mxu0 0
      %779 = vmatpush2.bf16.msra.mxu0 0
      %780 = vmatprep.subr.bf16.mxu0 0
      %781 = vmatpush2.bf16.msra.mxu0 0
      %782 = vmatprep.subr.bf16.mxu0 0
      %783 = vmatpush2.bf16.msra.mxu0 0
      %784 = vmatprep.subr.bf16.mxu0 0
      %785 = vmatpush2.bf16.msra.mxu0 0
      %786 = vmatprep.subr.bf16.mxu0 0
      %787 = vmatpush2.bf16.msra.mxu0 0
      %788 = vmatprep.mubr.bf16.mxu0 0
      %789 = vmatmul.mubr.bf16.gmra.mxu0 %v709
      %v790 = vpop.f32.mrf.mxu0
      %v791 = vadd.f32 0.0, %v790
      %v792 = vpop.f32.mrf.mxu0
      %v793 = vpop.f32.mrf.mxu0
      %v794 = vadd.f32 0.0, %v793
      %v795 = vpop.f32.mrf.mxu0
      %796 = vmatprep.mubr.bf16.mxu0 0
      %797 = vmatmul.mubr.bf16.gmra.mxu0 %v712
      %v798 = vpop.f32.mrf.mxu0
      %v799 = vadd.f32 0.0, %v798
      %v800 = vpop.f32.mrf.mxu0
      %v801 = vpop.f32.mrf.mxu0
      %v802 = vadd.f32 0.0, %v801
      %v803 = vpop.f32.mrf.mxu0
      %804 = vmatprep.mubr.bf16.mxu0 0
      %805 = vmatmul.mubr.bf16.gmra.mxu0 %v715
      %v806 = vpop.f32.mrf.mxu0
      %v807 = vadd.f32 0.0, %v806
      %v808 = vpop.f32.mrf.mxu0
      %v809 = vpop.f32.mrf.mxu0
      %v810 = vadd.f32 0.0, %v809
      %v811 = vpop.f32.mrf.mxu0
      %812 = vmatprep.mubr.bf16.mxu0 0
      %813 = vmatmul.mubr.bf16.gmra.mxu0 %v718
      %v814 = vpop.f32.mrf.mxu0
      %v815 = vadd.f32 0.0, %v814
      %v816 = vpop.f32.mrf.mxu0
      %v817 = vpop.f32.mrf.mxu0
      %v818 = vadd.f32 0.0, %v817
      %v819 = vpop.f32.mrf.mxu0
      %820 = vmatprep.mubr.bf16.mxu0 0
      %821 = vmatmul.mubr.bf16.gmra.mxu0 %v721
      %v822 = vpop.f32.mrf.mxu0
      %v823 = vadd.f32 0.0, %v822
      %v824 = vpop.f32.mrf.mxu0
      %v825 = vpop.f32.mrf.mxu0
      %v826 = vadd.f32 0.0, %v825
      %v827 = vpop.f32.mrf.mxu0
      %828 = vmatprep.mubr.bf16.mxu0 0
      %829 = vmatmul.mubr.bf16.gmra.mxu0 %v724
      %v830 = vpop.f32.mrf.mxu0
      %v831 = vadd.f32 0.0, %v830
      %v832 = vpop.f32.mrf.mxu0
      %v833 = vpop.f32.mrf.mxu0
      %v834 = vadd.f32 0.0, %v833
      %v835 = vpop.f32.mrf.mxu0
      %836 = vmatprep.mubr.bf16.mxu0 0
      %837 = vmatmul.mubr.bf16.gmra.mxu0 %v727
      %v838 = vpop.f32.mrf.mxu0
      %v839 = vadd.f32 0.0, %v838
      %v840 = vpop.f32.mrf.mxu0
      %v841 = vpop.f32.mrf.mxu0
      %v842 = vadd.f32 0.0, %v841
      %v843 = vpop.f32.mrf.mxu0
      %844 = vmatprep.mubr.bf16.mxu0 0
      %845 = vmatmul.mubr.bf16.gmra.mxu0 %v730
      %v846 = vpop.f32.mrf.mxu0
      %v847 = vadd.f32 0.0, %v846
      %v848 = vpop.f32.mrf.mxu0
      %v849 = vpop.f32.mrf.mxu0
      %v850 = vadd.f32 0.0, %v849
      %v851 = vpop.f32.mrf.mxu0
      %852 = vmatprep.mubr.bf16.mxu0 0
      %853 = vmatmul.mubr.bf16.gmra.mxu0 %v733
      %v854 = vpop.f32.mrf.mxu0
      %v855 = vadd.f32 0.0, %v854
      %v856 = vpop.f32.mrf.mxu0
      %v857 = vpop.f32.mrf.mxu0
      %v858 = vadd.f32 0.0, %v857
      %v859 = vpop.f32.mrf.mxu0
      %860 = vmatprep.mubr.bf16.mxu0 0
      %861 = vmatmul.mubr.bf16.gmra.mxu0 %v736
      %v862 = vpop.f32.mrf.mxu0
      %v863 = vadd.f32 0.0, %v862
      %v864 = vpop.f32.mrf.mxu0
      %v865 = vpop.f32.mrf.mxu0
      %v866 = vadd.f32 0.0, %v865
      %v867 = vpop.f32.mrf.mxu0
      %868 = vmatprep.mubr.bf16.mxu0 0
      %869 = vmatmul.mubr.bf16.gmra.mxu0 %v739
      %v870 = vpop.f32.mrf.mxu0
      %v871 = vadd.f32 0.0, %v870
      %v872 = vpop.f32.mrf.mxu0
      %v873 = vpop.f32.mrf.mxu0
      %v874 = vadd.f32 0.0, %v873
      %v875 = vpop.f32.mrf.mxu0
      %876 = vmatprep.mubr.bf16.mxu0 0
      %877 = vmatmul.mubr.bf16.gmra.mxu0 %v742
      %v878 = vpop.f32.mrf.mxu0
      %v879 = vadd.f32 0.0, %v878
      %v880 = vpop.f32.mrf.mxu0
      %v881 = vpop.f32.mrf.mxu0
      %v882 = vadd.f32 0.0, %v881
      %v883 = vpop.f32.mrf.mxu0
      %884 = vmatprep.mubr.bf16.mxu0 0
      %885 = vmatmul.mubr.bf16.gmra.mxu0 %v745
      %v886 = vpop.f32.mrf.mxu0
      %v887 = vadd.f32 0.0, %v886
      %v888 = vpop.f32.mrf.mxu0
      %v889 = vpop.f32.mrf.mxu0
      %v890 = vadd.f32 0.0, %v889
      %v891 = vpop.f32.mrf.mxu0
      %892 = vmatprep.mubr.bf16.mxu0 0
      %893 = vmatmul.mubr.bf16.gmra.mxu0 %v748
      %v894 = vpop.f32.mrf.mxu0
      %v895 = vadd.f32 0.0, %v894
      %v896 = vpop.f32.mrf.mxu0
      %v897 = vpop.f32.mrf.mxu0
      %v898 = vadd.f32 0.0, %v897
      %v899 = vpop.f32.mrf.mxu0
      %900 = vmatprep.mubr.bf16.mxu0 0
      %901 = vmatmul.mubr.bf16.gmra.mxu0 %v751
      %v902 = vpop.f32.mrf.mxu0
      %v903 = vadd.f32 0.0, %v902
      %v904 = vpop.f32.mrf.mxu0
      %v905 = vpop.f32.mrf.mxu0
      %v906 = vadd.f32 0.0, %v905
      %v907 = vpop.f32.mrf.mxu0
      %908 = vmatprep.mubr.bf16.mxu0 0
      %909 = vmatmul.mubr.bf16.gmra.mxu0 %v754
      %v910 = vpop.f32.mrf.mxu0
      %v911 = vadd.f32 0.0, %v910
      %v912 = vpop.f32.mrf.mxu0
      %v913 = vpop.f32.mrf.mxu0
      %v914 = vadd.f32 0.0, %v913
      %v915 = vpop.f32.mrf.mxu0
      %916 = vdwg.mxu0
      %v917 = vsub.f32 %v533, %v791
      %v918 = vsub.f32 %v536, %v794
      %v919 = vsub.f32 %v541, %v799
      %v920 = vsub.f32 %v544, %v802
      %v921 = vsub.f32 %v549, %v807
      %v922 = vsub.f32 %v552, %v810
      %v923 = vsub.f32 %v557, %v815
      %v924 = vsub.f32 %v560, %v818
      %v925 = vsub.f32 %v565, %v823
      %v926 = vsub.f32 %v568, %v826
      %v927 = vsub.f32 %v573, %v831
      %v928 = vsub.f32 %v576, %v834
      %v929 = vsub.f32 %v581, %v839
      %v930 = vsub.f32 %v584, %v842
      %v931 = vsub.f32 %v589, %v847
      %v932 = vsub.f32 %v592, %v850
      %v933 = vsub.f32 %v597, %v855
      %v934 = vsub.f32 %v600, %v858
      %v935 = vsub.f32 %v605, %v863
      %v936 = vsub.f32 %v608, %v866
      %v937 = vsub.f32 %v613, %v871
      %v938 = vsub.f32 %v616, %v874
      %v939 = vsub.f32 %v621, %v879
      %v940 = vsub.f32 %v624, %v882
      %v941 = vsub.f32 %v629, %v887
      %v942 = vsub.f32 %v632, %v890
      %v943 = vsub.f32 %v637, %v895
      %v944 = vsub.f32 %v640, %v898
      %v945 = vsub.f32 %v645, %v903
      %v946 = vsub.f32 %v648, %v906
      %v947 = vsub.f32 %v653, %v911
      %v948 = vsub.f32 %v656, %v914
      %v949 = vmul.f32 %v917, %v917
      %v950 = vmul.f32 %v918, %v918
      %v951 = vmul.f32 %v919, %v919
      %v952 = vmul.f32 %v920, %v920
      %v953 = vmul.f32 %v921, %v921
      %v954 = vmul.f32 %v922, %v922
      %v955 = vmul.f32 %v923, %v923
      %v956 = vmul.f32 %v924, %v924
      %v957 = vmul.f32 %v925, %v925
      %v958 = vmul.f32 %v926, %v926
      %v959 = vmul.f32 %v927, %v927
      %v960 = vmul.f32 %v928, %v928
      %v961 = vmul.f32 %v929, %v929
      %v962 = vmul.f32 %v930, %v930
      %v963 = vmul.f32 %v931, %v931
      %v964 = vmul.f32 %v932, %v932
      %v965 = vmul.f32 %v933, %v933
      %v966 = vmul.f32 %v934, %v934
      %v967 = vmul.f32 %v935, %v935
      %v968 = vmul.f32 %v936, %v936
      %v969 = vmul.f32 %v937, %v937
      %v970 = vmul.f32 %v938, %v938
      %v971 = vmul.f32 %v939, %v939
      %v972 = vmul.f32 %v940, %v940
      %v973 = vmul.f32 %v941, %v941
      %v974 = vmul.f32 %v942, %v942
      %v975 = vmul.f32 %v943, %v943
      %v976 = vmul.f32 %v944, %v944
      %v977 = vmul.f32 %v945, %v945
      %v978 = vmul.f32 %v946, %v946
      %v979 = vmul.f32 %v947, %v947
      %v980 = vmul.f32 %v948, %v948
      %v981 = vpack.c.bf16 %v950, %v949
      %v982 = vpack.c.bf16 %v952, %v951
      %v983 = vpack.c.bf16 %v954, %v953
      %v984 = vpack.c.bf16 %v956, %v955
      %v985 = vpack.c.bf16 %v958, %v957
      %v986 = vpack.c.bf16 %v960, %v959
      %v987 = vpack.c.bf16 %v962, %v961
      %v988 = vpack.c.bf16 %v964, %v963
      %v989 = vpack.c.bf16 %v966, %v965
      %v990 = vpack.c.bf16 %v968, %v967
      %v991 = vpack.c.bf16 %v970, %v969
      %v992 = vpack.c.bf16 %v972, %v971
      %v993 = vpack.c.bf16 %v974, %v973
      %v994 = vpack.c.bf16 %v976, %v975
      %v995 = vpack.c.bf16 %v978, %v977
      %v996 = vpack.c.bf16 %v980, %v979
      %v998 = vsel %vm707, %v981, 0
      %v1001 = vsel %vm707, %v982, 0
      %v1004 = vsel %vm707, %v983, 0
      %v1007 = vsel %vm707, %v984, 0
      %v1010 = vsel %vm707, %v985, 0
      %v1013 = vsel %vm707, %v986, 0
      %v1016 = vsel %vm707, %v987, 0
      %v1019 = vsel %vm707, %v988, 0
      %v1022 = vsel %vm707, %v989, 0
      %v1025 = vsel %vm707, %v990, 0
      %v1028 = vsel %vm707, %v991, 0
      %v1031 = vsel %vm707, %v992, 0
      %v1034 = vsel %vm707, %v993, 0
      %v1037 = vsel %vm707, %v994, 0
      %v1040 = vsel %vm707, %v995, 0
      %v1043 = vsel %vm707, %v996, 0
      %1045 = vmatprep.subr.bf16.mxu0 0
      %1046 = vmatpush1.bf16.msra.mxu0 0
      %1047 = vmatprep.subr.bf16.mxu0 0
      %1048 = vmatpush1.bf16.msra.mxu0 0
      %1049 = vmatprep.subr.bf16.mxu0 0
      %1050 = vmatpush1.bf16.msra.mxu0 0
      %1051 = vmatprep.subr.bf16.mxu0 0
      %1052 = vmatpush1.bf16.msra.mxu0 0
      %1053 = vmatprep.subr.bf16.mxu0 0
      %1054 = vmatpush1.bf16.msra.mxu0 %v702
      %1055 = vmatprep.subr.bf16.mxu0 0
      %1056 = vmatpush1.bf16.msra.mxu0 %v701
      %1057 = vmatprep.subr.bf16.mxu0 0
      %1058 = vmatpush1.bf16.msra.mxu0 %v700
      %1059 = vmatprep.subr.bf16.mxu0 0
      %1060 = vmatpush1.bf16.msra.mxu0 %v699
      %1061 = vmatprep.subr.bf16.mxu0 0
      %1062 = vmatpush2.bf16.msra.mxu0 0
      %1063 = vmatprep.subr.bf16.mxu0 0
      %1064 = vmatpush2.bf16.msra.mxu0 0
      %1065 = vmatprep.subr.bf16.mxu0 0
      %1066 = vmatpush2.bf16.msra.mxu0 0
      %1067 = vmatprep.subr.bf16.mxu0 0
      %1068 = vmatpush2.bf16.msra.mxu0 0
      %1069 = vmatprep.subr.bf16.mxu0 0
      %1070 = vmatpush2.bf16.msra.mxu0 0
      %1071 = vmatprep.subr.bf16.mxu0 0
      %1072 = vmatpush2.bf16.msra.mxu0 0
      %1073 = vmatprep.subr.bf16.mxu0 0
      %1074 = vmatpush2.bf16.msra.mxu0 0
      %1075 = vmatprep.subr.bf16.mxu0 0
      %1076 = vmatpush2.bf16.msra.mxu0 0
      %1077 = vmatprep.mubr.bf16.mxu0 0
      %1078 = vmatmul.mubr.bf16.gmra.mxu0 %v998
      %v1079 = vpop.f32.mrf.mxu0
      %v1080 = vadd.f32 1e-05, %v1079
      %v1081 = vpop.f32.mrf.mxu0
      %v1082 = vpop.f32.mrf.mxu0
      %v1083 = vadd.f32 1e-05, %v1082
      %v1084 = vpop.f32.mrf.mxu0
      %1085 = vmatprep.mubr.bf16.mxu0 0
      %1086 = vmatmul.mubr.bf16.gmra.mxu0 %v1001
      %v1087 = vpop.f32.mrf.mxu0
      %v1088 = vadd.f32 1e-05, %v1087
      %v1089 = vpop.f32.mrf.mxu0
      %v1090 = vpop.f32.mrf.mxu0
      %v1091 = vadd.f32 1e-05, %v1090
      %v1092 = vpop.f32.mrf.mxu0
      %1093 = vmatprep.mubr.bf16.mxu0 0
      %1094 = vmatmul.mubr.bf16.gmra.mxu0 %v1004
      %v1095 = vpop.f32.mrf.mxu0
      %v1096 = vadd.f32 1e-05, %v1095
      %v1097 = vpop.f32.mrf.mxu0
      %v1098 = vpop.f32.mrf.mxu0
      %v1099 = vadd.f32 1e-05, %v1098
      %v1100 = vpop.f32.mrf.mxu0
      %1101 = vmatprep.mubr.bf16.mxu0 0
      %1102 = vmatmul.mubr.bf16.gmra.mxu0 %v1007
      %v1103 = vpop.f32.mrf.mxu0
      %v1104 = vadd.f32 1e-05, %v1103
      %v1105 = vpop.f32.mrf.mxu0
      %v1106 = vpop.f32.mrf.mxu0
      %v1107 = vadd.f32 1e-05, %v1106
      %v1108 = vpop.f32.mrf.mxu0
      %1109 = vmatprep.mubr.bf16.mxu0 0
      %1110 = vmatmul.mubr.bf16.gmra.mxu0 %v1010
      %v1111 = vpop.f32.mrf.mxu0
      %v1112 = vadd.f32 1e-05, %v1111
      %v1113 = vpop.f32.mrf.mxu0
      %v1114 = vpop.f32.mrf.mxu0
      %v1115 = vadd.f32 1e-05, %v1114
      %v1116 = vpop.f32.mrf.mxu0
      %1117 = vmatprep.mubr.bf16.mxu0 0
      %1118 = vmatmul.mubr.bf16.gmra.mxu0 %v1013
      %v1119 = vpop.f32.mrf.mxu0
      %v1120 = vadd.f32 1e-05, %v1119
      %v1121 = vpop.f32.mrf.mxu0
      %v1122 = vpop.f32.mrf.mxu0
      %v1123 = vadd.f32 1e-05, %v1122
      %v1124 = vpop.f32.mrf.mxu0
      %1125 = vmatprep.mubr.bf16.mxu0 0
      %1126 = vmatmul.mubr.bf16.gmra.mxu0 %v1016
      %v1127 = vpop.f32.mrf.mxu0
      %v1128 = vadd.f32 1e-05, %v1127
      %v1129 = vpop.f32.mrf.mxu0
      %v1130 = vpop.f32.mrf.mxu0
      %v1131 = vadd.f32 1e-05, %v1130
      %v1132 = vpop.f32.mrf.mxu0
      %1133 = vmatprep.mubr.bf16.mxu0 0
      %1134 = vmatmul.mubr.bf16.gmra.mxu0 %v1019
      %v1135 = vpop.f32.mrf.mxu0
      %v1136 = vadd.f32 1e-05, %v1135
      %v1137 = vpop.f32.mrf.mxu0
      %v1138 = vpop.f32.mrf.mxu0
      %v1139 = vadd.f32 1e-05, %v1138
      %v1140 = vpop.f32.mrf.mxu0
      %1141 = vmatprep.mubr.bf16.mxu0 0
      %1142 = vmatmul.mubr.bf16.gmra.mxu0 %v1022
      %v1143 = vpop.f32.mrf.mxu0
      %v1144 = vadd.f32 1e-05, %v1143
      %v1145 = vpop.f32.mrf.mxu0
      %v1146 = vpop.f32.mrf.mxu0
      %v1147 = vadd.f32 1e-05, %v1146
      %v1148 = vpop.f32.mrf.mxu0
      %1149 = vmatprep.mubr.bf16.mxu0 0
      %1150 = vmatmul.mubr.bf16.gmra.mxu0 %v1025
      %v1151 = vpop.f32.mrf.mxu0
      %v1152 = vadd.f32 1e-05, %v1151
      %v1153 = vpop.f32.mrf.mxu0
      %v1154 = vpop.f32.mrf.mxu0
      %v1155 = vadd.f32 1e-05, %v1154
      %v1156 = vpop.f32.mrf.mxu0
      %1157 = vmatprep.mubr.bf16.mxu0 0
      %1158 = vmatmul.mubr.bf16.gmra.mxu0 %v1028
      %v1159 = vpop.f32.mrf.mxu0
      %v1160 = vadd.f32 1e-05, %v1159
      %v1161 = vpop.f32.mrf.mxu0
      %v1162 = vpop.f32.mrf.mxu0
      %v1163 = vadd.f32 1e-05, %v1162
      %v1164 = vpop.f32.mrf.mxu0
      %1165 = vmatprep.mubr.bf16.mxu0 0
      %1166 = vmatmul.mubr.bf16.gmra.mxu0 %v1031
      %v1167 = vpop.f32.mrf.mxu0
      %v1168 = vadd.f32 1e-05, %v1167
      %v1169 = vpop.f32.mrf.mxu0
      %v1170 = vpop.f32.mrf.mxu0
      %v1171 = vadd.f32 1e-05, %v1170
      %v1172 = vpop.f32.mrf.mxu0
      %1173 = vmatprep.mubr.bf16.mxu0 0
      %1174 = vmatmul.mubr.bf16.gmra.mxu0 %v1034
      %v1175 = vpop.f32.mrf.mxu0
      %v1176 = vadd.f32 1e-05, %v1175
      %v1177 = vpop.f32.mrf.mxu0
      %v1178 = vpop.f32.mrf.mxu0
      %v1179 = vadd.f32 1e-05, %v1178
      %v1180 = vpop.f32.mrf.mxu0
      %1181 = vmatprep.mubr.bf16.mxu0 0
      %1182 = vmatmul.mubr.bf16.gmra.mxu0 %v1037
      %v1183 = vpop.f32.mrf.mxu0
      %v1184 = vadd.f32 1e-05, %v1183
      %v1185 = vpop.f32.mrf.mxu0
      %v1186 = vpop.f32.mrf.mxu0
      %v1187 = vadd.f32 1e-05, %v1186
      %v1188 = vpop.f32.mrf.mxu0
      %1189 = vmatprep.mubr.bf16.mxu0 0
      %1190 = vmatmul.mubr.bf16.gmra.mxu0 %v1040
      %v1191 = vpop.f32.mrf.mxu0
      %v1192 = vadd.f32 1e-05, %v1191
      %v1193 = vpop.f32.mrf.mxu0
      %v1194 = vpop.f32.mrf.mxu0
      %v1195 = vadd.f32 1e-05, %v1194
      %v1196 = vpop.f32.mrf.mxu0
      %1197 = vmatprep.mubr.bf16.mxu0 0
      %1198 = vmatmul.mubr.bf16.gmra.mxu0 %v1043
      %v1199 = vpop.f32.mrf.mxu0
      %v1200 = vadd.f32 1e-05, %v1199
      %v1201 = vpop.f32.mrf.mxu0
      %v1202 = vpop.f32.mrf.mxu0
      %v1203 = vadd.f32 1e-05, %v1202
      %v1204 = vpop.f32.mrf.mxu0
      %1205 = vdwg.mxu0
      %v1206 = vrsqrt.pop %v1080
      %v1207 = vrsqrt.pop %v1083
      %v1208 = vrsqrt.pop %v1088
      %v1209 = vrsqrt.pop %v1091
      %v1210 = vrsqrt.pop %v1096
      %v1211 = vrsqrt.pop %v1099
      %v1212 = vrsqrt.pop %v1104
      %v1213 = vrsqrt.pop %v1107
      %v1214 = vrsqrt.pop %v1112
      %v1215 = vrsqrt.pop %v1115
      %v1216 = vrsqrt.pop %v1120
      %v1217 = vrsqrt.pop %v1123
      %v1218 = vrsqrt.pop %v1128
      %v1219 = vrsqrt.pop %v1131
      %v1220 = vrsqrt.pop %v1136
      %v1221 = vrsqrt.pop %v1139
      %v1222 = vrsqrt.pop %v1144
      %v1223 = vrsqrt.pop %v1147
      %v1224 = vrsqrt.pop %v1152
      %v1225 = vrsqrt.pop %v1155
      %v1226 = vrsqrt.pop %v1160
      %v1227 = vrsqrt.pop %v1163
      %v1228 = vrsqrt.pop %v1168
      %v1229 = vrsqrt.pop %v1171
      %v1230 = vrsqrt.pop %v1176
      %v1231 = vrsqrt.pop %v1179
      %v1232 = vrsqrt.pop %v1184
      %v1233 = vrsqrt.pop %v1187
      %v1234 = vrsqrt.pop %v1192
      %v1235 = vrsqrt.pop %v1195
      %v1236 = vrsqrt.pop %v1200
      %v1237 = vrsqrt.pop %v1203
      %v1238 = vmul.f32 %v917, %v1206
      %v1239 = vmul.f32 %v918, %v1207
      %v1240 = vmul.f32 %v919, %v1208
      %v1241 = vmul.f32 %v920, %v1209
      %v1242 = vmul.f32 %v921, %v1210
      %v1243 = vmul.f32 %v922, %v1211
      %v1244 = vmul.f32 %v923, %v1212
      %v1245 = vmul.f32 %v924, %v1213
      %v1246 = vmul.f32 %v925, %v1214
      %v1247 = vmul.f32 %v926, %v1215
      %v1248 = vmul.f32 %v927, %v1216
      %v1249 = vmul.f32 %v928, %v1217
      %v1250 = vmul.f32 %v929, %v1218
      %v1251 = vmul.f32 %v930, %v1219
      %v1252 = vmul.f32 %v931, %v1220
      %v1253 = vmul.f32 %v932, %v1221
      %v1254 = vmul.f32 %v933, %v1222
      %v1255 = vmul.f32 %v934, %v1223
      %v1256 = vmul.f32 %v935, %v1224
      %v1257 = vmul.f32 %v936, %v1225
      %v1258 = vmul.f32 %v937, %v1226
      %v1259 = vmul.f32 %v938, %v1227
      %v1260 = vmul.f32 %v939, %v1228
      %v1261 = vmul.f32 %v940, %v1229
      %v1262 = vmul.f32 %v941, %v1230
      %v1263 = vmul.f32 %v942, %v1231
      %v1264 = vmul.f32 %v943, %v1232
      %v1265 = vmul.f32 %v944, %v1233
      %v1266 = vmul.f32 %v945, %v1234
      %v1267 = vmul.f32 %v946, %v1235
      %v1268 = vmul.f32 %v947, %v1236
      %v1269 = vmul.f32 %v948, %v1237
      %v1270 = vld [vmem:[%s3] sm:$0x1]
      %v1272 = vlaneseq
      %v1273 = vshrl.u32 %v1272, 7
      %v1274 = vsub.s32 0, %v1273
      %v1275 = vrot.slane %v1270, %v1274
      %v1277 = vmul.f32 %v1238, %v1275
      %v1278 = vmul.f32 %v1239, %v1275
      %v1279 = vmul.f32 %v1240, %v1275
      %v1280 = vmul.f32 %v1241, %v1275
      %v1281 = vmul.f32 %v1242, %v1275
      %v1282 = vmul.f32 %v1243, %v1275
      %v1283 = vmul.f32 %v1244, %v1275
      %v1284 = vmul.f32 %v1245, %v1275
      %v1285 = vmul.f32 %v1246, %v1275
      %v1286 = vmul.f32 %v1247, %v1275
      %v1287 = vmul.f32 %v1248, %v1275
      %v1288 = vmul.f32 %v1249, %v1275
      %v1289 = vmul.f32 %v1250, %v1275
      %v1290 = vmul.f32 %v1251, %v1275
      %v1291 = vmul.f32 %v1252, %v1275
      %v1292 = vmul.f32 %v1253, %v1275
      %v1293 = vmul.f32 %v1254, %v1275
      %v1294 = vmul.f32 %v1255, %v1275
      %v1295 = vmul.f32 %v1256, %v1275
      %v1296 = vmul.f32 %v1257, %v1275
      %v1297 = vmul.f32 %v1258, %v1275
      %v1298 = vmul.f32 %v1259, %v1275
      %v1299 = vmul.f32 %v1260, %v1275
      %v1300 = vmul.f32 %v1261, %v1275
      %v1301 = vmul.f32 %v1262, %v1275
      %v1302 = vmul.f32 %v1263, %v1275
      %v1303 = vmul.f32 %v1264, %v1275
      %v1304 = vmul.f32 %v1265, %v1275
      %v1305 = vmul.f32 %v1266, %v1275
      %v1306 = vmul.f32 %v1267, %v1275
      %v1307 = vmul.f32 %v1268, %v1275
      %v1308 = vmul.f32 %v1269, %v1275
      %v1309 = vld [vmem:[%s4] sm:$0x1]
      %v1311 = vlaneseq
      %v1312 = vshrl.u32 %v1311, 7
      %v1313 = vsub.s32 0, %v1312
      %v1314 = vrot.slane %v1309, %v1313
      %v1316 = vadd.f32 %v1277, %v1314
      %v1317 = vadd.f32 %v1278, %v1314
      %v1318 = vadd.f32 %v1279, %v1314
      %v1319 = vadd.f32 %v1280, %v1314
      %v1320 = vadd.f32 %v1281, %v1314
      %v1321 = vadd.f32 %v1282, %v1314
      %v1322 = vadd.f32 %v1283, %v1314
      %v1323 = vadd.f32 %v1284, %v1314
      %v1324 = vadd.f32 %v1285, %v1314
      %v1325 = vadd.f32 %v1286, %v1314
      %v1326 = vadd.f32 %v1287, %v1314
      %v1327 = vadd.f32 %v1288, %v1314
      %v1328 = vadd.f32 %v1289, %v1314
      %v1329 = vadd.f32 %v1290, %v1314
      %v1330 = vadd.f32 %v1291, %v1314
      %v1331 = vadd.f32 %v1292, %v1314
      %v1332 = vadd.f32 %v1293, %v1314
      %v1333 = vadd.f32 %v1294, %v1314
      %v1334 = vadd.f32 %v1295, %v1314
      %v1335 = vadd.f32 %v1296, %v1314
      %v1336 = vadd.f32 %v1297, %v1314
      %v1337 = vadd.f32 %v1298, %v1314
      %v1338 = vadd.f32 %v1299, %v1314
      %v1339 = vadd.f32 %v1300, %v1314
      %v1340 = vadd.f32 %v1301, %v1314
      %v1341 = vadd.f32 %v1302, %v1314
      %v1342 = vadd.f32 %v1303, %v1314
      %v1343 = vadd.f32 %v1304, %v1314
      %v1344 = vadd.f32 %v1305, %v1314
      %v1345 = vadd.f32 %v1306, %v1314
      %v1346 = vadd.f32 %v1307, %v1314
      %v1347 = vadd.f32 %v1308, %v1314
      %v1348 = vld [vmem:[%s303] sm:$0xff]
      %v1349 = vld [vmem:[%s303 + $0x8] sm:$0xff]
      %v1350 = vld [vmem:[%s303 + $0x10] sm:$0xff]
      %v1351 = vld [vmem:[%s303 + $0x18] sm:$0xff]
      %v1352 = vpack.c.bf16 %v1317, %v1316
      %v1353 = vpack.c.bf16 %v1319, %v1318
      %v1354 = vpack.c.bf16 %v1321, %v1320
      %v1355 = vpack.c.bf16 %v1323, %v1322
      %v1356 = vpack.c.bf16 %v1325, %v1324
      %v1357 = vpack.c.bf16 %v1327, %v1326
      %v1358 = vpack.c.bf16 %v1329, %v1328
      %v1359 = vpack.c.bf16 %v1331, %v1330
      %v1360 = vpack.c.bf16 %v1333, %v1332
      %v1361 = vpack.c.bf16 %v1335, %v1334
      %v1362 = vpack.c.bf16 %v1337, %v1336
      %v1363 = vpack.c.bf16 %v1339, %v1338
      %v1364 = vpack.c.bf16 %v1341, %v1340
      %v1365 = vpack.c.bf16 %v1343, %v1342
      %v1366 = vpack.c.bf16 %v1345, %v1344
      %v1367 = vpack.c.bf16 %v1347, %v1346
      %1368 = vxpose.xlu0.c.b16.start [1/8] %v1352, 128
      %1369 = vxpose.xlu0.c.b16.cont [2/8] %v1353, 128
      %1370 = vxpose.xlu0.c.b16.cont [3/8] %v1354, 128
      %1371 = vxpose.xlu0.c.b16.cont [4/8] %v1355, 128
      %1372 = vxpose.xlu0.c.b16.cont [5/8] %v1356, 128
      %1373 = vxpose.xlu0.c.b16.cont [6/8] %v1357, 128
      %1374 = vxpose.xlu0.c.b16.cont [7/8] %v1358, 128
      %1375 = vxpose.xlu0.c.b16.end [8/8] %v1359, 128
      %v1376 = vpop.trf.xlu0
      %v1377 = vpop.trf.xlu0
      %v1378 = vpop.trf.xlu0
      %v1379 = vpop.trf.xlu0
      %v1380 = vpop.trf.xlu0
      %v1381 = vpop.trf.xlu0
      %v1382 = vpop.trf.xlu0
      %v1383 = vpop.trf.xlu0
      %1384 = vxpose.xlu0.c.b16.start [1/8] %v1360, 128
      %1385 = vxpose.xlu0.c.b16.cont [2/8] %v1361, 128
      %1386 = vxpose.xlu0.c.b16.cont [3/8] %v1362, 128
      %1387 = vxpose.xlu0.c.b16.cont [4/8] %v1363, 128
      %1388 = vxpose.xlu0.c.b16.cont [5/8] %v1364, 128
      %1389 = vxpose.xlu0.c.b16.cont [6/8] %v1365, 128
      %1390 = vxpose.xlu0.c.b16.cont [7/8] %v1366, 128
      %1391 = vxpose.xlu0.c.b16.end [8/8] %v1367, 128
      %v1392 = vpop.trf.xlu0
      %v1393 = vpop.trf.xlu0
      %v1394 = vpop.trf.xlu0
      %v1395 = vpop.trf.xlu0
      %v1396 = vpop.trf.xlu0
      %v1397 = vpop.trf.xlu0
      %v1398 = vpop.trf.xlu0
      %v1399 = vpop.trf.xlu0
      %1416 = vrot.lane.b32.xlu0 %v1352, 96
      %v1417 = vpop.permute.xlu0 %1416
      %1418 = vrot.lane.b32.xlu0 %v1353, 96
      %v1419 = vpop.permute.xlu0 %1418
      %1420 = vrot.lane.b32.xlu0 %v1354, 96
      %v1421 = vpop.permute.xlu0 %1420
      %1422 = vrot.lane.b32.xlu0 %v1355, 96
      %v1423 = vpop.permute.xlu0 %1422
      %1424 = vrot.lane.b32.xlu0 %v1356, 96
      %v1425 = vpop.permute.xlu0 %1424
      %1426 = vrot.lane.b32.xlu0 %v1357, 96
      %v1427 = vpop.permute.xlu0 %1426
      %1428 = vrot.lane.b32.xlu0 %v1358, 96
      %v1429 = vpop.permute.xlu0 %1428
      %1430 = vrot.lane.b32.xlu0 %v1359, 96
      %v1431 = vpop.permute.xlu0 %1430
      %1432 = vrot.lane.b32.xlu0 %v1360, 96
      %v1433 = vpop.permute.xlu0 %1432
      %1434 = vrot.lane.b32.xlu0 %v1361, 96
      %v1435 = vpop.permute.xlu0 %1434
      %1436 = vrot.lane.b32.xlu0 %v1362, 96
      %v1437 = vpop.permute.xlu0 %1436
      %1438 = vrot.lane.b32.xlu0 %v1363, 96
      %v1439 = vpop.permute.xlu0 %1438
      %1440 = vrot.lane.b32.xlu0 %v1364, 96
      %v1441 = vpop.permute.xlu0 %1440
      %1442 = vrot.lane.b32.xlu0 %v1365, 96
      %v1443 = vpop.permute.xlu0 %1442
      %1444 = vrot.lane.b32.xlu0 %v1366, 96
      %v1445 = vpop.permute.xlu0 %1444
      %1446 = vrot.lane.b32.xlu0 %v1367, 96
      %v1447 = vpop.permute.xlu0 %1446
      %1464 = vmatprep.subr.bf16.mxu0 0
      %1465 = vmatpush1.bf16.msra.mxu0 %v1431
      %1466 = vmatprep.subr.bf16.mxu0 0
      %1467 = vmatpush1.bf16.msra.mxu0 %v1429
      %1468 = vmatprep.subr.bf16.mxu0 0
      %1469 = vmatpush1.bf16.msra.mxu0 %v1427
      %1470 = vmatprep.subr.bf16.mxu0 0
      %1471 = vmatpush1.bf16.msra.mxu0 %v1425
      %1472 = vmatprep.subr.bf16.mxu0 0
      %1473 = vmatpush1.bf16.msra.mxu0 %v1423
      %1474 = vmatprep.subr.bf16.mxu0 0
      %1475 = vmatpush1.bf16.msra.mxu0 %v1421
      %1476 = vmatprep.subr.bf16.mxu0 0
      %1477 = vmatpush1.bf16.msra.mxu0 %v1419
      %1478 = vmatprep.subr.bf16.mxu0 0
      %1479 = vmatpush1.bf16.msra.mxu0 %v1417
      %1480 = vmatprep.subr.bf16.mxu0 0
      %1481 = vmatpush2.bf16.msra.mxu0 %v1447
      %1482 = vmatprep.subr.bf16.mxu0 0
      %1483 = vmatpush2.bf16.msra.mxu0 %v1445
      %1484 = vmatprep.subr.bf16.mxu0 0
      %1485 = vmatpush2.bf16.msra.mxu0 %v1443
      %1486 = vmatprep.subr.bf16.mxu0 0
      %1487 = vmatpush2.bf16.msra.mxu0 %v1441
      %1488 = vmatprep.subr.bf16.mxu0 0
      %1489 = vmatpush2.bf16.msra.mxu0 %v1439
      %1490 = vmatprep.subr.bf16.mxu0 0
      %1491 = vmatpush2.bf16.msra.mxu0 %v1437
      %1492 = vmatprep.subr.bf16.mxu0 0
      %1493 = vmatpush2.bf16.msra.mxu0 %v1435
      %1494 = vmatprep.subr.bf16.mxu0 0
      %1495 = vmatpush2.bf16.msra.mxu0 %v1433
      %1496 = vmatprep.mubr.bf16.mxu0 %v1392
      %1497 = vmatmul.mubr.bf16.gmra.mxu0 %v1376
      %v1498 = vpop.f32.mrf.mxu0
      %v1499 = vadd.f32 0.0, %v1498
      %v1500 = vpop.f32.mrf.mxu0
      %v1501 = vpop.f32.mrf.mxu0
      %v1502 = vadd.f32 0.0, %v1501
      %v1503 = vpop.f32.mrf.mxu0
      %1504 = vmatprep.mubr.bf16.mxu0 %v1393
      %1505 = vmatmul.mubr.bf16.gmra.mxu0 %v1377
      %v1506 = vpop.f32.mrf.mxu0
      %v1507 = vadd.f32 0.0, %v1506
      %v1508 = vpop.f32.mrf.mxu0
      %v1509 = vpop.f32.mrf.mxu0
      %v1510 = vadd.f32 0.0, %v1509
      %v1511 = vpop.f32.mrf.mxu0
      %1512 = vdwg.mxu0
      %v1513 = vadd.f32 %v1348, %v1499
      %v1514 = vadd.f32 %v1349, %v1502
      %v1515 = vadd.f32 %v1350, %v1507
      %v1516 = vadd.f32 %v1351, %v1510
      %1517 = vst.msk [vmem:[%s303] sm:$0xff] %vm449, %v1513
      %1518 = vst.msk [vmem:[%s303 + $0x8] sm:$0xff] %vm449, %v1514
      %1519 = vst.msk [vmem:[%s303 + $0x10] sm:$0xff] %vm449, %v1515
      %1520 = vst.msk [vmem:[%s303 + $0x18] sm:$0xff] %vm449, %v1516
      %p1521 = scmp.lt.s32.totalorder %s22, 1
      %s1522 = scalar_select %p1521, %s22, 1
      %p1523 = scmp.lt.s32.totalorder %s23, 0
      %s1524 = scalar_select %p1523, %s23, 0
      %s1525 = smul.addr %s1524, 4
      %s1526 = smul.addr %s1522, 4
      %s1527 = sadd.s32 %s1525, %s1526
      %s1528 = smul.addr %s1527, 8
      %s1529 = scalar_lea.vmem %s6, %s1528
      // Predicated region
      $region49: #{galerkin_transformer_2d.8} parent=43 // pred_check
        %p1530 = pneg %p191
      $region50: #{galerkin_transformer_2d.8} parent=43 // pred_check_branch
        %1532 = sbr.rel (%p1530) target = $region52
      $region51: #{galerkin_transformer_2d.8} parent=43 // pred_region
        _
      $region52: #{galerkin_transformer_2d.8} parent=43 // pred_fallthru
        _
    $region44: #{galerkin_transformer_2d.8} parent=5 // pred_fallthru
      _
    %p1533 = scmp.le.s32.totalorder 2, %s12
    // Predicated region
    $region53: #{galerkin_transformer_2d.8} parent=5 // pred_check
      %p1534 = pneg %p1533
    $region54: #{galerkin_transformer_2d.8} parent=5 // pred_check_branch
      %1536 = sbr.rel (%p1534) target = $region56
    $region55: #{galerkin_transformer_2d.8} parent=5 // pred_region
      %s1537 = ssub.s32 %s12, 2
      // Predicated region
      $region57: #{galerkin_transformer_2d.8} parent=55 // pred_check
        %p1538 = pneg %p197
      $region58: #{galerkin_transformer_2d.8} parent=55 // pred_check_branch
        %1540 = sbr.rel (%p1538) target = $region60
      $region59: #{galerkin_transformer_2d.8} parent=55 // pred_region
        %p1541 = scmp.lt.s32.totalorder %s25, 1
        %s1542 = scalar_select %p1541, %s25, 1
        %p1543 = scmp.lt.s32.totalorder %s26, 0
        %s1544 = scalar_select %p1543, %s26, 0
        %s1545 = smul.addr %s1544, 4
        %s1546 = smul.addr %s1542, 4
        %s1547 = sadd.s32 %s1545, %s1546
        %s1548 = smul.addr %s1547, 8
        %s1549 = scalar_lea.vmem %s6, %s1548
      $region60: #{galerkin_transformer_2d.8} parent=55 // pred_fallthru
        _
    $region56: #{galerkin_transformer_2d.8} parent=5 // pred_fallthru
      _
  $region6: #{galerkin_transformer_2d.8} parent=0 // loop_footer
    %s16 = sadd.s32 1, %s12
  $region7: #{galerkin_transformer_2d.8} parent=0 // loop_footer_branch
    %11 = sbr.rel target = $region3
  $region8: #{galerkin_transformer_2d.8} parent=0 // loop_exit
    _

// kernel: galerkin_transformer_2d.10
$region0: #{galerkin_transformer_2d.10}
  #allocation0 [shape = 'u32[]', space=smem, size = 0x4, offset = 0x4, fixed_abs, tag = 'smem constant byte address 0x4 - core index']
  #allocation1 [shape = 'u32[144,128]{1,0:T(1,128)}', space=vmem, size = 0x12000, scoped, tag = 'internal scratch']
  %s0 = inlined_call_operand.vmem [shape: bf16[2,256,32], index: 0, kind: input, shape index: {}]
  %s1 = inlined_call_operand.vmem [shape: bf16[2,32,32], index: 1, kind: input, shape index: {}]
  %s2 = inlined_call_operand.vmem [shape: f32[2,1,32], index: 2, kind: input, shape index: {}]
  %s3 = inlined_call_operand.vmem [shape: bf16[32,32], index: 3, kind: input, shape index: {}]
  %s4 = inlined_call_operand.vmem [shape: f32[1,32], index: 4, kind: input, shape index: {}]
  %s5 = inlined_call_operand.vmem [shape: bf16[32,32], index: 5, kind: input, shape index: {}]
  %s6 = inlined_call_operand.vmem [shape: f32[1,32], index: 6, kind: input, shape index: {}]
  %s7 = inlined_call_operand.vmem [shape: bf16[2,256,32], index: 7, kind: output, shape index: {}]
  %s8 = sld [smem:[#allocation0]]
  $region61: #{galerkin_transformer_2d.10} parent=0
    _
  %s10 = ssub.s32 1, %s8
  %s11 = scalar_select 0, %s10, %s8
  loop: start=0, step=1, limit=4
  $region2: #{galerkin_transformer_2d.10} parent=0 // loop_pre_header
    _
  $region3: #{galerkin_transformer_2d.10} parent=0 // loop_header
    %s13 = sphi 0, %s17
    %p14 = scmp.ge.s32.totalorder %s13, 4
    %s20 = sphi 0, %s32
    %s21 = sphi 0, %s28
    %s22 = sphi 0, %s20
    %s23 = sphi 0, %s21
    %s24 = sphi 0, %s22
    %s25 = sphi 0, %s23
    %s37 = sphi 0, %s39
    %s40 = sphi 0, %s37
    %s41 = sphi 0, %s40
    %s57 = sphi 0, %s41
    %s63 = sphi 0, %s65
    %s66 = sphi 0, %s63
    %s67 = sphi 0, %s66
    %s83 = sphi 0, %s67
    %s89 = sphi 0, %s91
    %s92 = sphi 0, %s89
    %s93 = sphi 0, %s92
    %s109 = sphi 0, %s93
    %s113 = sphi 0, %s113
    %s115 = sphi 0, %s113
    %s116 = sphi 0, %s115
    %s130 = sphi 0, %s116
    %s134 = sphi 0, %s134
    %s136 = sphi 0, %s134
    %s137 = sphi 0, %s136
    %s151 = sphi 0, %s137
    %s155 = sphi 0, %s155
    %s157 = sphi 0, %s155
    %s158 = sphi 0, %s157
    %s172 = sphi 0, %s158
    %s176 = sphi 0, %s176
    %s178 = sphi 0, %s176
    %s179 = sphi 0, %s178
    %s193 = sphi 0, %s179
    %s201 = sphi 0, %s203
    %s204 = sphi 0, %s201
    %s205 = sphi 0, %s204
    %s221 = sphi 0, %s205
  $region4: #{galerkin_transformer_2d.10} parent=0 // loop_header_branch
    %16 = sbr.rel (%p14) target = $region8
  $region5: #{galerkin_transformer_2d.10} parent=0 // loop_body
    %s18 = ssub.s32 %s13, 1
    %s19 = ssub.s32 %s13, 2
    %s26 = sadd.s32 1, %s21
    %p27 = scmp.ge.s32.totalorder %s26, 1
    %s28 = scalar_select %p27, 0, %s26
    %s29 = sadd.s32 1, %s20
    %s30 = scalar_select %p27, %s29, %s20
    %p31 = scmp.ge.s32.totalorder %s30, 2
    %s32 = scalar_select %p31, 0, %s30
    %s33 = ssub.s32 %s20, %s32
    %s34 = ssub.s32 %s21, %s28
    %s35 = sor.u32 %s33, %s34
    %p36 = scmp.eq.s32.totalorder %s35, 0
    %s38 = sadd.s32 %s37, 1
    %s39 = scalar_select %p36, %s37, %s38
    %p42 = pneg %p36
    %p43 = scmp.eq.s32.totalorder %s13, 1
    %p44 = por %p42, %p43
    %p45 = scmp.ne.s32.totalorder %s37, %s40
    %p46 = scmp.eq.s32.totalorder %s13, 0
    %p47 = por %p45, %p46
    %p48 = scmp.ne.s32.totalorder %s37, %s40
    %p49 = scmp.eq.s32.totalorder %s18, 1
    %p50 = por %p48, %p49
    %p51 = scmp.ne.s32.totalorder %s40, %s41
    %p52 = scmp.eq.s32.totalorder %s18, 0
    %p53 = por %p51, %p52
    %p54 = scmp.ne.s32.totalorder %s40, %s41
    %p55 = scmp.eq.s32.totalorder %s19, 1
    %p56 = por %p54, %p55
    %p58 = scmp.ne.s32.totalorder %s41, %s57
    %p59 = scmp.eq.s32.totalorder %s19, 0
    %p60 = por %p58, %p59
    %s61 = ssub.s32 %s20, %s32
    %p62 = scmp.eq.s32.totalorder %s61, 0
    %s64 = sadd.s32 %s63, 1
    %s65 = scalar_select %p62, %s63, %s64
    %p68 = pneg %p62
    %p69 = scmp.eq.s32.totalorder %s13, 1
    %p70 = por %p68, %p69
    %p71 = scmp.ne.s32.totalorder %s63, %s66
    %p72 = scmp.eq.s32.totalorder %s13, 0
    %p73 = por %p71, %p72
    %p74 = scmp.ne.s32.totalorder %s63, %s66
    %p75 = scmp.eq.s32.totalorder %s18, 1
    %p76 = por %p74, %p75
    %p77 = scmp.ne.s32.totalorder %s66, %s67
    %p78 = scmp.eq.s32.totalorder %s18, 0
    %p79 = por %p77, %p78
    %p80 = scmp.ne.s32.totalorder %s66, %s67
    %p81 = scmp.eq.s32.totalorder %s19, 1
    %p82 = por %p80, %p81
    %p84 = scmp.ne.s32.totalorder %s67, %s83
    %p85 = scmp.eq.s32.totalorder %s19, 0
    %p86 = por %p84, %p85
    %s87 = ssub.s32 %s20, %s32
    %p88 = scmp.eq.s32.totalorder %s87, 0
    %s90 = sadd.s32 %s89, 1
    %s91 = scalar_select %p88, %s89, %s90
    %p94 = pneg %p88
    %p95 = scmp.eq.s32.totalorder %s13, 1
    %p96 = por %p94, %p95
    %p97 = scmp.ne.s32.totalorder %s89, %s92
    %p98 = scmp.eq.s32.totalorder %s13, 0
    %p99 = por %p97, %p98
    %p100 = scmp.ne.s32.totalorder %s89, %s92
    %p101 = scmp.eq.s32.totalorder %s18, 1
    %p102 = por %p100, %p101
    %p103 = scmp.ne.s32.totalorder %s92, %s93
    %p104 = scmp.eq.s32.totalorder %s18, 0
    %p105 = por %p103, %p104
    %p106 = scmp.ne.s32.totalorder %s92, %s93
    %p107 = scmp.eq.s32.totalorder %s19, 1
    %p108 = por %p106, %p107
    %p110 = scmp.ne.s32.totalorder %s93, %s109
    %p111 = scmp.eq.s32.totalorder %s19, 0
    %p112 = por %p110, %p111
    %s114 = sadd.s32 %s113, 1
    %p117 = scmp.eq.s32.totalorder %s13, 1
    %p118 = scmp.ne.s32.totalorder %s113, %s115
    %p119 = scmp.eq.s32.totalorder %s13, 0
    %p120 = por %p118, %p119
    %p121 = scmp.ne.s32.totalorder %s113, %s115
    %p122 = scmp.eq.s32.totalorder %s18, 1
    %p123 = por %p121, %p122
    %p124 = scmp.ne.s32.totalorder %s115, %s116
    %p125 = scmp.eq.s32.totalorder %s18, 0
    %p126 = por %p124, %p125
    %p127 = scmp.ne.s32.totalorder %s115, %s116
    %p128 = scmp.eq.s32.totalorder %s19, 1
    %p129 = por %p127, %p128
    %p131 = scmp.ne.s32.totalorder %s116, %s130
    %p132 = scmp.eq.s32.totalorder %s19, 0
    %p133 = por %p131, %p132
    %s135 = sadd.s32 %s134, 1
    %p138 = scmp.eq.s32.totalorder %s13, 1
    %p139 = scmp.ne.s32.totalorder %s134, %s136
    %p140 = scmp.eq.s32.totalorder %s13, 0
    %p141 = por %p139, %p140
    %p142 = scmp.ne.s32.totalorder %s134, %s136
    %p143 = scmp.eq.s32.totalorder %s18, 1
    %p144 = por %p142, %p143
    %p145 = scmp.ne.s32.totalorder %s136, %s137
    %p146 = scmp.eq.s32.totalorder %s18, 0
    %p147 = por %p145, %p146
    %p148 = scmp.ne.s32.totalorder %s136, %s137
    %p149 = scmp.eq.s32.totalorder %s19, 1
    %p150 = por %p148, %p149
    %p152 = scmp.ne.s32.totalorder %s137, %s151
    %p153 = scmp.eq.s32.totalorder %s19, 0
    %p154 = por %p152, %p153
    %s156 = sadd.s32 %s155, 1
    %p159 = scmp.eq.s32.totalorder %s13, 1
    %p160 = scmp.ne.s32.totalorder %s155, %s157
    %p161 = scmp.eq.s32.totalorder %s13, 0
    %p162 = por %p160, %p161
    %p163 = scmp.ne.s32.totalorder %s155, %s157
    %p164 = scmp.eq.s32.totalorder %s18, 1
    %p165 = por %p163, %p164
    %p166 = scmp.ne.s32.totalorder %s157, %s158
    %p167 = scmp.eq.s32.totalorder %s18, 0
    %p168 = por %p166, %p167
    %p169 = scmp.ne.s32.totalorder %s157, %s158
    %p170 = scmp.eq.s32.totalorder %s19, 1
    %p171 = por %p169, %p170
    %p173 = scmp.ne.s32.totalorder %s158, %s172
    %p174 = scmp.eq.s32.totalorder %s19, 0
    %p175 = por %p173, %p174
    %s177 = sadd.s32 %s176, 1
    %p180 = scmp.eq.s32.totalorder %s13, 1
    %p181 = scmp.ne.s32.totalorder %s176, %s178
    %p182 = scmp.eq.s32.totalorder %s13, 0
    %p183 = por %p181, %p182
    %p184 = scmp.ne.s32.totalorder %s176, %s178
    %p185 = scmp.eq.s32.totalorder %s18, 1
    %p186 = por %p184, %p185
    %p187 = scmp.ne.s32.totalorder %s178, %s179
    %p188 = scmp.eq.s32.totalorder %s18, 0
    %p189 = por %p187, %p188
    %p190 = scmp.ne.s32.totalorder %s178, %s179
    %p191 = scmp.eq.s32.totalorder %s19, 1
    %p192 = por %p190, %p191
    %p194 = scmp.ne.s32.totalorder %s179, %s193
    %p195 = scmp.eq.s32.totalorder %s19, 0
    %p196 = por %p194, %p195
    %s197 = ssub.s32 %s20, %s32
    %s198 = ssub.s32 %s21, %s28
    %s199 = sor.u32 %s197, %s198
    %p200 = scmp.eq.s32.totalorder %s199, 0
    %s202 = sadd.s32 %s201, 1
    %s203 = scalar_select %p200, %s201, %s202
    %p206 = pneg %p200
    %p207 = scmp.eq.s32.totalorder %s13, 1
    %p208 = por %p206, %p207
    %p209 = scmp.ne.s32.totalorder %s201, %s204
    %p210 = scmp.eq.s32.totalorder %s13, 0
    %p211 = por %p209, %p210
    %p212 = scmp.ne.s32.totalorder %s201, %s204
    %p213 = scmp.eq.s32.totalorder %s18, 1
    %p214 = por %p212, %p213
    %p215 = scmp.ne.s32.totalorder %s204, %s205
    %p216 = scmp.eq.s32.totalorder %s18, 0
    %p217 = por %p215, %p216
    %p218 = scmp.ne.s32.totalorder %s204, %s205
    %p219 = scmp.eq.s32.totalorder %s19, 1
    %p220 = por %p218, %p219
    %p222 = scmp.ne.s32.totalorder %s205, %s221
    %p223 = scmp.eq.s32.totalorder %s19, 0
    %p224 = por %p222, %p223
    %p225 = scmp.le.s32.totalorder 1, %s13
    %p226 = scmp.lt.s32.totalorder %s13, 3
    %p227 = pnand %p225, %p226
    %p228 = pneg %p227
    // Predicated region
    $region9: #{galerkin_transformer_2d.10} parent=5 // pred_check
      _
    $region10: #{galerkin_transformer_2d.10} parent=5 // pred_check_branch
      %230 = sbr.rel (%p227) target = $region12
    $region11: #{galerkin_transformer_2d.10} parent=5 // pred_region
      %s231 = ssub.s32 %s13, 1
      // Predicated region
      $region13: #{galerkin_transformer_2d.10} parent=11 // pred_check
        %p232 = pneg %p126
      $region14: #{galerkin_transformer_2d.10} parent=11 // pred_check_branch
        %234 = sbr.rel (%p232) target = $region16
      $region15: #{galerkin_transformer_2d.10} parent=11 // pred_region
        _
      $region16: #{galerkin_transformer_2d.10} parent=11 // pred_fallthru
        _
      // Predicated region
      $region17: #{galerkin_transformer_2d.10} parent=11 // pred_check
        %p235 = pneg %p147
      $region18: #{galerkin_transformer_2d.10} parent=11 // pred_check_branch
        %237 = sbr.rel (%p235) target = $region20
      $region19: #{galerkin_transformer_2d.10} parent=11 // pred_region
        _
      $region20: #{galerkin_transformer_2d.10} parent=11 // pred_fallthru
        _
      // Predicated region
      $region21: #{galerkin_transformer_2d.10} parent=11 // pred_check
        %p238 = pneg %p168
      $region22: #{galerkin_transformer_2d.10} parent=11 // pred_check_branch
        %240 = sbr.rel (%p238) target = $region24
      $region23: #{galerkin_transformer_2d.10} parent=11 // pred_region
        _
      $region24: #{galerkin_transformer_2d.10} parent=11 // pred_fallthru
        _
      // Predicated region
      $region25: #{galerkin_transformer_2d.10} parent=11 // pred_check
        %p241 = pneg %p189
      $region26: #{galerkin_transformer_2d.10} parent=11 // pred_check_branch
        %243 = sbr.rel (%p241) target = $region28
      $region27: #{galerkin_transformer_2d.10} parent=11 // pred_region
        _
      $region28: #{galerkin_transformer_2d.10} parent=11 // pred_fallthru
        _
    $region12: #{galerkin_transformer_2d.10} parent=5 // pred_fallthru
      _
    %p244 = scmp.lt.s32.totalorder %s13, 2
    // Predicated region
    $region29: #{galerkin_transformer_2d.10} parent=5 // pred_check
      %p245 = pneg %p244
    $region30: #{galerkin_transformer_2d.10} parent=5 // pred_check_branch
      %247 = sbr.rel (%p245) target = $region32
    $region31: #{galerkin_transformer_2d.10} parent=5 // pred_region
      // Predicated region
      $region33: #{galerkin_transformer_2d.10} parent=31 // pred_check
        %p248 = pneg %p47
      $region34: #{galerkin_transformer_2d.10} parent=31 // pred_check_branch
        %250 = sbr.rel (%p248) target = $region36
      $region35: #{galerkin_transformer_2d.10} parent=31 // pred_region
        %s251 = smul.u32 32, %s21
        %p252 = scmp.lt.s32.totalorder %s20, 1
        %s253 = scalar_select %p252, %s20, 1
        %p254 = scmp.lt.s32.totalorder %s251, 31
        %s255 = scalar_select %p254, %s251, 31
        %s256 = smul.addr %s253, 32
        %s257 = sadd.s32 %s255, %s256
        %s258 = smul.addr %s257, 4
        %s259 = scalar_lea.vmem %s0, %s258
        %s260 = smul.u32 32, %s21
      $region36: #{galerkin_transformer_2d.10} parent=31 // pred_fallthru
        _
      // Predicated region
      $region37: #{galerkin_transformer_2d.10} parent=31 // pred_check
        %p261 = pneg %p73
      $region38: #{galerkin_transformer_2d.10} parent=31 // pred_check_branch
        %263 = sbr.rel (%p261) target = $region40
      $region39: #{galerkin_transformer_2d.10} parent=31 // pred_region
        %p264 = scmp.lt.s32.totalorder %s20, 1
        %s265 = scalar_select %p264, %s20, 1
        %s266 = smul.addr %s265, 4
        %s267 = smul.addr %s266, 4
        %s268 = scalar_lea.vmem %s1, %s267
      $region40: #{galerkin_transformer_2d.10} parent=31 // pred_fallthru
        _
      // Predicated region
      $region41: #{galerkin_transformer_2d.10} parent=31 // pred_check
        %p269 = pneg %p99
      $region42: #{galerkin_transformer_2d.10} parent=31 // pred_check_branch
        %271 = sbr.rel (%p269) target = $region44
      $region43: #{galerkin_transformer_2d.10} parent=31 // pred_region
        %p272 = scmp.lt.s32.totalorder %s20, 1
        %s273 = scalar_select %p272, %s20, 1
        %s274 = scalar_lea.vmem %s2, %s273
      $region44: #{galerkin_transformer_2d.10} parent=31 // pred_fallthru
        _
    $region32: #{galerkin_transformer_2d.10} parent=5 // pred_fallthru
      _
    %p275 = scmp.le.s32.totalorder 1, %s13
    %p276 = scmp.lt.s32.totalorder %s13, 3
    %p277 = pnand %p275, %p276
    %p278 = pneg %p277
    // Predicated region
    $region45: #{galerkin_transformer_2d.10} parent=5 // pred_check
      _
    $region46: #{galerkin_transformer_2d.10} parent=5 // pred_check_branch
      %280 = sbr.rel (%p277) target = $region48
    $region47: #{galerkin_transformer_2d.10} parent=5 // pred_region
      %s281 = ssub.s32 %s13, 1
      %s282 = smul.u32 32, %s23
      %p283 = scmp.lt.s32.totalorder %s22, 1
      %s284 = scalar_select %p283, %s22, 1
      %p285 = scmp.lt.s32.totalorder %s282, 31
      %s286 = scalar_select %p285, %s282, 31
      %s287 = smul.addr %s284, 32
      %s288 = sadd.s32 %s286, %s287
      %s289 = smul.addr %s288, 4
      %s290 = scalar_lea.vmem %s0, %s289
      %p291 = pneg %p53
      %p292 = pneg %p50
      %p293 = scmp.lt.s32.totalorder %s22, 1
      %s294 = scalar_select %p293, %s22, 1
      %s295 = smul.addr %s294, 4
      %s296 = smul.addr %s295, 4
      %s297 = scalar_lea.vmem %s1, %s296
      %p298 = pneg %p79
      %p299 = pneg %p76
      %p300 = scmp.lt.s32.totalorder %s22, 1
      %s301 = scalar_select %p300, %s22, 1
      %s302 = scalar_lea.vmem %s2, %s301
      %p303 = pneg %p105
      %p304 = pneg %p102
      %p305 = pneg %p126
      %p306 = pneg %p123
      %p307 = pneg %p147
      %p308 = pneg %p144
      %p309 = pneg %p168
      %p310 = pneg %p165
      %p311 = pneg %p189
      %p312 = pneg %p186
      %p313 = pneg %p217
      %p314 = pneg %p214
      %s315 = smul.u32 32, %s23
      %p316 = scmp.lt.s32.totalorder %s22, 1
      %s317 = scalar_select %p316, %s22, 1
      %p318 = scmp.lt.s32.totalorder %s315, 31
      %s319 = scalar_select %p318, %s315, 31
      %s320 = smul.addr %s317, 32
      %s321 = sadd.s32 %s319, %s320
      %s322 = smul.addr %s321, 4
      %s323 = scalar_lea.vmem %s7, %s322
      %s324 = smul.u32 32, %s23
      %p325 = scmp.lt.s32.totalorder %s22, 1
      %s326 = scalar_select %p325, %s22, 1
      %p327 = scmp.lt.s32.totalorder %s324, 31
      %s328 = scalar_select %p327, %s324, 31
      %s329 = smul.addr %s326, 32
      %s330 = sadd.s32 %s328, %s329
      %s331 = smul.addr %s330, 4
      %s332 = scalar_lea.vmem %s0, %s331
      %s333 = smul.u32 32, %s23
      %p334 = scmp.lt.s32.totalorder %s22, 1
      %s335 = scalar_select %p334, %s22, 1
      %s336 = smul.addr %s335, 4
      %s337 = smul.addr %s336, 4
      %s338 = scalar_lea.vmem %s1, %s337
      %p339 = scmp.lt.s32.totalorder %s22, 1
      %s340 = scalar_select %p339, %s22, 1
      %s341 = scalar_lea.vmem %s2, %s340
      %s342 = smul.u32 32, %s23
      %p343 = scmp.lt.s32.totalorder %s22, 1
      %s344 = scalar_select %p343, %s22, 1
      %p345 = scmp.lt.s32.totalorder %s342, 31
      %s346 = scalar_select %p345, %s342, 31
      %s347 = smul.addr %s344, 32
      %s348 = sadd.s32 %s346, %s347
      %s349 = smul.addr %s348, 4
      %s350 = scalar_lea.vmem %s7, %s349
      %s351 = smul.u32 32, %s23
      %v353 = vld [vmem:[%s332] sm:$0xf]
      %v354 = vld [vmem:[%s332 + $0x4] sm:$0xf]
      %v355 = vld [vmem:[%s332 + $0x8] sm:$0xf]
      %v356 = vld [vmem:[%s332 + $0xc] sm:$0xf]
      %v357 = vld [vmem:[%s332 + $0x10] sm:$0xf]
      %v358 = vld [vmem:[%s332 + $0x14] sm:$0xf]
      %v359 = vld [vmem:[%s332 + $0x18] sm:$0xf]
      %v360 = vld [vmem:[%s332 + $0x1c] sm:$0xf]
      %v361 = vld [vmem:[%s332 + $0x20] sm:$0xf]
      %v362 = vld [vmem:[%s332 + $0x24] sm:$0xf]
      %v363 = vld [vmem:[%s332 + $0x28] sm:$0xf]
      %v364 = vld [vmem:[%s332 + $0x2c] sm:$0xf]
      %v365 = vld [vmem:[%s332 + $0x30] sm:$0xf]
      %v366 = vld [vmem:[%s332 + $0x34] sm:$0xf]
      %v367 = vld [vmem:[%s332 + $0x38] sm:$0xf]
      %v368 = vld [vmem:[%s332 + $0x3c] sm:$0xf]
      %v369 = vld [vmem:[%s332 + $0x40] sm:$0xf]
      %v370 = vld [vmem:[%s332 + $0x44] sm:$0xf]
      %v371 = vld [vmem:[%s332 + $0x48] sm:$0xf]
      %v372 = vld [vmem:[%s332 + $0x4c] sm:$0xf]
      %v373 = vld [vmem:[%s332 + $0x50] sm:$0xf]
      %v374 = vld [vmem:[%s332 + $0x54] sm:$0xf]
      %v375 = vld [vmem:[%s332 + $0x58] sm:$0xf]
      %v376 = vld [vmem:[%s332 + $0x5c] sm:$0xf]
      %v377 = vld [vmem:[%s332 + $0x60] sm:$0xf]
      %v378 = vld [vmem:[%s332 + $0x64] sm:$0xf]
      %v379 = vld [vmem:[%s332 + $0x68] sm:$0xf]
      %v380 = vld [vmem:[%s332 + $0x6c] sm:$0xf]
      %v381 = vld [vmem:[%s332 + $0x70] sm:$0xf]
      %v382 = vld [vmem:[%s332 + $0x74] sm:$0xf]
      %v383 = vld [vmem:[%s332 + $0x78] sm:$0xf]
      %v384 = vld [vmem:[%s332 + $0x7c] sm:$0xf]
      %v385 = vunpack.c.l.bf16 %v353
      %v386 = vunpack.c.l.bf16 %v354
      %v387 = vunpack.c.l.bf16 %v355
      %v388 = vunpack.c.l.bf16 %v356
      %v389 = vunpack.c.l.bf16 %v357
      %v390 = vunpack.c.l.bf16 %v358
      %v391 = vunpack.c.l.bf16 %v359
      %v392 = vunpack.c.l.bf16 %v360
      %v393 = vunpack.c.l.bf16 %v361
      %v394 = vunpack.c.l.bf16 %v362
      %v395 = vunpack.c.l.bf16 %v363
      %v396 = vunpack.c.l.bf16 %v364
      %v397 = vunpack.c.l.bf16 %v365
      %v398 = vunpack.c.l.bf16 %v366
      %v399 = vunpack.c.l.bf16 %v367
      %v400 = vunpack.c.l.bf16 %v368
      %v401 = vunpack.c.l.bf16 %v369
      %v402 = vunpack.c.l.bf16 %v370
      %v403 = vunpack.c.l.bf16 %v371
      %v404 = vunpack.c.l.bf16 %v372
      %v405 = vunpack.c.l.bf16 %v373
      %v406 = vunpack.c.l.bf16 %v374
      %v407 = vunpack.c.l.bf16 %v375
      %v408 = vunpack.c.l.bf16 %v376
      %v409 = vunpack.c.l.bf16 %v377
      %v410 = vunpack.c.l.bf16 %v378
      %v411 = vunpack.c.l.bf16 %v379
      %v412 = vunpack.c.l.bf16 %v380
      %v413 = vunpack.c.l.bf16 %v381
      %v414 = vunpack.c.l.bf16 %v382
      %v415 = vunpack.c.l.bf16 %v383
      %v416 = vunpack.c.l.bf16 %v384
      %v417 = vld [vmem:[%s338] sm:$0xf]
      %v418 = vld [vmem:[%s338 + $0x4] sm:$0xf]
      %v419 = vld [vmem:[%s338 + $0x8] sm:$0xf]
      %v420 = vld [vmem:[%s338 + $0xc] sm:$0xf]
      %v421 = vld [vmem:[%s341] sm:$0x1]
      %v423 = vlaneseq
      %v424 = vshrl.u32 %v423, 7
      %v425 = vsub.s32 0, %v424
      %v426 = vrot.slane %v421, %v425
      %v460 = vunpack.c.l.b16 %v353
      %v461 = vunpack.c.l.b16 %v354
      %v462 = vunpack.c.l.b16 %v355
      %v463 = vunpack.c.l.b16 %v356
      %v464 = vunpack.c.l.b16 %v357
      %v465 = vunpack.c.l.b16 %v358
      %v466 = vunpack.c.l.b16 %v359
      %v467 = vunpack.c.l.b16 %v360
      %v468 = vunpack.c.l.b16 %v361
      %v469 = vunpack.c.l.b16 %v362
      %v470 = vunpack.c.l.b16 %v363
      %v471 = vunpack.c.l.b16 %v364
      %v472 = vunpack.c.l.b16 %v365
      %v473 = vunpack.c.l.b16 %v366
      %v474 = vunpack.c.l.b16 %v367
      %v475 = vunpack.c.l.b16 %v368
      %v476 = vunpack.c.l.b16 %v369
      %v477 = vunpack.c.l.b16 %v370
      %v478 = vunpack.c.l.b16 %v371
      %v479 = vunpack.c.l.b16 %v372
      %v480 = vunpack.c.l.b16 %v373
      %v481 = vunpack.c.l.b16 %v374
      %v482 = vunpack.c.l.b16 %v375
      %v483 = vunpack.c.l.b16 %v376
      %v484 = vunpack.c.l.b16 %v377
      %v485 = vunpack.c.l.b16 %v378
      %v486 = vunpack.c.l.b16 %v379
      %v487 = vunpack.c.l.b16 %v380
      %v488 = vunpack.c.l.b16 %v381
      %v489 = vunpack.c.l.b16 %v382
      %v490 = vunpack.c.l.b16 %v383
      %v491 = vunpack.c.l.b16 %v384
      %v492 = vpack.c.b16 %v461, %v460
      %v493 = vpack.c.b16 %v463, %v462
      %v494 = vpack.c.b16 %v465, %v464
      %v495 = vpack.c.b16 %v467, %v466
      %v496 = vpack.c.b16 %v469, %v468
      %v497 = vpack.c.b16 %v471, %v470
      %v498 = vpack.c.b16 %v473, %v472
      %v499 = vpack.c.b16 %v475, %v474
      %v500 = vpack.c.b16 %v477, %v476
      %v501 = vpack.c.b16 %v479, %v478
      %v502 = vpack.c.b16 %v481, %v480
      %v503 = vpack.c.b16 %v483, %v482
      %v504 = vpack.c.b16 %v485, %v484
      %v505 = vpack.c.b16 %v487, %v486
      %v506 = vpack.c.b16 %v489, %v488
      %v507 = vpack.c.b16 %v491, %v490
      %v512 = vunpack.c.l.b16 %v417
      %v513 = vunpack.c.l.b16 %v418
      %v514 = vunpack.c.l.b16 %v419
      %v515 = vunpack.c.l.b16 %v420
      %v516 = vpack.c.b16 %v513, %v512
      %v517 = vpack.c.b16 %v515, %v514
      %vm520 = vcmask 261120
      %v522 = vsel %vm520, %v492, 0
      %v525 = vsel %vm520, %v493, 0
      %v528 = vsel %vm520, %v494, 0
      %v531 = vsel %vm520, %v495, 0
      %v534 = vsel %vm520, %v496, 0
      %v537 = vsel %vm520, %v497, 0
      %v540 = vsel %vm520, %v498, 0
      %v543 = vsel %vm520, %v499, 0
      %v546 = vsel %vm520, %v500, 0
      %v549 = vsel %vm520, %v501, 0
      %v552 = vsel %vm520, %v502, 0
      %v555 = vsel %vm520, %v503, 0
      %v558 = vsel %vm520, %v504, 0
      %v561 = vsel %vm520, %v505, 0
      %v564 = vsel %vm520, %v506, 0
      %v567 = vsel %vm520, %v507, 0
      %569 = vmatprep.subr.bf16.mxu0 0
      %570 = vmatpush1.bf16.msra.mxu0 0
      %571 = vmatprep.subr.bf16.mxu0 0
      %572 = vmatpush1.bf16.msra.mxu0 0
      %573 = vmatprep.subr.bf16.mxu0 0
      %574 = vmatpush1.bf16.msra.mxu0 0
      %575 = vmatprep.subr.bf16.mxu0 0
      %576 = vmatpush1.bf16.msra.mxu0 0
      %577 = vmatprep.subr.bf16.mxu0 0
      %578 = vmatpush1.bf16.msra.mxu0 0
      %579 = vmatprep.subr.bf16.mxu0 0
      %580 = vmatpush1.bf16.msra.mxu0 0
      %581 = vmatprep.subr.bf16.mxu0 0
      %582 = vmatpush1.bf16.msra.mxu0 %v517
      %583 = vmatprep.subr.bf16.mxu0 0
      %584 = vmatpush1.bf16.msra.mxu0 %v516
      %585 = vmatprep.subr.bf16.mxu0 0
      %586 = vmatpush2.bf16.msra.mxu0 0
      %587 = vmatprep.subr.bf16.mxu0 0
      %588 = vmatpush2.bf16.msra.mxu0 0
      %589 = vmatprep.subr.bf16.mxu0 0
      %590 = vmatpush2.bf16.msra.mxu0 0
      %591 = vmatprep.subr.bf16.mxu0 0
      %592 = vmatpush2.bf16.msra.mxu0 0
      %593 = vmatprep.subr.bf16.mxu0 0
      %594 = vmatpush2.bf16.msra.mxu0 0
      %595 = vmatprep.subr.bf16.mxu0 0
      %596 = vmatpush2.bf16.msra.mxu0 0
      %597 = vmatprep.subr.bf16.mxu0 0
      %598 = vmatpush2.bf16.msra.mxu0 0
      %599 = vmatprep.subr.bf16.mxu0 0
      %600 = vmatpush2.bf16.msra.mxu0 0
      %601 = vmatprep.mubr.bf16.mxu0 0
      %602 = vmatmul.mubr.bf16.gmra.mxu0 %v522
      %v603 = vpop.f32.mrf.mxu0
      %v604 = vadd.f32 %v426, %v603
      %v605 = vpop.f32.mrf.mxu0
      %v606 = vpop.f32.mrf.mxu0
      %v607 = vadd.f32 %v426, %v606
      %v608 = vpop.f32.mrf.mxu0
      %609 = vmatprep.mubr.bf16.mxu0 0
      %610 = vmatmul.mubr.bf16.gmra.mxu0 %v525
      %v611 = vpop.f32.mrf.mxu0
      %v612 = vadd.f32 %v426, %v611
      %v613 = vpop.f32.mrf.mxu0
      %v614 = vpop.f32.mrf.mxu0
      %v615 = vadd.f32 %v426, %v614
      %v616 = vpop.f32.mrf.mxu0
      %617 = vmatprep.mubr.bf16.mxu0 0
      %618 = vmatmul.mubr.bf16.gmra.mxu0 %v528
      %v619 = vpop.f32.mrf.mxu0
      %v620 = vadd.f32 %v426, %v619
      %v621 = vpop.f32.mrf.mxu0
      %v622 = vpop.f32.mrf.mxu0
      %v623 = vadd.f32 %v426, %v622
      %v624 = vpop.f32.mrf.mxu0
      %625 = vmatprep.mubr.bf16.mxu0 0
      %626 = vmatmul.mubr.bf16.gmra.mxu0 %v531
      %v627 = vpop.f32.mrf.mxu0
      %v628 = vadd.f32 %v426, %v627
      %v629 = vpop.f32.mrf.mxu0
      %v630 = vpop.f32.mrf.mxu0
      %v631 = vadd.f32 %v426, %v630
      %v632 = vpop.f32.mrf.mxu0
      %633 = vmatprep.mubr.bf16.mxu0 0
      %634 = vmatmul.mubr.bf16.gmra.mxu0 %v534
      %v635 = vpop.f32.mrf.mxu0
      %v636 = vadd.f32 %v426, %v635
      %v637 = vpop.f32.mrf.mxu0
      %v638 = vpop.f32.mrf.mxu0
      %v639 = vadd.f32 %v426, %v638
      %v640 = vpop.f32.mrf.mxu0
      %641 = vmatprep.mubr.bf16.mxu0 0
      %642 = vmatmul.mubr.bf16.gmra.mxu0 %v537
      %v643 = vpop.f32.mrf.mxu0
      %v644 = vadd.f32 %v426, %v643
      %v645 = vpop.f32.mrf.mxu0
      %v646 = vpop.f32.mrf.mxu0
      %v647 = vadd.f32 %v426, %v646
      %v648 = vpop.f32.mrf.mxu0
      %649 = vmatprep.mubr.bf16.mxu0 0
      %650 = vmatmul.mubr.bf16.gmra.mxu0 %v540
      %v651 = vpop.f32.mrf.mxu0
      %v652 = vadd.f32 %v426, %v651
      %v653 = vpop.f32.mrf.mxu0
      %v654 = vpop.f32.mrf.mxu0
      %v655 = vadd.f32 %v426, %v654
      %v656 = vpop.f32.mrf.mxu0
      %657 = vmatprep.mubr.bf16.mxu0 0
      %658 = vmatmul.mubr.bf16.gmra.mxu0 %v543
      %v659 = vpop.f32.mrf.mxu0
      %v660 = vadd.f32 %v426, %v659
      %v661 = vpop.f32.mrf.mxu0
      %v662 = vpop.f32.mrf.mxu0
      %v663 = vadd.f32 %v426, %v662
      %v664 = vpop.f32.mrf.mxu0
      %665 = vmatprep.mubr.bf16.mxu0 0
      %666 = vmatmul.mubr.bf16.gmra.mxu0 %v546
      %v667 = vpop.f32.mrf.mxu0
      %v668 = vadd.f32 %v426, %v667
      %v669 = vpop.f32.mrf.mxu0
      %v670 = vpop.f32.mrf.mxu0
      %v671 = vadd.f32 %v426, %v670
      %v672 = vpop.f32.mrf.mxu0
      %673 = vmatprep.mubr.bf16.mxu0 0
      %674 = vmatmul.mubr.bf16.gmra.mxu0 %v549
      %v675 = vpop.f32.mrf.mxu0
      %v676 = vadd.f32 %v426, %v675
      %v677 = vpop.f32.mrf.mxu0
      %v678 = vpop.f32.mrf.mxu0
      %v679 = vadd.f32 %v426, %v678
      %v680 = vpop.f32.mrf.mxu0
      %681 = vmatprep.mubr.bf16.mxu0 0
      %682 = vmatmul.mubr.bf16.gmra.mxu0 %v552
      %v683 = vpop.f32.mrf.mxu0
      %v684 = vadd.f32 %v426, %v683
      %v685 = vpop.f32.mrf.mxu0
      %v686 = vpop.f32.mrf.mxu0
      %v687 = vadd.f32 %v426, %v686
      %v688 = vpop.f32.mrf.mxu0
      %689 = vmatprep.mubr.bf16.mxu0 0
      %690 = vmatmul.mubr.bf16.gmra.mxu0 %v555
      %v691 = vpop.f32.mrf.mxu0
      %v692 = vadd.f32 %v426, %v691
      %v693 = vpop.f32.mrf.mxu0
      %v694 = vpop.f32.mrf.mxu0
      %v695 = vadd.f32 %v426, %v694
      %v696 = vpop.f32.mrf.mxu0
      %697 = vmatprep.mubr.bf16.mxu0 0
      %698 = vmatmul.mubr.bf16.gmra.mxu0 %v558
      %v699 = vpop.f32.mrf.mxu0
      %v700 = vadd.f32 %v426, %v699
      %v701 = vpop.f32.mrf.mxu0
      %v702 = vpop.f32.mrf.mxu0
      %v703 = vadd.f32 %v426, %v702
      %v704 = vpop.f32.mrf.mxu0
      %705 = vmatprep.mubr.bf16.mxu0 0
      %706 = vmatmul.mubr.bf16.gmra.mxu0 %v561
      %v707 = vpop.f32.mrf.mxu0
      %v708 = vadd.f32 %v426, %v707
      %v709 = vpop.f32.mrf.mxu0
      %v710 = vpop.f32.mrf.mxu0
      %v711 = vadd.f32 %v426, %v710
      %v712 = vpop.f32.mrf.mxu0
      %713 = vmatprep.mubr.bf16.mxu0 0
      %714 = vmatmul.mubr.bf16.gmra.mxu0 %v564
      %v715 = vpop.f32.mrf.mxu0
      %v716 = vadd.f32 %v426, %v715
      %v717 = vpop.f32.mrf.mxu0
      %v718 = vpop.f32.mrf.mxu0
      %v719 = vadd.f32 %v426, %v718
      %v720 = vpop.f32.mrf.mxu0
      %721 = vmatprep.mubr.bf16.mxu0 0
      %722 = vmatmul.mubr.bf16.gmra.mxu0 %v567
      %v723 = vpop.f32.mrf.mxu0
      %v724 = vadd.f32 %v426, %v723
      %v725 = vpop.f32.mrf.mxu0
      %v726 = vpop.f32.mrf.mxu0
      %v727 = vadd.f32 %v426, %v726
      %v728 = vpop.f32.mrf.mxu0
      %729 = vdwg.mxu0
      %v730 = vadd.f32 %v604, %v385
      %v731 = vadd.f32 %v607, %v386
      %v732 = vadd.f32 %v612, %v387
      %v733 = vadd.f32 %v615, %v388
      %v734 = vadd.f32 %v620, %v389
      %v735 = vadd.f32 %v623, %v390
      %v736 = vadd.f32 %v628, %v391
      %v737 = vadd.f32 %v631, %v392
      %v738 = vadd.f32 %v636, %v393
      %v739 = vadd.f32 %v639, %v394
      %v740 = vadd.f32 %v644, %v395
      %v741 = vadd.f32 %v647, %v396
      %v742 = vadd.f32 %v652, %v397
      %v743 = vadd.f32 %v655, %v398
      %v744 = vadd.f32 %v660, %v399
      %v745 = vadd.f32 %v663, %v400
      %v746 = vadd.f32 %v668, %v401
      %v747 = vadd.f32 %v671, %v402
      %v748 = vadd.f32 %v676, %v403
      %v749 = vadd.f32 %v679, %v404
      %v750 = vadd.f32 %v684, %v405
      %v751 = vadd.f32 %v687, %v406
      %v752 = vadd.f32 %v692, %v407
      %v753 = vadd.f32 %v695, %v408
      %v754 = vadd.f32 %v700, %v409
      %v755 = vadd.f32 %v703, %v410
      %v756 = vadd.f32 %v708, %v411
      %v757 = vadd.f32 %v711, %v412
      %v758 = vadd.f32 %v716, %v413
      %v759 = vadd.f32 %v719, %v414
      %v760 = vadd.f32 %v724, %v415
      %v761 = vadd.f32 %v727, %v416
      %v762 = vpack.c.bf16 %v731, %v730
      %v763 = vpack.c.bf16 %v733, %v732
      %v764 = vpack.c.bf16 %v735, %v734
      %v765 = vpack.c.bf16 %v737, %v736
      %v766 = vpack.c.bf16 %v739, %v738
      %v767 = vpack.c.bf16 %v741, %v740
      %v768 = vpack.c.bf16 %v743, %v742
      %v769 = vpack.c.bf16 %v745, %v744
      %v770 = vpack.c.bf16 %v747, %v746
      %v771 = vpack.c.bf16 %v749, %v748
      %v772 = vpack.c.bf16 %v751, %v750
      %v773 = vpack.c.bf16 %v753, %v752
      %v774 = vpack.c.bf16 %v755, %v754
      %v775 = vpack.c.bf16 %v757, %v756
      %v776 = vpack.c.bf16 %v759, %v758
      %v777 = vpack.c.bf16 %v761, %v760
      %v778 = vld [vmem:[%s3] sm:$0xf]
      %v779 = vld [vmem:[%s3 + $0x4] sm:$0xf]
      %v780 = vld [vmem:[%s3 + $0x8] sm:$0xf]
      %v781 = vld [vmem:[%s3 + $0xc] sm:$0xf]
      %v782 = vld [vmem:[%s4] sm:$0x1]
      %v784 = vlaneseq
      %v785 = vshrl.u32 %v784, 7
      %v786 = vsub.s32 0, %v785
      %v787 = vrot.slane %v782, %v786
      %v793 = vunpack.c.l.b16 %v778
      %v794 = vunpack.c.l.b16 %v779
      %v795 = vunpack.c.l.b16 %v780
      %v796 = vunpack.c.l.b16 %v781
      %v797 = vpack.c.b16 %v794, %v793
      %v798 = vpack.c.b16 %v796, %v795
      %v802 = vsel %vm520, %v762, 0
      %v805 = vsel %vm520, %v763, 0
      %v808 = vsel %vm520, %v764, 0
      %v811 = vsel %vm520, %v765, 0
      %v814 = vsel %vm520, %v766, 0
      %v817 = vsel %vm520, %v767, 0
      %v820 = vsel %vm520, %v768, 0
      %v823 = vsel %vm520, %v769, 0
      %v826 = vsel %vm520, %v770, 0
      %v829 = vsel %vm520, %v771, 0
      %v832 = vsel %vm520, %v772, 0
      %v835 = vsel %vm520, %v773, 0
      %v838 = vsel %vm520, %v774, 0
      %v841 = vsel %vm520, %v775, 0
      %v844 = vsel %vm520, %v776, 0
      %v847 = vsel %vm520, %v777, 0
      %849 = vmatprep.subr.bf16.mxu0 0
      %850 = vmatpush1.bf16.msra.mxu0 0
      %851 = vmatprep.subr.bf16.mxu0 0
      %852 = vmatpush1.bf16.msra.mxu0 0
      %853 = vmatprep.subr.bf16.mxu0 0
      %854 = vmatpush1.bf16.msra.mxu0 0
      %855 = vmatprep.subr.bf16.mxu0 0
      %856 = vmatpush1.bf16.msra.mxu0 0
      %857 = vmatprep.subr.bf16.mxu0 0
      %858 = vmatpush1.bf16.msra.mxu0 0
      %859 = vmatprep.subr.bf16.mxu0 0
      %860 = vmatpush1.bf16.msra.mxu0 0
      %861 = vmatprep.subr.bf16.mxu0 0
      %862 = vmatpush1.bf16.msra.mxu0 %v798
      %863 = vmatprep.subr.bf16.mxu0 0
      %864 = vmatpush1.bf16.msra.mxu0 %v797
      %865 = vmatprep.subr.bf16.mxu0 0
      %866 = vmatpush2.bf16.msra.mxu0 0
      %867 = vmatprep.subr.bf16.mxu0 0
      %868 = vmatpush2.bf16.msra.mxu0 0
      %869 = vmatprep.subr.bf16.mxu0 0
      %870 = vmatpush2.bf16.msra.mxu0 0
      %871 = vmatprep.subr.bf16.mxu0 0
      %872 = vmatpush2.bf16.msra.mxu0 0
      %873 = vmatprep.subr.bf16.mxu0 0
      %874 = vmatpush2.bf16.msra.mxu0 0
      %875 = vmatprep.subr.bf16.mxu0 0
      %876 = vmatpush2.bf16.msra.mxu0 0
      %877 = vmatprep.subr.bf16.mxu0 0
      %878 = vmatpush2.bf16.msra.mxu0 0
      %879 = vmatprep.subr.bf16.mxu0 0
      %880 = vmatpush2.bf16.msra.mxu0 0
      %881 = vmatprep.mubr.bf16.mxu0 0
      %882 = vmatmul.mubr.bf16.gmra.mxu0 %v802
      %v883 = vpop.f32.mrf.mxu0
      %v884 = vadd.f32 %v787, %v883
      %v885 = vpop.f32.mrf.mxu0
      %v886 = vpop.f32.mrf.mxu0
      %v887 = vadd.f32 %v787, %v886
      %v888 = vpop.f32.mrf.mxu0
      %889 = vmatprep.mubr.bf16.mxu0 0
      %890 = vmatmul.mubr.bf16.gmra.mxu0 %v805
      %v891 = vpop.f32.mrf.mxu0
      %v892 = vadd.f32 %v787, %v891
      %v893 = vpop.f32.mrf.mxu0
      %v894 = vpop.f32.mrf.mxu0
      %v895 = vadd.f32 %v787, %v894
      %v896 = vpop.f32.mrf.mxu0
      %897 = vmatprep.mubr.bf16.mxu0 0
      %898 = vmatmul.mubr.bf16.gmra.mxu0 %v808
      %v899 = vpop.f32.mrf.mxu0
      %v900 = vadd.f32 %v787, %v899
      %v901 = vpop.f32.mrf.mxu0
      %v902 = vpop.f32.mrf.mxu0
      %v903 = vadd.f32 %v787, %v902
      %v904 = vpop.f32.mrf.mxu0
      %905 = vmatprep.mubr.bf16.mxu0 0
      %906 = vmatmul.mubr.bf16.gmra.mxu0 %v811
      %v907 = vpop.f32.mrf.mxu0
      %v908 = vadd.f32 %v787, %v907
      %v909 = vpop.f32.mrf.mxu0
      %v910 = vpop.f32.mrf.mxu0
      %v911 = vadd.f32 %v787, %v910
      %v912 = vpop.f32.mrf.mxu0
      %913 = vmatprep.mubr.bf16.mxu0 0
      %914 = vmatmul.mubr.bf16.gmra.mxu0 %v814
      %v915 = vpop.f32.mrf.mxu0
      %v916 = vadd.f32 %v787, %v915
      %v917 = vpop.f32.mrf.mxu0
      %v918 = vpop.f32.mrf.mxu0
      %v919 = vadd.f32 %v787, %v918
      %v920 = vpop.f32.mrf.mxu0
      %921 = vmatprep.mubr.bf16.mxu0 0
      %922 = vmatmul.mubr.bf16.gmra.mxu0 %v817
      %v923 = vpop.f32.mrf.mxu0
      %v924 = vadd.f32 %v787, %v923
      %v925 = vpop.f32.mrf.mxu0
      %v926 = vpop.f32.mrf.mxu0
      %v927 = vadd.f32 %v787, %v926
      %v928 = vpop.f32.mrf.mxu0
      %929 = vmatprep.mubr.bf16.mxu0 0
      %930 = vmatmul.mubr.bf16.gmra.mxu0 %v820
      %v931 = vpop.f32.mrf.mxu0
      %v932 = vadd.f32 %v787, %v931
      %v933 = vpop.f32.mrf.mxu0
      %v934 = vpop.f32.mrf.mxu0
      %v935 = vadd.f32 %v787, %v934
      %v936 = vpop.f32.mrf.mxu0
      %937 = vmatprep.mubr.bf16.mxu0 0
      %938 = vmatmul.mubr.bf16.gmra.mxu0 %v823
      %v939 = vpop.f32.mrf.mxu0
      %v940 = vadd.f32 %v787, %v939
      %v941 = vpop.f32.mrf.mxu0
      %v942 = vpop.f32.mrf.mxu0
      %v943 = vadd.f32 %v787, %v942
      %v944 = vpop.f32.mrf.mxu0
      %945 = vmatprep.mubr.bf16.mxu0 0
      %946 = vmatmul.mubr.bf16.gmra.mxu0 %v826
      %v947 = vpop.f32.mrf.mxu0
      %v948 = vadd.f32 %v787, %v947
      %v949 = vpop.f32.mrf.mxu0
      %v950 = vpop.f32.mrf.mxu0
      %v951 = vadd.f32 %v787, %v950
      %v952 = vpop.f32.mrf.mxu0
      %953 = vmatprep.mubr.bf16.mxu0 0
      %954 = vmatmul.mubr.bf16.gmra.mxu0 %v829
      %v955 = vpop.f32.mrf.mxu0
      %v956 = vadd.f32 %v787, %v955
      %v957 = vpop.f32.mrf.mxu0
      %v958 = vpop.f32.mrf.mxu0
      %v959 = vadd.f32 %v787, %v958
      %v960 = vpop.f32.mrf.mxu0
      %961 = vmatprep.mubr.bf16.mxu0 0
      %962 = vmatmul.mubr.bf16.gmra.mxu0 %v832
      %v963 = vpop.f32.mrf.mxu0
      %v964 = vadd.f32 %v787, %v963
      %v965 = vpop.f32.mrf.mxu0
      %v966 = vpop.f32.mrf.mxu0
      %v967 = vadd.f32 %v787, %v966
      %v968 = vpop.f32.mrf.mxu0
      %969 = vmatprep.mubr.bf16.mxu0 0
      %970 = vmatmul.mubr.bf16.gmra.mxu0 %v835
      %v971 = vpop.f32.mrf.mxu0
      %v972 = vadd.f32 %v787, %v971
      %v973 = vpop.f32.mrf.mxu0
      %v974 = vpop.f32.mrf.mxu0
      %v975 = vadd.f32 %v787, %v974
      %v976 = vpop.f32.mrf.mxu0
      %977 = vmatprep.mubr.bf16.mxu0 0
      %978 = vmatmul.mubr.bf16.gmra.mxu0 %v838
      %v979 = vpop.f32.mrf.mxu0
      %v980 = vadd.f32 %v787, %v979
      %v981 = vpop.f32.mrf.mxu0
      %v982 = vpop.f32.mrf.mxu0
      %v983 = vadd.f32 %v787, %v982
      %v984 = vpop.f32.mrf.mxu0
      %985 = vmatprep.mubr.bf16.mxu0 0
      %986 = vmatmul.mubr.bf16.gmra.mxu0 %v841
      %v987 = vpop.f32.mrf.mxu0
      %v988 = vadd.f32 %v787, %v987
      %v989 = vpop.f32.mrf.mxu0
      %v990 = vpop.f32.mrf.mxu0
      %v991 = vadd.f32 %v787, %v990
      %v992 = vpop.f32.mrf.mxu0
      %993 = vmatprep.mubr.bf16.mxu0 0
      %994 = vmatmul.mubr.bf16.gmra.mxu0 %v844
      %v995 = vpop.f32.mrf.mxu0
      %v996 = vadd.f32 %v787, %v995
      %v997 = vpop.f32.mrf.mxu0
      %v998 = vpop.f32.mrf.mxu0
      %v999 = vadd.f32 %v787, %v998
      %v1000 = vpop.f32.mrf.mxu0
      %1001 = vmatprep.mubr.bf16.mxu0 0
      %1002 = vmatmul.mubr.bf16.gmra.mxu0 %v847
      %v1003 = vpop.f32.mrf.mxu0
      %v1004 = vadd.f32 %v787, %v1003
      %v1005 = vpop.f32.mrf.mxu0
      %v1006 = vpop.f32.mrf.mxu0
      %v1007 = vadd.f32 %v787, %v1006
      %v1008 = vpop.f32.mrf.mxu0
      %1009 = vdwg.mxu0
      %v1010 = vmul.f32 %v884, %v884
      %v1011 = vmul.f32 %v887, %v887
      %v1012 = vmul.f32 %v892, %v892
      %v1013 = vmul.f32 %v895, %v895
      %v1014 = vmul.f32 %v900, %v900
      %v1015 = vmul.f32 %v903, %v903
      %v1016 = vmul.f32 %v908, %v908
      %v1017 = vmul.f32 %v911, %v911
      %v1018 = vmul.f32 %v916, %v916
      %v1019 = vmul.f32 %v919, %v919
      %v1020 = vmul.f32 %v924, %v924
      %v1021 = vmul.f32 %v927, %v927
      %v1022 = vmul.f32 %v932, %v932
      %v1023 = vmul.f32 %v935, %v935
      %v1024 = vmul.f32 %v940, %v940
      %v1025 = vmul.f32 %v943, %v943
      %v1026 = vmul.f32 %v948, %v948
      %v1027 = vmul.f32 %v951, %v951
      %v1028 = vmul.f32 %v956, %v956
      %v1029 = vmul.f32 %v959, %v959
      %v1030 = vmul.f32 %v964, %v964
      %v1031 = vmul.f32 %v967, %v967
      %v1032 = vmul.f32 %v972, %v972
      %v1033 = vmul.f32 %v975, %v975
      %v1034 = vmul.f32 %v980, %v980
      %v1035 = vmul.f32 %v983, %v983
      %v1036 = vmul.f32 %v988, %v988
      %v1037 = vmul.f32 %v991, %v991
      %v1038 = vmul.f32 %v996, %v996
      %v1039 = vmul.f32 %v999, %v999
      %v1040 = vmul.f32 %v1004, %v1004
      %v1041 = vmul.f32 %v1007, %v1007
      %v1042 = vmul.f32 %v884, %v1010
      %v1043 = vmul.f32 %v887, %v1011
      %v1044 = vmul.f32 %v892, %v1012
      %v1045 = vmul.f32 %v895, %v1013
      %v1046 = vmul.f32 %v900, %v1014
      %v1047 = vmul.f32 %v903, %v1015
      %v1048 = vmul.f32 %v908, %v1016
      %v1049 = vmul.f32 %v911, %v1017
      %v1050 = vmul.f32 %v916, %v1018
      %v1051 = vmul.f32 %v919, %v1019
      %v1052 = vmul.f32 %v924, %v1020
      %v1053 = vmul.f32 %v927, %v1021
      %v1054 = vmul.f32 %v932, %v1022
      %v1055 = vmul.f32 %v935, %v1023
      %v1056 = vmul.f32 %v940, %v1024
      %v1057 = vmul.f32 %v943, %v1025
      %v1058 = vmul.f32 %v948, %v1026
      %v1059 = vmul.f32 %v951, %v1027
      %v1060 = vmul.f32 %v956, %v1028
      %v1061 = vmul.f32 %v959, %v1029
      %v1062 = vmul.f32 %v964, %v1030
      %v1063 = vmul.f32 %v967, %v1031
      %v1064 = vmul.f32 %v972, %v1032
      %v1065 = vmul.f32 %v975, %v1033
      %v1066 = vmul.f32 %v980, %v1034
      %v1067 = vmul.f32 %v983, %v1035
      %v1068 = vmul.f32 %v988, %v1036
      %v1069 = vmul.f32 %v991, %v1037
      %v1070 = vmul.f32 %v996, %v1038
      %v1071 = vmul.f32 %v999, %v1039
      %v1072 = vmul.f32 %v1004, %v1040
      %v1073 = vmul.f32 %v1007, %v1041
      %v1074 = vmul.f32 %v1042, 0.044715
      %v1075 = vmul.f32 %v1043, 0.044715
      %v1076 = vmul.f32 %v1044, 0.044715
      %v1077 = vmul.f32 %v1045, 0.044715
      %v1078 = vmul.f32 %v1046, 0.044715
      %v1079 = vmul.f32 %v1047, 0.044715
      %v1080 = vmul.f32 %v1048, 0.044715
      %v1081 = vmul.f32 %v1049, 0.044715
      %v1082 = vmul.f32 %v1050, 0.044715
      %v1083 = vmul.f32 %v1051, 0.044715
      %v1084 = vmul.f32 %v1052, 0.044715
      %v1085 = vmul.f32 %v1053, 0.044715
      %v1086 = vmul.f32 %v1054, 0.044715
      %v1087 = vmul.f32 %v1055, 0.044715
      %v1088 = vmul.f32 %v1056, 0.044715
      %v1089 = vmul.f32 %v1057, 0.044715
      %v1090 = vmul.f32 %v1058, 0.044715
      %v1091 = vmul.f32 %v1059, 0.044715
      %v1092 = vmul.f32 %v1060, 0.044715
      %v1093 = vmul.f32 %v1061, 0.044715
      %v1094 = vmul.f32 %v1062, 0.044715
      %v1095 = vmul.f32 %v1063, 0.044715
      %v1096 = vmul.f32 %v1064, 0.044715
      %v1097 = vmul.f32 %v1065, 0.044715
      %v1098 = vmul.f32 %v1066, 0.044715
      %v1099 = vmul.f32 %v1067, 0.044715
      %v1100 = vmul.f32 %v1068, 0.044715
      %v1101 = vmul.f32 %v1069, 0.044715
      %v1102 = vmul.f32 %v1070, 0.044715
      %v1103 = vmul.f32 %v1071, 0.044715
      %v1104 = vmul.f32 %v1072, 0.044715
      %v1105 = vmul.f32 %v1073, 0.044715
      %v1106 = vadd.f32 %v884, %v1074
      %v1107 = vadd.f32 %v887, %v1075
      %v1108 = vadd.f32 %v892, %v1076
      %v1109 = vadd.f32 %v895, %v1077
      %v1110 = vadd.f32 %v900, %v1078
      %v1111 = vadd.f32 %v903, %v1079
      %v1112 = vadd.f32 %v908, %v1080
      %v1113 = vadd.f32 %v911, %v1081
      %v1114 = vadd.f32 %v916, %v1082
      %v1115 = vadd.f32 %v919, %v1083
      %v1116 = vadd.f32 %v924, %v1084
      %v1117 = vadd.f32 %v927, %v1085
      %v1118 = vadd.f32 %v932, %v1086
      %v1119 = vadd.f32 %v935, %v1087
      %v1120 = vadd.f32 %v940, %v1088
      %v1121 = vadd.f32 %v943, %v1089
      %v1122 = vadd.f32 %v948, %v1090
      %v1123 = vadd.f32 %v951, %v1091
      %v1124 = vadd.f32 %v956, %v1092
      %v1125 = vadd.f32 %v959, %v1093
      %v1126 = vadd.f32 %v964, %v1094
      %v1127 = vadd.f32 %v967, %v1095
      %v1128 = vadd.f32 %v972, %v1096
      %v1129 = vadd.f32 %v975, %v1097
      %v1130 = vadd.f32 %v980, %v1098
      %v1131 = vadd.f32 %v983, %v1099
      %v1132 = vadd.f32 %v988, %v1100
      %v1133 = vadd.f32 %v991, %v1101
      %v1134 = vadd.f32 %v996, %v1102
      %v1135 = vadd.f32 %v999, %v1103
      %v1136 = vadd.f32 %v1004, %v1104
      %v1137 = vadd.f32 %v1007, %v1105
      %v1138 = vmul.f32 %v1106, 0.7978846
      %v1139 = vmul.f32 %v1107, 0.7978846
      %v1140 = vmul.f32 %v1108, 0.7978846
      %v1141 = vmul.f32 %v1109, 0.7978846
      %v1142 = vmul.f32 %v1110, 0.7978846
      %v1143 = vmul.f32 %v1111, 0.7978846
      %v1144 = vmul.f32 %v1112, 0.7978846
      %v1145 = vmul.f32 %v1113, 0.7978846
      %v1146 = vmul.f32 %v1114, 0.7978846
      %v1147 = vmul.f32 %v1115, 0.7978846
      %v1148 = vmul.f32 %v1116, 0.7978846
      %v1149 = vmul.f32 %v1117, 0.7978846
      %v1150 = vmul.f32 %v1118, 0.7978846
      %v1151 = vmul.f32 %v1119, 0.7978846
      %v1152 = vmul.f32 %v1120, 0.7978846
      %v1153 = vmul.f32 %v1121, 0.7978846
      %v1154 = vmul.f32 %v1122, 0.7978846
      %v1155 = vmul.f32 %v1123, 0.7978846
      %v1156 = vmul.f32 %v1124, 0.7978846
      %v1157 = vmul.f32 %v1125, 0.7978846
      %v1158 = vmul.f32 %v1126, 0.7978846
      %v1159 = vmul.f32 %v1127, 0.7978846
      %v1160 = vmul.f32 %v1128, 0.7978846
      %v1161 = vmul.f32 %v1129, 0.7978846
      %v1162 = vmul.f32 %v1130, 0.7978846
      %v1163 = vmul.f32 %v1131, 0.7978846
      %v1164 = vmul.f32 %v1132, 0.7978846
      %v1165 = vmul.f32 %v1133, 0.7978846
      %v1166 = vmul.f32 %v1134, 0.7978846
      %v1167 = vmul.f32 %v1135, 0.7978846
      %v1168 = vmul.f32 %v1136, 0.7978846
      %v1169 = vmul.f32 %v1137, 0.7978846
      %v1170 = vtanh.pop %v1138
      %v1171 = vtanh.pop %v1139
      %v1172 = vtanh.pop %v1140
      %v1173 = vtanh.pop %v1141
      %v1174 = vtanh.pop %v1142
      %v1175 = vtanh.pop %v1143
      %v1176 = vtanh.pop %v1144
      %v1177 = vtanh.pop %v1145
      %v1178 = vtanh.pop %v1146
      %v1179 = vtanh.pop %v1147
      %v1180 = vtanh.pop %v1148
      %v1181 = vtanh.pop %v1149
      %v1182 = vtanh.pop %v1150
      %v1183 = vtanh.pop %v1151
      %v1184 = vtanh.pop %v1152
      %v1185 = vtanh.pop %v1153
      %v1186 = vtanh.pop %v1154
      %v1187 = vtanh.pop %v1155
      %v1188 = vtanh.pop %v1156
      %v1189 = vtanh.pop %v1157
      %v1190 = vtanh.pop %v1158
      %v1191 = vtanh.pop %v1159
      %v1192 = vtanh.pop %v1160
      %v1193 = vtanh.pop %v1161
      %v1194 = vtanh.pop %v1162
      %v1195 = vtanh.pop %v1163
      %v1196 = vtanh.pop %v1164
      %v1197 = vtanh.pop %v1165
      %v1198 = vtanh.pop %v1166
      %v1199 = vtanh.pop %v1167
      %v1200 = vtanh.pop %v1168
      %v1201 = vtanh.pop %v1169
      %v1202 = vadd.f32 %v1170, 1.0
      %v1203 = vadd.f32 %v1171, 1.0
      %v1204 = vadd.f32 %v1172, 1.0
      %v1205 = vadd.f32 %v1173, 1.0
      %v1206 = vadd.f32 %v1174, 1.0
      %v1207 = vadd.f32 %v1175, 1.0
      %v1208 = vadd.f32 %v1176, 1.0
      %v1209 = vadd.f32 %v1177, 1.0
      %v1210 = vadd.f32 %v1178, 1.0
      %v1211 = vadd.f32 %v1179, 1.0
      %v1212 = vadd.f32 %v1180, 1.0
      %v1213 = vadd.f32 %v1181, 1.0
      %v1214 = vadd.f32 %v1182, 1.0
      %v1215 = vadd.f32 %v1183, 1.0
      %v1216 = vadd.f32 %v1184, 1.0
      %v1217 = vadd.f32 %v1185, 1.0
      %v1218 = vadd.f32 %v1186, 1.0
      %v1219 = vadd.f32 %v1187, 1.0
      %v1220 = vadd.f32 %v1188, 1.0
      %v1221 = vadd.f32 %v1189, 1.0
      %v1222 = vadd.f32 %v1190, 1.0
      %v1223 = vadd.f32 %v1191, 1.0
      %v1224 = vadd.f32 %v1192, 1.0
      %v1225 = vadd.f32 %v1193, 1.0
      %v1226 = vadd.f32 %v1194, 1.0
      %v1227 = vadd.f32 %v1195, 1.0
      %v1228 = vadd.f32 %v1196, 1.0
      %v1229 = vadd.f32 %v1197, 1.0
      %v1230 = vadd.f32 %v1198, 1.0
      %v1231 = vadd.f32 %v1199, 1.0
      %v1232 = vadd.f32 %v1200, 1.0
      %v1233 = vadd.f32 %v1201, 1.0
      %v1234 = vmul.f32 %v1202, 0.5
      %v1235 = vmul.f32 %v1203, 0.5
      %v1236 = vmul.f32 %v1204, 0.5
      %v1237 = vmul.f32 %v1205, 0.5
      %v1238 = vmul.f32 %v1206, 0.5
      %v1239 = vmul.f32 %v1207, 0.5
      %v1240 = vmul.f32 %v1208, 0.5
      %v1241 = vmul.f32 %v1209, 0.5
      %v1242 = vmul.f32 %v1210, 0.5
      %v1243 = vmul.f32 %v1211, 0.5
      %v1244 = vmul.f32 %v1212, 0.5
      %v1245 = vmul.f32 %v1213, 0.5
      %v1246 = vmul.f32 %v1214, 0.5
      %v1247 = vmul.f32 %v1215, 0.5
      %v1248 = vmul.f32 %v1216, 0.5
      %v1249 = vmul.f32 %v1217, 0.5
      %v1250 = vmul.f32 %v1218, 0.5
      %v1251 = vmul.f32 %v1219, 0.5
      %v1252 = vmul.f32 %v1220, 0.5
      %v1253 = vmul.f32 %v1221, 0.5
      %v1254 = vmul.f32 %v1222, 0.5
      %v1255 = vmul.f32 %v1223, 0.5
      %v1256 = vmul.f32 %v1224, 0.5
      %v1257 = vmul.f32 %v1225, 0.5
      %v1258 = vmul.f32 %v1226, 0.5
      %v1259 = vmul.f32 %v1227, 0.5
      %v1260 = vmul.f32 %v1228, 0.5
      %v1261 = vmul.f32 %v1229, 0.5
      %v1262 = vmul.f32 %v1230, 0.5
      %v1263 = vmul.f32 %v1231, 0.5
      %v1264 = vmul.f32 %v1232, 0.5
      %v1265 = vmul.f32 %v1233, 0.5
      %v1266 = vmul.f32 %v884, %v1234
      %v1267 = vmul.f32 %v887, %v1235
      %v1268 = vmul.f32 %v892, %v1236
      %v1269 = vmul.f32 %v895, %v1237
      %v1270 = vmul.f32 %v900, %v1238
      %v1271 = vmul.f32 %v903, %v1239
      %v1272 = vmul.f32 %v908, %v1240
      %v1273 = vmul.f32 %v911, %v1241
      %v1274 = vmul.f32 %v916, %v1242
      %v1275 = vmul.f32 %v919, %v1243
      %v1276 = vmul.f32 %v924, %v1244
      %v1277 = vmul.f32 %v927, %v1245
      %v1278 = vmul.f32 %v932, %v1246
      %v1279 = vmul.f32 %v935, %v1247
      %v1280 = vmul.f32 %v940, %v1248
      %v1281 = vmul.f32 %v943, %v1249
      %v1282 = vmul.f32 %v948, %v1250
      %v1283 = vmul.f32 %v951, %v1251
      %v1284 = vmul.f32 %v956, %v1252
      %v1285 = vmul.f32 %v959, %v1253
      %v1286 = vmul.f32 %v964, %v1254
      %v1287 = vmul.f32 %v967, %v1255
      %v1288 = vmul.f32 %v972, %v1256
      %v1289 = vmul.f32 %v975, %v1257
      %v1290 = vmul.f32 %v980, %v1258
      %v1291 = vmul.f32 %v983, %v1259
      %v1292 = vmul.f32 %v988, %v1260
      %v1293 = vmul.f32 %v991, %v1261
      %v1294 = vmul.f32 %v996, %v1262
      %v1295 = vmul.f32 %v999, %v1263
      %v1296 = vmul.f32 %v1004, %v1264
      %v1297 = vmul.f32 %v1007, %v1265
      %v1298 = vpack.c.bf16 %v1267, %v1266
      %v1299 = vpack.c.bf16 %v1269, %v1268
      %v1300 = vpack.c.bf16 %v1271, %v1270
      %v1301 = vpack.c.bf16 %v1273, %v1272
      %v1302 = vpack.c.bf16 %v1275, %v1274
      %v1303 = vpack.c.bf16 %v1277, %v1276
      %v1304 = vpack.c.bf16 %v1279, %v1278
      %v1305 = vpack.c.bf16 %v1281, %v1280
      %v1306 = vpack.c.bf16 %v1283, %v1282
      %v1307 = vpack.c.bf16 %v1285, %v1284
      %v1308 = vpack.c.bf16 %v1287, %v1286
      %v1309 = vpack.c.bf16 %v1289, %v1288
      %v1310 = vpack.c.bf16 %v1291, %v1290
      %v1311 = vpack.c.bf16 %v1293, %v1292
      %v1312 = vpack.c.bf16 %v1295, %v1294
      %v1313 = vpack.c.bf16 %v1297, %v1296
      %v1314 = vld [vmem:[%s5] sm:$0xf]
      %v1315 = vld [vmem:[%s5 + $0x4] sm:$0xf]
      %v1316 = vld [vmem:[%s5 + $0x8] sm:$0xf]
      %v1317 = vld [vmem:[%s5 + $0xc] sm:$0xf]
      %v1318 = vld [vmem:[%s6] sm:$0x1]
      %v1320 = vlaneseq
      %v1321 = vshrl.u32 %v1320, 7
      %v1322 = vsub.s32 0, %v1321
      %v1323 = vrot.slane %v1318, %v1322
      %v1329 = vunpack.c.l.b16 %v1314
      %v1330 = vunpack.c.l.b16 %v1315
      %v1331 = vunpack.c.l.b16 %v1316
      %v1332 = vunpack.c.l.b16 %v1317
      %v1333 = vpack.c.b16 %v1330, %v1329
      %v1334 = vpack.c.b16 %v1332, %v1331
      %v1338 = vsel %vm520, %v1298, 0
      %v1341 = vsel %vm520, %v1299, 0
      %v1344 = vsel %vm520, %v1300, 0
      %v1347 = vsel %vm520, %v1301, 0
      %v1350 = vsel %vm520, %v1302, 0
      %v1353 = vsel %vm520, %v1303, 0
      %v1356 = vsel %vm520, %v1304, 0
      %v1359 = vsel %vm520, %v1305, 0
      %v1362 = vsel %vm520, %v1306, 0
      %v1365 = vsel %vm520, %v1307, 0
      %v1368 = vsel %vm520, %v1308, 0
      %v1371 = vsel %vm520, %v1309, 0
      %v1374 = vsel %vm520, %v1310, 0
      %v1377 = vsel %vm520, %v1311, 0
      %v1380 = vsel %vm520, %v1312, 0
      %v1383 = vsel %vm520, %v1313, 0
      %1385 = vmatprep.subr.bf16.mxu0 0
      %1386 = vmatpush1.bf16.msra.mxu0 0
      %1387 = vmatprep.subr.bf16.mxu0 0
      %1388 = vmatpush1.bf16.msra.mxu0 0
      %1389 = vmatprep.subr.bf16.mxu0 0
      %1390 = vmatpush1.bf16.msra.mxu0 0
      %1391 = vmatprep.subr.bf16.mxu0 0
      %1392 = vmatpush1.bf16.msra.mxu0 0
      %1393 = vmatprep.subr.bf16.mxu0 0
      %1394 = vmatpush1.bf16.msra.mxu0 0
      %1395 = vmatprep.subr.bf16.mxu0 0
      %1396 = vmatpush1.bf16.msra.mxu0 0
      %1397 = vmatprep.subr.bf16.mxu0 0
      %1398 = vmatpush1.bf16.msra.mxu0 %v1334
      %1399 = vmatprep.subr.bf16.mxu0 0
      %1400 = vmatpush1.bf16.msra.mxu0 %v1333
      %1401 = vmatprep.subr.bf16.mxu0 0
      %1402 = vmatpush2.bf16.msra.mxu0 0
      %1403 = vmatprep.subr.bf16.mxu0 0
      %1404 = vmatpush2.bf16.msra.mxu0 0
      %1405 = vmatprep.subr.bf16.mxu0 0
      %1406 = vmatpush2.bf16.msra.mxu0 0
      %1407 = vmatprep.subr.bf16.mxu0 0
      %1408 = vmatpush2.bf16.msra.mxu0 0
      %1409 = vmatprep.subr.bf16.mxu0 0
      %1410 = vmatpush2.bf16.msra.mxu0 0
      %1411 = vmatprep.subr.bf16.mxu0 0
      %1412 = vmatpush2.bf16.msra.mxu0 0
      %1413 = vmatprep.subr.bf16.mxu0 0
      %1414 = vmatpush2.bf16.msra.mxu0 0
      %1415 = vmatprep.subr.bf16.mxu0 0
      %1416 = vmatpush2.bf16.msra.mxu0 0
      %1417 = vmatprep.mubr.bf16.mxu0 0
      %1418 = vmatmul.mubr.bf16.gmra.mxu0 %v1338
      %v1419 = vpop.f32.mrf.mxu0
      %v1420 = vadd.f32 %v1323, %v1419
      %v1421 = vpop.f32.mrf.mxu0
      %v1422 = vpop.f32.mrf.mxu0
      %v1423 = vadd.f32 %v1323, %v1422
      %v1424 = vpop.f32.mrf.mxu0
      %1425 = vmatprep.mubr.bf16.mxu0 0
      %1426 = vmatmul.mubr.bf16.gmra.mxu0 %v1341
      %v1427 = vpop.f32.mrf.mxu0
      %v1428 = vadd.f32 %v1323, %v1427
      %v1429 = vpop.f32.mrf.mxu0
      %v1430 = vpop.f32.mrf.mxu0
      %v1431 = vadd.f32 %v1323, %v1430
      %v1432 = vpop.f32.mrf.mxu0
      %1433 = vmatprep.mubr.bf16.mxu0 0
      %1434 = vmatmul.mubr.bf16.gmra.mxu0 %v1344
      %v1435 = vpop.f32.mrf.mxu0
      %v1436 = vadd.f32 %v1323, %v1435
      %v1437 = vpop.f32.mrf.mxu0
      %v1438 = vpop.f32.mrf.mxu0
      %v1439 = vadd.f32 %v1323, %v1438
      %v1440 = vpop.f32.mrf.mxu0
      %1441 = vmatprep.mubr.bf16.mxu0 0
      %1442 = vmatmul.mubr.bf16.gmra.mxu0 %v1347
      %v1443 = vpop.f32.mrf.mxu0
      %v1444 = vadd.f32 %v1323, %v1443
      %v1445 = vpop.f32.mrf.mxu0
      %v1446 = vpop.f32.mrf.mxu0
      %v1447 = vadd.f32 %v1323, %v1446
      %v1448 = vpop.f32.mrf.mxu0
      %1449 = vmatprep.mubr.bf16.mxu0 0
      %1450 = vmatmul.mubr.bf16.gmra.mxu0 %v1350
      %v1451 = vpop.f32.mrf.mxu0
      %v1452 = vadd.f32 %v1323, %v1451
      %v1453 = vpop.f32.mrf.mxu0
      %v1454 = vpop.f32.mrf.mxu0
      %v1455 = vadd.f32 %v1323, %v1454
      %v1456 = vpop.f32.mrf.mxu0
      %1457 = vmatprep.mubr.bf16.mxu0 0
      %1458 = vmatmul.mubr.bf16.gmra.mxu0 %v1353
      %v1459 = vpop.f32.mrf.mxu0
      %v1460 = vadd.f32 %v1323, %v1459
      %v1461 = vpop.f32.mrf.mxu0
      %v1462 = vpop.f32.mrf.mxu0
      %v1463 = vadd.f32 %v1323, %v1462
      %v1464 = vpop.f32.mrf.mxu0
      %1465 = vmatprep.mubr.bf16.mxu0 0
      %1466 = vmatmul.mubr.bf16.gmra.mxu0 %v1356
      %v1467 = vpop.f32.mrf.mxu0
      %v1468 = vadd.f32 %v1323, %v1467
      %v1469 = vpop.f32.mrf.mxu0
      %v1470 = vpop.f32.mrf.mxu0
      %v1471 = vadd.f32 %v1323, %v1470
      %v1472 = vpop.f32.mrf.mxu0
      %1473 = vmatprep.mubr.bf16.mxu0 0
      %1474 = vmatmul.mubr.bf16.gmra.mxu0 %v1359
      %v1475 = vpop.f32.mrf.mxu0
      %v1476 = vadd.f32 %v1323, %v1475
      %v1477 = vpop.f32.mrf.mxu0
      %v1478 = vpop.f32.mrf.mxu0
      %v1479 = vadd.f32 %v1323, %v1478
      %v1480 = vpop.f32.mrf.mxu0
      %1481 = vmatprep.mubr.bf16.mxu0 0
      %1482 = vmatmul.mubr.bf16.gmra.mxu0 %v1362
      %v1483 = vpop.f32.mrf.mxu0
      %v1484 = vadd.f32 %v1323, %v1483
      %v1485 = vpop.f32.mrf.mxu0
      %v1486 = vpop.f32.mrf.mxu0
      %v1487 = vadd.f32 %v1323, %v1486
      %v1488 = vpop.f32.mrf.mxu0
      %1489 = vmatprep.mubr.bf16.mxu0 0
      %1490 = vmatmul.mubr.bf16.gmra.mxu0 %v1365
      %v1491 = vpop.f32.mrf.mxu0
      %v1492 = vadd.f32 %v1323, %v1491
      %v1493 = vpop.f32.mrf.mxu0
      %v1494 = vpop.f32.mrf.mxu0
      %v1495 = vadd.f32 %v1323, %v1494
      %v1496 = vpop.f32.mrf.mxu0
      %1497 = vmatprep.mubr.bf16.mxu0 0
      %1498 = vmatmul.mubr.bf16.gmra.mxu0 %v1368
      %v1499 = vpop.f32.mrf.mxu0
      %v1500 = vadd.f32 %v1323, %v1499
      %v1501 = vpop.f32.mrf.mxu0
      %v1502 = vpop.f32.mrf.mxu0
      %v1503 = vadd.f32 %v1323, %v1502
      %v1504 = vpop.f32.mrf.mxu0
      %1505 = vmatprep.mubr.bf16.mxu0 0
      %1506 = vmatmul.mubr.bf16.gmra.mxu0 %v1371
      %v1507 = vpop.f32.mrf.mxu0
      %v1508 = vadd.f32 %v1323, %v1507
      %v1509 = vpop.f32.mrf.mxu0
      %v1510 = vpop.f32.mrf.mxu0
      %v1511 = vadd.f32 %v1323, %v1510
      %v1512 = vpop.f32.mrf.mxu0
      %1513 = vmatprep.mubr.bf16.mxu0 0
      %1514 = vmatmul.mubr.bf16.gmra.mxu0 %v1374
      %v1515 = vpop.f32.mrf.mxu0
      %v1516 = vadd.f32 %v1323, %v1515
      %v1517 = vpop.f32.mrf.mxu0
      %v1518 = vpop.f32.mrf.mxu0
      %v1519 = vadd.f32 %v1323, %v1518
      %v1520 = vpop.f32.mrf.mxu0
      %1521 = vmatprep.mubr.bf16.mxu0 0
      %1522 = vmatmul.mubr.bf16.gmra.mxu0 %v1377
      %v1523 = vpop.f32.mrf.mxu0
      %v1524 = vadd.f32 %v1323, %v1523
      %v1525 = vpop.f32.mrf.mxu0
      %v1526 = vpop.f32.mrf.mxu0
      %v1527 = vadd.f32 %v1323, %v1526
      %v1528 = vpop.f32.mrf.mxu0
      %1529 = vmatprep.mubr.bf16.mxu0 0
      %1530 = vmatmul.mubr.bf16.gmra.mxu0 %v1380
      %v1531 = vpop.f32.mrf.mxu0
      %v1532 = vadd.f32 %v1323, %v1531
      %v1533 = vpop.f32.mrf.mxu0
      %v1534 = vpop.f32.mrf.mxu0
      %v1535 = vadd.f32 %v1323, %v1534
      %v1536 = vpop.f32.mrf.mxu0
      %1537 = vmatprep.mubr.bf16.mxu0 0
      %1538 = vmatmul.mubr.bf16.gmra.mxu0 %v1383
      %v1539 = vpop.f32.mrf.mxu0
      %v1540 = vadd.f32 %v1323, %v1539
      %v1541 = vpop.f32.mrf.mxu0
      %v1542 = vpop.f32.mrf.mxu0
      %v1543 = vadd.f32 %v1323, %v1542
      %v1544 = vpop.f32.mrf.mxu0
      %1545 = vdwg.mxu0
      %v1546 = vadd.f32 %v1420, %v730
      %v1547 = vadd.f32 %v1423, %v731
      %v1548 = vadd.f32 %v1428, %v732
      %v1549 = vadd.f32 %v1431, %v733
      %v1550 = vadd.f32 %v1436, %v734
      %v1551 = vadd.f32 %v1439, %v735
      %v1552 = vadd.f32 %v1444, %v736
      %v1553 = vadd.f32 %v1447, %v737
      %v1554 = vadd.f32 %v1452, %v738
      %v1555 = vadd.f32 %v1455, %v739
      %v1556 = vadd.f32 %v1460, %v740
      %v1557 = vadd.f32 %v1463, %v741
      %v1558 = vadd.f32 %v1468, %v742
      %v1559 = vadd.f32 %v1471, %v743
      %v1560 = vadd.f32 %v1476, %v744
      %v1561 = vadd.f32 %v1479, %v745
      %v1562 = vadd.f32 %v1484, %v746
      %v1563 = vadd.f32 %v1487, %v747
      %v1564 = vadd.f32 %v1492, %v748
      %v1565 = vadd.f32 %v1495, %v749
      %v1566 = vadd.f32 %v1500, %v750
      %v1567 = vadd.f32 %v1503, %v751
      %v1568 = vadd.f32 %v1508, %v752
      %v1569 = vadd.f32 %v1511, %v753
      %v1570 = vadd.f32 %v1516, %v754
      %v1571 = vadd.f32 %v1519, %v755
      %v1572 = vadd.f32 %v1524, %v756
      %v1573 = vadd.f32 %v1527, %v757
      %v1574 = vadd.f32 %v1532, %v758
      %v1575 = vadd.f32 %v1535, %v759
      %v1576 = vadd.f32 %v1540, %v760
      %v1577 = vadd.f32 %v1543, %v761
      %v1578 = vpack.c.bf16 %v1547, %v1546
      %v1579 = vpack.c.bf16 %v1549, %v1548
      %v1580 = vpack.c.bf16 %v1551, %v1550
      %v1581 = vpack.c.bf16 %v1553, %v1552
      %v1582 = vpack.c.bf16 %v1555, %v1554
      %v1583 = vpack.c.bf16 %v1557, %v1556
      %v1584 = vpack.c.bf16 %v1559, %v1558
      %v1585 = vpack.c.bf16 %v1561, %v1560
      %v1586 = vpack.c.bf16 %v1563, %v1562
      %v1587 = vpack.c.bf16 %v1565, %v1564
      %v1588 = vpack.c.bf16 %v1567, %v1566
      %v1589 = vpack.c.bf16 %v1569, %v1568
      %v1590 = vpack.c.bf16 %v1571, %v1570
      %v1591 = vpack.c.bf16 %v1573, %v1572
      %v1592 = vpack.c.bf16 %v1575, %v1574
      %v1593 = vpack.c.bf16 %v1577, %v1576
      %v1610 = vunpack.c.l.b16 %v1578
      %v1611 = vunpack.c.h.b16 %v1578
      %v1612 = vunpack.c.l.b16 %v1579
      %v1613 = vunpack.c.h.b16 %v1579
      %v1614 = vunpack.c.l.b16 %v1580
      %v1615 = vunpack.c.h.b16 %v1580
      %v1616 = vunpack.c.l.b16 %v1581
      %v1617 = vunpack.c.h.b16 %v1581
      %v1618 = vunpack.c.l.b16 %v1582
      %v1619 = vunpack.c.h.b16 %v1582
      %v1620 = vunpack.c.l.b16 %v1583
      %v1621 = vunpack.c.h.b16 %v1583
      %v1622 = vunpack.c.l.b16 %v1584
      %v1623 = vunpack.c.h.b16 %v1584
      %v1624 = vunpack.c.l.b16 %v1585
      %v1625 = vunpack.c.h.b16 %v1585
      %v1626 = vunpack.c.l.b16 %v1586
      %v1627 = vunpack.c.h.b16 %v1586
      %v1628 = vunpack.c.l.b16 %v1587
      %v1629 = vunpack.c.h.b16 %v1587
      %v1630 = vunpack.c.l.b16 %v1588
      %v1631 = vunpack.c.h.b16 %v1588
      %v1632 = vunpack.c.l.b16 %v1589
      %v1633 = vunpack.c.h.b16 %v1589
      %v1634 = vunpack.c.l.b16 %v1590
      %v1635 = vunpack.c.h.b16 %v1590
      %v1636 = vunpack.c.l.b16 %v1591
      %v1637 = vunpack.c.h.b16 %v1591
      %v1638 = vunpack.c.l.b16 %v1592
      %v1639 = vunpack.c.h.b16 %v1592
      %v1640 = vunpack.c.l.b16 %v1593
      %v1641 = vunpack.c.h.b16 %v1593
      %v1642 = vpack.c.b16 %v1610, %v1610
      %v1643 = vpack.c.b16 %v1611, %v1611
      %v1644 = vpack.c.b16 %v1612, %v1612
      %v1645 = vpack.c.b16 %v1613, %v1613
      %v1646 = vpack.c.b16 %v1614, %v1614
      %v1647 = vpack.c.b16 %v1615, %v1615
      %v1648 = vpack.c.b16 %v1616, %v1616
      %v1649 = vpack.c.b16 %v1617, %v1617
      %v1650 = vpack.c.b16 %v1618, %v1618
      %v1651 = vpack.c.b16 %v1619, %v1619
      %v1652 = vpack.c.b16 %v1620, %v1620
      %v1653 = vpack.c.b16 %v1621, %v1621
      %v1654 = vpack.c.b16 %v1622, %v1622
      %v1655 = vpack.c.b16 %v1623, %v1623
      %v1656 = vpack.c.b16 %v1624, %v1624
      %v1657 = vpack.c.b16 %v1625, %v1625
      %v1658 = vpack.c.b16 %v1626, %v1626
      %v1659 = vpack.c.b16 %v1627, %v1627
      %v1660 = vpack.c.b16 %v1628, %v1628
      %v1661 = vpack.c.b16 %v1629, %v1629
      %v1662 = vpack.c.b16 %v1630, %v1630
      %v1663 = vpack.c.b16 %v1631, %v1631
      %v1664 = vpack.c.b16 %v1632, %v1632
      %v1665 = vpack.c.b16 %v1633, %v1633
      %v1666 = vpack.c.b16 %v1634, %v1634
      %v1667 = vpack.c.b16 %v1635, %v1635
      %v1668 = vpack.c.b16 %v1636, %v1636
      %v1669 = vpack.c.b16 %v1637, %v1637
      %v1670 = vpack.c.b16 %v1638, %v1638
      %v1671 = vpack.c.b16 %v1639, %v1639
      %v1672 = vpack.c.b16 %v1640, %v1640
      %v1673 = vpack.c.b16 %v1641, %v1641
      %vm1706 = vcmask 257024
      %1707 = vst.msk [vmem:[%s350] sm:$0xf] %vm1706, %v1642
      %1708 = vst.msk [vmem:[%s350 + $0x4] sm:$0xf] %vm1706, %v1643
      %1709 = vst.msk [vmem:[%s350 + $0x8] sm:$0xf] %vm1706, %v1644
      %1710 = vst.msk [vmem:[%s350 + $0xc] sm:$0xf] %vm1706, %v1645
      %1711 = vst.msk [vmem:[%s350 + $0x10] sm:$0xf] %vm1706, %v1646
      %1712 = vst.msk [vmem:[%s350 + $0x14] sm:$0xf] %vm1706, %v1647
      %1713 = vst.msk [vmem:[%s350 + $0x18] sm:$0xf] %vm1706, %v1648
      %1714 = vst.msk [vmem:[%s350 + $0x1c] sm:$0xf] %vm1706, %v1649
      %1715 = vst.msk [vmem:[%s350 + $0x20] sm:$0xf] %vm1706, %v1650
      %1716 = vst.msk [vmem:[%s350 + $0x24] sm:$0xf] %vm1706, %v1651
      %1717 = vst.msk [vmem:[%s350 + $0x28] sm:$0xf] %vm1706, %v1652
      %1718 = vst.msk [vmem:[%s350 + $0x2c] sm:$0xf] %vm1706, %v1653
      %1719 = vst.msk [vmem:[%s350 + $0x30] sm:$0xf] %vm1706, %v1654
      %1720 = vst.msk [vmem:[%s350 + $0x34] sm:$0xf] %vm1706, %v1655
      %1721 = vst.msk [vmem:[%s350 + $0x38] sm:$0xf] %vm1706, %v1656
      %1722 = vst.msk [vmem:[%s350 + $0x3c] sm:$0xf] %vm1706, %v1657
      %1723 = vst.msk [vmem:[%s350 + $0x40] sm:$0xf] %vm1706, %v1658
      %1724 = vst.msk [vmem:[%s350 + $0x44] sm:$0xf] %vm1706, %v1659
      %1725 = vst.msk [vmem:[%s350 + $0x48] sm:$0xf] %vm1706, %v1660
      %1726 = vst.msk [vmem:[%s350 + $0x4c] sm:$0xf] %vm1706, %v1661
      %1727 = vst.msk [vmem:[%s350 + $0x50] sm:$0xf] %vm1706, %v1662
      %1728 = vst.msk [vmem:[%s350 + $0x54] sm:$0xf] %vm1706, %v1663
      %1729 = vst.msk [vmem:[%s350 + $0x58] sm:$0xf] %vm1706, %v1664
      %1730 = vst.msk [vmem:[%s350 + $0x5c] sm:$0xf] %vm1706, %v1665
      %1731 = vst.msk [vmem:[%s350 + $0x60] sm:$0xf] %vm1706, %v1666
      %1732 = vst.msk [vmem:[%s350 + $0x64] sm:$0xf] %vm1706, %v1667
      %1733 = vst.msk [vmem:[%s350 + $0x68] sm:$0xf] %vm1706, %v1668
      %1734 = vst.msk [vmem:[%s350 + $0x6c] sm:$0xf] %vm1706, %v1669
      %1735 = vst.msk [vmem:[%s350 + $0x70] sm:$0xf] %vm1706, %v1670
      %1736 = vst.msk [vmem:[%s350 + $0x74] sm:$0xf] %vm1706, %v1671
      %1737 = vst.msk [vmem:[%s350 + $0x78] sm:$0xf] %vm1706, %v1672
      %1738 = vst.msk [vmem:[%s350 + $0x7c] sm:$0xf] %vm1706, %v1673
      %s1739 = smul.u32 32, %s23
      %p1740 = scmp.lt.s32.totalorder %s22, 1
      %s1741 = scalar_select %p1740, %s22, 1
      %p1742 = scmp.lt.s32.totalorder %s1739, 31
      %s1743 = scalar_select %p1742, %s1739, 31
      %s1744 = smul.addr %s1741, 32
      %s1745 = sadd.s32 %s1743, %s1744
      %s1746 = smul.addr %s1745, 4
      %s1747 = scalar_lea.vmem %s7, %s1746
      // Predicated region
      $region49: #{galerkin_transformer_2d.10} parent=47 // pred_check
        %p1748 = pneg %p214
      $region50: #{galerkin_transformer_2d.10} parent=47 // pred_check_branch
        %1750 = sbr.rel (%p1748) target = $region52
      $region51: #{galerkin_transformer_2d.10} parent=47 // pred_region
        %s1751 = smul.u32 32, %s23
      $region52: #{galerkin_transformer_2d.10} parent=47 // pred_fallthru
        _
    $region48: #{galerkin_transformer_2d.10} parent=5 // pred_fallthru
      _
    %p1752 = scmp.le.s32.totalorder 2, %s13
    // Predicated region
    $region53: #{galerkin_transformer_2d.10} parent=5 // pred_check
      %p1753 = pneg %p1752
    $region54: #{galerkin_transformer_2d.10} parent=5 // pred_check_branch
      %1755 = sbr.rel (%p1753) target = $region56
    $region55: #{galerkin_transformer_2d.10} parent=5 // pred_region
      %s1756 = ssub.s32 %s13, 2
      // Predicated region
      $region57: #{galerkin_transformer_2d.10} parent=55 // pred_check
        %p1757 = pneg %p220
      $region58: #{galerkin_transformer_2d.10} parent=55 // pred_check_branch
        %1759 = sbr.rel (%p1757) target = $region60
      $region59: #{galerkin_transformer_2d.10} parent=55 // pred_region
        %s1760 = smul.u32 32, %s25
        %p1761 = scmp.lt.s32.totalorder %s24, 1
        %s1762 = scalar_select %p1761, %s24, 1
        %p1763 = scmp.lt.s32.totalorder %s1760, 31
        %s1764 = scalar_select %p1763, %s1760, 31
        %s1765 = smul.addr %s1762, 32
        %s1766 = sadd.s32 %s1764, %s1765
        %s1767 = smul.addr %s1766, 4
        %s1768 = scalar_lea.vmem %s7, %s1767
      $region60: #{galerkin_transformer_2d.10} parent=55 // pred_fallthru
        _
    $region56: #{galerkin_transformer_2d.10} parent=5 // pred_fallthru
      _
  $region6: #{galerkin_transformer_2d.10} parent=0 // loop_footer
    %s17 = sadd.s32 1, %s13
  $region7: #{galerkin_transformer_2d.10} parent=0 // loop_footer_branch
    %12 = sbr.rel target = $region3
  $region8: #{galerkin_transformer_2d.10} parent=0 // loop_exit
    _

// kernel: galerkin_transformer_2d.13
$region0: #{galerkin_transformer_2d.13}
  #allocation0 [shape = 'u32[]', space=smem, size = 0x4, offset = 0x4, fixed_abs, tag = 'smem constant byte address 0x4 - core index']
  #allocation1 [shape = 'u32[144,128]{1,0:T(1,128)}', space=vmem, size = 0x12000, scoped, tag = 'internal scratch']
  %s0 = inlined_call_operand.vmem [shape: bf16[2,256,32], index: 0, kind: input, shape index: {}]
  %s1 = inlined_call_operand.vmem [shape: bf16[2,32,32], index: 1, kind: input, shape index: {}]
  %s2 = inlined_call_operand.vmem [shape: f32[2,1,32], index: 2, kind: input, shape index: {}]
  %s3 = inlined_call_operand.vmem [shape: bf16[32,32], index: 3, kind: input, shape index: {}]
  %s4 = inlined_call_operand.vmem [shape: f32[1,32], index: 4, kind: input, shape index: {}]
  %s5 = inlined_call_operand.vmem [shape: bf16[32,32], index: 5, kind: input, shape index: {}]
  %s6 = inlined_call_operand.vmem [shape: f32[1,32], index: 6, kind: input, shape index: {}]
  %s7 = inlined_call_operand.vmem [shape: bf16[32,32], index: 7, kind: input, shape index: {}]
  %s8 = inlined_call_operand.vmem [shape: f32[1,32], index: 8, kind: input, shape index: {}]
  %s9 = inlined_call_operand.vmem [shape: bf16[32,128], index: 9, kind: input, shape index: {}]
  %s10 = inlined_call_operand.vmem [shape: f32[1,128], index: 10, kind: input, shape index: {}]
  %s11 = inlined_call_operand.vmem [shape: bf16[2,256,128], index: 11, kind: output, shape index: {}]
  %s12 = sld [smem:[#allocation0]]
  $region77: #{galerkin_transformer_2d.13} parent=0
    _
  %s14 = ssub.s32 1, %s12
  %s15 = scalar_select 0, %s14, %s12
  loop: start=0, step=1, limit=4
  $region2: #{galerkin_transformer_2d.13} parent=0 // loop_pre_header
    _
  $region3: #{galerkin_transformer_2d.13} parent=0 // loop_header
    %s17 = sphi 0, %s21
    %p18 = scmp.ge.s32.totalorder %s17, 4
    %s24 = sphi 0, %s36
    %s25 = sphi 0, %s32
    %s26 = sphi 0, %s24
    %s27 = sphi 0, %s25
    %s28 = sphi 0, %s26
    %s29 = sphi 0, %s27
    %s41 = sphi 0, %s43
    %s44 = sphi 0, %s41
    %s45 = sphi 0, %s44
    %s61 = sphi 0, %s45
    %s67 = sphi 0, %s69
    %s70 = sphi 0, %s67
    %s71 = sphi 0, %s70
    %s87 = sphi 0, %s71
    %s93 = sphi 0, %s95
    %s96 = sphi 0, %s93
    %s97 = sphi 0, %s96
    %s113 = sphi 0, %s97
    %s117 = sphi 0, %s117
    %s119 = sphi 0, %s117
    %s120 = sphi 0, %s119
    %s134 = sphi 0, %s120
    %s138 = sphi 0, %s138
    %s140 = sphi 0, %s138
    %s141 = sphi 0, %s140
    %s155 = sphi 0, %s141
    %s159 = sphi 0, %s159
    %s161 = sphi 0, %s159
    %s162 = sphi 0, %s161
    %s176 = sphi 0, %s162
    %s180 = sphi 0, %s180
    %s182 = sphi 0, %s180
    %s183 = sphi 0, %s182
    %s197 = sphi 0, %s183
    %s201 = sphi 0, %s201
    %s203 = sphi 0, %s201
    %s204 = sphi 0, %s203
    %s218 = sphi 0, %s204
    %s222 = sphi 0, %s222
    %s224 = sphi 0, %s222
    %s225 = sphi 0, %s224
    %s239 = sphi 0, %s225
    %s243 = sphi 0, %s243
    %s245 = sphi 0, %s243
    %s246 = sphi 0, %s245
    %s260 = sphi 0, %s246
    %s264 = sphi 0, %s264
    %s266 = sphi 0, %s264
    %s267 = sphi 0, %s266
    %s281 = sphi 0, %s267
    %s289 = sphi 0, %s291
    %s292 = sphi 0, %s289
    %s293 = sphi 0, %s292
    %s309 = sphi 0, %s293
  $region4: #{galerkin_transformer_2d.13} parent=0 // loop_header_branch
    %20 = sbr.rel (%p18) target = $region8
  $region5: #{galerkin_transformer_2d.13} parent=0 // loop_body
    %s22 = ssub.s32 %s17, 1
    %s23 = ssub.s32 %s17, 2
    %s30 = sadd.s32 1, %s25
    %p31 = scmp.ge.s32.totalorder %s30, 1
    %s32 = scalar_select %p31, 0, %s30
    %s33 = sadd.s32 1, %s24
    %s34 = scalar_select %p31, %s33, %s24
    %p35 = scmp.ge.s32.totalorder %s34, 2
    %s36 = scalar_select %p35, 0, %s34
    %s37 = ssub.s32 %s24, %s36
    %s38 = ssub.s32 %s25, %s32
    %s39 = sor.u32 %s37, %s38
    %p40 = scmp.eq.s32.totalorder %s39, 0
    %s42 = sadd.s32 %s41, 1
    %s43 = scalar_select %p40, %s41, %s42
    %p46 = pneg %p40
    %p47 = scmp.eq.s32.totalorder %s17, 1
    %p48 = por %p46, %p47
    %p49 = scmp.ne.s32.totalorder %s41, %s44
    %p50 = scmp.eq.s32.totalorder %s17, 0
    %p51 = por %p49, %p50
    %p52 = scmp.ne.s32.totalorder %s41, %s44
    %p53 = scmp.eq.s32.totalorder %s22, 1
    %p54 = por %p52, %p53
    %p55 = scmp.ne.s32.totalorder %s44, %s45
    %p56 = scmp.eq.s32.totalorder %s22, 0
    %p57 = por %p55, %p56
    %p58 = scmp.ne.s32.totalorder %s44, %s45
    %p59 = scmp.eq.s32.totalorder %s23, 1
    %p60 = por %p58, %p59
    %p62 = scmp.ne.s32.totalorder %s45, %s61
    %p63 = scmp.eq.s32.totalorder %s23, 0
    %p64 = por %p62, %p63
    %s65 = ssub.s32 %s24, %s36
    %p66 = scmp.eq.s32.totalorder %s65, 0
    %s68 = sadd.s32 %s67, 1
    %s69 = scalar_select %p66, %s67, %s68
    %p72 = pneg %p66
    %p73 = scmp.eq.s32.totalorder %s17, 1
    %p74 = por %p72, %p73
    %p75 = scmp.ne.s32.totalorder %s67, %s70
    %p76 = scmp.eq.s32.totalorder %s17, 0
    %p77 = por %p75, %p76
    %p78 = scmp.ne.s32.totalorder %s67, %s70
    %p79 = scmp.eq.s32.totalorder %s22, 1
    %p80 = por %p78, %p79
    %p81 = scmp.ne.s32.totalorder %s70, %s71
    %p82 = scmp.eq.s32.totalorder %s22, 0
    %p83 = por %p81, %p82
    %p84 = scmp.ne.s32.totalorder %s70, %s71
    %p85 = scmp.eq.s32.totalorder %s23, 1
    %p86 = por %p84, %p85
    %p88 = scmp.ne.s32.totalorder %s71, %s87
    %p89 = scmp.eq.s32.totalorder %s23, 0
    %p90 = por %p88, %p89
    %s91 = ssub.s32 %s24, %s36
    %p92 = scmp.eq.s32.totalorder %s91, 0
    %s94 = sadd.s32 %s93, 1
    %s95 = scalar_select %p92, %s93, %s94
    %p98 = pneg %p92
    %p99 = scmp.eq.s32.totalorder %s17, 1
    %p100 = por %p98, %p99
    %p101 = scmp.ne.s32.totalorder %s93, %s96
    %p102 = scmp.eq.s32.totalorder %s17, 0
    %p103 = por %p101, %p102
    %p104 = scmp.ne.s32.totalorder %s93, %s96
    %p105 = scmp.eq.s32.totalorder %s22, 1
    %p106 = por %p104, %p105
    %p107 = scmp.ne.s32.totalorder %s96, %s97
    %p108 = scmp.eq.s32.totalorder %s22, 0
    %p109 = por %p107, %p108
    %p110 = scmp.ne.s32.totalorder %s96, %s97
    %p111 = scmp.eq.s32.totalorder %s23, 1
    %p112 = por %p110, %p111
    %p114 = scmp.ne.s32.totalorder %s97, %s113
    %p115 = scmp.eq.s32.totalorder %s23, 0
    %p116 = por %p114, %p115
    %s118 = sadd.s32 %s117, 1
    %p121 = scmp.eq.s32.totalorder %s17, 1
    %p122 = scmp.ne.s32.totalorder %s117, %s119
    %p123 = scmp.eq.s32.totalorder %s17, 0
    %p124 = por %p122, %p123
    %p125 = scmp.ne.s32.totalorder %s117, %s119
    %p126 = scmp.eq.s32.totalorder %s22, 1
    %p127 = por %p125, %p126
    %p128 = scmp.ne.s32.totalorder %s119, %s120
    %p129 = scmp.eq.s32.totalorder %s22, 0
    %p130 = por %p128, %p129
    %p131 = scmp.ne.s32.totalorder %s119, %s120
    %p132 = scmp.eq.s32.totalorder %s23, 1
    %p133 = por %p131, %p132
    %p135 = scmp.ne.s32.totalorder %s120, %s134
    %p136 = scmp.eq.s32.totalorder %s23, 0
    %p137 = por %p135, %p136
    %s139 = sadd.s32 %s138, 1
    %p142 = scmp.eq.s32.totalorder %s17, 1
    %p143 = scmp.ne.s32.totalorder %s138, %s140
    %p144 = scmp.eq.s32.totalorder %s17, 0
    %p145 = por %p143, %p144
    %p146 = scmp.ne.s32.totalorder %s138, %s140
    %p147 = scmp.eq.s32.totalorder %s22, 1
    %p148 = por %p146, %p147
    %p149 = scmp.ne.s32.totalorder %s140, %s141
    %p150 = scmp.eq.s32.totalorder %s22, 0
    %p151 = por %p149, %p150
    %p152 = scmp.ne.s32.totalorder %s140, %s141
    %p153 = scmp.eq.s32.totalorder %s23, 1
    %p154 = por %p152, %p153
    %p156 = scmp.ne.s32.totalorder %s141, %s155
    %p157 = scmp.eq.s32.totalorder %s23, 0
    %p158 = por %p156, %p157
    %s160 = sadd.s32 %s159, 1
    %p163 = scmp.eq.s32.totalorder %s17, 1
    %p164 = scmp.ne.s32.totalorder %s159, %s161
    %p165 = scmp.eq.s32.totalorder %s17, 0
    %p166 = por %p164, %p165
    %p167 = scmp.ne.s32.totalorder %s159, %s161
    %p168 = scmp.eq.s32.totalorder %s22, 1
    %p169 = por %p167, %p168
    %p170 = scmp.ne.s32.totalorder %s161, %s162
    %p171 = scmp.eq.s32.totalorder %s22, 0
    %p172 = por %p170, %p171
    %p173 = scmp.ne.s32.totalorder %s161, %s162
    %p174 = scmp.eq.s32.totalorder %s23, 1
    %p175 = por %p173, %p174
    %p177 = scmp.ne.s32.totalorder %s162, %s176
    %p178 = scmp.eq.s32.totalorder %s23, 0
    %p179 = por %p177, %p178
    %s181 = sadd.s32 %s180, 1
    %p184 = scmp.eq.s32.totalorder %s17, 1
    %p185 = scmp.ne.s32.totalorder %s180, %s182
    %p186 = scmp.eq.s32.totalorder %s17, 0
    %p187 = por %p185, %p186
    %p188 = scmp.ne.s32.totalorder %s180, %s182
    %p189 = scmp.eq.s32.totalorder %s22, 1
    %p190 = por %p188, %p189
    %p191 = scmp.ne.s32.totalorder %s182, %s183
    %p192 = scmp.eq.s32.totalorder %s22, 0
    %p193 = por %p191, %p192
    %p194 = scmp.ne.s32.totalorder %s182, %s183
    %p195 = scmp.eq.s32.totalorder %s23, 1
    %p196 = por %p194, %p195
    %p198 = scmp.ne.s32.totalorder %s183, %s197
    %p199 = scmp.eq.s32.totalorder %s23, 0
    %p200 = por %p198, %p199
    %s202 = sadd.s32 %s201, 1
    %p205 = scmp.eq.s32.totalorder %s17, 1
    %p206 = scmp.ne.s32.totalorder %s201, %s203
    %p207 = scmp.eq.s32.totalorder %s17, 0
    %p208 = por %p206, %p207
    %p209 = scmp.ne.s32.totalorder %s201, %s203
    %p210 = scmp.eq.s32.totalorder %s22, 1
    %p211 = por %p209, %p210
    %p212 = scmp.ne.s32.totalorder %s203, %s204
    %p213 = scmp.eq.s32.totalorder %s22, 0
    %p214 = por %p212, %p213
    %p215 = scmp.ne.s32.totalorder %s203, %s204
    %p216 = scmp.eq.s32.totalorder %s23, 1
    %p217 = por %p215, %p216
    %p219 = scmp.ne.s32.totalorder %s204, %s218
    %p220 = scmp.eq.s32.totalorder %s23, 0
    %p221 = por %p219, %p220
    %s223 = sadd.s32 %s222, 1
    %p226 = scmp.eq.s32.totalorder %s17, 1
    %p227 = scmp.ne.s32.totalorder %s222, %s224
    %p228 = scmp.eq.s32.totalorder %s17, 0
    %p229 = por %p227, %p228
    %p230 = scmp.ne.s32.totalorder %s222, %s224
    %p231 = scmp.eq.s32.totalorder %s22, 1
    %p232 = por %p230, %p231
    %p233 = scmp.ne.s32.totalorder %s224, %s225
    %p234 = scmp.eq.s32.totalorder %s22, 0
    %p235 = por %p233, %p234
    %p236 = scmp.ne.s32.totalorder %s224, %s225
    %p237 = scmp.eq.s32.totalorder %s23, 1
    %p238 = por %p236, %p237
    %p240 = scmp.ne.s32.totalorder %s225, %s239
    %p241 = scmp.eq.s32.totalorder %s23, 0
    %p242 = por %p240, %p241
    %s244 = sadd.s32 %s243, 1
    %p247 = scmp.eq.s32.totalorder %s17, 1
    %p248 = scmp.ne.s32.totalorder %s243, %s245
    %p249 = scmp.eq.s32.totalorder %s17, 0
    %p250 = por %p248, %p249
    %p251 = scmp.ne.s32.totalorder %s243, %s245
    %p252 = scmp.eq.s32.totalorder %s22, 1
    %p253 = por %p251, %p252
    %p254 = scmp.ne.s32.totalorder %s245, %s246
    %p255 = scmp.eq.s32.totalorder %s22, 0
    %p256 = por %p254, %p255
    %p257 = scmp.ne.s32.totalorder %s245, %s246
    %p258 = scmp.eq.s32.totalorder %s23, 1
    %p259 = por %p257, %p258
    %p261 = scmp.ne.s32.totalorder %s246, %s260
    %p262 = scmp.eq.s32.totalorder %s23, 0
    %p263 = por %p261, %p262
    %s265 = sadd.s32 %s264, 1
    %p268 = scmp.eq.s32.totalorder %s17, 1
    %p269 = scmp.ne.s32.totalorder %s264, %s266
    %p270 = scmp.eq.s32.totalorder %s17, 0
    %p271 = por %p269, %p270
    %p272 = scmp.ne.s32.totalorder %s264, %s266
    %p273 = scmp.eq.s32.totalorder %s22, 1
    %p274 = por %p272, %p273
    %p275 = scmp.ne.s32.totalorder %s266, %s267
    %p276 = scmp.eq.s32.totalorder %s22, 0
    %p277 = por %p275, %p276
    %p278 = scmp.ne.s32.totalorder %s266, %s267
    %p279 = scmp.eq.s32.totalorder %s23, 1
    %p280 = por %p278, %p279
    %p282 = scmp.ne.s32.totalorder %s267, %s281
    %p283 = scmp.eq.s32.totalorder %s23, 0
    %p284 = por %p282, %p283
    %s285 = ssub.s32 %s24, %s36
    %s286 = ssub.s32 %s25, %s32
    %s287 = sor.u32 %s285, %s286
    %p288 = scmp.eq.s32.totalorder %s287, 0
    %s290 = sadd.s32 %s289, 1
    %s291 = scalar_select %p288, %s289, %s290
    %p294 = pneg %p288
    %p295 = scmp.eq.s32.totalorder %s17, 1
    %p296 = por %p294, %p295
    %p297 = scmp.ne.s32.totalorder %s289, %s292
    %p298 = scmp.eq.s32.totalorder %s17, 0
    %p299 = por %p297, %p298
    %p300 = scmp.ne.s32.totalorder %s289, %s292
    %p301 = scmp.eq.s32.totalorder %s22, 1
    %p302 = por %p300, %p301
    %p303 = scmp.ne.s32.totalorder %s292, %s293
    %p304 = scmp.eq.s32.totalorder %s22, 0
    %p305 = por %p303, %p304
    %p306 = scmp.ne.s32.totalorder %s292, %s293
    %p307 = scmp.eq.s32.totalorder %s23, 1
    %p308 = por %p306, %p307
    %p310 = scmp.ne.s32.totalorder %s293, %s309
    %p311 = scmp.eq.s32.totalorder %s23, 0
    %p312 = por %p310, %p311
    %p313 = scmp.le.s32.totalorder 1, %s17
    %p314 = scmp.lt.s32.totalorder %s17, 3
    %p315 = pnand %p313, %p314
    %p316 = pneg %p315
    // Predicated region
    $region9: #{galerkin_transformer_2d.13} parent=5 // pred_check
      _
    $region10: #{galerkin_transformer_2d.13} parent=5 // pred_check_branch
      %318 = sbr.rel (%p315) target = $region12
    $region11: #{galerkin_transformer_2d.13} parent=5 // pred_region
      %s319 = ssub.s32 %s17, 1
      // Predicated region
      $region13: #{galerkin_transformer_2d.13} parent=11 // pred_check
        %p320 = pneg %p130
      $region14: #{galerkin_transformer_2d.13} parent=11 // pred_check_branch
        %322 = sbr.rel (%p320) target = $region16
      $region15: #{galerkin_transformer_2d.13} parent=11 // pred_region
        _
      $region16: #{galerkin_transformer_2d.13} parent=11 // pred_fallthru
        _
      // Predicated region
      $region17: #{galerkin_transformer_2d.13} parent=11 // pred_check
        %p323 = pneg %p151
      $region18: #{galerkin_transformer_2d.13} parent=11 // pred_check_branch
        %325 = sbr.rel (%p323) target = $region20
      $region19: #{galerkin_transformer_2d.13} parent=11 // pred_region
        _
      $region20: #{galerkin_transformer_2d.13} parent=11 // pred_fallthru
        _
      // Predicated region
      $region21: #{galerkin_transformer_2d.13} parent=11 // pred_check
        %p326 = pneg %p172
      $region22: #{galerkin_transformer_2d.13} parent=11 // pred_check_branch
        %328 = sbr.rel (%p326) target = $region24
      $region23: #{galerkin_transformer_2d.13} parent=11 // pred_region
        _
      $region24: #{galerkin_transformer_2d.13} parent=11 // pred_fallthru
        _
      // Predicated region
      $region25: #{galerkin_transformer_2d.13} parent=11 // pred_check
        %p329 = pneg %p193
      $region26: #{galerkin_transformer_2d.13} parent=11 // pred_check_branch
        %331 = sbr.rel (%p329) target = $region28
      $region27: #{galerkin_transformer_2d.13} parent=11 // pred_region
        _
      $region28: #{galerkin_transformer_2d.13} parent=11 // pred_fallthru
        _
      // Predicated region
      $region29: #{galerkin_transformer_2d.13} parent=11 // pred_check
        %p332 = pneg %p214
      $region30: #{galerkin_transformer_2d.13} parent=11 // pred_check_branch
        %334 = sbr.rel (%p332) target = $region32
      $region31: #{galerkin_transformer_2d.13} parent=11 // pred_region
        _
      $region32: #{galerkin_transformer_2d.13} parent=11 // pred_fallthru
        _
      // Predicated region
      $region33: #{galerkin_transformer_2d.13} parent=11 // pred_check
        %p335 = pneg %p235
      $region34: #{galerkin_transformer_2d.13} parent=11 // pred_check_branch
        %337 = sbr.rel (%p335) target = $region36
      $region35: #{galerkin_transformer_2d.13} parent=11 // pred_region
        _
      $region36: #{galerkin_transformer_2d.13} parent=11 // pred_fallthru
        _
      // Predicated region
      $region37: #{galerkin_transformer_2d.13} parent=11 // pred_check
        %p338 = pneg %p256
      $region38: #{galerkin_transformer_2d.13} parent=11 // pred_check_branch
        %340 = sbr.rel (%p338) target = $region40
      $region39: #{galerkin_transformer_2d.13} parent=11 // pred_region
        _
      $region40: #{galerkin_transformer_2d.13} parent=11 // pred_fallthru
        _
      // Predicated region
      $region41: #{galerkin_transformer_2d.13} parent=11 // pred_check
        %p341 = pneg %p277
      $region42: #{galerkin_transformer_2d.13} parent=11 // pred_check_branch
        %343 = sbr.rel (%p341) target = $region44
      $region43: #{galerkin_transformer_2d.13} parent=11 // pred_region
        _
      $region44: #{galerkin_transformer_2d.13} parent=11 // pred_fallthru
        _
    $region12: #{galerkin_transformer_2d.13} parent=5 // pred_fallthru
      _
    %p344 = scmp.lt.s32.totalorder %s17, 2
    // Predicated region
    $region45: #{galerkin_transformer_2d.13} parent=5 // pred_check
      %p345 = pneg %p344
    $region46: #{galerkin_transformer_2d.13} parent=5 // pred_check_branch
      %347 = sbr.rel (%p345) target = $region48
    $region47: #{galerkin_transformer_2d.13} parent=5 // pred_region
      // Predicated region
      $region49: #{galerkin_transformer_2d.13} parent=47 // pred_check
        %p348 = pneg %p51
      $region50: #{galerkin_transformer_2d.13} parent=47 // pred_check_branch
        %350 = sbr.rel (%p348) target = $region52
      $region51: #{galerkin_transformer_2d.13} parent=47 // pred_region
        %s351 = smul.u32 32, %s25
        %p352 = scmp.lt.s32.totalorder %s24, 1
        %s353 = scalar_select %p352, %s24, 1
        %p354 = scmp.lt.s32.totalorder %s351, 31
        %s355 = scalar_select %p354, %s351, 31
        %s356 = smul.addr %s353, 32
        %s357 = sadd.s32 %s355, %s356
        %s358 = smul.addr %s357, 4
        %s359 = scalar_lea.vmem %s0, %s358
        %s360 = smul.u32 32, %s25
      $region52: #{galerkin_transformer_2d.13} parent=47 // pred_fallthru
        _
      // Predicated region
      $region53: #{galerkin_transformer_2d.13} parent=47 // pred_check
        %p361 = pneg %p77
      $region54: #{galerkin_transformer_2d.13} parent=47 // pred_check_branch
        %363 = sbr.rel (%p361) target = $region56
      $region55: #{galerkin_transformer_2d.13} parent=47 // pred_region
        %p364 = scmp.lt.s32.totalorder %s24, 1
        %s365 = scalar_select %p364, %s24, 1
        %s366 = smul.addr %s365, 4
        %s367 = smul.addr %s366, 4
        %s368 = scalar_lea.vmem %s1, %s367
      $region56: #{galerkin_transformer_2d.13} parent=47 // pred_fallthru
        _
      // Predicated region
      $region57: #{galerkin_transformer_2d.13} parent=47 // pred_check
        %p369 = pneg %p103
      $region58: #{galerkin_transformer_2d.13} parent=47 // pred_check_branch
        %371 = sbr.rel (%p369) target = $region60
      $region59: #{galerkin_transformer_2d.13} parent=47 // pred_region
        %p372 = scmp.lt.s32.totalorder %s24, 1
        %s373 = scalar_select %p372, %s24, 1
        %s374 = scalar_lea.vmem %s2, %s373
      $region60: #{galerkin_transformer_2d.13} parent=47 // pred_fallthru
        _
    $region48: #{galerkin_transformer_2d.13} parent=5 // pred_fallthru
      _
    %p375 = scmp.le.s32.totalorder 1, %s17
    %p376 = scmp.lt.s32.totalorder %s17, 3
    %p377 = pnand %p375, %p376
    %p378 = pneg %p377
    // Predicated region
    $region61: #{galerkin_transformer_2d.13} parent=5 // pred_check
      _
    $region62: #{galerkin_transformer_2d.13} parent=5 // pred_check_branch
      %380 = sbr.rel (%p377) target = $region64
    $region63: #{galerkin_transformer_2d.13} parent=5 // pred_region
      %s381 = ssub.s32 %s17, 1
      %s382 = smul.u32 32, %s27
      %p383 = scmp.lt.s32.totalorder %s26, 1
      %s384 = scalar_select %p383, %s26, 1
      %p385 = scmp.lt.s32.totalorder %s382, 31
      %s386 = scalar_select %p385, %s382, 31
      %s387 = smul.addr %s384, 32
      %s388 = sadd.s32 %s386, %s387
      %s389 = smul.addr %s388, 4
      %s390 = scalar_lea.vmem %s0, %s389
      %p391 = pneg %p57
      %p392 = pneg %p54
      %p393 = scmp.lt.s32.totalorder %s26, 1
      %s394 = scalar_select %p393, %s26, 1
      %s395 = smul.addr %s394, 4
      %s396 = smul.addr %s395, 4
      %s397 = scalar_lea.vmem %s1, %s396
      %p398 = pneg %p83
      %p399 = pneg %p80
      %p400 = scmp.lt.s32.totalorder %s26, 1
      %s401 = scalar_select %p400, %s26, 1
      %s402 = scalar_lea.vmem %s2, %s401
      %p403 = pneg %p109
      %p404 = pneg %p106
      %p405 = pneg %p130
      %p406 = pneg %p127
      %p407 = pneg %p151
      %p408 = pneg %p148
      %p409 = pneg %p172
      %p410 = pneg %p169
      %p411 = pneg %p193
      %p412 = pneg %p190
      %p413 = pneg %p214
      %p414 = pneg %p211
      %p415 = pneg %p235
      %p416 = pneg %p232
      %p417 = pneg %p256
      %p418 = pneg %p253
      %p419 = pneg %p277
      %p420 = pneg %p274
      %p421 = pneg %p305
      %p422 = pneg %p302
      %s423 = smul.u32 32, %s27
      %p424 = scmp.lt.s32.totalorder %s26, 1
      %s425 = scalar_select %p424, %s26, 1
      %p426 = scmp.lt.s32.totalorder %s423, 31
      %s427 = scalar_select %p426, %s423, 31
      %s428 = smul.addr %s425, 32
      %s429 = sadd.s32 %s427, %s428
      %s430 = smul.addr %s429, 4
      %s431 = scalar_lea.vmem %s11, %s430
      %s432 = smul.u32 32, %s27
      %p433 = scmp.lt.s32.totalorder %s26, 1
      %s434 = scalar_select %p433, %s26, 1
      %p435 = scmp.lt.s32.totalorder %s432, 31
      %s436 = scalar_select %p435, %s432, 31
      %s437 = smul.addr %s434, 32
      %s438 = sadd.s32 %s436, %s437
      %s439 = smul.addr %s438, 4
      %s440 = scalar_lea.vmem %s0, %s439
      %s441 = smul.u32 32, %s27
      %p442 = scmp.lt.s32.totalorder %s26, 1
      %s443 = scalar_select %p442, %s26, 1
      %s444 = smul.addr %s443, 4
      %s445 = smul.addr %s444, 4
      %s446 = scalar_lea.vmem %s1, %s445
      %p447 = scmp.lt.s32.totalorder %s26, 1
      %s448 = scalar_select %p447, %s26, 1
      %s449 = scalar_lea.vmem %s2, %s448
      %s450 = smul.u32 32, %s27
      %p451 = scmp.lt.s32.totalorder %s26, 1
      %s452 = scalar_select %p451, %s26, 1
      %p453 = scmp.lt.s32.totalorder %s450, 31
      %s454 = scalar_select %p453, %s450, 31
      %s455 = smul.addr %s452, 32
      %s456 = sadd.s32 %s454, %s455
      %s457 = smul.addr %s456, 4
      %s458 = scalar_lea.vmem %s11, %s457
      %s459 = smul.u32 32, %s27
      %v461 = vld [vmem:[%s440] sm:$0xf]
      %v462 = vld [vmem:[%s440 + $0x4] sm:$0xf]
      %v463 = vld [vmem:[%s440 + $0x8] sm:$0xf]
      %v464 = vld [vmem:[%s440 + $0xc] sm:$0xf]
      %v465 = vld [vmem:[%s440 + $0x10] sm:$0xf]
      %v466 = vld [vmem:[%s440 + $0x14] sm:$0xf]
      %v467 = vld [vmem:[%s440 + $0x18] sm:$0xf]
      %v468 = vld [vmem:[%s440 + $0x1c] sm:$0xf]
      %v469 = vld [vmem:[%s440 + $0x20] sm:$0xf]
      %v470 = vld [vmem:[%s440 + $0x24] sm:$0xf]
      %v471 = vld [vmem:[%s440 + $0x28] sm:$0xf]
      %v472 = vld [vmem:[%s440 + $0x2c] sm:$0xf]
      %v473 = vld [vmem:[%s440 + $0x30] sm:$0xf]
      %v474 = vld [vmem:[%s440 + $0x34] sm:$0xf]
      %v475 = vld [vmem:[%s440 + $0x38] sm:$0xf]
      %v476 = vld [vmem:[%s440 + $0x3c] sm:$0xf]
      %v477 = vld [vmem:[%s440 + $0x40] sm:$0xf]
      %v478 = vld [vmem:[%s440 + $0x44] sm:$0xf]
      %v479 = vld [vmem:[%s440 + $0x48] sm:$0xf]
      %v480 = vld [vmem:[%s440 + $0x4c] sm:$0xf]
      %v481 = vld [vmem:[%s440 + $0x50] sm:$0xf]
      %v482 = vld [vmem:[%s440 + $0x54] sm:$0xf]
      %v483 = vld [vmem:[%s440 + $0x58] sm:$0xf]
      %v484 = vld [vmem:[%s440 + $0x5c] sm:$0xf]
      %v485 = vld [vmem:[%s440 + $0x60] sm:$0xf]
      %v486 = vld [vmem:[%s440 + $0x64] sm:$0xf]
      %v487 = vld [vmem:[%s440 + $0x68] sm:$0xf]
      %v488 = vld [vmem:[%s440 + $0x6c] sm:$0xf]
      %v489 = vld [vmem:[%s440 + $0x70] sm:$0xf]
      %v490 = vld [vmem:[%s440 + $0x74] sm:$0xf]
      %v491 = vld [vmem:[%s440 + $0x78] sm:$0xf]
      %v492 = vld [vmem:[%s440 + $0x7c] sm:$0xf]
      %v493 = vunpack.c.l.bf16 %v461
      %v494 = vunpack.c.l.bf16 %v462
      %v495 = vunpack.c.l.bf16 %v463
      %v496 = vunpack.c.l.bf16 %v464
      %v497 = vunpack.c.l.bf16 %v465
      %v498 = vunpack.c.l.bf16 %v466
      %v499 = vunpack.c.l.bf16 %v467
      %v500 = vunpack.c.l.bf16 %v468
      %v501 = vunpack.c.l.bf16 %v469
      %v502 = vunpack.c.l.bf16 %v470
      %v503 = vunpack.c.l.bf16 %v471
      %v504 = vunpack.c.l.bf16 %v472
      %v505 = vunpack.c.l.bf16 %v473
      %v506 = vunpack.c.l.bf16 %v474
      %v507 = vunpack.c.l.bf16 %v475
      %v508 = vunpack.c.l.bf16 %v476
      %v509 = vunpack.c.l.bf16 %v477
      %v510 = vunpack.c.l.bf16 %v478
      %v511 = vunpack.c.l.bf16 %v479
      %v512 = vunpack.c.l.bf16 %v480
      %v513 = vunpack.c.l.bf16 %v481
      %v514 = vunpack.c.l.bf16 %v482
      %v515 = vunpack.c.l.bf16 %v483
      %v516 = vunpack.c.l.bf16 %v484
      %v517 = vunpack.c.l.bf16 %v485
      %v518 = vunpack.c.l.bf16 %v486
      %v519 = vunpack.c.l.bf16 %v487
      %v520 = vunpack.c.l.bf16 %v488
      %v521 = vunpack.c.l.bf16 %v489
      %v522 = vunpack.c.l.bf16 %v490
      %v523 = vunpack.c.l.bf16 %v491
      %v524 = vunpack.c.l.bf16 %v492
      %v525 = vld [vmem:[%s446] sm:$0xf]
      %v526 = vld [vmem:[%s446 + $0x4] sm:$0xf]
      %v527 = vld [vmem:[%s446 + $0x8] sm:$0xf]
      %v528 = vld [vmem:[%s446 + $0xc] sm:$0xf]
      %v529 = vld [vmem:[%s449] sm:$0x1]
      %v531 = vlaneseq
      %v532 = vshrl.u32 %v531, 7
      %v533 = vsub.s32 0, %v532
      %v534 = vrot.slane %v529, %v533
      %v568 = vunpack.c.l.b16 %v461
      %v569 = vunpack.c.l.b16 %v462
      %v570 = vunpack.c.l.b16 %v463
      %v571 = vunpack.c.l.b16 %v464
      %v572 = vunpack.c.l.b16 %v465
      %v573 = vunpack.c.l.b16 %v466
      %v574 = vunpack.c.l.b16 %v467
      %v575 = vunpack.c.l.b16 %v468
      %v576 = vunpack.c.l.b16 %v469
      %v577 = vunpack.c.l.b16 %v470
      %v578 = vunpack.c.l.b16 %v471
      %v579 = vunpack.c.l.b16 %v472
      %v580 = vunpack.c.l.b16 %v473
      %v581 = vunpack.c.l.b16 %v474
      %v582 = vunpack.c.l.b16 %v475
      %v583 = vunpack.c.l.b16 %v476
      %v584 = vunpack.c.l.b16 %v477
      %v585 = vunpack.c.l.b16 %v478
      %v586 = vunpack.c.l.b16 %v479
      %v587 = vunpack.c.l.b16 %v480
      %v588 = vunpack.c.l.b16 %v481
      %v589 = vunpack.c.l.b16 %v482
      %v590 = vunpack.c.l.b16 %v483
      %v591 = vunpack.c.l.b16 %v484
      %v592 = vunpack.c.l.b16 %v485
      %v593 = vunpack.c.l.b16 %v486
      %v594 = vunpack.c.l.b16 %v487
      %v595 = vunpack.c.l.b16 %v488
      %v596 = vunpack.c.l.b16 %v489
      %v597 = vunpack.c.l.b16 %v490
      %v598 = vunpack.c.l.b16 %v491
      %v599 = vunpack.c.l.b16 %v492
      %v600 = vpack.c.b16 %v569, %v568
      %v601 = vpack.c.b16 %v571, %v570
      %v602 = vpack.c.b16 %v573, %v572
      %v603 = vpack.c.b16 %v575, %v574
      %v604 = vpack.c.b16 %v577, %v576
      %v605 = vpack.c.b16 %v579, %v578
      %v606 = vpack.c.b16 %v581, %v580
      %v607 = vpack.c.b16 %v583, %v582
      %v608 = vpack.c.b16 %v585, %v584
      %v609 = vpack.c.b16 %v587, %v586
      %v610 = vpack.c.b16 %v589, %v588
      %v611 = vpack.c.b16 %v591, %v590
      %v612 = vpack.c.b16 %v593, %v592
      %v613 = vpack.c.b16 %v595, %v594
      %v614 = vpack.c.b16 %v597, %v596
      %v615 = vpack.c.b16 %v599, %v598
      %v620 = vunpack.c.l.b16 %v525
      %v621 = vunpack.c.l.b16 %v526
      %v622 = vunpack.c.l.b16 %v527
      %v623 = vunpack.c.l.b16 %v528
      %v624 = vpack.c.b16 %v621, %v620
      %v625 = vpack.c.b16 %v623, %v622
      %vm628 = vcmask 261120
      %v630 = vsel %vm628, %v600, 0
      %v633 = vsel %vm628, %v601, 0
      %v636 = vsel %vm628, %v602, 0
      %v639 = vsel %vm628, %v603, 0
      %v642 = vsel %vm628, %v604, 0
      %v645 = vsel %vm628, %v605, 0
      %v648 = vsel %vm628, %v606, 0
      %v651 = vsel %vm628, %v607, 0
      %v654 = vsel %vm628, %v608, 0
      %v657 = vsel %vm628, %v609, 0
      %v660 = vsel %vm628, %v610, 0
      %v663 = vsel %vm628, %v611, 0
      %v666 = vsel %vm628, %v612, 0
      %v669 = vsel %vm628, %v613, 0
      %v672 = vsel %vm628, %v614, 0
      %v675 = vsel %vm628, %v615, 0
      %677 = vmatprep.subr.bf16.mxu0 0
      %678 = vmatpush1.bf16.msra.mxu0 0
      %679 = vmatprep.subr.bf16.mxu0 0
      %680 = vmatpush1.bf16.msra.mxu0 0
      %681 = vmatprep.subr.bf16.mxu0 0
      %682 = vmatpush1.bf16.msra.mxu0 0
      %683 = vmatprep.subr.bf16.mxu0 0
      %684 = vmatpush1.bf16.msra.mxu0 0
      %685 = vmatprep.subr.bf16.mxu0 0
      %686 = vmatpush1.bf16.msra.mxu0 0
      %687 = vmatprep.subr.bf16.mxu0 0
      %688 = vmatpush1.bf16.msra.mxu0 0
      %689 = vmatprep.subr.bf16.mxu0 0
      %690 = vmatpush1.bf16.msra.mxu0 %v625
      %691 = vmatprep.subr.bf16.mxu0 0
      %692 = vmatpush1.bf16.msra.mxu0 %v624
      %693 = vmatprep.subr.bf16.mxu0 0
      %694 = vmatpush2.bf16.msra.mxu0 0
      %695 = vmatprep.subr.bf16.mxu0 0
      %696 = vmatpush2.bf16.msra.mxu0 0
      %697 = vmatprep.subr.bf16.mxu0 0
      %698 = vmatpush2.bf16.msra.mxu0 0
      %699 = vmatprep.subr.bf16.mxu0 0
      %700 = vmatpush2.bf16.msra.mxu0 0
      %701 = vmatprep.subr.bf16.mxu0 0
      %702 = vmatpush2.bf16.msra.mxu0 0
      %703 = vmatprep.subr.bf16.mxu0 0
      %704 = vmatpush2.bf16.msra.mxu0 0
      %705 = vmatprep.subr.bf16.mxu0 0
      %706 = vmatpush2.bf16.msra.mxu0 0
      %707 = vmatprep.subr.bf16.mxu0 0
      %708 = vmatpush2.bf16.msra.mxu0 0
      %709 = vmatprep.mubr.bf16.mxu0 0
      %710 = vmatmul.mubr.bf16.gmra.mxu0 %v630
      %v711 = vpop.f32.mrf.mxu0
      %v712 = vadd.f32 %v534, %v711
      %v713 = vpop.f32.mrf.mxu0
      %v714 = vpop.f32.mrf.mxu0
      %v715 = vadd.f32 %v534, %v714
      %v716 = vpop.f32.mrf.mxu0
      %717 = vmatprep.mubr.bf16.mxu0 0
      %718 = vmatmul.mubr.bf16.gmra.mxu0 %v633
      %v719 = vpop.f32.mrf.mxu0
      %v720 = vadd.f32 %v534, %v719
      %v721 = vpop.f32.mrf.mxu0
      %v722 = vpop.f32.mrf.mxu0
      %v723 = vadd.f32 %v534, %v722
      %v724 = vpop.f32.mrf.mxu0
      %725 = vmatprep.mubr.bf16.mxu0 0
      %726 = vmatmul.mubr.bf16.gmra.mxu0 %v636
      %v727 = vpop.f32.mrf.mxu0
      %v728 = vadd.f32 %v534, %v727
      %v729 = vpop.f32.mrf.mxu0
      %v730 = vpop.f32.mrf.mxu0
      %v731 = vadd.f32 %v534, %v730
      %v732 = vpop.f32.mrf.mxu0
      %733 = vmatprep.mubr.bf16.mxu0 0
      %734 = vmatmul.mubr.bf16.gmra.mxu0 %v639
      %v735 = vpop.f32.mrf.mxu0
      %v736 = vadd.f32 %v534, %v735
      %v737 = vpop.f32.mrf.mxu0
      %v738 = vpop.f32.mrf.mxu0
      %v739 = vadd.f32 %v534, %v738
      %v740 = vpop.f32.mrf.mxu0
      %741 = vmatprep.mubr.bf16.mxu0 0
      %742 = vmatmul.mubr.bf16.gmra.mxu0 %v642
      %v743 = vpop.f32.mrf.mxu0
      %v744 = vadd.f32 %v534, %v743
      %v745 = vpop.f32.mrf.mxu0
      %v746 = vpop.f32.mrf.mxu0
      %v747 = vadd.f32 %v534, %v746
      %v748 = vpop.f32.mrf.mxu0
      %749 = vmatprep.mubr.bf16.mxu0 0
      %750 = vmatmul.mubr.bf16.gmra.mxu0 %v645
      %v751 = vpop.f32.mrf.mxu0
      %v752 = vadd.f32 %v534, %v751
      %v753 = vpop.f32.mrf.mxu0
      %v754 = vpop.f32.mrf.mxu0
      %v755 = vadd.f32 %v534, %v754
      %v756 = vpop.f32.mrf.mxu0
      %757 = vmatprep.mubr.bf16.mxu0 0
      %758 = vmatmul.mubr.bf16.gmra.mxu0 %v648
      %v759 = vpop.f32.mrf.mxu0
      %v760 = vadd.f32 %v534, %v759
      %v761 = vpop.f32.mrf.mxu0
      %v762 = vpop.f32.mrf.mxu0
      %v763 = vadd.f32 %v534, %v762
      %v764 = vpop.f32.mrf.mxu0
      %765 = vmatprep.mubr.bf16.mxu0 0
      %766 = vmatmul.mubr.bf16.gmra.mxu0 %v651
      %v767 = vpop.f32.mrf.mxu0
      %v768 = vadd.f32 %v534, %v767
      %v769 = vpop.f32.mrf.mxu0
      %v770 = vpop.f32.mrf.mxu0
      %v771 = vadd.f32 %v534, %v770
      %v772 = vpop.f32.mrf.mxu0
      %773 = vmatprep.mubr.bf16.mxu0 0
      %774 = vmatmul.mubr.bf16.gmra.mxu0 %v654
      %v775 = vpop.f32.mrf.mxu0
      %v776 = vadd.f32 %v534, %v775
      %v777 = vpop.f32.mrf.mxu0
      %v778 = vpop.f32.mrf.mxu0
      %v779 = vadd.f32 %v534, %v778
      %v780 = vpop.f32.mrf.mxu0
      %781 = vmatprep.mubr.bf16.mxu0 0
      %782 = vmatmul.mubr.bf16.gmra.mxu0 %v657
      %v783 = vpop.f32.mrf.mxu0
      %v784 = vadd.f32 %v534, %v783
      %v785 = vpop.f32.mrf.mxu0
      %v786 = vpop.f32.mrf.mxu0
      %v787 = vadd.f32 %v534, %v786
      %v788 = vpop.f32.mrf.mxu0
      %789 = vmatprep.mubr.bf16.mxu0 0
      %790 = vmatmul.mubr.bf16.gmra.mxu0 %v660
      %v791 = vpop.f32.mrf.mxu0
      %v792 = vadd.f32 %v534, %v791
      %v793 = vpop.f32.mrf.mxu0
      %v794 = vpop.f32.mrf.mxu0
      %v795 = vadd.f32 %v534, %v794
      %v796 = vpop.f32.mrf.mxu0
      %797 = vmatprep.mubr.bf16.mxu0 0
      %798 = vmatmul.mubr.bf16.gmra.mxu0 %v663
      %v799 = vpop.f32.mrf.mxu0
      %v800 = vadd.f32 %v534, %v799
      %v801 = vpop.f32.mrf.mxu0
      %v802 = vpop.f32.mrf.mxu0
      %v803 = vadd.f32 %v534, %v802
      %v804 = vpop.f32.mrf.mxu0
      %805 = vmatprep.mubr.bf16.mxu0 0
      %806 = vmatmul.mubr.bf16.gmra.mxu0 %v666
      %v807 = vpop.f32.mrf.mxu0
      %v808 = vadd.f32 %v534, %v807
      %v809 = vpop.f32.mrf.mxu0
      %v810 = vpop.f32.mrf.mxu0
      %v811 = vadd.f32 %v534, %v810
      %v812 = vpop.f32.mrf.mxu0
      %813 = vmatprep.mubr.bf16.mxu0 0
      %814 = vmatmul.mubr.bf16.gmra.mxu0 %v669
      %v815 = vpop.f32.mrf.mxu0
      %v816 = vadd.f32 %v534, %v815
      %v817 = vpop.f32.mrf.mxu0
      %v818 = vpop.f32.mrf.mxu0
      %v819 = vadd.f32 %v534, %v818
      %v820 = vpop.f32.mrf.mxu0
      %821 = vmatprep.mubr.bf16.mxu0 0
      %822 = vmatmul.mubr.bf16.gmra.mxu0 %v672
      %v823 = vpop.f32.mrf.mxu0
      %v824 = vadd.f32 %v534, %v823
      %v825 = vpop.f32.mrf.mxu0
      %v826 = vpop.f32.mrf.mxu0
      %v827 = vadd.f32 %v534, %v826
      %v828 = vpop.f32.mrf.mxu0
      %829 = vmatprep.mubr.bf16.mxu0 0
      %830 = vmatmul.mubr.bf16.gmra.mxu0 %v675
      %v831 = vpop.f32.mrf.mxu0
      %v832 = vadd.f32 %v534, %v831
      %v833 = vpop.f32.mrf.mxu0
      %v834 = vpop.f32.mrf.mxu0
      %v835 = vadd.f32 %v534, %v834
      %v836 = vpop.f32.mrf.mxu0
      %837 = vdwg.mxu0
      %v838 = vadd.f32 %v712, %v493
      %v839 = vadd.f32 %v715, %v494
      %v840 = vadd.f32 %v720, %v495
      %v841 = vadd.f32 %v723, %v496
      %v842 = vadd.f32 %v728, %v497
      %v843 = vadd.f32 %v731, %v498
      %v844 = vadd.f32 %v736, %v499
      %v845 = vadd.f32 %v739, %v500
      %v846 = vadd.f32 %v744, %v501
      %v847 = vadd.f32 %v747, %v502
      %v848 = vadd.f32 %v752, %v503
      %v849 = vadd.f32 %v755, %v504
      %v850 = vadd.f32 %v760, %v505
      %v851 = vadd.f32 %v763, %v506
      %v852 = vadd.f32 %v768, %v507
      %v853 = vadd.f32 %v771, %v508
      %v854 = vadd.f32 %v776, %v509
      %v855 = vadd.f32 %v779, %v510
      %v856 = vadd.f32 %v784, %v511
      %v857 = vadd.f32 %v787, %v512
      %v858 = vadd.f32 %v792, %v513
      %v859 = vadd.f32 %v795, %v514
      %v860 = vadd.f32 %v800, %v515
      %v861 = vadd.f32 %v803, %v516
      %v862 = vadd.f32 %v808, %v517
      %v863 = vadd.f32 %v811, %v518
      %v864 = vadd.f32 %v816, %v519
      %v865 = vadd.f32 %v819, %v520
      %v866 = vadd.f32 %v824, %v521
      %v867 = vadd.f32 %v827, %v522
      %v868 = vadd.f32 %v832, %v523
      %v869 = vadd.f32 %v835, %v524
      %v870 = vpack.c.bf16 %v839, %v838
      %v871 = vpack.c.bf16 %v841, %v840
      %v872 = vpack.c.bf16 %v843, %v842
      %v873 = vpack.c.bf16 %v845, %v844
      %v874 = vpack.c.bf16 %v847, %v846
      %v875 = vpack.c.bf16 %v849, %v848
      %v876 = vpack.c.bf16 %v851, %v850
      %v877 = vpack.c.bf16 %v853, %v852
      %v878 = vpack.c.bf16 %v855, %v854
      %v879 = vpack.c.bf16 %v857, %v856
      %v880 = vpack.c.bf16 %v859, %v858
      %v881 = vpack.c.bf16 %v861, %v860
      %v882 = vpack.c.bf16 %v863, %v862
      %v883 = vpack.c.bf16 %v865, %v864
      %v884 = vpack.c.bf16 %v867, %v866
      %v885 = vpack.c.bf16 %v869, %v868
      %v886 = vld [vmem:[%s3] sm:$0xf]
      %v887 = vld [vmem:[%s3 + $0x4] sm:$0xf]
      %v888 = vld [vmem:[%s3 + $0x8] sm:$0xf]
      %v889 = vld [vmem:[%s3 + $0xc] sm:$0xf]
      %v890 = vld [vmem:[%s4] sm:$0x1]
      %v892 = vlaneseq
      %v893 = vshrl.u32 %v892, 7
      %v894 = vsub.s32 0, %v893
      %v895 = vrot.slane %v890, %v894
      %v901 = vunpack.c.l.b16 %v886
      %v902 = vunpack.c.l.b16 %v887
      %v903 = vunpack.c.l.b16 %v888
      %v904 = vunpack.c.l.b16 %v889
      %v905 = vpack.c.b16 %v902, %v901
      %v906 = vpack.c.b16 %v904, %v903
      %v910 = vsel %vm628, %v870, 0
      %v913 = vsel %vm628, %v871, 0
      %v916 = vsel %vm628, %v872, 0
      %v919 = vsel %vm628, %v873, 0
      %v922 = vsel %vm628, %v874, 0
      %v925 = vsel %vm628, %v875, 0
      %v928 = vsel %vm628, %v876, 0
      %v931 = vsel %vm628, %v877, 0
      %v934 = vsel %vm628, %v878, 0
      %v937 = vsel %vm628, %v879, 0
      %v940 = vsel %vm628, %v880, 0
      %v943 = vsel %vm628, %v881, 0
      %v946 = vsel %vm628, %v882, 0
      %v949 = vsel %vm628, %v883, 0
      %v952 = vsel %vm628, %v884, 0
      %v955 = vsel %vm628, %v885, 0
      %957 = vmatprep.subr.bf16.mxu0 0
      %958 = vmatpush1.bf16.msra.mxu0 0
      %959 = vmatprep.subr.bf16.mxu0 0
      %960 = vmatpush1.bf16.msra.mxu0 0
      %961 = vmatprep.subr.bf16.mxu0 0
      %962 = vmatpush1.bf16.msra.mxu0 0
      %963 = vmatprep.subr.bf16.mxu0 0
      %964 = vmatpush1.bf16.msra.mxu0 0
      %965 = vmatprep.subr.bf16.mxu0 0
      %966 = vmatpush1.bf16.msra.mxu0 0
      %967 = vmatprep.subr.bf16.mxu0 0
      %968 = vmatpush1.bf16.msra.mxu0 0
      %969 = vmatprep.subr.bf16.mxu0 0
      %970 = vmatpush1.bf16.msra.mxu0 %v906
      %971 = vmatprep.subr.bf16.mxu0 0
      %972 = vmatpush1.bf16.msra.mxu0 %v905
      %973 = vmatprep.subr.bf16.mxu0 0
      %974 = vmatpush2.bf16.msra.mxu0 0
      %975 = vmatprep.subr.bf16.mxu0 0
      %976 = vmatpush2.bf16.msra.mxu0 0
      %977 = vmatprep.subr.bf16.mxu0 0
      %978 = vmatpush2.bf16.msra.mxu0 0
      %979 = vmatprep.subr.bf16.mxu0 0
      %980 = vmatpush2.bf16.msra.mxu0 0
      %981 = vmatprep.subr.bf16.mxu0 0
      %982 = vmatpush2.bf16.msra.mxu0 0
      %983 = vmatprep.subr.bf16.mxu0 0
      %984 = vmatpush2.bf16.msra.mxu0 0
      %985 = vmatprep.subr.bf16.mxu0 0
      %986 = vmatpush2.bf16.msra.mxu0 0
      %987 = vmatprep.subr.bf16.mxu0 0
      %988 = vmatpush2.bf16.msra.mxu0 0
      %989 = vmatprep.mubr.bf16.mxu0 0
      %990 = vmatmul.mubr.bf16.gmra.mxu0 %v910
      %v991 = vpop.f32.mrf.mxu0
      %v992 = vadd.f32 %v895, %v991
      %v993 = vpop.f32.mrf.mxu0
      %v994 = vpop.f32.mrf.mxu0
      %v995 = vadd.f32 %v895, %v994
      %v996 = vpop.f32.mrf.mxu0
      %997 = vmatprep.mubr.bf16.mxu0 0
      %998 = vmatmul.mubr.bf16.gmra.mxu0 %v913
      %v999 = vpop.f32.mrf.mxu0
      %v1000 = vadd.f32 %v895, %v999
      %v1001 = vpop.f32.mrf.mxu0
      %v1002 = vpop.f32.mrf.mxu0
      %v1003 = vadd.f32 %v895, %v1002
      %v1004 = vpop.f32.mrf.mxu0
      %1005 = vmatprep.mubr.bf16.mxu0 0
      %1006 = vmatmul.mubr.bf16.gmra.mxu0 %v916
      %v1007 = vpop.f32.mrf.mxu0
      %v1008 = vadd.f32 %v895, %v1007
      %v1009 = vpop.f32.mrf.mxu0
      %v1010 = vpop.f32.mrf.mxu0
      %v1011 = vadd.f32 %v895, %v1010
      %v1012 = vpop.f32.mrf.mxu0
      %1013 = vmatprep.mubr.bf16.mxu0 0
      %1014 = vmatmul.mubr.bf16.gmra.mxu0 %v919
      %v1015 = vpop.f32.mrf.mxu0
      %v1016 = vadd.f32 %v895, %v1015
      %v1017 = vpop.f32.mrf.mxu0
      %v1018 = vpop.f32.mrf.mxu0
      %v1019 = vadd.f32 %v895, %v1018
      %v1020 = vpop.f32.mrf.mxu0
      %1021 = vmatprep.mubr.bf16.mxu0 0
      %1022 = vmatmul.mubr.bf16.gmra.mxu0 %v922
      %v1023 = vpop.f32.mrf.mxu0
      %v1024 = vadd.f32 %v895, %v1023
      %v1025 = vpop.f32.mrf.mxu0
      %v1026 = vpop.f32.mrf.mxu0
      %v1027 = vadd.f32 %v895, %v1026
      %v1028 = vpop.f32.mrf.mxu0
      %1029 = vmatprep.mubr.bf16.mxu0 0
      %1030 = vmatmul.mubr.bf16.gmra.mxu0 %v925
      %v1031 = vpop.f32.mrf.mxu0
      %v1032 = vadd.f32 %v895, %v1031
      %v1033 = vpop.f32.mrf.mxu0
      %v1034 = vpop.f32.mrf.mxu0
      %v1035 = vadd.f32 %v895, %v1034
      %v1036 = vpop.f32.mrf.mxu0
      %1037 = vmatprep.mubr.bf16.mxu0 0
      %1038 = vmatmul.mubr.bf16.gmra.mxu0 %v928
      %v1039 = vpop.f32.mrf.mxu0
      %v1040 = vadd.f32 %v895, %v1039
      %v1041 = vpop.f32.mrf.mxu0
      %v1042 = vpop.f32.mrf.mxu0
      %v1043 = vadd.f32 %v895, %v1042
      %v1044 = vpop.f32.mrf.mxu0
      %1045 = vmatprep.mubr.bf16.mxu0 0
      %1046 = vmatmul.mubr.bf16.gmra.mxu0 %v931
      %v1047 = vpop.f32.mrf.mxu0
      %v1048 = vadd.f32 %v895, %v1047
      %v1049 = vpop.f32.mrf.mxu0
      %v1050 = vpop.f32.mrf.mxu0
      %v1051 = vadd.f32 %v895, %v1050
      %v1052 = vpop.f32.mrf.mxu0
      %1053 = vmatprep.mubr.bf16.mxu0 0
      %1054 = vmatmul.mubr.bf16.gmra.mxu0 %v934
      %v1055 = vpop.f32.mrf.mxu0
      %v1056 = vadd.f32 %v895, %v1055
      %v1057 = vpop.f32.mrf.mxu0
      %v1058 = vpop.f32.mrf.mxu0
      %v1059 = vadd.f32 %v895, %v1058
      %v1060 = vpop.f32.mrf.mxu0
      %1061 = vmatprep.mubr.bf16.mxu0 0
      %1062 = vmatmul.mubr.bf16.gmra.mxu0 %v937
      %v1063 = vpop.f32.mrf.mxu0
      %v1064 = vadd.f32 %v895, %v1063
      %v1065 = vpop.f32.mrf.mxu0
      %v1066 = vpop.f32.mrf.mxu0
      %v1067 = vadd.f32 %v895, %v1066
      %v1068 = vpop.f32.mrf.mxu0
      %1069 = vmatprep.mubr.bf16.mxu0 0
      %1070 = vmatmul.mubr.bf16.gmra.mxu0 %v940
      %v1071 = vpop.f32.mrf.mxu0
      %v1072 = vadd.f32 %v895, %v1071
      %v1073 = vpop.f32.mrf.mxu0
      %v1074 = vpop.f32.mrf.mxu0
      %v1075 = vadd.f32 %v895, %v1074
      %v1076 = vpop.f32.mrf.mxu0
      %1077 = vmatprep.mubr.bf16.mxu0 0
      %1078 = vmatmul.mubr.bf16.gmra.mxu0 %v943
      %v1079 = vpop.f32.mrf.mxu0
      %v1080 = vadd.f32 %v895, %v1079
      %v1081 = vpop.f32.mrf.mxu0
      %v1082 = vpop.f32.mrf.mxu0
      %v1083 = vadd.f32 %v895, %v1082
      %v1084 = vpop.f32.mrf.mxu0
      %1085 = vmatprep.mubr.bf16.mxu0 0
      %1086 = vmatmul.mubr.bf16.gmra.mxu0 %v946
      %v1087 = vpop.f32.mrf.mxu0
      %v1088 = vadd.f32 %v895, %v1087
      %v1089 = vpop.f32.mrf.mxu0
      %v1090 = vpop.f32.mrf.mxu0
      %v1091 = vadd.f32 %v895, %v1090
      %v1092 = vpop.f32.mrf.mxu0
      %1093 = vmatprep.mubr.bf16.mxu0 0
      %1094 = vmatmul.mubr.bf16.gmra.mxu0 %v949
      %v1095 = vpop.f32.mrf.mxu0
      %v1096 = vadd.f32 %v895, %v1095
      %v1097 = vpop.f32.mrf.mxu0
      %v1098 = vpop.f32.mrf.mxu0
      %v1099 = vadd.f32 %v895, %v1098
      %v1100 = vpop.f32.mrf.mxu0
      %1101 = vmatprep.mubr.bf16.mxu0 0
      %1102 = vmatmul.mubr.bf16.gmra.mxu0 %v952
      %v1103 = vpop.f32.mrf.mxu0
      %v1104 = vadd.f32 %v895, %v1103
      %v1105 = vpop.f32.mrf.mxu0
      %v1106 = vpop.f32.mrf.mxu0
      %v1107 = vadd.f32 %v895, %v1106
      %v1108 = vpop.f32.mrf.mxu0
      %1109 = vmatprep.mubr.bf16.mxu0 0
      %1110 = vmatmul.mubr.bf16.gmra.mxu0 %v955
      %v1111 = vpop.f32.mrf.mxu0
      %v1112 = vadd.f32 %v895, %v1111
      %v1113 = vpop.f32.mrf.mxu0
      %v1114 = vpop.f32.mrf.mxu0
      %v1115 = vadd.f32 %v895, %v1114
      %v1116 = vpop.f32.mrf.mxu0
      %1117 = vdwg.mxu0
      %v1118 = vmul.f32 %v992, %v992
      %v1119 = vmul.f32 %v995, %v995
      %v1120 = vmul.f32 %v1000, %v1000
      %v1121 = vmul.f32 %v1003, %v1003
      %v1122 = vmul.f32 %v1008, %v1008
      %v1123 = vmul.f32 %v1011, %v1011
      %v1124 = vmul.f32 %v1016, %v1016
      %v1125 = vmul.f32 %v1019, %v1019
      %v1126 = vmul.f32 %v1024, %v1024
      %v1127 = vmul.f32 %v1027, %v1027
      %v1128 = vmul.f32 %v1032, %v1032
      %v1129 = vmul.f32 %v1035, %v1035
      %v1130 = vmul.f32 %v1040, %v1040
      %v1131 = vmul.f32 %v1043, %v1043
      %v1132 = vmul.f32 %v1048, %v1048
      %v1133 = vmul.f32 %v1051, %v1051
      %v1134 = vmul.f32 %v1056, %v1056
      %v1135 = vmul.f32 %v1059, %v1059
      %v1136 = vmul.f32 %v1064, %v1064
      %v1137 = vmul.f32 %v1067, %v1067
      %v1138 = vmul.f32 %v1072, %v1072
      %v1139 = vmul.f32 %v1075, %v1075
      %v1140 = vmul.f32 %v1080, %v1080
      %v1141 = vmul.f32 %v1083, %v1083
      %v1142 = vmul.f32 %v1088, %v1088
      %v1143 = vmul.f32 %v1091, %v1091
      %v1144 = vmul.f32 %v1096, %v1096
      %v1145 = vmul.f32 %v1099, %v1099
      %v1146 = vmul.f32 %v1104, %v1104
      %v1147 = vmul.f32 %v1107, %v1107
      %v1148 = vmul.f32 %v1112, %v1112
      %v1149 = vmul.f32 %v1115, %v1115
      %v1150 = vmul.f32 %v992, %v1118
      %v1151 = vmul.f32 %v995, %v1119
      %v1152 = vmul.f32 %v1000, %v1120
      %v1153 = vmul.f32 %v1003, %v1121
      %v1154 = vmul.f32 %v1008, %v1122
      %v1155 = vmul.f32 %v1011, %v1123
      %v1156 = vmul.f32 %v1016, %v1124
      %v1157 = vmul.f32 %v1019, %v1125
      %v1158 = vmul.f32 %v1024, %v1126
      %v1159 = vmul.f32 %v1027, %v1127
      %v1160 = vmul.f32 %v1032, %v1128
      %v1161 = vmul.f32 %v1035, %v1129
      %v1162 = vmul.f32 %v1040, %v1130
      %v1163 = vmul.f32 %v1043, %v1131
      %v1164 = vmul.f32 %v1048, %v1132
      %v1165 = vmul.f32 %v1051, %v1133
      %v1166 = vmul.f32 %v1056, %v1134
      %v1167 = vmul.f32 %v1059, %v1135
      %v1168 = vmul.f32 %v1064, %v1136
      %v1169 = vmul.f32 %v1067, %v1137
      %v1170 = vmul.f32 %v1072, %v1138
      %v1171 = vmul.f32 %v1075, %v1139
      %v1172 = vmul.f32 %v1080, %v1140
      %v1173 = vmul.f32 %v1083, %v1141
      %v1174 = vmul.f32 %v1088, %v1142
      %v1175 = vmul.f32 %v1091, %v1143
      %v1176 = vmul.f32 %v1096, %v1144
      %v1177 = vmul.f32 %v1099, %v1145
      %v1178 = vmul.f32 %v1104, %v1146
      %v1179 = vmul.f32 %v1107, %v1147
      %v1180 = vmul.f32 %v1112, %v1148
      %v1181 = vmul.f32 %v1115, %v1149
      %v1182 = vmul.f32 %v1150, 0.044715
      %v1183 = vmul.f32 %v1151, 0.044715
      %v1184 = vmul.f32 %v1152, 0.044715
      %v1185 = vmul.f32 %v1153, 0.044715
      %v1186 = vmul.f32 %v1154, 0.044715
      %v1187 = vmul.f32 %v1155, 0.044715
      %v1188 = vmul.f32 %v1156, 0.044715
      %v1189 = vmul.f32 %v1157, 0.044715
      %v1190 = vmul.f32 %v1158, 0.044715
      %v1191 = vmul.f32 %v1159, 0.044715
      %v1192 = vmul.f32 %v1160, 0.044715
      %v1193 = vmul.f32 %v1161, 0.044715
      %v1194 = vmul.f32 %v1162, 0.044715
      %v1195 = vmul.f32 %v1163, 0.044715
      %v1196 = vmul.f32 %v1164, 0.044715
      %v1197 = vmul.f32 %v1165, 0.044715
      %v1198 = vmul.f32 %v1166, 0.044715
      %v1199 = vmul.f32 %v1167, 0.044715
      %v1200 = vmul.f32 %v1168, 0.044715
      %v1201 = vmul.f32 %v1169, 0.044715
      %v1202 = vmul.f32 %v1170, 0.044715
      %v1203 = vmul.f32 %v1171, 0.044715
      %v1204 = vmul.f32 %v1172, 0.044715
      %v1205 = vmul.f32 %v1173, 0.044715
      %v1206 = vmul.f32 %v1174, 0.044715
      %v1207 = vmul.f32 %v1175, 0.044715
      %v1208 = vmul.f32 %v1176, 0.044715
      %v1209 = vmul.f32 %v1177, 0.044715
      %v1210 = vmul.f32 %v1178, 0.044715
      %v1211 = vmul.f32 %v1179, 0.044715
      %v1212 = vmul.f32 %v1180, 0.044715
      %v1213 = vmul.f32 %v1181, 0.044715
      %v1214 = vadd.f32 %v992, %v1182
      %v1215 = vadd.f32 %v995, %v1183
      %v1216 = vadd.f32 %v1000, %v1184
      %v1217 = vadd.f32 %v1003, %v1185
      %v1218 = vadd.f32 %v1008, %v1186
      %v1219 = vadd.f32 %v1011, %v1187
      %v1220 = vadd.f32 %v1016, %v1188
      %v1221 = vadd.f32 %v1019, %v1189
      %v1222 = vadd.f32 %v1024, %v1190
      %v1223 = vadd.f32 %v1027, %v1191
      %v1224 = vadd.f32 %v1032, %v1192
      %v1225 = vadd.f32 %v1035, %v1193
      %v1226 = vadd.f32 %v1040, %v1194
      %v1227 = vadd.f32 %v1043, %v1195
      %v1228 = vadd.f32 %v1048, %v1196
      %v1229 = vadd.f32 %v1051, %v1197
      %v1230 = vadd.f32 %v1056, %v1198
      %v1231 = vadd.f32 %v1059, %v1199
      %v1232 = vadd.f32 %v1064, %v1200
      %v1233 = vadd.f32 %v1067, %v1201
      %v1234 = vadd.f32 %v1072, %v1202
      %v1235 = vadd.f32 %v1075, %v1203
      %v1236 = vadd.f32 %v1080, %v1204
      %v1237 = vadd.f32 %v1083, %v1205
      %v1238 = vadd.f32 %v1088, %v1206
      %v1239 = vadd.f32 %v1091, %v1207
      %v1240 = vadd.f32 %v1096, %v1208
      %v1241 = vadd.f32 %v1099, %v1209
      %v1242 = vadd.f32 %v1104, %v1210
      %v1243 = vadd.f32 %v1107, %v1211
      %v1244 = vadd.f32 %v1112, %v1212
      %v1245 = vadd.f32 %v1115, %v1213
      %v1246 = vmul.f32 %v1214, 0.7978846
      %v1247 = vmul.f32 %v1215, 0.7978846
      %v1248 = vmul.f32 %v1216, 0.7978846
      %v1249 = vmul.f32 %v1217, 0.7978846
      %v1250 = vmul.f32 %v1218, 0.7978846
      %v1251 = vmul.f32 %v1219, 0.7978846
      %v1252 = vmul.f32 %v1220, 0.7978846
      %v1253 = vmul.f32 %v1221, 0.7978846
      %v1254 = vmul.f32 %v1222, 0.7978846
      %v1255 = vmul.f32 %v1223, 0.7978846
      %v1256 = vmul.f32 %v1224, 0.7978846
      %v1257 = vmul.f32 %v1225, 0.7978846
      %v1258 = vmul.f32 %v1226, 0.7978846
      %v1259 = vmul.f32 %v1227, 0.7978846
      %v1260 = vmul.f32 %v1228, 0.7978846
      %v1261 = vmul.f32 %v1229, 0.7978846
      %v1262 = vmul.f32 %v1230, 0.7978846
      %v1263 = vmul.f32 %v1231, 0.7978846
      %v1264 = vmul.f32 %v1232, 0.7978846
      %v1265 = vmul.f32 %v1233, 0.7978846
      %v1266 = vmul.f32 %v1234, 0.7978846
      %v1267 = vmul.f32 %v1235, 0.7978846
      %v1268 = vmul.f32 %v1236, 0.7978846
      %v1269 = vmul.f32 %v1237, 0.7978846
      %v1270 = vmul.f32 %v1238, 0.7978846
      %v1271 = vmul.f32 %v1239, 0.7978846
      %v1272 = vmul.f32 %v1240, 0.7978846
      %v1273 = vmul.f32 %v1241, 0.7978846
      %v1274 = vmul.f32 %v1242, 0.7978846
      %v1275 = vmul.f32 %v1243, 0.7978846
      %v1276 = vmul.f32 %v1244, 0.7978846
      %v1277 = vmul.f32 %v1245, 0.7978846
      %v1278 = vtanh.pop %v1246
      %v1279 = vtanh.pop %v1247
      %v1280 = vtanh.pop %v1248
      %v1281 = vtanh.pop %v1249
      %v1282 = vtanh.pop %v1250
      %v1283 = vtanh.pop %v1251
      %v1284 = vtanh.pop %v1252
      %v1285 = vtanh.pop %v1253
      %v1286 = vtanh.pop %v1254
      %v1287 = vtanh.pop %v1255
      %v1288 = vtanh.pop %v1256
      %v1289 = vtanh.pop %v1257
      %v1290 = vtanh.pop %v1258
      %v1291 = vtanh.pop %v1259
      %v1292 = vtanh.pop %v1260
      %v1293 = vtanh.pop %v1261
      %v1294 = vtanh.pop %v1262
      %v1295 = vtanh.pop %v1263
      %v1296 = vtanh.pop %v1264
      %v1297 = vtanh.pop %v1265
      %v1298 = vtanh.pop %v1266
      %v1299 = vtanh.pop %v1267
      %v1300 = vtanh.pop %v1268
      %v1301 = vtanh.pop %v1269
      %v1302 = vtanh.pop %v1270
      %v1303 = vtanh.pop %v1271
      %v1304 = vtanh.pop %v1272
      %v1305 = vtanh.pop %v1273
      %v1306 = vtanh.pop %v1274
      %v1307 = vtanh.pop %v1275
      %v1308 = vtanh.pop %v1276
      %v1309 = vtanh.pop %v1277
      %v1310 = vadd.f32 %v1278, 1.0
      %v1311 = vadd.f32 %v1279, 1.0
      %v1312 = vadd.f32 %v1280, 1.0
      %v1313 = vadd.f32 %v1281, 1.0
      %v1314 = vadd.f32 %v1282, 1.0
      %v1315 = vadd.f32 %v1283, 1.0
      %v1316 = vadd.f32 %v1284, 1.0
      %v1317 = vadd.f32 %v1285, 1.0
      %v1318 = vadd.f32 %v1286, 1.0
      %v1319 = vadd.f32 %v1287, 1.0
      %v1320 = vadd.f32 %v1288, 1.0
      %v1321 = vadd.f32 %v1289, 1.0
      %v1322 = vadd.f32 %v1290, 1.0
      %v1323 = vadd.f32 %v1291, 1.0
      %v1324 = vadd.f32 %v1292, 1.0
      %v1325 = vadd.f32 %v1293, 1.0
      %v1326 = vadd.f32 %v1294, 1.0
      %v1327 = vadd.f32 %v1295, 1.0
      %v1328 = vadd.f32 %v1296, 1.0
      %v1329 = vadd.f32 %v1297, 1.0
      %v1330 = vadd.f32 %v1298, 1.0
      %v1331 = vadd.f32 %v1299, 1.0
      %v1332 = vadd.f32 %v1300, 1.0
      %v1333 = vadd.f32 %v1301, 1.0
      %v1334 = vadd.f32 %v1302, 1.0
      %v1335 = vadd.f32 %v1303, 1.0
      %v1336 = vadd.f32 %v1304, 1.0
      %v1337 = vadd.f32 %v1305, 1.0
      %v1338 = vadd.f32 %v1306, 1.0
      %v1339 = vadd.f32 %v1307, 1.0
      %v1340 = vadd.f32 %v1308, 1.0
      %v1341 = vadd.f32 %v1309, 1.0
      %v1342 = vmul.f32 %v1310, 0.5
      %v1343 = vmul.f32 %v1311, 0.5
      %v1344 = vmul.f32 %v1312, 0.5
      %v1345 = vmul.f32 %v1313, 0.5
      %v1346 = vmul.f32 %v1314, 0.5
      %v1347 = vmul.f32 %v1315, 0.5
      %v1348 = vmul.f32 %v1316, 0.5
      %v1349 = vmul.f32 %v1317, 0.5
      %v1350 = vmul.f32 %v1318, 0.5
      %v1351 = vmul.f32 %v1319, 0.5
      %v1352 = vmul.f32 %v1320, 0.5
      %v1353 = vmul.f32 %v1321, 0.5
      %v1354 = vmul.f32 %v1322, 0.5
      %v1355 = vmul.f32 %v1323, 0.5
      %v1356 = vmul.f32 %v1324, 0.5
      %v1357 = vmul.f32 %v1325, 0.5
      %v1358 = vmul.f32 %v1326, 0.5
      %v1359 = vmul.f32 %v1327, 0.5
      %v1360 = vmul.f32 %v1328, 0.5
      %v1361 = vmul.f32 %v1329, 0.5
      %v1362 = vmul.f32 %v1330, 0.5
      %v1363 = vmul.f32 %v1331, 0.5
      %v1364 = vmul.f32 %v1332, 0.5
      %v1365 = vmul.f32 %v1333, 0.5
      %v1366 = vmul.f32 %v1334, 0.5
      %v1367 = vmul.f32 %v1335, 0.5
      %v1368 = vmul.f32 %v1336, 0.5
      %v1369 = vmul.f32 %v1337, 0.5
      %v1370 = vmul.f32 %v1338, 0.5
      %v1371 = vmul.f32 %v1339, 0.5
      %v1372 = vmul.f32 %v1340, 0.5
      %v1373 = vmul.f32 %v1341, 0.5
      %v1374 = vmul.f32 %v992, %v1342
      %v1375 = vmul.f32 %v995, %v1343
      %v1376 = vmul.f32 %v1000, %v1344
      %v1377 = vmul.f32 %v1003, %v1345
      %v1378 = vmul.f32 %v1008, %v1346
      %v1379 = vmul.f32 %v1011, %v1347
      %v1380 = vmul.f32 %v1016, %v1348
      %v1381 = vmul.f32 %v1019, %v1349
      %v1382 = vmul.f32 %v1024, %v1350
      %v1383 = vmul.f32 %v1027, %v1351
      %v1384 = vmul.f32 %v1032, %v1352
      %v1385 = vmul.f32 %v1035, %v1353
      %v1386 = vmul.f32 %v1040, %v1354
      %v1387 = vmul.f32 %v1043, %v1355
      %v1388 = vmul.f32 %v1048, %v1356
      %v1389 = vmul.f32 %v1051, %v1357
      %v1390 = vmul.f32 %v1056, %v1358
      %v1391 = vmul.f32 %v1059, %v1359
      %v1392 = vmul.f32 %v1064, %v1360
      %v1393 = vmul.f32 %v1067, %v1361
      %v1394 = vmul.f32 %v1072, %v1362
      %v1395 = vmul.f32 %v1075, %v1363
      %v1396 = vmul.f32 %v1080, %v1364
      %v1397 = vmul.f32 %v1083, %v1365
      %v1398 = vmul.f32 %v1088, %v1366
      %v1399 = vmul.f32 %v1091, %v1367
      %v1400 = vmul.f32 %v1096, %v1368
      %v1401 = vmul.f32 %v1099, %v1369
      %v1402 = vmul.f32 %v1104, %v1370
      %v1403 = vmul.f32 %v1107, %v1371
      %v1404 = vmul.f32 %v1112, %v1372
      %v1405 = vmul.f32 %v1115, %v1373
      %v1406 = vpack.c.bf16 %v1375, %v1374
      %v1407 = vpack.c.bf16 %v1377, %v1376
      %v1408 = vpack.c.bf16 %v1379, %v1378
      %v1409 = vpack.c.bf16 %v1381, %v1380
      %v1410 = vpack.c.bf16 %v1383, %v1382
      %v1411 = vpack.c.bf16 %v1385, %v1384
      %v1412 = vpack.c.bf16 %v1387, %v1386
      %v1413 = vpack.c.bf16 %v1389, %v1388
      %v1414 = vpack.c.bf16 %v1391, %v1390
      %v1415 = vpack.c.bf16 %v1393, %v1392
      %v1416 = vpack.c.bf16 %v1395, %v1394
      %v1417 = vpack.c.bf16 %v1397, %v1396
      %v1418 = vpack.c.bf16 %v1399, %v1398
      %v1419 = vpack.c.bf16 %v1401, %v1400
      %v1420 = vpack.c.bf16 %v1403, %v1402
      %v1421 = vpack.c.bf16 %v1405, %v1404
      %v1422 = vld [vmem:[%s5] sm:$0xf]
      %v1423 = vld [vmem:[%s5 + $0x4] sm:$0xf]
      %v1424 = vld [vmem:[%s5 + $0x8] sm:$0xf]
      %v1425 = vld [vmem:[%s5 + $0xc] sm:$0xf]
      %v1426 = vld [vmem:[%s6] sm:$0x1]
      %v1428 = vlaneseq
      %v1429 = vshrl.u32 %v1428, 7
      %v1430 = vsub.s32 0, %v1429
      %v1431 = vrot.slane %v1426, %v1430
      %v1437 = vunpack.c.l.b16 %v1422
      %v1438 = vunpack.c.l.b16 %v1423
      %v1439 = vunpack.c.l.b16 %v1424
      %v1440 = vunpack.c.l.b16 %v1425
      %v1441 = vpack.c.b16 %v1438, %v1437
      %v1442 = vpack.c.b16 %v1440, %v1439
      %v1446 = vsel %vm628, %v1406, 0
      %v1449 = vsel %vm628, %v1407, 0
      %v1452 = vsel %vm628, %v1408, 0
      %v1455 = vsel %vm628, %v1409, 0
      %v1458 = vsel %vm628, %v1410, 0
      %v1461 = vsel %vm628, %v1411, 0
      %v1464 = vsel %vm628, %v1412, 0
      %v1467 = vsel %vm628, %v1413, 0
      %v1470 = vsel %vm628, %v1414, 0
      %v1473 = vsel %vm628, %v1415, 0
      %v1476 = vsel %vm628, %v1416, 0
      %v1479 = vsel %vm628, %v1417, 0
      %v1482 = vsel %vm628, %v1418, 0
      %v1485 = vsel %vm628, %v1419, 0
      %v1488 = vsel %vm628, %v1420, 0
      %v1491 = vsel %vm628, %v1421, 0
      %1493 = vmatprep.subr.bf16.mxu0 0
      %1494 = vmatpush1.bf16.msra.mxu0 0
      %1495 = vmatprep.subr.bf16.mxu0 0
      %1496 = vmatpush1.bf16.msra.mxu0 0
      %1497 = vmatprep.subr.bf16.mxu0 0
      %1498 = vmatpush1.bf16.msra.mxu0 0
      %1499 = vmatprep.subr.bf16.mxu0 0
      %1500 = vmatpush1.bf16.msra.mxu0 0
      %1501 = vmatprep.subr.bf16.mxu0 0
      %1502 = vmatpush1.bf16.msra.mxu0 0
      %1503 = vmatprep.subr.bf16.mxu0 0
      %1504 = vmatpush1.bf16.msra.mxu0 0
      %1505 = vmatprep.subr.bf16.mxu0 0
      %1506 = vmatpush1.bf16.msra.mxu0 %v1442
      %1507 = vmatprep.subr.bf16.mxu0 0
      %1508 = vmatpush1.bf16.msra.mxu0 %v1441
      %1509 = vmatprep.subr.bf16.mxu0 0
      %1510 = vmatpush2.bf16.msra.mxu0 0
      %1511 = vmatprep.subr.bf16.mxu0 0
      %1512 = vmatpush2.bf16.msra.mxu0 0
      %1513 = vmatprep.subr.bf16.mxu0 0
      %1514 = vmatpush2.bf16.msra.mxu0 0
      %1515 = vmatprep.subr.bf16.mxu0 0
      %1516 = vmatpush2.bf16.msra.mxu0 0
      %1517 = vmatprep.subr.bf16.mxu0 0
      %1518 = vmatpush2.bf16.msra.mxu0 0
      %1519 = vmatprep.subr.bf16.mxu0 0
      %1520 = vmatpush2.bf16.msra.mxu0 0
      %1521 = vmatprep.subr.bf16.mxu0 0
      %1522 = vmatpush2.bf16.msra.mxu0 0
      %1523 = vmatprep.subr.bf16.mxu0 0
      %1524 = vmatpush2.bf16.msra.mxu0 0
      %1525 = vmatprep.mubr.bf16.mxu0 0
      %1526 = vmatmul.mubr.bf16.gmra.mxu0 %v1446
      %v1527 = vpop.f32.mrf.mxu0
      %v1528 = vadd.f32 %v1431, %v1527
      %v1529 = vpop.f32.mrf.mxu0
      %v1530 = vpop.f32.mrf.mxu0
      %v1531 = vadd.f32 %v1431, %v1530
      %v1532 = vpop.f32.mrf.mxu0
      %1533 = vmatprep.mubr.bf16.mxu0 0
      %1534 = vmatmul.mubr.bf16.gmra.mxu0 %v1449
      %v1535 = vpop.f32.mrf.mxu0
      %v1536 = vadd.f32 %v1431, %v1535
      %v1537 = vpop.f32.mrf.mxu0
      %v1538 = vpop.f32.mrf.mxu0
      %v1539 = vadd.f32 %v1431, %v1538
      %v1540 = vpop.f32.mrf.mxu0
      %1541 = vmatprep.mubr.bf16.mxu0 0
      %1542 = vmatmul.mubr.bf16.gmra.mxu0 %v1452
      %v1543 = vpop.f32.mrf.mxu0
      %v1544 = vadd.f32 %v1431, %v1543
      %v1545 = vpop.f32.mrf.mxu0
      %v1546 = vpop.f32.mrf.mxu0
      %v1547 = vadd.f32 %v1431, %v1546
      %v1548 = vpop.f32.mrf.mxu0
      %1549 = vmatprep.mubr.bf16.mxu0 0
      %1550 = vmatmul.mubr.bf16.gmra.mxu0 %v1455
      %v1551 = vpop.f32.mrf.mxu0
      %v1552 = vadd.f32 %v1431, %v1551
      %v1553 = vpop.f32.mrf.mxu0
      %v1554 = vpop.f32.mrf.mxu0
      %v1555 = vadd.f32 %v1431, %v1554
      %v1556 = vpop.f32.mrf.mxu0
      %1557 = vmatprep.mubr.bf16.mxu0 0
      %1558 = vmatmul.mubr.bf16.gmra.mxu0 %v1458
      %v1559 = vpop.f32.mrf.mxu0
      %v1560 = vadd.f32 %v1431, %v1559
      %v1561 = vpop.f32.mrf.mxu0
      %v1562 = vpop.f32.mrf.mxu0
      %v1563 = vadd.f32 %v1431, %v1562
      %v1564 = vpop.f32.mrf.mxu0
      %1565 = vmatprep.mubr.bf16.mxu0 0
      %1566 = vmatmul.mubr.bf16.gmra.mxu0 %v1461
      %v1567 = vpop.f32.mrf.mxu0
      %v1568 = vadd.f32 %v1431, %v1567
      %v1569 = vpop.f32.mrf.mxu0
      %v1570 = vpop.f32.mrf.mxu0
      %v1571 = vadd.f32 %v1431, %v1570
      %v1572 = vpop.f32.mrf.mxu0
      %1573 = vmatprep.mubr.bf16.mxu0 0
      %1574 = vmatmul.mubr.bf16.gmra.mxu0 %v1464
      %v1575 = vpop.f32.mrf.mxu0
      %v1576 = vadd.f32 %v1431, %v1575
      %v1577 = vpop.f32.mrf.mxu0
      %v1578 = vpop.f32.mrf.mxu0
      %v1579 = vadd.f32 %v1431, %v1578
      %v1580 = vpop.f32.mrf.mxu0
      %1581 = vmatprep.mubr.bf16.mxu0 0
      %1582 = vmatmul.mubr.bf16.gmra.mxu0 %v1467
      %v1583 = vpop.f32.mrf.mxu0
      %v1584 = vadd.f32 %v1431, %v1583
      %v1585 = vpop.f32.mrf.mxu0
      %v1586 = vpop.f32.mrf.mxu0
      %v1587 = vadd.f32 %v1431, %v1586
      %v1588 = vpop.f32.mrf.mxu0
      %1589 = vmatprep.mubr.bf16.mxu0 0
      %1590 = vmatmul.mubr.bf16.gmra.mxu0 %v1470
      %v1591 = vpop.f32.mrf.mxu0
      %v1592 = vadd.f32 %v1431, %v1591
      %v1593 = vpop.f32.mrf.mxu0
      %v1594 = vpop.f32.mrf.mxu0
      %v1595 = vadd.f32 %v1431, %v1594
      %v1596 = vpop.f32.mrf.mxu0
      %1597 = vmatprep.mubr.bf16.mxu0 0
      %1598 = vmatmul.mubr.bf16.gmra.mxu0 %v1473
      %v1599 = vpop.f32.mrf.mxu0
      %v1600 = vadd.f32 %v1431, %v1599
      %v1601 = vpop.f32.mrf.mxu0
      %v1602 = vpop.f32.mrf.mxu0
      %v1603 = vadd.f32 %v1431, %v1602
      %v1604 = vpop.f32.mrf.mxu0
      %1605 = vmatprep.mubr.bf16.mxu0 0
      %1606 = vmatmul.mubr.bf16.gmra.mxu0 %v1476
      %v1607 = vpop.f32.mrf.mxu0
      %v1608 = vadd.f32 %v1431, %v1607
      %v1609 = vpop.f32.mrf.mxu0
      %v1610 = vpop.f32.mrf.mxu0
      %v1611 = vadd.f32 %v1431, %v1610
      %v1612 = vpop.f32.mrf.mxu0
      %1613 = vmatprep.mubr.bf16.mxu0 0
      %1614 = vmatmul.mubr.bf16.gmra.mxu0 %v1479
      %v1615 = vpop.f32.mrf.mxu0
      %v1616 = vadd.f32 %v1431, %v1615
      %v1617 = vpop.f32.mrf.mxu0
      %v1618 = vpop.f32.mrf.mxu0
      %v1619 = vadd.f32 %v1431, %v1618
      %v1620 = vpop.f32.mrf.mxu0
      %1621 = vmatprep.mubr.bf16.mxu0 0
      %1622 = vmatmul.mubr.bf16.gmra.mxu0 %v1482
      %v1623 = vpop.f32.mrf.mxu0
      %v1624 = vadd.f32 %v1431, %v1623
      %v1625 = vpop.f32.mrf.mxu0
      %v1626 = vpop.f32.mrf.mxu0
      %v1627 = vadd.f32 %v1431, %v1626
      %v1628 = vpop.f32.mrf.mxu0
      %1629 = vmatprep.mubr.bf16.mxu0 0
      %1630 = vmatmul.mubr.bf16.gmra.mxu0 %v1485
      %v1631 = vpop.f32.mrf.mxu0
      %v1632 = vadd.f32 %v1431, %v1631
      %v1633 = vpop.f32.mrf.mxu0
      %v1634 = vpop.f32.mrf.mxu0
      %v1635 = vadd.f32 %v1431, %v1634
      %v1636 = vpop.f32.mrf.mxu0
      %1637 = vmatprep.mubr.bf16.mxu0 0
      %1638 = vmatmul.mubr.bf16.gmra.mxu0 %v1488
      %v1639 = vpop.f32.mrf.mxu0
      %v1640 = vadd.f32 %v1431, %v1639
      %v1641 = vpop.f32.mrf.mxu0
      %v1642 = vpop.f32.mrf.mxu0
      %v1643 = vadd.f32 %v1431, %v1642
      %v1644 = vpop.f32.mrf.mxu0
      %1645 = vmatprep.mubr.bf16.mxu0 0
      %1646 = vmatmul.mubr.bf16.gmra.mxu0 %v1491
      %v1647 = vpop.f32.mrf.mxu0
      %v1648 = vadd.f32 %v1431, %v1647
      %v1649 = vpop.f32.mrf.mxu0
      %v1650 = vpop.f32.mrf.mxu0
      %v1651 = vadd.f32 %v1431, %v1650
      %v1652 = vpop.f32.mrf.mxu0
      %1653 = vdwg.mxu0
      %v1654 = vadd.f32 %v1528, %v838
      %v1655 = vadd.f32 %v1531, %v839
      %v1656 = vadd.f32 %v1536, %v840
      %v1657 = vadd.f32 %v1539, %v841
      %v1658 = vadd.f32 %v1544, %v842
      %v1659 = vadd.f32 %v1547, %v843
      %v1660 = vadd.f32 %v1552, %v844
      %v1661 = vadd.f32 %v1555, %v845
      %v1662 = vadd.f32 %v1560, %v846
      %v1663 = vadd.f32 %v1563, %v847
      %v1664 = vadd.f32 %v1568, %v848
      %v1665 = vadd.f32 %v1571, %v849
      %v1666 = vadd.f32 %v1576, %v850
      %v1667 = vadd.f32 %v1579, %v851
      %v1668 = vadd.f32 %v1584, %v852
      %v1669 = vadd.f32 %v1587, %v853
      %v1670 = vadd.f32 %v1592, %v854
      %v1671 = vadd.f32 %v1595, %v855
      %v1672 = vadd.f32 %v1600, %v856
      %v1673 = vadd.f32 %v1603, %v857
      %v1674 = vadd.f32 %v1608, %v858
      %v1675 = vadd.f32 %v1611, %v859
      %v1676 = vadd.f32 %v1616, %v860
      %v1677 = vadd.f32 %v1619, %v861
      %v1678 = vadd.f32 %v1624, %v862
      %v1679 = vadd.f32 %v1627, %v863
      %v1680 = vadd.f32 %v1632, %v864
      %v1681 = vadd.f32 %v1635, %v865
      %v1682 = vadd.f32 %v1640, %v866
      %v1683 = vadd.f32 %v1643, %v867
      %v1684 = vadd.f32 %v1648, %v868
      %v1685 = vadd.f32 %v1651, %v869
      %v1686 = vpack.c.bf16 %v1655, %v1654
      %v1687 = vpack.c.bf16 %v1657, %v1656
      %v1688 = vpack.c.bf16 %v1659, %v1658
      %v1689 = vpack.c.bf16 %v1661, %v1660
      %v1690 = vpack.c.bf16 %v1663, %v1662
      %v1691 = vpack.c.bf16 %v1665, %v1664
      %v1692 = vpack.c.bf16 %v1667, %v1666
      %v1693 = vpack.c.bf16 %v1669, %v1668
      %v1694 = vpack.c.bf16 %v1671, %v1670
      %v1695 = vpack.c.bf16 %v1673, %v1672
      %v1696 = vpack.c.bf16 %v1675, %v1674
      %v1697 = vpack.c.bf16 %v1677, %v1676
      %v1698 = vpack.c.bf16 %v1679, %v1678
      %v1699 = vpack.c.bf16 %v1681, %v1680
      %v1700 = vpack.c.bf16 %v1683, %v1682
      %v1701 = vpack.c.bf16 %v1685, %v1684
      %v1702 = vld [vmem:[%s7] sm:$0xf]
      %v1703 = vld [vmem:[%s7 + $0x4] sm:$0xf]
      %v1704 = vld [vmem:[%s7 + $0x8] sm:$0xf]
      %v1705 = vld [vmem:[%s7 + $0xc] sm:$0xf]
      %v1706 = vld [vmem:[%s8] sm:$0x1]
      %v1708 = vlaneseq
      %v1709 = vshrl.u32 %v1708, 7
      %v1710 = vsub.s32 0, %v1709
      %v1711 = vrot.slane %v1706, %v1710
      %v1717 = vunpack.c.l.b16 %v1702
      %v1718 = vunpack.c.l.b16 %v1703
      %v1719 = vunpack.c.l.b16 %v1704
      %v1720 = vunpack.c.l.b16 %v1705
      %v1721 = vpack.c.b16 %v1718, %v1717
      %v1722 = vpack.c.b16 %v1720, %v1719
      %v1726 = vsel %vm628, %v1686, 0
      %v1729 = vsel %vm628, %v1687, 0
      %v1732 = vsel %vm628, %v1688, 0
      %v1735 = vsel %vm628, %v1689, 0
      %v1738 = vsel %vm628, %v1690, 0
      %v1741 = vsel %vm628, %v1691, 0
      %v1744 = vsel %vm628, %v1692, 0
      %v1747 = vsel %vm628, %v1693, 0
      %v1750 = vsel %vm628, %v1694, 0
      %v1753 = vsel %vm628, %v1695, 0
      %v1756 = vsel %vm628, %v1696, 0
      %v1759 = vsel %vm628, %v1697, 0
      %v1762 = vsel %vm628, %v1698, 0
      %v1765 = vsel %vm628, %v1699, 0
      %v1768 = vsel %vm628, %v1700, 0
      %v1771 = vsel %vm628, %v1701, 0
      %1773 = vmatprep.subr.bf16.mxu0 0
      %1774 = vmatpush1.bf16.msra.mxu0 0
      %1775 = vmatprep.subr.bf16.mxu0 0
      %1776 = vmatpush1.bf16.msra.mxu0 0
      %1777 = vmatprep.subr.bf16.mxu0 0
      %1778 = vmatpush1.bf16.msra.mxu0 0
      %1779 = vmatprep.subr.bf16.mxu0 0
      %1780 = vmatpush1.bf16.msra.mxu0 0
      %1781 = vmatprep.subr.bf16.mxu0 0
      %1782 = vmatpush1.bf16.msra.mxu0 0
      %1783 = vmatprep.subr.bf16.mxu0 0
      %1784 = vmatpush1.bf16.msra.mxu0 0
      %1785 = vmatprep.subr.bf16.mxu0 0
      %1786 = vmatpush1.bf16.msra.mxu0 %v1722
      %1787 = vmatprep.subr.bf16.mxu0 0
      %1788 = vmatpush1.bf16.msra.mxu0 %v1721
      %1789 = vmatprep.subr.bf16.mxu0 0
      %1790 = vmatpush2.bf16.msra.mxu0 0
      %1791 = vmatprep.subr.bf16.mxu0 0
      %1792 = vmatpush2.bf16.msra.mxu0 0
      %1793 = vmatprep.subr.bf16.mxu0 0
      %1794 = vmatpush2.bf16.msra.mxu0 0
      %1795 = vmatprep.subr.bf16.mxu0 0
      %1796 = vmatpush2.bf16.msra.mxu0 0
      %1797 = vmatprep.subr.bf16.mxu0 0
      %1798 = vmatpush2.bf16.msra.mxu0 0
      %1799 = vmatprep.subr.bf16.mxu0 0
      %1800 = vmatpush2.bf16.msra.mxu0 0
      %1801 = vmatprep.subr.bf16.mxu0 0
      %1802 = vmatpush2.bf16.msra.mxu0 0
      %1803 = vmatprep.subr.bf16.mxu0 0
      %1804 = vmatpush2.bf16.msra.mxu0 0
      %1805 = vmatprep.mubr.bf16.mxu0 0
      %1806 = vmatmul.mubr.bf16.gmra.mxu0 %v1726
      %v1807 = vpop.f32.mrf.mxu0
      %v1808 = vadd.f32 %v1711, %v1807
      %v1809 = vpop.f32.mrf.mxu0
      %v1810 = vpop.f32.mrf.mxu0
      %v1811 = vadd.f32 %v1711, %v1810
      %v1812 = vpop.f32.mrf.mxu0
      %1813 = vmatprep.mubr.bf16.mxu0 0
      %1814 = vmatmul.mubr.bf16.gmra.mxu0 %v1729
      %v1815 = vpop.f32.mrf.mxu0
      %v1816 = vadd.f32 %v1711, %v1815
      %v1817 = vpop.f32.mrf.mxu0
      %v1818 = vpop.f32.mrf.mxu0
      %v1819 = vadd.f32 %v1711, %v1818
      %v1820 = vpop.f32.mrf.mxu0
      %1821 = vmatprep.mubr.bf16.mxu0 0
      %1822 = vmatmul.mubr.bf16.gmra.mxu0 %v1732
      %v1823 = vpop.f32.mrf.mxu0
      %v1824 = vadd.f32 %v1711, %v1823
      %v1825 = vpop.f32.mrf.mxu0
      %v1826 = vpop.f32.mrf.mxu0
      %v1827 = vadd.f32 %v1711, %v1826
      %v1828 = vpop.f32.mrf.mxu0
      %1829 = vmatprep.mubr.bf16.mxu0 0
      %1830 = vmatmul.mubr.bf16.gmra.mxu0 %v1735
      %v1831 = vpop.f32.mrf.mxu0
      %v1832 = vadd.f32 %v1711, %v1831
      %v1833 = vpop.f32.mrf.mxu0
      %v1834 = vpop.f32.mrf.mxu0
      %v1835 = vadd.f32 %v1711, %v1834
      %v1836 = vpop.f32.mrf.mxu0
      %1837 = vmatprep.mubr.bf16.mxu0 0
      %1838 = vmatmul.mubr.bf16.gmra.mxu0 %v1738
      %v1839 = vpop.f32.mrf.mxu0
      %v1840 = vadd.f32 %v1711, %v1839
      %v1841 = vpop.f32.mrf.mxu0
      %v1842 = vpop.f32.mrf.mxu0
      %v1843 = vadd.f32 %v1711, %v1842
      %v1844 = vpop.f32.mrf.mxu0
      %1845 = vmatprep.mubr.bf16.mxu0 0
      %1846 = vmatmul.mubr.bf16.gmra.mxu0 %v1741
      %v1847 = vpop.f32.mrf.mxu0
      %v1848 = vadd.f32 %v1711, %v1847
      %v1849 = vpop.f32.mrf.mxu0
      %v1850 = vpop.f32.mrf.mxu0
      %v1851 = vadd.f32 %v1711, %v1850
      %v1852 = vpop.f32.mrf.mxu0
      %1853 = vmatprep.mubr.bf16.mxu0 0
      %1854 = vmatmul.mubr.bf16.gmra.mxu0 %v1744
      %v1855 = vpop.f32.mrf.mxu0
      %v1856 = vadd.f32 %v1711, %v1855
      %v1857 = vpop.f32.mrf.mxu0
      %v1858 = vpop.f32.mrf.mxu0
      %v1859 = vadd.f32 %v1711, %v1858
      %v1860 = vpop.f32.mrf.mxu0
      %1861 = vmatprep.mubr.bf16.mxu0 0
      %1862 = vmatmul.mubr.bf16.gmra.mxu0 %v1747
      %v1863 = vpop.f32.mrf.mxu0
      %v1864 = vadd.f32 %v1711, %v1863
      %v1865 = vpop.f32.mrf.mxu0
      %v1866 = vpop.f32.mrf.mxu0
      %v1867 = vadd.f32 %v1711, %v1866
      %v1868 = vpop.f32.mrf.mxu0
      %1869 = vmatprep.mubr.bf16.mxu0 0
      %1870 = vmatmul.mubr.bf16.gmra.mxu0 %v1750
      %v1871 = vpop.f32.mrf.mxu0
      %v1872 = vadd.f32 %v1711, %v1871
      %v1873 = vpop.f32.mrf.mxu0
      %v1874 = vpop.f32.mrf.mxu0
      %v1875 = vadd.f32 %v1711, %v1874
      %v1876 = vpop.f32.mrf.mxu0
      %1877 = vmatprep.mubr.bf16.mxu0 0
      %1878 = vmatmul.mubr.bf16.gmra.mxu0 %v1753
      %v1879 = vpop.f32.mrf.mxu0
      %v1880 = vadd.f32 %v1711, %v1879
      %v1881 = vpop.f32.mrf.mxu0
      %v1882 = vpop.f32.mrf.mxu0
      %v1883 = vadd.f32 %v1711, %v1882
      %v1884 = vpop.f32.mrf.mxu0
      %1885 = vmatprep.mubr.bf16.mxu0 0
      %1886 = vmatmul.mubr.bf16.gmra.mxu0 %v1756
      %v1887 = vpop.f32.mrf.mxu0
      %v1888 = vadd.f32 %v1711, %v1887
      %v1889 = vpop.f32.mrf.mxu0
      %v1890 = vpop.f32.mrf.mxu0
      %v1891 = vadd.f32 %v1711, %v1890
      %v1892 = vpop.f32.mrf.mxu0
      %1893 = vmatprep.mubr.bf16.mxu0 0
      %1894 = vmatmul.mubr.bf16.gmra.mxu0 %v1759
      %v1895 = vpop.f32.mrf.mxu0
      %v1896 = vadd.f32 %v1711, %v1895
      %v1897 = vpop.f32.mrf.mxu0
      %v1898 = vpop.f32.mrf.mxu0
      %v1899 = vadd.f32 %v1711, %v1898
      %v1900 = vpop.f32.mrf.mxu0
      %1901 = vmatprep.mubr.bf16.mxu0 0
      %1902 = vmatmul.mubr.bf16.gmra.mxu0 %v1762
      %v1903 = vpop.f32.mrf.mxu0
      %v1904 = vadd.f32 %v1711, %v1903
      %v1905 = vpop.f32.mrf.mxu0
      %v1906 = vpop.f32.mrf.mxu0
      %v1907 = vadd.f32 %v1711, %v1906
      %v1908 = vpop.f32.mrf.mxu0
      %1909 = vmatprep.mubr.bf16.mxu0 0
      %1910 = vmatmul.mubr.bf16.gmra.mxu0 %v1765
      %v1911 = vpop.f32.mrf.mxu0
      %v1912 = vadd.f32 %v1711, %v1911
      %v1913 = vpop.f32.mrf.mxu0
      %v1914 = vpop.f32.mrf.mxu0
      %v1915 = vadd.f32 %v1711, %v1914
      %v1916 = vpop.f32.mrf.mxu0
      %1917 = vmatprep.mubr.bf16.mxu0 0
      %1918 = vmatmul.mubr.bf16.gmra.mxu0 %v1768
      %v1919 = vpop.f32.mrf.mxu0
      %v1920 = vadd.f32 %v1711, %v1919
      %v1921 = vpop.f32.mrf.mxu0
      %v1922 = vpop.f32.mrf.mxu0
      %v1923 = vadd.f32 %v1711, %v1922
      %v1924 = vpop.f32.mrf.mxu0
      %1925 = vmatprep.mubr.bf16.mxu0 0
      %1926 = vmatmul.mubr.bf16.gmra.mxu0 %v1771
      %v1927 = vpop.f32.mrf.mxu0
      %v1928 = vadd.f32 %v1711, %v1927
      %v1929 = vpop.f32.mrf.mxu0
      %v1930 = vpop.f32.mrf.mxu0
      %v1931 = vadd.f32 %v1711, %v1930
      %v1932 = vpop.f32.mrf.mxu0
      %1933 = vdwg.mxu0
      %v1934 = vmul.f32 %v1808, %v1808
      %v1935 = vmul.f32 %v1811, %v1811
      %v1936 = vmul.f32 %v1816, %v1816
      %v1937 = vmul.f32 %v1819, %v1819
      %v1938 = vmul.f32 %v1824, %v1824
      %v1939 = vmul.f32 %v1827, %v1827
      %v1940 = vmul.f32 %v1832, %v1832
      %v1941 = vmul.f32 %v1835, %v1835
      %v1942 = vmul.f32 %v1840, %v1840
      %v1943 = vmul.f32 %v1843, %v1843
      %v1944 = vmul.f32 %v1848, %v1848
      %v1945 = vmul.f32 %v1851, %v1851
      %v1946 = vmul.f32 %v1856, %v1856
      %v1947 = vmul.f32 %v1859, %v1859
      %v1948 = vmul.f32 %v1864, %v1864
      %v1949 = vmul.f32 %v1867, %v1867
      %v1950 = vmul.f32 %v1872, %v1872
      %v1951 = vmul.f32 %v1875, %v1875
      %v1952 = vmul.f32 %v1880, %v1880
      %v1953 = vmul.f32 %v1883, %v1883
      %v1954 = vmul.f32 %v1888, %v1888
      %v1955 = vmul.f32 %v1891, %v1891
      %v1956 = vmul.f32 %v1896, %v1896
      %v1957 = vmul.f32 %v1899, %v1899
      %v1958 = vmul.f32 %v1904, %v1904
      %v1959 = vmul.f32 %v1907, %v1907
      %v1960 = vmul.f32 %v1912, %v1912
      %v1961 = vmul.f32 %v1915, %v1915
      %v1962 = vmul.f32 %v1920, %v1920
      %v1963 = vmul.f32 %v1923, %v1923
      %v1964 = vmul.f32 %v1928, %v1928
      %v1965 = vmul.f32 %v1931, %v1931
      %v1966 = vmul.f32 %v1808, %v1934
      %v1967 = vmul.f32 %v1811, %v1935
      %v1968 = vmul.f32 %v1816, %v1936
      %v1969 = vmul.f32 %v1819, %v1937
      %v1970 = vmul.f32 %v1824, %v1938
      %v1971 = vmul.f32 %v1827, %v1939
      %v1972 = vmul.f32 %v1832, %v1940
      %v1973 = vmul.f32 %v1835, %v1941
      %v1974 = vmul.f32 %v1840, %v1942
      %v1975 = vmul.f32 %v1843, %v1943
      %v1976 = vmul.f32 %v1848, %v1944
      %v1977 = vmul.f32 %v1851, %v1945
      %v1978 = vmul.f32 %v1856, %v1946
      %v1979 = vmul.f32 %v1859, %v1947
      %v1980 = vmul.f32 %v1864, %v1948
      %v1981 = vmul.f32 %v1867, %v1949
      %v1982 = vmul.f32 %v1872, %v1950
      %v1983 = vmul.f32 %v1875, %v1951
      %v1984 = vmul.f32 %v1880, %v1952
      %v1985 = vmul.f32 %v1883, %v1953
      %v1986 = vmul.f32 %v1888, %v1954
      %v1987 = vmul.f32 %v1891, %v1955
      %v1988 = vmul.f32 %v1896, %v1956
      %v1989 = vmul.f32 %v1899, %v1957
      %v1990 = vmul.f32 %v1904, %v1958
      %v1991 = vmul.f32 %v1907, %v1959
      %v1992 = vmul.f32 %v1912, %v1960
      %v1993 = vmul.f32 %v1915, %v1961
      %v1994 = vmul.f32 %v1920, %v1962
      %v1995 = vmul.f32 %v1923, %v1963
      %v1996 = vmul.f32 %v1928, %v1964
      %v1997 = vmul.f32 %v1931, %v1965
      %v1998 = vmul.f32 %v1966, 0.044715
      %v1999 = vmul.f32 %v1967, 0.044715
      %v2000 = vmul.f32 %v1968, 0.044715
      %v2001 = vmul.f32 %v1969, 0.044715
      %v2002 = vmul.f32 %v1970, 0.044715
      %v2003 = vmul.f32 %v1971, 0.044715
      %v2004 = vmul.f32 %v1972, 0.044715
      %v2005 = vmul.f32 %v1973, 0.044715
      %v2006 = vmul.f32 %v1974, 0.044715
      %v2007 = vmul.f32 %v1975, 0.044715
      %v2008 = vmul.f32 %v1976, 0.044715
      %v2009 = vmul.f32 %v1977, 0.044715
      %v2010 = vmul.f32 %v1978, 0.044715
      %v2011 = vmul.f32 %v1979, 0.044715
      %v2012 = vmul.f32 %v1980, 0.044715
      %v2013 = vmul.f32 %v1981, 0.044715
      %v2014 = vmul.f32 %v1982, 0.044715
      %v2015 = vmul.f32 %v1983, 0.044715
      %v2016 = vmul.f32 %v1984, 0.044715
      %v2017 = vmul.f32 %v1985, 0.044715
      %v2018 = vmul.f32 %v1986, 0.044715
      %v2019 = vmul.f32 %v1987, 0.044715
      %v2020 = vmul.f32 %v1988, 0.044715
      %v2021 = vmul.f32 %v1989, 0.044715
      %v2022 = vmul.f32 %v1990, 0.044715
      %v2023 = vmul.f32 %v1991, 0.044715
      %v2024 = vmul.f32 %v1992, 0.044715
      %v2025 = vmul.f32 %v1993, 0.044715
      %v2026 = vmul.f32 %v1994, 0.044715
      %v2027 = vmul.f32 %v1995, 0.044715
      %v2028 = vmul.f32 %v1996, 0.044715
      %v2029 = vmul.f32 %v1997, 0.044715
      %v2030 = vadd.f32 %v1808, %v1998
      %v2031 = vadd.f32 %v1811, %v1999
      %v2032 = vadd.f32 %v1816, %v2000
      %v2033 = vadd.f32 %v1819, %v2001
      %v2034 = vadd.f32 %v1824, %v2002
      %v2035 = vadd.f32 %v1827, %v2003
      %v2036 = vadd.f32 %v1832, %v2004
      %v2037 = vadd.f32 %v1835, %v2005
      %v2038 = vadd.f32 %v1840, %v2006
      %v2039 = vadd.f32 %v1843, %v2007
      %v2040 = vadd.f32 %v1848, %v2008
      %v2041 = vadd.f32 %v1851, %v2009
      %v2042 = vadd.f32 %v1856, %v2010
      %v2043 = vadd.f32 %v1859, %v2011
      %v2044 = vadd.f32 %v1864, %v2012
      %v2045 = vadd.f32 %v1867, %v2013
      %v2046 = vadd.f32 %v1872, %v2014
      %v2047 = vadd.f32 %v1875, %v2015
      %v2048 = vadd.f32 %v1880, %v2016
      %v2049 = vadd.f32 %v1883, %v2017
      %v2050 = vadd.f32 %v1888, %v2018
      %v2051 = vadd.f32 %v1891, %v2019
      %v2052 = vadd.f32 %v1896, %v2020
      %v2053 = vadd.f32 %v1899, %v2021
      %v2054 = vadd.f32 %v1904, %v2022
      %v2055 = vadd.f32 %v1907, %v2023
      %v2056 = vadd.f32 %v1912, %v2024
      %v2057 = vadd.f32 %v1915, %v2025
      %v2058 = vadd.f32 %v1920, %v2026
      %v2059 = vadd.f32 %v1923, %v2027
      %v2060 = vadd.f32 %v1928, %v2028
      %v2061 = vadd.f32 %v1931, %v2029
      %v2062 = vmul.f32 %v2030, 0.7978846
      %v2063 = vmul.f32 %v2031, 0.7978846
      %v2064 = vmul.f32 %v2032, 0.7978846
      %v2065 = vmul.f32 %v2033, 0.7978846
      %v2066 = vmul.f32 %v2034, 0.7978846
      %v2067 = vmul.f32 %v2035, 0.7978846
      %v2068 = vmul.f32 %v2036, 0.7978846
      %v2069 = vmul.f32 %v2037, 0.7978846
      %v2070 = vmul.f32 %v2038, 0.7978846
      %v2071 = vmul.f32 %v2039, 0.7978846
      %v2072 = vmul.f32 %v2040, 0.7978846
      %v2073 = vmul.f32 %v2041, 0.7978846
      %v2074 = vmul.f32 %v2042, 0.7978846
      %v2075 = vmul.f32 %v2043, 0.7978846
      %v2076 = vmul.f32 %v2044, 0.7978846
      %v2077 = vmul.f32 %v2045, 0.7978846
      %v2078 = vmul.f32 %v2046, 0.7978846
      %v2079 = vmul.f32 %v2047, 0.7978846
      %v2080 = vmul.f32 %v2048, 0.7978846
      %v2081 = vmul.f32 %v2049, 0.7978846
      %v2082 = vmul.f32 %v2050, 0.7978846
      %v2083 = vmul.f32 %v2051, 0.7978846
      %v2084 = vmul.f32 %v2052, 0.7978846
      %v2085 = vmul.f32 %v2053, 0.7978846
      %v2086 = vmul.f32 %v2054, 0.7978846
      %v2087 = vmul.f32 %v2055, 0.7978846
      %v2088 = vmul.f32 %v2056, 0.7978846
      %v2089 = vmul.f32 %v2057, 0.7978846
      %v2090 = vmul.f32 %v2058, 0.7978846
      %v2091 = vmul.f32 %v2059, 0.7978846
      %v2092 = vmul.f32 %v2060, 0.7978846
      %v2093 = vmul.f32 %v2061, 0.7978846
      %v2094 = vtanh.pop %v2062
      %v2095 = vtanh.pop %v2063
      %v2096 = vtanh.pop %v2064
      %v2097 = vtanh.pop %v2065
      %v2098 = vtanh.pop %v2066
      %v2099 = vtanh.pop %v2067
      %v2100 = vtanh.pop %v2068
      %v2101 = vtanh.pop %v2069
      %v2102 = vtanh.pop %v2070
      %v2103 = vtanh.pop %v2071
      %v2104 = vtanh.pop %v2072
      %v2105 = vtanh.pop %v2073
      %v2106 = vtanh.pop %v2074
      %v2107 = vtanh.pop %v2075
      %v2108 = vtanh.pop %v2076
      %v2109 = vtanh.pop %v2077
      %v2110 = vtanh.pop %v2078
      %v2111 = vtanh.pop %v2079
      %v2112 = vtanh.pop %v2080
      %v2113 = vtanh.pop %v2081
      %v2114 = vtanh.pop %v2082
      %v2115 = vtanh.pop %v2083
      %v2116 = vtanh.pop %v2084
      %v2117 = vtanh.pop %v2085
      %v2118 = vtanh.pop %v2086
      %v2119 = vtanh.pop %v2087
      %v2120 = vtanh.pop %v2088
      %v2121 = vtanh.pop %v2089
      %v2122 = vtanh.pop %v2090
      %v2123 = vtanh.pop %v2091
      %v2124 = vtanh.pop %v2092
      %v2125 = vtanh.pop %v2093
      %v2126 = vadd.f32 %v2094, 1.0
      %v2127 = vadd.f32 %v2095, 1.0
      %v2128 = vadd.f32 %v2096, 1.0
      %v2129 = vadd.f32 %v2097, 1.0
      %v2130 = vadd.f32 %v2098, 1.0
      %v2131 = vadd.f32 %v2099, 1.0
      %v2132 = vadd.f32 %v2100, 1.0
      %v2133 = vadd.f32 %v2101, 1.0
      %v2134 = vadd.f32 %v2102, 1.0
      %v2135 = vadd.f32 %v2103, 1.0
      %v2136 = vadd.f32 %v2104, 1.0
      %v2137 = vadd.f32 %v2105, 1.0
      %v2138 = vadd.f32 %v2106, 1.0
      %v2139 = vadd.f32 %v2107, 1.0
      %v2140 = vadd.f32 %v2108, 1.0
      %v2141 = vadd.f32 %v2109, 1.0
      %v2142 = vadd.f32 %v2110, 1.0
      %v2143 = vadd.f32 %v2111, 1.0
      %v2144 = vadd.f32 %v2112, 1.0
      %v2145 = vadd.f32 %v2113, 1.0
      %v2146 = vadd.f32 %v2114, 1.0
      %v2147 = vadd.f32 %v2115, 1.0
      %v2148 = vadd.f32 %v2116, 1.0
      %v2149 = vadd.f32 %v2117, 1.0
      %v2150 = vadd.f32 %v2118, 1.0
      %v2151 = vadd.f32 %v2119, 1.0
      %v2152 = vadd.f32 %v2120, 1.0
      %v2153 = vadd.f32 %v2121, 1.0
      %v2154 = vadd.f32 %v2122, 1.0
      %v2155 = vadd.f32 %v2123, 1.0
      %v2156 = vadd.f32 %v2124, 1.0
      %v2157 = vadd.f32 %v2125, 1.0
      %v2158 = vmul.f32 %v2126, 0.5
      %v2159 = vmul.f32 %v2127, 0.5
      %v2160 = vmul.f32 %v2128, 0.5
      %v2161 = vmul.f32 %v2129, 0.5
      %v2162 = vmul.f32 %v2130, 0.5
      %v2163 = vmul.f32 %v2131, 0.5
      %v2164 = vmul.f32 %v2132, 0.5
      %v2165 = vmul.f32 %v2133, 0.5
      %v2166 = vmul.f32 %v2134, 0.5
      %v2167 = vmul.f32 %v2135, 0.5
      %v2168 = vmul.f32 %v2136, 0.5
      %v2169 = vmul.f32 %v2137, 0.5
      %v2170 = vmul.f32 %v2138, 0.5
      %v2171 = vmul.f32 %v2139, 0.5
      %v2172 = vmul.f32 %v2140, 0.5
      %v2173 = vmul.f32 %v2141, 0.5
      %v2174 = vmul.f32 %v2142, 0.5
      %v2175 = vmul.f32 %v2143, 0.5
      %v2176 = vmul.f32 %v2144, 0.5
      %v2177 = vmul.f32 %v2145, 0.5
      %v2178 = vmul.f32 %v2146, 0.5
      %v2179 = vmul.f32 %v2147, 0.5
      %v2180 = vmul.f32 %v2148, 0.5
      %v2181 = vmul.f32 %v2149, 0.5
      %v2182 = vmul.f32 %v2150, 0.5
      %v2183 = vmul.f32 %v2151, 0.5
      %v2184 = vmul.f32 %v2152, 0.5
      %v2185 = vmul.f32 %v2153, 0.5
      %v2186 = vmul.f32 %v2154, 0.5
      %v2187 = vmul.f32 %v2155, 0.5
      %v2188 = vmul.f32 %v2156, 0.5
      %v2189 = vmul.f32 %v2157, 0.5
      %v2190 = vmul.f32 %v1808, %v2158
      %v2191 = vmul.f32 %v1811, %v2159
      %v2192 = vmul.f32 %v1816, %v2160
      %v2193 = vmul.f32 %v1819, %v2161
      %v2194 = vmul.f32 %v1824, %v2162
      %v2195 = vmul.f32 %v1827, %v2163
      %v2196 = vmul.f32 %v1832, %v2164
      %v2197 = vmul.f32 %v1835, %v2165
      %v2198 = vmul.f32 %v1840, %v2166
      %v2199 = vmul.f32 %v1843, %v2167
      %v2200 = vmul.f32 %v1848, %v2168
      %v2201 = vmul.f32 %v1851, %v2169
      %v2202 = vmul.f32 %v1856, %v2170
      %v2203 = vmul.f32 %v1859, %v2171
      %v2204 = vmul.f32 %v1864, %v2172
      %v2205 = vmul.f32 %v1867, %v2173
      %v2206 = vmul.f32 %v1872, %v2174
      %v2207 = vmul.f32 %v1875, %v2175
      %v2208 = vmul.f32 %v1880, %v2176
      %v2209 = vmul.f32 %v1883, %v2177
      %v2210 = vmul.f32 %v1888, %v2178
      %v2211 = vmul.f32 %v1891, %v2179
      %v2212 = vmul.f32 %v1896, %v2180
      %v2213 = vmul.f32 %v1899, %v2181
      %v2214 = vmul.f32 %v1904, %v2182
      %v2215 = vmul.f32 %v1907, %v2183
      %v2216 = vmul.f32 %v1912, %v2184
      %v2217 = vmul.f32 %v1915, %v2185
      %v2218 = vmul.f32 %v1920, %v2186
      %v2219 = vmul.f32 %v1923, %v2187
      %v2220 = vmul.f32 %v1928, %v2188
      %v2221 = vmul.f32 %v1931, %v2189
      %v2222 = vpack.c.bf16 %v2191, %v2190
      %v2223 = vpack.c.bf16 %v2193, %v2192
      %v2224 = vpack.c.bf16 %v2195, %v2194
      %v2225 = vpack.c.bf16 %v2197, %v2196
      %v2226 = vpack.c.bf16 %v2199, %v2198
      %v2227 = vpack.c.bf16 %v2201, %v2200
      %v2228 = vpack.c.bf16 %v2203, %v2202
      %v2229 = vpack.c.bf16 %v2205, %v2204
      %v2230 = vpack.c.bf16 %v2207, %v2206
      %v2231 = vpack.c.bf16 %v2209, %v2208
      %v2232 = vpack.c.bf16 %v2211, %v2210
      %v2233 = vpack.c.bf16 %v2213, %v2212
      %v2234 = vpack.c.bf16 %v2215, %v2214
      %v2235 = vpack.c.bf16 %v2217, %v2216
      %v2236 = vpack.c.bf16 %v2219, %v2218
      %v2237 = vpack.c.bf16 %v2221, %v2220
      %v2238 = vld [vmem:[%s9] sm:$0xf]
      %v2239 = vld [vmem:[%s9 + $0x4] sm:$0xf]
      %v2240 = vld [vmem:[%s9 + $0x8] sm:$0xf]
      %v2241 = vld [vmem:[%s9 + $0xc] sm:$0xf]
      %v2242 = vld [vmem:[%s10] sm:$0x1]
      %v2244 = vlaneseq
      %v2245 = vshrl.u32 %v2244, 7
      %v2246 = vsub.s32 0, %v2245
      %v2247 = vrot.slane %v2242, %v2246
      %v2253 = vunpack.c.l.b16 %v2238
      %v2254 = vunpack.c.l.b16 %v2239
      %v2255 = vunpack.c.l.b16 %v2240
      %v2256 = vunpack.c.l.b16 %v2241
      %v2257 = vpack.c.b16 %v2254, %v2253
      %v2258 = vpack.c.b16 %v2256, %v2255
      %v2262 = vsel %vm628, %v2222, 0
      %v2265 = vsel %vm628, %v2223, 0
      %v2268 = vsel %vm628, %v2224, 0
      %v2271 = vsel %vm628, %v2225, 0
      %v2274 = vsel %vm628, %v2226, 0
      %v2277 = vsel %vm628, %v2227, 0
      %v2280 = vsel %vm628, %v2228, 0
      %v2283 = vsel %vm628, %v2229, 0
      %v2286 = vsel %vm628, %v2230, 0
      %v2289 = vsel %vm628, %v2231, 0
      %v2292 = vsel %vm628, %v2232, 0
      %v2295 = vsel %vm628, %v2233, 0
      %v2298 = vsel %vm628, %v2234, 0
      %v2301 = vsel %vm628, %v2235, 0
      %v2304 = vsel %vm628, %v2236, 0
      %v2307 = vsel %vm628, %v2237, 0
      %2309 = vmatprep.subr.bf16.mxu0 0
      %2310 = vmatpush1.bf16.msra.mxu0 0
      %2311 = vmatprep.subr.bf16.mxu0 0
      %2312 = vmatpush1.bf16.msra.mxu0 0
      %2313 = vmatprep.subr.bf16.mxu0 0
      %2314 = vmatpush1.bf16.msra.mxu0 0
      %2315 = vmatprep.subr.bf16.mxu0 0
      %2316 = vmatpush1.bf16.msra.mxu0 0
      %2317 = vmatprep.subr.bf16.mxu0 0
      %2318 = vmatpush1.bf16.msra.mxu0 0
      %2319 = vmatprep.subr.bf16.mxu0 0
      %2320 = vmatpush1.bf16.msra.mxu0 0
      %2321 = vmatprep.subr.bf16.mxu0 0
      %2322 = vmatpush1.bf16.msra.mxu0 %v2258
      %2323 = vmatprep.subr.bf16.mxu0 0
      %2324 = vmatpush1.bf16.msra.mxu0 %v2257
      %2325 = vmatprep.subr.bf16.mxu0 0
      %2326 = vmatpush2.bf16.msra.mxu0 0
      %2327 = vmatprep.subr.bf16.mxu0 0
      %2328 = vmatpush2.bf16.msra.mxu0 0
      %2329 = vmatprep.subr.bf16.mxu0 0
      %2330 = vmatpush2.bf16.msra.mxu0 0
      %2331 = vmatprep.subr.bf16.mxu0 0
      %2332 = vmatpush2.bf16.msra.mxu0 0
      %2333 = vmatprep.subr.bf16.mxu0 0
      %2334 = vmatpush2.bf16.msra.mxu0 0
      %2335 = vmatprep.subr.bf16.mxu0 0
      %2336 = vmatpush2.bf16.msra.mxu0 0
      %2337 = vmatprep.subr.bf16.mxu0 0
      %2338 = vmatpush2.bf16.msra.mxu0 0
      %2339 = vmatprep.subr.bf16.mxu0 0
      %2340 = vmatpush2.bf16.msra.mxu0 0
      %2341 = vmatprep.mubr.bf16.mxu0 0
      %2342 = vmatmul.mubr.bf16.gmra.mxu0 %v2262
      %v2343 = vpop.f32.mrf.mxu0
      %v2344 = vadd.f32 %v2247, %v2343
      %v2345 = vpop.f32.mrf.mxu0
      %v2346 = vpop.f32.mrf.mxu0
      %v2347 = vadd.f32 %v2247, %v2346
      %v2348 = vpop.f32.mrf.mxu0
      %2349 = vmatprep.mubr.bf16.mxu0 0
      %2350 = vmatmul.mubr.bf16.gmra.mxu0 %v2265
      %v2351 = vpop.f32.mrf.mxu0
      %v2352 = vadd.f32 %v2247, %v2351
      %v2353 = vpop.f32.mrf.mxu0
      %v2354 = vpop.f32.mrf.mxu0
      %v2355 = vadd.f32 %v2247, %v2354
      %v2356 = vpop.f32.mrf.mxu0
      %2357 = vmatprep.mubr.bf16.mxu0 0
      %2358 = vmatmul.mubr.bf16.gmra.mxu0 %v2268
      %v2359 = vpop.f32.mrf.mxu0
      %v2360 = vadd.f32 %v2247, %v2359
      %v2361 = vpop.f32.mrf.mxu0
      %v2362 = vpop.f32.mrf.mxu0
      %v2363 = vadd.f32 %v2247, %v2362
      %v2364 = vpop.f32.mrf.mxu0
      %2365 = vmatprep.mubr.bf16.mxu0 0
      %2366 = vmatmul.mubr.bf16.gmra.mxu0 %v2271
      %v2367 = vpop.f32.mrf.mxu0
      %v2368 = vadd.f32 %v2247, %v2367
      %v2369 = vpop.f32.mrf.mxu0
      %v2370 = vpop.f32.mrf.mxu0
      %v2371 = vadd.f32 %v2247, %v2370
      %v2372 = vpop.f32.mrf.mxu0
      %2373 = vmatprep.mubr.bf16.mxu0 0
      %2374 = vmatmul.mubr.bf16.gmra.mxu0 %v2274
      %v2375 = vpop.f32.mrf.mxu0
      %v2376 = vadd.f32 %v2247, %v2375
      %v2377 = vpop.f32.mrf.mxu0
      %v2378 = vpop.f32.mrf.mxu0
      %v2379 = vadd.f32 %v2247, %v2378
      %v2380 = vpop.f32.mrf.mxu0
      %2381 = vmatprep.mubr.bf16.mxu0 0
      %2382 = vmatmul.mubr.bf16.gmra.mxu0 %v2277
      %v2383 = vpop.f32.mrf.mxu0
      %v2384 = vadd.f32 %v2247, %v2383
      %v2385 = vpop.f32.mrf.mxu0
      %v2386 = vpop.f32.mrf.mxu0
      %v2387 = vadd.f32 %v2247, %v2386
      %v2388 = vpop.f32.mrf.mxu0
      %2389 = vmatprep.mubr.bf16.mxu0 0
      %2390 = vmatmul.mubr.bf16.gmra.mxu0 %v2280
      %v2391 = vpop.f32.mrf.mxu0
      %v2392 = vadd.f32 %v2247, %v2391
      %v2393 = vpop.f32.mrf.mxu0
      %v2394 = vpop.f32.mrf.mxu0
      %v2395 = vadd.f32 %v2247, %v2394
      %v2396 = vpop.f32.mrf.mxu0
      %2397 = vmatprep.mubr.bf16.mxu0 0
      %2398 = vmatmul.mubr.bf16.gmra.mxu0 %v2283
      %v2399 = vpop.f32.mrf.mxu0
      %v2400 = vadd.f32 %v2247, %v2399
      %v2401 = vpop.f32.mrf.mxu0
      %v2402 = vpop.f32.mrf.mxu0
      %v2403 = vadd.f32 %v2247, %v2402
      %v2404 = vpop.f32.mrf.mxu0
      %2405 = vmatprep.mubr.bf16.mxu0 0
      %2406 = vmatmul.mubr.bf16.gmra.mxu0 %v2286
      %v2407 = vpop.f32.mrf.mxu0
      %v2408 = vadd.f32 %v2247, %v2407
      %v2409 = vpop.f32.mrf.mxu0
      %v2410 = vpop.f32.mrf.mxu0
      %v2411 = vadd.f32 %v2247, %v2410
      %v2412 = vpop.f32.mrf.mxu0
      %2413 = vmatprep.mubr.bf16.mxu0 0
      %2414 = vmatmul.mubr.bf16.gmra.mxu0 %v2289
      %v2415 = vpop.f32.mrf.mxu0
      %v2416 = vadd.f32 %v2247, %v2415
      %v2417 = vpop.f32.mrf.mxu0
      %v2418 = vpop.f32.mrf.mxu0
      %v2419 = vadd.f32 %v2247, %v2418
      %v2420 = vpop.f32.mrf.mxu0
      %2421 = vmatprep.mubr.bf16.mxu0 0
      %2422 = vmatmul.mubr.bf16.gmra.mxu0 %v2292
      %v2423 = vpop.f32.mrf.mxu0
      %v2424 = vadd.f32 %v2247, %v2423
      %v2425 = vpop.f32.mrf.mxu0
      %v2426 = vpop.f32.mrf.mxu0
      %v2427 = vadd.f32 %v2247, %v2426
      %v2428 = vpop.f32.mrf.mxu0
      %2429 = vmatprep.mubr.bf16.mxu0 0
      %2430 = vmatmul.mubr.bf16.gmra.mxu0 %v2295
      %v2431 = vpop.f32.mrf.mxu0
      %v2432 = vadd.f32 %v2247, %v2431
      %v2433 = vpop.f32.mrf.mxu0
      %v2434 = vpop.f32.mrf.mxu0
      %v2435 = vadd.f32 %v2247, %v2434
      %v2436 = vpop.f32.mrf.mxu0
      %2437 = vmatprep.mubr.bf16.mxu0 0
      %2438 = vmatmul.mubr.bf16.gmra.mxu0 %v2298
      %v2439 = vpop.f32.mrf.mxu0
      %v2440 = vadd.f32 %v2247, %v2439
      %v2441 = vpop.f32.mrf.mxu0
      %v2442 = vpop.f32.mrf.mxu0
      %v2443 = vadd.f32 %v2247, %v2442
      %v2444 = vpop.f32.mrf.mxu0
      %2445 = vmatprep.mubr.bf16.mxu0 0
      %2446 = vmatmul.mubr.bf16.gmra.mxu0 %v2301
      %v2447 = vpop.f32.mrf.mxu0
      %v2448 = vadd.f32 %v2247, %v2447
      %v2449 = vpop.f32.mrf.mxu0
      %v2450 = vpop.f32.mrf.mxu0
      %v2451 = vadd.f32 %v2247, %v2450
      %v2452 = vpop.f32.mrf.mxu0
      %2453 = vmatprep.mubr.bf16.mxu0 0
      %2454 = vmatmul.mubr.bf16.gmra.mxu0 %v2304
      %v2455 = vpop.f32.mrf.mxu0
      %v2456 = vadd.f32 %v2247, %v2455
      %v2457 = vpop.f32.mrf.mxu0
      %v2458 = vpop.f32.mrf.mxu0
      %v2459 = vadd.f32 %v2247, %v2458
      %v2460 = vpop.f32.mrf.mxu0
      %2461 = vmatprep.mubr.bf16.mxu0 0
      %2462 = vmatmul.mubr.bf16.gmra.mxu0 %v2307
      %v2463 = vpop.f32.mrf.mxu0
      %v2464 = vadd.f32 %v2247, %v2463
      %v2465 = vpop.f32.mrf.mxu0
      %v2466 = vpop.f32.mrf.mxu0
      %v2467 = vadd.f32 %v2247, %v2466
      %v2468 = vpop.f32.mrf.mxu0
      %2469 = vdwg.mxu0
      %v2470 = vpack.c.bf16 %v2347, %v2344
      %v2471 = vpack.c.bf16 %v2355, %v2352
      %v2472 = vpack.c.bf16 %v2363, %v2360
      %v2473 = vpack.c.bf16 %v2371, %v2368
      %v2474 = vpack.c.bf16 %v2379, %v2376
      %v2475 = vpack.c.bf16 %v2387, %v2384
      %v2476 = vpack.c.bf16 %v2395, %v2392
      %v2477 = vpack.c.bf16 %v2403, %v2400
      %v2478 = vpack.c.bf16 %v2411, %v2408
      %v2479 = vpack.c.bf16 %v2419, %v2416
      %v2480 = vpack.c.bf16 %v2427, %v2424
      %v2481 = vpack.c.bf16 %v2435, %v2432
      %v2482 = vpack.c.bf16 %v2443, %v2440
      %v2483 = vpack.c.bf16 %v2451, %v2448
      %v2484 = vpack.c.bf16 %v2459, %v2456
      %v2485 = vpack.c.bf16 %v2467, %v2464
      %v2502 = vunpack.c.l.b16 %v2470
      %v2503 = vunpack.c.h.b16 %v2470
      %v2504 = vunpack.c.l.b16 %v2471
      %v2505 = vunpack.c.h.b16 %v2471
      %v2506 = vunpack.c.l.b16 %v2472
      %v2507 = vunpack.c.h.b16 %v2472
      %v2508 = vunpack.c.l.b16 %v2473
      %v2509 = vunpack.c.h.b16 %v2473
      %v2510 = vunpack.c.l.b16 %v2474
      %v2511 = vunpack.c.h.b16 %v2474
      %v2512 = vunpack.c.l.b16 %v2475
      %v2513 = vunpack.c.h.b16 %v2475
      %v2514 = vunpack.c.l.b16 %v2476
      %v2515 = vunpack.c.h.b16 %v2476
      %v2516 = vunpack.c.l.b16 %v2477
      %v2517 = vunpack.c.h.b16 %v2477
      %v2518 = vunpack.c.l.b16 %v2478
      %v2519 = vunpack.c.h.b16 %v2478
      %v2520 = vunpack.c.l.b16 %v2479
      %v2521 = vunpack.c.h.b16 %v2479
      %v2522 = vunpack.c.l.b16 %v2480
      %v2523 = vunpack.c.h.b16 %v2480
      %v2524 = vunpack.c.l.b16 %v2481
      %v2525 = vunpack.c.h.b16 %v2481
      %v2526 = vunpack.c.l.b16 %v2482
      %v2527 = vunpack.c.h.b16 %v2482
      %v2528 = vunpack.c.l.b16 %v2483
      %v2529 = vunpack.c.h.b16 %v2483
      %v2530 = vunpack.c.l.b16 %v2484
      %v2531 = vunpack.c.h.b16 %v2484
      %v2532 = vunpack.c.l.b16 %v2485
      %v2533 = vunpack.c.h.b16 %v2485
      %v2534 = vpack.c.b16 %v2502, %v2502
      %v2535 = vpack.c.b16 %v2503, %v2503
      %v2536 = vpack.c.b16 %v2504, %v2504
      %v2537 = vpack.c.b16 %v2505, %v2505
      %v2538 = vpack.c.b16 %v2506, %v2506
      %v2539 = vpack.c.b16 %v2507, %v2507
      %v2540 = vpack.c.b16 %v2508, %v2508
      %v2541 = vpack.c.b16 %v2509, %v2509
      %v2542 = vpack.c.b16 %v2510, %v2510
      %v2543 = vpack.c.b16 %v2511, %v2511
      %v2544 = vpack.c.b16 %v2512, %v2512
      %v2545 = vpack.c.b16 %v2513, %v2513
      %v2546 = vpack.c.b16 %v2514, %v2514
      %v2547 = vpack.c.b16 %v2515, %v2515
      %v2548 = vpack.c.b16 %v2516, %v2516
      %v2549 = vpack.c.b16 %v2517, %v2517
      %v2550 = vpack.c.b16 %v2518, %v2518
      %v2551 = vpack.c.b16 %v2519, %v2519
      %v2552 = vpack.c.b16 %v2520, %v2520
      %v2553 = vpack.c.b16 %v2521, %v2521
      %v2554 = vpack.c.b16 %v2522, %v2522
      %v2555 = vpack.c.b16 %v2523, %v2523
      %v2556 = vpack.c.b16 %v2524, %v2524
      %v2557 = vpack.c.b16 %v2525, %v2525
      %v2558 = vpack.c.b16 %v2526, %v2526
      %v2559 = vpack.c.b16 %v2527, %v2527
      %v2560 = vpack.c.b16 %v2528, %v2528
      %v2561 = vpack.c.b16 %v2529, %v2529
      %v2562 = vpack.c.b16 %v2530, %v2530
      %v2563 = vpack.c.b16 %v2531, %v2531
      %v2564 = vpack.c.b16 %v2532, %v2532
      %v2565 = vpack.c.b16 %v2533, %v2533
      %2598 = vst [vmem:[%s458] sm:$0xf] %v2534
      %2599 = vst [vmem:[%s458 + $0x4] sm:$0xf] %v2535
      %2600 = vst [vmem:[%s458 + $0x8] sm:$0xf] %v2536
      %2601 = vst [vmem:[%s458 + $0xc] sm:$0xf] %v2537
      %2602 = vst [vmem:[%s458 + $0x10] sm:$0xf] %v2538
      %2603 = vst [vmem:[%s458 + $0x14] sm:$0xf] %v2539
      %2604 = vst [vmem:[%s458 + $0x18] sm:$0xf] %v2540
      %2605 = vst [vmem:[%s458 + $0x1c] sm:$0xf] %v2541
      %2606 = vst [vmem:[%s458 + $0x20] sm:$0xf] %v2542
      %2607 = vst [vmem:[%s458 + $0x24] sm:$0xf] %v2543
      %2608 = vst [vmem:[%s458 + $0x28] sm:$0xf] %v2544
      %2609 = vst [vmem:[%s458 + $0x2c] sm:$0xf] %v2545
      %2610 = vst [vmem:[%s458 + $0x30] sm:$0xf] %v2546
      %2611 = vst [vmem:[%s458 + $0x34] sm:$0xf] %v2547
      %2612 = vst [vmem:[%s458 + $0x38] sm:$0xf] %v2548
      %2613 = vst [vmem:[%s458 + $0x3c] sm:$0xf] %v2549
      %2614 = vst [vmem:[%s458 + $0x40] sm:$0xf] %v2550
      %2615 = vst [vmem:[%s458 + $0x44] sm:$0xf] %v2551
      %2616 = vst [vmem:[%s458 + $0x48] sm:$0xf] %v2552
      %2617 = vst [vmem:[%s458 + $0x4c] sm:$0xf] %v2553
      %2618 = vst [vmem:[%s458 + $0x50] sm:$0xf] %v2554
      %2619 = vst [vmem:[%s458 + $0x54] sm:$0xf] %v2555
      %2620 = vst [vmem:[%s458 + $0x58] sm:$0xf] %v2556
      %2621 = vst [vmem:[%s458 + $0x5c] sm:$0xf] %v2557
      %2622 = vst [vmem:[%s458 + $0x60] sm:$0xf] %v2558
      %2623 = vst [vmem:[%s458 + $0x64] sm:$0xf] %v2559
      %2624 = vst [vmem:[%s458 + $0x68] sm:$0xf] %v2560
      %2625 = vst [vmem:[%s458 + $0x6c] sm:$0xf] %v2561
      %2626 = vst [vmem:[%s458 + $0x70] sm:$0xf] %v2562
      %2627 = vst [vmem:[%s458 + $0x74] sm:$0xf] %v2563
      %2628 = vst [vmem:[%s458 + $0x78] sm:$0xf] %v2564
      %2629 = vst [vmem:[%s458 + $0x7c] sm:$0xf] %v2565
      %s2630 = smul.u32 32, %s27
      %p2631 = scmp.lt.s32.totalorder %s26, 1
      %s2632 = scalar_select %p2631, %s26, 1
      %p2633 = scmp.lt.s32.totalorder %s2630, 31
      %s2634 = scalar_select %p2633, %s2630, 31
      %s2635 = smul.addr %s2632, 32
      %s2636 = sadd.s32 %s2634, %s2635
      %s2637 = smul.addr %s2636, 4
      %s2638 = scalar_lea.vmem %s11, %s2637
      // Predicated region
      $region65: #{galerkin_transformer_2d.13} parent=63 // pred_check
        %p2639 = pneg %p302
      $region66: #{galerkin_transformer_2d.13} parent=63 // pred_check_branch
        %2641 = sbr.rel (%p2639) target = $region68
      $region67: #{galerkin_transformer_2d.13} parent=63 // pred_region
        %s2642 = smul.u32 32, %s27
      $region68: #{galerkin_transformer_2d.13} parent=63 // pred_fallthru
        _
    $region64: #{galerkin_transformer_2d.13} parent=5 // pred_fallthru
      _
    %p2643 = scmp.le.s32.totalorder 2, %s17
    // Predicated region
    $region69: #{galerkin_transformer_2d.13} parent=5 // pred_check
      %p2644 = pneg %p2643
    $region70: #{galerkin_transformer_2d.13} parent=5 // pred_check_branch
      %2646 = sbr.rel (%p2644) target = $region72
    $region71: #{galerkin_transformer_2d.13} parent=5 // pred_region
      %s2647 = ssub.s32 %s17, 2
      // Predicated region
      $region73: #{galerkin_transformer_2d.13} parent=71 // pred_check
        %p2648 = pneg %p308
      $region74: #{galerkin_transformer_2d.13} parent=71 // pred_check_branch
        %2650 = sbr.rel (%p2648) target = $region76
      $region75: #{galerkin_transformer_2d.13} parent=71 // pred_region
        %s2651 = smul.u32 32, %s29
        %p2652 = scmp.lt.s32.totalorder %s28, 1
        %s2653 = scalar_select %p2652, %s28, 1
        %p2654 = scmp.lt.s32.totalorder %s2651, 31
        %s2655 = scalar_select %p2654, %s2651, 31
        %s2656 = smul.addr %s2653, 32
        %s2657 = sadd.s32 %s2655, %s2656
        %s2658 = smul.addr %s2657, 4
        %s2659 = scalar_lea.vmem %s11, %s2658
      $region76: #{galerkin_transformer_2d.13} parent=71 // pred_fallthru
        _
    $region72: #{galerkin_transformer_2d.13} parent=5 // pred_fallthru
      _
  $region6: #{galerkin_transformer_2d.13} parent=0 // loop_footer
    %s21 = sadd.s32 1, %s17
  $region7: #{galerkin_transformer_2d.13} parent=0 // loop_footer_branch
    %16 = sbr.rel target = $region3
  $region8: #{galerkin_transformer_2d.13} parent=0 // loop_exit
    _

</llo_original>
